<compile_context>
chip_gen: v6e
topology: v6e:2x2x1
jax: 0.10.0
libtpu: 0.0.40
codegen_flags: <defaults>
</compile_context>

<pallas_src>
import functools

import jax
import jax.numpy as jnp
import numpy as np
from jax.experimental import pallas as pl
from jax.experimental.pallas import tpu as pltpu

EPS = 1e-5


def _bn(a_f32, gamma, beta, *, relu):
    """Training-mode BatchNorm over axis 0 (biased variance), one-pass stats."""
    inv_cnt = 1.0 / a_f32.shape[0]
    s = jnp.sum(a_f32, axis=0, keepdims=True)
    ss = jnp.sum(a_f32 * a_f32, axis=0, keepdims=True)
    mean = s * inv_cnt
    var = ss * inv_cnt - mean * mean
    scale = gamma * jax.lax.rsqrt(var + EPS)
    shift = beta - mean * scale
    h = a_f32 * scale + shift
    return jnp.maximum(h, 0.0) if relu else h


def _bottleneck_kernel(x_ref,
                       w1_ref, g1_ref, b1_ref,
                       w2_ref, g2_ref, b2_ref,
                       w3_ref, g3_ref, b3_ref,
                       out_ref,
                       h1pad_ref, col_ref):
    """Fused Bottleneck block. Everything lives in VMEM (small demo shapes)."""
    N, H, W, C4 = x_ref.shape          # C4 = planes * expansion
    Cm = w1_ref.shape[1]               # planes
    Hp, Wp = H + 2, W + 2
    M = N * H * W

    # ---- single HBM read of the input; reused for conv1 and the residual ---
    x_flat = x_ref[...].reshape(M, C4).astype(jnp.float32)

    # ---- conv1 (1x1)  +  bn1  +  relu --------------------------------------
    a1 = jnp.dot(x_flat.astype(jnp.bfloat16), w1_ref[...],
                 preferred_element_type=jnp.float32)          # (M, Cm)
    h1 = _bn(a1, g1_ref[...], b1_ref[...], relu=True)

    # ---- zero only the 1-pixel halo of the padded scratch, write interior --
    h1pad_ref[:, 0:1, :, :] = jnp.zeros((N, 1, Wp, Cm), jnp.float32)
    h1pad_ref[:, Hp - 1:Hp, :, :] = jnp.zeros((N, 1, Wp, Cm), jnp.float32)
    h1pad_ref[:, :, 0:1, :] = jnp.zeros((N, Hp, 1, Cm), jnp.float32)
    h1pad_ref[:, :, Wp - 1:Wp, :] = jnp.zeros((N, Hp, 1, Cm), jnp.float32)
    h1pad_ref[:, 1:H + 1, 1:W + 1, :] = h1.reshape(N, H, W, Cm)

    # ---- im2col once into VMEM: (N, H, W, 9*Cm) ----------------------------
    for kh in range(3):
        for kw in range(3):
            tap = kh * 3 + kw
            col_ref[:, :, :, tap * Cm:(tap + 1) * Cm] = \
                h1pad_ref[:, kh:kh + H, kw:kw + W, :]

    # ---- conv2 (3x3, pad 1) as ONE matmul with K = 9*Cm  + bn2 + relu ------
    patches = col_ref[...].reshape(M, 9 * Cm).astype(jnp.bfloat16)
    a2 = jnp.dot(patches, w2_ref[...],
                 preferred_element_type=jnp.float32)          # (M, Cm)
    h2 = _bn(a2, g2_ref[...], b2_ref[...], relu=True)

    # ---- conv3 (1x1)  +  bn3 ------------------------------------------------
    a3 = jnp.dot(h2.astype(jnp.bfloat16), w3_ref[...],
                 preferred_element_type=jnp.float32)          # (M, C4)
    h3 = _bn(a3, g3_ref[...], b3_ref[...], relu=False)

    # ---- identity residual add + relu --------------------------------------
    out = jnp.maximum(h3 + x_flat, 0.0)
    out_ref[...] = out.reshape(N, H, W, C4).astype(out_ref.dtype)


@jax.jit
def bottleneck_pallas(x_nchw, w1, g1, b1, w2, g2, b2, w3, g3, b3):
    """x_nchw: (N, C, H, W) f32; conv weights in PyTorch OIHW layout."""
    N, C4, H, W = x_nchw.shape
    Cm = w1.shape[0]                       # planes
    assert w1.shape == (Cm, C4, 1, 1)
    assert w2.shape == (Cm, Cm, 3, 3)
    assert w3.shape == (C4, Cm, 1, 1)
    assert C4 == 4 * Cm, "identity residual needs inplanes == planes * 4"

    # TODO(synk): in a real network keep activations in NHWC across blocks and
    # pre-repack weights once, so these per-call transposes disappear.
    x_nhwc = jnp.transpose(x_nchw, (0, 2, 3, 1))

    # Repack conv weights into matmul operands (bf16 for the MXU).
    w1_k = jnp.transpose(w1[:, :, 0, 0], (1, 0)).astype(jnp.bfloat16)     # (C4, Cm)
    w2_k = jnp.transpose(w2, (2, 3, 1, 0)).reshape(9 * Cm, Cm)            # (9*Cm, Cm)
    w2_k = w2_k.astype(jnp.bfloat16)
    w3_k = jnp.transpose(w3[:, :, 0, 0], (1, 0)).astype(jnp.bfloat16)     # (Cm, C4)

    g1_k = g1.reshape(1, Cm).astype(jnp.float32)
    b1_k = b1.reshape(1, Cm).astype(jnp.float32)
    g2_k = g2.reshape(1, Cm).astype(jnp.float32)
    b2_k = b2.reshape(1, Cm).astype(jnp.float32)
    g3_k = g3.reshape(1, C4).astype(jnp.float32)
    b3_k = b3.reshape(1, C4).astype(jnp.float32)

    vmem = pl.BlockSpec(memory_space=pltpu.MemorySpace.VMEM)
    # TODO(synk): for production ResNet shapes add a grid over N / H-tiles
    # ("parallel" for the v7x second TensorCore) with BN stats accumulated as
    # partial sums across grid steps; training-mode batch stats couple the
    # whole batch, so the grid-less form is kept for this small demo.
    out_nhwc = pl.pallas_call(
        _bottleneck_kernel,
        out_shape=jax.ShapeDtypeStruct((N, H, W, C4), jnp.float32),
        in_specs=[vmem] * 10,
        out_specs=vmem,
        scratch_shapes=[
            pltpu.VMEM((N, H + 2, W + 2, Cm), jnp.float32),   # padded h1
            pltpu.VMEM((N, H, W, 9 * Cm), jnp.float32),       # im2col patches
        ],
    )(x_nhwc, w1_k, g1_k, b1_k, w2_k, g2_k, b2_k, w3_k, g3_k, b3_k)

    return jnp.transpose(out_nhwc, (0, 3, 1, 2))


def bottleneck_reference(x, w1, g1, b1, w2, g2, b2, w3, g3, b3):
    """Pure-JAX reference mirroring PyTorch Bottleneck (training-mode BN)."""
    def conv(x, w, pad):
        return jax.lax.conv_general_dilated(
            x, w, window_strides=(1, 1), padding=((pad, pad), (pad, pad)),
            dimension_numbers=("NCHW", "OIHW", "NCHW"))

    def bn(x, g, b):
        mean = jnp.mean(x, axis=(0, 2, 3), keepdims=True)
        var = jnp.mean((x - mean) ** 2, axis=(0, 2, 3), keepdims=True)
        return ((x - mean) * jax.lax.rsqrt(var + EPS)
                * g[None, :, None, None] + b[None, :, None, None])

    out = jnp.maximum(bn(conv(x, w1, 0), g1, b1), 0.0)
    out = jnp.maximum(bn(conv(out, w2, 1), g2, b2), 0.0)
    out = bn(conv(out, w3, 0), g3, b3)
    return jnp.maximum(out + x, 0.0)


if __name__ == "__main__":
    # Small deterministic problem: planes=4, inplanes=planes*4=16, stride=1,
    # downsample=None (identity residual).
    N, planes, H, W = 2, 4, 16, 16
    inplanes = planes * 4

    key = jax.random.PRNGKey(0)
    ks = jax.random.split(key, 10)
    x = jax.random.normal(ks[0], (N, inplanes, H, W), jnp.float32)
    w1 = jax.random.normal(ks[1], (planes, inplanes, 1, 1), jnp.float32) * 0.2
    w2 = jax.random.normal(ks[2], (planes, planes, 3, 3), jnp.float32) * 0.2
    w3 = jax.random.normal(ks[3], (inplanes, planes, 1, 1), jnp.float32) * 0.2
    g1 = 1.0 + 0.1 * jax.random.normal(ks[4], (planes,), jnp.float32)
    b1 = 0.1 * jax.random.normal(ks[5], (planes,), jnp.float32)
    g2 = 1.0 + 0.1 * jax.random.normal(ks[6], (planes,), jnp.float32)
    b2 = 0.1 * jax.random.normal(ks[7], (planes,), jnp.float32)
    g3 = 1.0 + 0.1 * jax.random.normal(ks[8], (inplanes,), jnp.float32)
    b3 = 0.1 * jax.random.normal(ks[9], (inplanes,), jnp.float32)

    out = jax.block_until_ready(
        bottleneck_pallas(x, w1, g1, b1, w2, g2, b2, w3, g3, b3))
    ref = jax.block_until_ready(
        bottleneck_reference(x, w1, g1, b1, w2, g2, b2, w3, g3, b3))

    # Tolerance accounts for bf16 MXU operands (f32 accumulation, f32 BN math).
    np.testing.assert_allclose(np.asarray(out), np.asarray(ref),
                               rtol=3e-2, atol=3e-2)
    print("KERNEL_OK")
</pallas_src>

<mosaic_0001>
module attributes {stable_mosaic.version = 11 : i64} {
  func.func @_bottleneck_kernel(%arg0: memref<2x16x16x16xf32, #tpu.memory_space<vmem>>, %arg1: memref<16x4xbf16, #tpu.memory_space<vmem>>, %arg2: memref<1x4xf32, #tpu.memory_space<vmem>>, %arg3: memref<1x4xf32, #tpu.memory_space<vmem>>, %arg4: memref<36x4xbf16, #tpu.memory_space<vmem>>, %arg5: memref<1x4xf32, #tpu.memory_space<vmem>>, %arg6: memref<1x4xf32, #tpu.memory_space<vmem>>, %arg7: memref<4x16xbf16, #tpu.memory_space<vmem>>, %arg8: memref<1x16xf32, #tpu.memory_space<vmem>>, %arg9: memref<1x16xf32, #tpu.memory_space<vmem>>, %arg10: memref<2x16x16x16xf32, #tpu.memory_space<vmem>>, %arg11: memref<2x18x18x4xf32, #tpu.memory_space<vmem>>, %arg12: memref<2x16x16x36xf32, #tpu.memory_space<vmem>>) attributes {dimension_semantics = [], scalar_prefetch = 0 : i64, scratch_operands = 2 : i64, tpu.core_type = #tpu.core_type<tc>} {
    %c0 = arith.constant 0 : index
    %c0_0 = arith.constant 0 : index
    %c0_1 = arith.constant 0 : index
    %c0_2 = arith.constant 0 : index
    %0 = vector.load %arg0[%c0, %c0_0, %c0_1, %c0_2] : memref<2x16x16x16xf32, #tpu.memory_space<vmem>>, vector<2x16x16x16xf32>
    %1 = vector.shape_cast %0 : vector<2x16x16x16xf32> to vector<512x16xf32>
    %2 = arith.truncf %1 : vector<512x16xf32> to vector<512x16xbf16>
    %c0_3 = arith.constant 0 : index
    %c0_4 = arith.constant 0 : index
    %3 = vector.load %arg1[%c0_3, %c0_4] : memref<16x4xbf16, #tpu.memory_space<vmem>>, vector<16x4xbf16>
    %cst = arith.constant dense<0.000000e+00> : vector<512x4xf32>
    %4 = tpu.matmul %2, %3, %cst {dimension_numbers = #tpu.dot_dimension_numbers<[1], [0], [0], [1], [0, 0, 1, 1], [], []>} : vector<512x16xbf16>, vector<16x4xbf16>, vector<512x4xf32> -> vector<512x4xf32>
    %c0_5 = arith.constant 0 : index
    %c0_6 = arith.constant 0 : index
    %5 = vector.load %arg2[%c0_5, %c0_6] : memref<1x4xf32, #tpu.memory_space<vmem>>, vector<1x4xf32>
    %c0_7 = arith.constant 0 : index
    %c0_8 = arith.constant 0 : index
    %6 = vector.load %arg3[%c0_7, %c0_8] : memref<1x4xf32, #tpu.memory_space<vmem>>, vector<1x4xf32>
    %cst_9 = arith.constant dense<0.000000e+00> : vector<4xf32>
    %7 = vector.multi_reduction <add>, %4, %cst_9 [0] : vector<512x4xf32> to vector<4xf32>
    %8 = vector.shape_cast %7 : vector<4xf32> to vector<1x4xf32>
    %9 = arith.mulf %4, %4 : vector<512x4xf32>
    %cst_10 = arith.constant dense<0.000000e+00> : vector<4xf32>
    %10 = vector.multi_reduction <add>, %9, %cst_10 [0] : vector<512x4xf32> to vector<4xf32>
    %11 = vector.shape_cast %10 : vector<4xf32> to vector<1x4xf32>
    %cst_11 = arith.constant 0.001953125 : f32
    %12 = vector.broadcast %cst_11 : f32 to vector<1x4xf32>
    %13 = arith.mulf %8, %12 : vector<1x4xf32>
    %cst_12 = arith.constant 0.001953125 : f32
    %14 = vector.broadcast %cst_12 : f32 to vector<1x4xf32>
    %15 = arith.mulf %11, %14 : vector<1x4xf32>
    %16 = arith.mulf %13, %13 : vector<1x4xf32>
    %17 = arith.subf %15, %16 : vector<1x4xf32>
    %cst_13 = arith.constant 9.99999974E-6 : f32
    %18 = vector.broadcast %cst_13 : f32 to vector<1x4xf32>
    %19 = arith.addf %17, %18 : vector<1x4xf32>
    %20 = math.rsqrt %19 : vector<1x4xf32>
    %21 = arith.mulf %5, %20 : vector<1x4xf32>
    %22 = arith.mulf %13, %21 : vector<1x4xf32>
    %23 = arith.subf %6, %22 : vector<1x4xf32>
    %24 = vector.broadcast %21 : vector<1x4xf32> to vector<512x4xf32>
    %25 = arith.mulf %4, %24 : vector<512x4xf32>
    %26 = vector.broadcast %23 : vector<1x4xf32> to vector<512x4xf32>
    %27 = arith.addf %25, %26 : vector<512x4xf32>
    %cst_14 = arith.constant 0.000000e+00 : f32
    %28 = vector.broadcast %cst_14 : f32 to vector<512x4xf32>
    %29 = arith.maximumf %27, %28 : vector<512x4xf32>
    %cst_15 = arith.constant 0.000000e+00 : f32
    %30 = vector.broadcast %cst_15 : f32 to vector<2x1x18x4xf32>
    %c0_16 = arith.constant 0 : index
    %c0_17 = arith.constant 0 : index
    %c0_18 = arith.constant 0 : index
    %c0_19 = arith.constant 0 : index
    %31 = vector.load %arg11[%c0_16, %c0_17, %c0_18, %c0_19] : memref<2x18x18x4xf32, #tpu.memory_space<vmem>>, vector<2x1x18x4xf32>
    tpu.vector_store %arg11[%c0_16, %c0_17, %c0_18, %c0_19], %30 {strides = array<i32>} : memref<2x18x18x4xf32, #tpu.memory_space<vmem>>, vector<2x1x18x4xf32>,
    %cst_20 = arith.constant 0.000000e+00 : f32
    %32 = vector.broadcast %cst_20 : f32 to vector<2x1x18x4xf32>
    %c0_21 = arith.constant 0 : index
    %c17 = arith.constant 17 : index
    %c0_22 = arith.constant 0 : index
    %c0_23 = arith.constant 0 : index
    %33 = vector.load %arg11[%c0_21, %c17, %c0_22, %c0_23] : memref<2x18x18x4xf32, #tpu.memory_space<vmem>>, vector<2x1x18x4xf32>
    tpu.vector_store %arg11[%c0_21, %c17, %c0_22, %c0_23], %32 {strides = array<i32>} : memref<2x18x18x4xf32, #tpu.memory_space<vmem>>, vector<2x1x18x4xf32>,
    %cst_24 = arith.constant 0.000000e+00 : f32
    %34 = vector.broadcast %cst_24 : f32 to vector<2x18x1x4xf32>
    %c0_25 = arith.constant 0 : index
    %c0_26 = arith.constant 0 : index
    %c0_27 = arith.constant 0 : index
    %c0_28 = arith.constant 0 : index
    %35 = vector.load %arg11[%c0_25, %c0_26, %c0_27, %c0_28] : memref<2x18x18x4xf32, #tpu.memory_space<vmem>>, vector<2x18x1x4xf32>
    tpu.vector_store %arg11[%c0_25, %c0_26, %c0_27, %c0_28], %34 {strides = array<i32>} : memref<2x18x18x4xf32, #tpu.memory_space<vmem>>, vector<2x18x1x4xf32>,
    %cst_29 = arith.constant 0.000000e+00 : f32
    %36 = vector.broadcast %cst_29 : f32 to vector<2x18x1x4xf32>
    %c0_30 = arith.constant 0 : index
    %c0_31 = arith.constant 0 : index
    %c17_32 = arith.constant 17 : index
    %c0_33 = arith.constant 0 : index
    %37 = vector.load %arg11[%c0_30, %c0_31, %c17_32, %c0_33] : memref<2x18x18x4xf32, #tpu.memory_space<vmem>>, vector<2x18x1x4xf32>
    tpu.vector_store %arg11[%c0_30, %c0_31, %c17_32, %c0_33], %36 {strides = array<i32>} : memref<2x18x18x4xf32, #tpu.memory_space<vmem>>, vector<2x18x1x4xf32>,
    %38 = vector.shape_cast %29 : vector<512x4xf32> to vector<2x16x16x4xf32>
    %c0_34 = arith.constant 0 : index
    %c1 = arith.constant 1 : index
    %c1_35 = arith.constant 1 : index
    %c0_36 = arith.constant 0 : index
    %39 = vector.load %arg11[%c0_34, %c1, %c1_35, %c0_36] : memref<2x18x18x4xf32, #tpu.memory_space<vmem>>, vector<2x16x16x4xf32>
    tpu.vector_store %arg11[%c0_34, %c1, %c1_35, %c0_36], %38 {strides = array<i32>} : memref<2x18x18x4xf32, #tpu.memory_space<vmem>>, vector<2x16x16x4xf32>,
    %c0_37 = arith.constant 0 : index
    %c0_38 = arith.constant 0 : index
    %c0_39 = arith.constant 0 : index
    %c0_40 = arith.constant 0 : index
    %40 = vector.load %arg11[%c0_37, %c0_38, %c0_39, %c0_40] : memref<2x18x18x4xf32, #tpu.memory_space<vmem>>, vector<2x16x16x4xf32>
    %c0_41 = arith.constant 0 : index
    %c0_42 = arith.constant 0 : index
    %c0_43 = arith.constant 0 : index
    %c0_44 = arith.constant 0 : index
    %41 = vector.load %arg12[%c0_41, %c0_42, %c0_43, %c0_44] : memref<2x16x16x36xf32, #tpu.memory_space<vmem>>, vector<2x16x16x4xf32>
    tpu.vector_store %arg12[%c0_41, %c0_42, %c0_43, %c0_44], %40 {strides = array<i32>} : memref<2x16x16x36xf32, #tpu.memory_space<vmem>>, vector<2x16x16x4xf32>,
    %c0_45 = arith.constant 0 : index
    %c0_46 = arith.constant 0 : index
    %c1_47 = arith.constant 1 : index
    %c0_48 = arith.constant 0 : index
    %42 = vector.load %arg11[%c0_45, %c0_46, %c1_47, %c0_48] : memref<2x18x18x4xf32, #tpu.memory_space<vmem>>, vector<2x16x16x4xf32>
    %c0_49 = arith.constant 0 : index
    %c0_50 = arith.constant 0 : index
    %c0_51 = arith.constant 0 : index
    %c4 = arith.constant 4 : index
    %43 = vector.load %arg12[%c0_49, %c0_50, %c0_51, %c4] : memref<2x16x16x36xf32, #tpu.memory_space<vmem>>, vector<2x16x16x4xf32>
    tpu.vector_store %arg12[%c0_49, %c0_50, %c0_51, %c4], %42 {strides = array<i32>} : memref<2x16x16x36xf32, #tpu.memory_space<vmem>>, vector<2x16x16x4xf32>,
    %c0_52 = arith.constant 0 : index
    %c0_53 = arith.constant 0 : index
    %c2 = arith.constant 2 : index
    %c0_54 = arith.constant 0 : index
    %44 = vector.load %arg11[%c0_52, %c0_53, %c2, %c0_54] : memref<2x18x18x4xf32, #tpu.memory_space<vmem>>, vector<2x16x16x4xf32>
    %c0_55 = arith.constant 0 : index
    %c0_56 = arith.constant 0 : index
    %c0_57 = arith.constant 0 : index
    %c8 = arith.constant 8 : index
    %45 = vector.load %arg12[%c0_55, %c0_56, %c0_57, %c8] : memref<2x16x16x36xf32, #tpu.memory_space<vmem>>, vector<2x16x16x4xf32>
    tpu.vector_store %arg12[%c0_55, %c0_56, %c0_57, %c8], %44 {strides = array<i32>} : memref<2x16x16x36xf32, #tpu.memory_space<vmem>>, vector<2x16x16x4xf32>,
    %c0_58 = arith.constant 0 : index
    %c1_59 = arith.constant 1 : index
    %c0_60 = arith.constant 0 : index
    %c0_61 = arith.constant 0 : index
    %46 = vector.load %arg11[%c0_58, %c1_59, %c0_60, %c0_61] : memref<2x18x18x4xf32, #tpu.memory_space<vmem>>, vector<2x16x16x4xf32>
    %c0_62 = arith.constant 0 : index
    %c0_63 = arith.constant 0 : index
    %c0_64 = arith.constant 0 : index
    %c12 = arith.constant 12 : index
    %47 = vector.load %arg12[%c0_62, %c0_63, %c0_64, %c12] : memref<2x16x16x36xf32, #tpu.memory_space<vmem>>, vector<2x16x16x4xf32>
    tpu.vector_store %arg12[%c0_62, %c0_63, %c0_64, %c12], %46 {strides = array<i32>} : memref<2x16x16x36xf32, #tpu.memory_space<vmem>>, vector<2x16x16x4xf32>,
    %c0_65 = arith.constant 0 : index
    %c1_66 = arith.constant 1 : index
    %c1_67 = arith.constant 1 : index
    %c0_68 = arith.constant 0 : index
    %48 = vector.load %arg11[%c0_65, %c1_66, %c1_67, %c0_68] : memref<2x18x18x4xf32, #tpu.memory_space<vmem>>, vector<2x16x16x4xf32>
    %c0_69 = arith.constant 0 : index
    %c0_70 = arith.constant 0 : index
    %c0_71 = arith.constant 0 : index
    %c16 = arith.constant 16 : index
    %49 = vector.load %arg12[%c0_69, %c0_70, %c0_71, %c16] : memref<2x16x16x36xf32, #tpu.memory_space<vmem>>, vector<2x16x16x4xf32>
    tpu.vector_store %arg12[%c0_69, %c0_70, %c0_71, %c16], %48 {strides = array<i32>} : memref<2x16x16x36xf32, #tpu.memory_space<vmem>>, vector<2x16x16x4xf32>,
    %c0_72 = arith.constant 0 : index
    %c1_73 = arith.constant 1 : index
    %c2_74 = arith.constant 2 : index
    %c0_75 = arith.constant 0 : index
    %50 = vector.load %arg11[%c0_72, %c1_73, %c2_74, %c0_75] : memref<2x18x18x4xf32, #tpu.memory_space<vmem>>, vector<2x16x16x4xf32>
    %c0_76 = arith.constant 0 : index
    %c0_77 = arith.constant 0 : index
    %c0_78 = arith.constant 0 : index
    %c20 = arith.constant 20 : index
    %51 = vector.load %arg12[%c0_76, %c0_77, %c0_78, %c20] : memref<2x16x16x36xf32, #tpu.memory_space<vmem>>, vector<2x16x16x4xf32>
    tpu.vector_store %arg12[%c0_76, %c0_77, %c0_78, %c20], %50 {strides = array<i32>} : memref<2x16x16x36xf32, #tpu.memory_space<vmem>>, vector<2x16x16x4xf32>,
    %c0_79 = arith.constant 0 : index
    %c2_80 = arith.constant 2 : index
    %c0_81 = arith.constant 0 : index
    %c0_82 = arith.constant 0 : index
    %52 = vector.load %arg11[%c0_79, %c2_80, %c0_81, %c0_82] : memref<2x18x18x4xf32, #tpu.memory_space<vmem>>, vector<2x16x16x4xf32>
    %c0_83 = arith.constant 0 : index
    %c0_84 = arith.constant 0 : index
    %c0_85 = arith.constant 0 : index
    %c24 = arith.constant 24 : index
    %53 = vector.load %arg12[%c0_83, %c0_84, %c0_85, %c24] : memref<2x16x16x36xf32, #tpu.memory_space<vmem>>, vector<2x16x16x4xf32>
    tpu.vector_store %arg12[%c0_83, %c0_84, %c0_85, %c24], %52 {strides = array<i32>} : memref<2x16x16x36xf32, #tpu.memory_space<vmem>>, vector<2x16x16x4xf32>,
    %c0_86 = arith.constant 0 : index
    %c2_87 = arith.constant 2 : index
    %c1_88 = arith.constant 1 : index
    %c0_89 = arith.constant 0 : index
    %54 = vector.load %arg11[%c0_86, %c2_87, %c1_88, %c0_89] : memref<2x18x18x4xf32, #tpu.memory_space<vmem>>, vector<2x16x16x4xf32>
    %c0_90 = arith.constant 0 : index
    %c0_91 = arith.constant 0 : index
    %c0_92 = arith.constant 0 : index
    %c28 = arith.constant 28 : index
    %55 = vector.load %arg12[%c0_90, %c0_91, %c0_92, %c28] : memref<2x16x16x36xf32, #tpu.memory_space<vmem>>, vector<2x16x16x4xf32>
    tpu.vector_store %arg12[%c0_90, %c0_91, %c0_92, %c28], %54 {strides = array<i32>} : memref<2x16x16x36xf32, #tpu.memory_space<vmem>>, vector<2x16x16x4xf32>,
    %c0_93 = arith.constant 0 : index
    %c2_94 = arith.constant 2 : index
    %c2_95 = arith.constant 2 : index
    %c0_96 = arith.constant 0 : index
    %56 = vector.load %arg11[%c0_93, %c2_94, %c2_95, %c0_96] : memref<2x18x18x4xf32, #tpu.memory_space<vmem>>, vector<2x16x16x4xf32>
    %c0_97 = arith.constant 0 : index
    %c0_98 = arith.constant 0 : index
    %c0_99 = arith.constant 0 : index
    %c32 = arith.constant 32 : index
    %57 = vector.load %arg12[%c0_97, %c0_98, %c0_99, %c32] : memref<2x16x16x36xf32, #tpu.memory_space<vmem>>, vector<2x16x16x4xf32>
    tpu.vector_store %arg12[%c0_97, %c0_98, %c0_99, %c32], %56 {strides = array<i32>} : memref<2x16x16x36xf32, #tpu.memory_space<vmem>>, vector<2x16x16x4xf32>,
    %c0_100 = arith.constant 0 : index
    %c0_101 = arith.constant 0 : index
    %c0_102 = arith.constant 0 : index
    %c0_103 = arith.constant 0 : index
    %58 = vector.load %arg12[%c0_100, %c0_101, %c0_102, %c0_103] : memref<2x16x16x36xf32, #tpu.memory_space<vmem>>, vector<2x16x16x36xf32>
    %59 = vector.shape_cast %58 : vector<2x16x16x36xf32> to vector<512x36xf32>
    %60 = arith.truncf %59 : vector<512x36xf32> to vector<512x36xbf16>
    %c0_104 = arith.constant 0 : index
    %c0_105 = arith.constant 0 : index
    %61 = vector.load %arg4[%c0_104, %c0_105] : memref<36x4xbf16, #tpu.memory_space<vmem>>, vector<36x4xbf16>
    %cst_106 = arith.constant dense<0.000000e+00> : vector<512x4xf32>
    %62 = tpu.matmul %60, %61, %cst_106 {dimension_numbers = #tpu.dot_dimension_numbers<[1], [0], [0], [1], [0, 0, 1, 1], [], []>} : vector<512x36xbf16>, vector<36x4xbf16>, vector<512x4xf32> -> vector<512x4xf32>
    %c0_107 = arith.constant 0 : index
    %c0_108 = arith.constant 0 : index
    %63 = vector.load %arg5[%c0_107, %c0_108] : memref<1x4xf32, #tpu.memory_space<vmem>>, vector<1x4xf32>
    %c0_109 = arith.constant 0 : index
    %c0_110 = arith.constant 0 : index
    %64 = vector.load %arg6[%c0_109, %c0_110] : memref<1x4xf32, #tpu.memory_space<vmem>>, vector<1x4xf32>
    %cst_111 = arith.constant dense<0.000000e+00> : vector<4xf32>
    %65 = vector.multi_reduction <add>, %62, %cst_111 [0] : vector<512x4xf32> to vector<4xf32>
    %66 = vector.shape_cast %65 : vector<4xf32> to vector<1x4xf32>
    %67 = arith.mulf %62, %62 : vector<512x4xf32>
    %cst_112 = arith.constant dense<0.000000e+00> : vector<4xf32>
    %68 = vector.multi_reduction <add>, %67, %cst_112 [0] : vector<512x4xf32> to vector<4xf32>
    %69 = vector.shape_cast %68 : vector<4xf32> to vector<1x4xf32>
    %cst_113 = arith.constant 0.001953125 : f32
    %70 = vector.broadcast %cst_113 : f32 to vector<1x4xf32>
    %71 = arith.mulf %66, %70 : vector<1x4xf32>
    %cst_114 = arith.constant 0.001953125 : f32
    %72 = vector.broadcast %cst_114 : f32 to vector<1x4xf32>
    %73 = arith.mulf %69, %72 : vector<1x4xf32>
    %74 = arith.mulf %71, %71 : vector<1x4xf32>
    %75 = arith.subf %73, %74 : vector<1x4xf32>
    %cst_115 = arith.constant 9.99999974E-6 : f32
    %76 = vector.broadcast %cst_115 : f32 to vector<1x4xf32>
    %77 = arith.addf %75, %76 : vector<1x4xf32>
    %78 = math.rsqrt %77 : vector<1x4xf32>
    %79 = arith.mulf %63, %78 : vector<1x4xf32>
    %80 = arith.mulf %71, %79 : vector<1x4xf32>
    %81 = arith.subf %64, %80 : vector<1x4xf32>
    %82 = vector.broadcast %79 : vector<1x4xf32> to vector<512x4xf32>
    %83 = arith.mulf %62, %82 : vector<512x4xf32>
    %84 = vector.broadcast %81 : vector<1x4xf32> to vector<512x4xf32>
    %85 = arith.addf %83, %84 : vector<512x4xf32>
    %cst_116 = arith.constant 0.000000e+00 : f32
    %86 = vector.broadcast %cst_116 : f32 to vector<512x4xf32>
    %87 = arith.maximumf %85, %86 : vector<512x4xf32>
    %88 = arith.truncf %87 : vector<512x4xf32> to vector<512x4xbf16>
    %c0_117 = arith.constant 0 : index
    %c0_118 = arith.constant 0 : index
    %89 = vector.load %arg7[%c0_117, %c0_118] : memref<4x16xbf16, #tpu.memory_space<vmem>>, vector<4x16xbf16>
    %cst_119 = arith.constant dense<0.000000e+00> : vector<512x16xf32>
    %90 = tpu.matmul %88, %89, %cst_119 {dimension_numbers = #tpu.dot_dimension_numbers<[1], [0], [0], [1], [0, 0, 1, 1], [], []>} : vector<512x4xbf16>, vector<4x16xbf16>, vector<512x16xf32> -> vector<512x16xf32>
    %c0_120 = arith.constant 0 : index
    %c0_121 = arith.constant 0 : index
    %91 = vector.load %arg8[%c0_120, %c0_121] : memref<1x16xf32, #tpu.memory_space<vmem>>, vector<1x16xf32>
    %c0_122 = arith.constant 0 : index
    %c0_123 = arith.constant 0 : index
    %92 = vector.load %arg9[%c0_122, %c0_123] : memref<1x16xf32, #tpu.memory_space<vmem>>, vector<1x16xf32>
    %cst_124 = arith.constant dense<0.000000e+00> : vector<16xf32>
    %93 = vector.multi_reduction <add>, %90, %cst_124 [0] : vector<512x16xf32> to vector<16xf32>
    %94 = vector.shape_cast %93 : vector<16xf32> to vector<1x16xf32>
    %95 = arith.mulf %90, %90 : vector<512x16xf32>
    %cst_125 = arith.constant dense<0.000000e+00> : vector<16xf32>
    %96 = vector.multi_reduction <add>, %95, %cst_125 [0] : vector<512x16xf32> to vector<16xf32>
    %97 = vector.shape_cast %96 : vector<16xf32> to vector<1x16xf32>
    %cst_126 = arith.constant 0.001953125 : f32
    %98 = vector.broadcast %cst_126 : f32 to vector<1x16xf32>
    %99 = arith.mulf %94, %98 : vector<1x16xf32>
    %cst_127 = arith.constant 0.001953125 : f32
    %100 = vector.broadcast %cst_127 : f32 to vector<1x16xf32>
    %101 = arith.mulf %97, %100 : vector<1x16xf32>
    %102 = arith.mulf %99, %99 : vector<1x16xf32>
    %103 = arith.subf %101, %102 : vector<1x16xf32>
    %cst_128 = arith.constant 9.99999974E-6 : f32
    %104 = vector.broadcast %cst_128 : f32 to vector<1x16xf32>
    %105 = arith.addf %103, %104 : vector<1x16xf32>
    %106 = math.rsqrt %105 : vector<1x16xf32>
    %107 = arith.mulf %91, %106 : vector<1x16xf32>
    %108 = arith.mulf %99, %107 : vector<1x16xf32>
    %109 = arith.subf %92, %108 : vector<1x16xf32>
    %110 = vector.broadcast %107 : vector<1x16xf32> to vector<512x16xf32>
    %111 = arith.mulf %90, %110 : vector<512x16xf32>
    %112 = vector.broadcast %109 : vector<1x16xf32> to vector<512x16xf32>
    %113 = arith.addf %111, %112 : vector<512x16xf32>
    %114 = arith.addf %113, %1 : vector<512x16xf32>
    %cst_129 = arith.constant 0.000000e+00 : f32
    %115 = vector.broadcast %cst_129 : f32 to vector<512x16xf32>
    %116 = arith.maximumf %114, %115 : vector<512x16xf32>
    %117 = vector.shape_cast %116 : vector<512x16xf32> to vector<2x16x16x16xf32>
    %c0_130 = arith.constant 0 : index
    %c0_131 = arith.constant 0 : index
    %c0_132 = arith.constant 0 : index
    %c0_133 = arith.constant 0 : index
    %118 = vector.load %arg10[%c0_130, %c0_131, %c0_132, %c0_133] : memref<2x16x16x16xf32, #tpu.memory_space<vmem>>, vector<2x16x16x16xf32>
    tpu.vector_store %arg10[%c0_130, %c0_131, %c0_132, %c0_133], %117 {strides = array<i32>} : memref<2x16x16x16xf32, #tpu.memory_space<vmem>>, vector<2x16x16x16xf32>,
    return
  }
}

</mosaic_0001>

<llo_original>
// kernel: bottleneck_pallas.1
$region0: #{bottleneck_pallas.1}
  #allocation0 [shape = 'u32[]', space=smem, size = 0x4, offset = 0x4, fixed_abs, tag = 'smem constant byte address 0x4 - core index']
  #allocation1 [shape = 'u32[144,128]{1,0:T(1,128)}', space=vmem, size = 0x12000, scoped, tag = 'internal scratch']
  #allocation2 [shape = 'f32[2,18,18,4]{3,2,1,0:T(8,128)}', space=vmem, size = 0x6c000, scoped, tag = 'scratch operand']
  #allocation3 [shape = 'f32[2,16,16,36]{3,2,1,0:T(8,128)}', space=vmem, size = 0x40000, scoped, tag = 'scratch operand']
  %s0 = inlined_call_operand.vmem [shape: f32[2,16,16,16], index: 0, kind: input, shape index: {}]
  %s1 = inlined_call_operand.vmem [shape: bf16[16,4], index: 1, kind: input, shape index: {}]
  %s2 = inlined_call_operand.vmem [shape: f32[1,4], index: 2, kind: input, shape index: {}]
  %s3 = inlined_call_operand.vmem [shape: f32[1,4], index: 3, kind: input, shape index: {}]
  %s4 = inlined_call_operand.vmem [shape: bf16[36,4], index: 4, kind: input, shape index: {}]
  %s5 = inlined_call_operand.vmem [shape: f32[1,4], index: 5, kind: input, shape index: {}]
  %s6 = inlined_call_operand.vmem [shape: f32[1,4], index: 6, kind: input, shape index: {}]
  %s7 = inlined_call_operand.vmem [shape: bf16[4,16], index: 7, kind: input, shape index: {}]
  %s8 = inlined_call_operand.vmem [shape: f32[1,16], index: 8, kind: input, shape index: {}]
  %s9 = inlined_call_operand.vmem [shape: f32[1,16], index: 9, kind: input, shape index: {}]
  %s10 = inlined_call_operand.vmem [shape: f32[2,16,16,16], index: 10, kind: output, shape index: {}]
  %s11 = sld [smem:[#allocation0]]
  $region50: #{bottleneck_pallas.1} parent=0
    _
  %s13 = ssub.s32 1, %s11
  %s14 = scalar_select 0, %s13, %s11
  // Predicated region
  $region2: #{bottleneck_pallas.1} parent=0 // pred_check
    _
  $region3: #{bottleneck_pallas.1} parent=0 // pred_check_branch
    %16 = sbr.rel (0) target = $region5
  $region4: #{bottleneck_pallas.1} parent=0 // pred_region
    _
  $region5: #{bottleneck_pallas.1} parent=0 // pred_fallthru
    _
  // Predicated region
  $region6: #{bottleneck_pallas.1} parent=0 // pred_check
    _
  $region7: #{bottleneck_pallas.1} parent=0 // pred_check_branch
    %18 = sbr.rel (0) target = $region9
  $region8: #{bottleneck_pallas.1} parent=0 // pred_region
    _
  $region9: #{bottleneck_pallas.1} parent=0 // pred_fallthru
    _
  // Predicated region
  $region10: #{bottleneck_pallas.1} parent=0 // pred_check
    _
  $region11: #{bottleneck_pallas.1} parent=0 // pred_check_branch
    %20 = sbr.rel (0) target = $region13
  $region12: #{bottleneck_pallas.1} parent=0 // pred_region
    _
  $region13: #{bottleneck_pallas.1} parent=0 // pred_fallthru
    _
  // Predicated region
  $region14: #{bottleneck_pallas.1} parent=0 // pred_check
    _
  $region15: #{bottleneck_pallas.1} parent=0 // pred_check_branch
    %22 = sbr.rel (0) target = $region17
  $region16: #{bottleneck_pallas.1} parent=0 // pred_region
    _
  $region17: #{bottleneck_pallas.1} parent=0 // pred_fallthru
    _
  // Predicated region
  $region18: #{bottleneck_pallas.1} parent=0 // pred_check
    _
  $region19: #{bottleneck_pallas.1} parent=0 // pred_check_branch
    %24 = sbr.rel (0) target = $region21
  $region20: #{bottleneck_pallas.1} parent=0 // pred_region
    _
  $region21: #{bottleneck_pallas.1} parent=0 // pred_fallthru
    _
  // Predicated region
  $region22: #{bottleneck_pallas.1} parent=0 // pred_check
    _
  $region23: #{bottleneck_pallas.1} parent=0 // pred_check_branch
    %26 = sbr.rel (0) target = $region25
  $region24: #{bottleneck_pallas.1} parent=0 // pred_region
    _
  $region25: #{bottleneck_pallas.1} parent=0 // pred_fallthru
    _
  // Predicated region
  $region26: #{bottleneck_pallas.1} parent=0 // pred_check
    _
  $region27: #{bottleneck_pallas.1} parent=0 // pred_check_branch
    %28 = sbr.rel (0) target = $region29
  $region28: #{bottleneck_pallas.1} parent=0 // pred_region
    _
  $region29: #{bottleneck_pallas.1} parent=0 // pred_fallthru
    _
  // Predicated region
  $region30: #{bottleneck_pallas.1} parent=0 // pred_check
    _
  $region31: #{bottleneck_pallas.1} parent=0 // pred_check_branch
    %30 = sbr.rel (0) target = $region33
  $region32: #{bottleneck_pallas.1} parent=0 // pred_region
    _
  $region33: #{bottleneck_pallas.1} parent=0 // pred_fallthru
    _
  // Predicated region
  $region34: #{bottleneck_pallas.1} parent=0 // pred_check
    _
  $region35: #{bottleneck_pallas.1} parent=0 // pred_check_branch
    %32 = sbr.rel (0) target = $region37
  $region36: #{bottleneck_pallas.1} parent=0 // pred_region
    _
  $region37: #{bottleneck_pallas.1} parent=0 // pred_fallthru
    _
  // Predicated region
  $region38: #{bottleneck_pallas.1} parent=0 // pred_check
    _
  $region39: #{bottleneck_pallas.1} parent=0 // pred_check_branch
    %34 = sbr.rel (0) target = $region41
  $region40: #{bottleneck_pallas.1} parent=0 // pred_region
    _
  $region41: #{bottleneck_pallas.1} parent=0 // pred_fallthru
    _
  %v36 = vld [vmem:[%s0] sm:$0xff]
  %v37 = vld [vmem:[%s0 + $0x8] sm:$0xff]
  %v38 = vld [vmem:[%s0 + $0x10] sm:$0xff]
  %v39 = vld [vmem:[%s0 + $0x18] sm:$0xff]
  %v40 = vld [vmem:[%s0 + $0x20] sm:$0xff]
  %v41 = vld [vmem:[%s0 + $0x28] sm:$0xff]
  %v42 = vld [vmem:[%s0 + $0x30] sm:$0xff]
  %v43 = vld [vmem:[%s0 + $0x38] sm:$0xff]
  %v44 = vld [vmem:[%s0 + $0x40] sm:$0xff]
  %v45 = vld [vmem:[%s0 + $0x48] sm:$0xff]
  %v46 = vld [vmem:[%s0 + $0x50] sm:$0xff]
  %v47 = vld [vmem:[%s0 + $0x58] sm:$0xff]
  %v48 = vld [vmem:[%s0 + $0x60] sm:$0xff]
  %v49 = vld [vmem:[%s0 + $0x68] sm:$0xff]
  %v50 = vld [vmem:[%s0 + $0x70] sm:$0xff]
  %v51 = vld [vmem:[%s0 + $0x78] sm:$0xff]
  %v52 = vld [vmem:[%s0 + $0x80] sm:$0xff]
  %v53 = vld [vmem:[%s0 + $0x88] sm:$0xff]
  %v54 = vld [vmem:[%s0 + $0x90] sm:$0xff]
  %v55 = vld [vmem:[%s0 + $0x98] sm:$0xff]
  %v56 = vld [vmem:[%s0 + $0xa0] sm:$0xff]
  %v57 = vld [vmem:[%s0 + $0xa8] sm:$0xff]
  %v58 = vld [vmem:[%s0 + $0xb0] sm:$0xff]
  %v59 = vld [vmem:[%s0 + $0xb8] sm:$0xff]
  %v60 = vld [vmem:[%s0 + $0xc0] sm:$0xff]
  %v61 = vld [vmem:[%s0 + $0xc8] sm:$0xff]
  %v62 = vld [vmem:[%s0 + $0xd0] sm:$0xff]
  %v63 = vld [vmem:[%s0 + $0xd8] sm:$0xff]
  %v64 = vld [vmem:[%s0 + $0xe0] sm:$0xff]
  %v65 = vld [vmem:[%s0 + $0xe8] sm:$0xff]
  %v66 = vld [vmem:[%s0 + $0xf0] sm:$0xff]
  %v67 = vld [vmem:[%s0 + $0xf8] sm:$0xff]
  %v68 = vld [vmem:[%s0 + $0x100] sm:$0xff]
  %v69 = vld [vmem:[%s0 + $0x108] sm:$0xff]
  %v70 = vld [vmem:[%s0 + $0x110] sm:$0xff]
  %v71 = vld [vmem:[%s0 + $0x118] sm:$0xff]
  %v72 = vld [vmem:[%s0 + $0x120] sm:$0xff]
  %v73 = vld [vmem:[%s0 + $0x128] sm:$0xff]
  %v74 = vld [vmem:[%s0 + $0x130] sm:$0xff]
  %v75 = vld [vmem:[%s0 + $0x138] sm:$0xff]
  %v76 = vld [vmem:[%s0 + $0x140] sm:$0xff]
  %v77 = vld [vmem:[%s0 + $0x148] sm:$0xff]
  %v78 = vld [vmem:[%s0 + $0x150] sm:$0xff]
  %v79 = vld [vmem:[%s0 + $0x158] sm:$0xff]
  %v80 = vld [vmem:[%s0 + $0x160] sm:$0xff]
  %v81 = vld [vmem:[%s0 + $0x168] sm:$0xff]
  %v82 = vld [vmem:[%s0 + $0x170] sm:$0xff]
  %v83 = vld [vmem:[%s0 + $0x178] sm:$0xff]
  %v84 = vld [vmem:[%s0 + $0x180] sm:$0xff]
  %v85 = vld [vmem:[%s0 + $0x188] sm:$0xff]
  %v86 = vld [vmem:[%s0 + $0x190] sm:$0xff]
  %v87 = vld [vmem:[%s0 + $0x198] sm:$0xff]
  %v88 = vld [vmem:[%s0 + $0x1a0] sm:$0xff]
  %v89 = vld [vmem:[%s0 + $0x1a8] sm:$0xff]
  %v90 = vld [vmem:[%s0 + $0x1b0] sm:$0xff]
  %v91 = vld [vmem:[%s0 + $0x1b8] sm:$0xff]
  %v92 = vld [vmem:[%s0 + $0x1c0] sm:$0xff]
  %v93 = vld [vmem:[%s0 + $0x1c8] sm:$0xff]
  %v94 = vld [vmem:[%s0 + $0x1d0] sm:$0xff]
  %v95 = vld [vmem:[%s0 + $0x1d8] sm:$0xff]
  %v96 = vld [vmem:[%s0 + $0x1e0] sm:$0xff]
  %v97 = vld [vmem:[%s0 + $0x1e8] sm:$0xff]
  %v98 = vld [vmem:[%s0 + $0x1f0] sm:$0xff]
  %v99 = vld [vmem:[%s0 + $0x1f8] sm:$0xff]
  %v100 = vpack.c.bf16 %v37, %v36
  %v101 = vpack.c.bf16 %v39, %v38
  %v102 = vpack.c.bf16 %v41, %v40
  %v103 = vpack.c.bf16 %v43, %v42
  %v104 = vpack.c.bf16 %v45, %v44
  %v105 = vpack.c.bf16 %v47, %v46
  %v106 = vpack.c.bf16 %v49, %v48
  %v107 = vpack.c.bf16 %v51, %v50
  %v108 = vpack.c.bf16 %v53, %v52
  %v109 = vpack.c.bf16 %v55, %v54
  %v110 = vpack.c.bf16 %v57, %v56
  %v111 = vpack.c.bf16 %v59, %v58
  %v112 = vpack.c.bf16 %v61, %v60
  %v113 = vpack.c.bf16 %v63, %v62
  %v114 = vpack.c.bf16 %v65, %v64
  %v115 = vpack.c.bf16 %v67, %v66
  %v116 = vpack.c.bf16 %v69, %v68
  %v117 = vpack.c.bf16 %v71, %v70
  %v118 = vpack.c.bf16 %v73, %v72
  %v119 = vpack.c.bf16 %v75, %v74
  %v120 = vpack.c.bf16 %v77, %v76
  %v121 = vpack.c.bf16 %v79, %v78
  %v122 = vpack.c.bf16 %v81, %v80
  %v123 = vpack.c.bf16 %v83, %v82
  %v124 = vpack.c.bf16 %v85, %v84
  %v125 = vpack.c.bf16 %v87, %v86
  %v126 = vpack.c.bf16 %v89, %v88
  %v127 = vpack.c.bf16 %v91, %v90
  %v128 = vpack.c.bf16 %v93, %v92
  %v129 = vpack.c.bf16 %v95, %v94
  %v130 = vpack.c.bf16 %v97, %v96
  %v131 = vpack.c.bf16 %v99, %v98
  %v132 = vld [vmem:[%s1] sm:$0xf]
  %v133 = vld [vmem:[%s1 + $0x4] sm:$0xf]
  %v136 = vunpack.c.l.b16 %v132
  %v137 = vunpack.c.l.b16 %v133
  %v138 = vpack.c.b16 %v137, %v136
  %vm140 = vcmask 130048
  %v142 = vsel %vm140, %v100, 0
  %v145 = vsel %vm140, %v101, 0
  %v148 = vsel %vm140, %v102, 0
  %v151 = vsel %vm140, %v103, 0
  %v154 = vsel %vm140, %v104, 0
  %v157 = vsel %vm140, %v105, 0
  %v160 = vsel %vm140, %v106, 0
  %v163 = vsel %vm140, %v107, 0
  %v166 = vsel %vm140, %v108, 0
  %v169 = vsel %vm140, %v109, 0
  %v172 = vsel %vm140, %v110, 0
  %v175 = vsel %vm140, %v111, 0
  %v178 = vsel %vm140, %v112, 0
  %v181 = vsel %vm140, %v113, 0
  %v184 = vsel %vm140, %v114, 0
  %v187 = vsel %vm140, %v115, 0
  %v190 = vsel %vm140, %v116, 0
  %v193 = vsel %vm140, %v117, 0
  %v196 = vsel %vm140, %v118, 0
  %v199 = vsel %vm140, %v119, 0
  %v202 = vsel %vm140, %v120, 0
  %v205 = vsel %vm140, %v121, 0
  %v208 = vsel %vm140, %v122, 0
  %v211 = vsel %vm140, %v123, 0
  %v214 = vsel %vm140, %v124, 0
  %v217 = vsel %vm140, %v125, 0
  %v220 = vsel %vm140, %v126, 0
  %v223 = vsel %vm140, %v127, 0
  %v226 = vsel %vm140, %v128, 0
  %v229 = vsel %vm140, %v129, 0
  %v232 = vsel %vm140, %v130, 0
  %v235 = vsel %vm140, %v131, 0
  %237 = vmatprep.subr.bf16.mxu0 0
  %238 = vmatpush1.bf16.msra.mxu0 0
  %239 = vmatprep.subr.bf16.mxu0 0
  %240 = vmatpush1.bf16.msra.mxu0 0
  %241 = vmatprep.subr.bf16.mxu0 0
  %242 = vmatpush1.bf16.msra.mxu0 0
  %243 = vmatprep.subr.bf16.mxu0 0
  %244 = vmatpush1.bf16.msra.mxu0 0
  %245 = vmatprep.subr.bf16.mxu0 0
  %246 = vmatpush1.bf16.msra.mxu0 0
  %247 = vmatprep.subr.bf16.mxu0 0
  %248 = vmatpush1.bf16.msra.mxu0 0
  %249 = vmatprep.subr.bf16.mxu0 0
  %250 = vmatpush1.bf16.msra.mxu0 0
  %251 = vmatprep.subr.bf16.mxu0 0
  %252 = vmatpush1.bf16.msra.mxu0 %v138
  %253 = vmatprep.subr.bf16.mxu0 0
  %254 = vmatpush2.bf16.msra.mxu0 0
  %255 = vmatprep.subr.bf16.mxu0 0
  %256 = vmatpush2.bf16.msra.mxu0 0
  %257 = vmatprep.subr.bf16.mxu0 0
  %258 = vmatpush2.bf16.msra.mxu0 0
  %259 = vmatprep.subr.bf16.mxu0 0
  %260 = vmatpush2.bf16.msra.mxu0 0
  %261 = vmatprep.subr.bf16.mxu0 0
  %262 = vmatpush2.bf16.msra.mxu0 0
  %263 = vmatprep.subr.bf16.mxu0 0
  %264 = vmatpush2.bf16.msra.mxu0 0
  %265 = vmatprep.subr.bf16.mxu0 0
  %266 = vmatpush2.bf16.msra.mxu0 0
  %267 = vmatprep.subr.bf16.mxu0 0
  %268 = vmatpush2.bf16.msra.mxu0 0
  %269 = vmatprep.mubr.bf16.mxu0 0
  %270 = vmatmul.mubr.bf16.gmra.mxu0 %v142
  %v271 = vpop.f32.mrf.mxu0
  %v272 = vadd.f32 0.0, %v271
  %v273 = vpop.f32.mrf.mxu0
  %v274 = vpop.f32.mrf.mxu0
  %v275 = vadd.f32 0.0, %v274
  %v276 = vpop.f32.mrf.mxu0
  %277 = vmatprep.mubr.bf16.mxu0 0
  %278 = vmatmul.mubr.bf16.gmra.mxu0 %v145
  %v279 = vpop.f32.mrf.mxu0
  %v280 = vadd.f32 0.0, %v279
  %v281 = vpop.f32.mrf.mxu0
  %v282 = vpop.f32.mrf.mxu0
  %v283 = vadd.f32 0.0, %v282
  %v284 = vpop.f32.mrf.mxu0
  %285 = vmatprep.mubr.bf16.mxu0 0
  %286 = vmatmul.mubr.bf16.gmra.mxu0 %v148
  %v287 = vpop.f32.mrf.mxu0
  %v288 = vadd.f32 0.0, %v287
  %v289 = vpop.f32.mrf.mxu0
  %v290 = vpop.f32.mrf.mxu0
  %v291 = vadd.f32 0.0, %v290
  %v292 = vpop.f32.mrf.mxu0
  %293 = vmatprep.mubr.bf16.mxu0 0
  %294 = vmatmul.mubr.bf16.gmra.mxu0 %v151
  %v295 = vpop.f32.mrf.mxu0
  %v296 = vadd.f32 0.0, %v295
  %v297 = vpop.f32.mrf.mxu0
  %v298 = vpop.f32.mrf.mxu0
  %v299 = vadd.f32 0.0, %v298
  %v300 = vpop.f32.mrf.mxu0
  %301 = vmatprep.mubr.bf16.mxu0 0
  %302 = vmatmul.mubr.bf16.gmra.mxu0 %v154
  %v303 = vpop.f32.mrf.mxu0
  %v304 = vadd.f32 0.0, %v303
  %v305 = vpop.f32.mrf.mxu0
  %v306 = vpop.f32.mrf.mxu0
  %v307 = vadd.f32 0.0, %v306
  %v308 = vpop.f32.mrf.mxu0
  %309 = vmatprep.mubr.bf16.mxu0 0
  %310 = vmatmul.mubr.bf16.gmra.mxu0 %v157
  %v311 = vpop.f32.mrf.mxu0
  %v312 = vadd.f32 0.0, %v311
  %v313 = vpop.f32.mrf.mxu0
  %v314 = vpop.f32.mrf.mxu0
  %v315 = vadd.f32 0.0, %v314
  %v316 = vpop.f32.mrf.mxu0
  %317 = vmatprep.mubr.bf16.mxu0 0
  %318 = vmatmul.mubr.bf16.gmra.mxu0 %v160
  %v319 = vpop.f32.mrf.mxu0
  %v320 = vadd.f32 0.0, %v319
  %v321 = vpop.f32.mrf.mxu0
  %v322 = vpop.f32.mrf.mxu0
  %v323 = vadd.f32 0.0, %v322
  %v324 = vpop.f32.mrf.mxu0
  %325 = vmatprep.mubr.bf16.mxu0 0
  %326 = vmatmul.mubr.bf16.gmra.mxu0 %v163
  %v327 = vpop.f32.mrf.mxu0
  %v328 = vadd.f32 0.0, %v327
  %v329 = vpop.f32.mrf.mxu0
  %v330 = vpop.f32.mrf.mxu0
  %v331 = vadd.f32 0.0, %v330
  %v332 = vpop.f32.mrf.mxu0
  %333 = vmatprep.mubr.bf16.mxu0 0
  %334 = vmatmul.mubr.bf16.gmra.mxu0 %v166
  %v335 = vpop.f32.mrf.mxu0
  %v336 = vadd.f32 0.0, %v335
  %v337 = vpop.f32.mrf.mxu0
  %v338 = vpop.f32.mrf.mxu0
  %v339 = vadd.f32 0.0, %v338
  %v340 = vpop.f32.mrf.mxu0
  %341 = vmatprep.mubr.bf16.mxu0 0
  %342 = vmatmul.mubr.bf16.gmra.mxu0 %v169
  %v343 = vpop.f32.mrf.mxu0
  %v344 = vadd.f32 0.0, %v343
  %v345 = vpop.f32.mrf.mxu0
  %v346 = vpop.f32.mrf.mxu0
  %v347 = vadd.f32 0.0, %v346
  %v348 = vpop.f32.mrf.mxu0
  %349 = vmatprep.mubr.bf16.mxu0 0
  %350 = vmatmul.mubr.bf16.gmra.mxu0 %v172
  %v351 = vpop.f32.mrf.mxu0
  %v352 = vadd.f32 0.0, %v351
  %v353 = vpop.f32.mrf.mxu0
  %v354 = vpop.f32.mrf.mxu0
  %v355 = vadd.f32 0.0, %v354
  %v356 = vpop.f32.mrf.mxu0
  %357 = vmatprep.mubr.bf16.mxu0 0
  %358 = vmatmul.mubr.bf16.gmra.mxu0 %v175
  %v359 = vpop.f32.mrf.mxu0
  %v360 = vadd.f32 0.0, %v359
  %v361 = vpop.f32.mrf.mxu0
  %v362 = vpop.f32.mrf.mxu0
  %v363 = vadd.f32 0.0, %v362
  %v364 = vpop.f32.mrf.mxu0
  %365 = vmatprep.mubr.bf16.mxu0 0
  %366 = vmatmul.mubr.bf16.gmra.mxu0 %v178
  %v367 = vpop.f32.mrf.mxu0
  %v368 = vadd.f32 0.0, %v367
  %v369 = vpop.f32.mrf.mxu0
  %v370 = vpop.f32.mrf.mxu0
  %v371 = vadd.f32 0.0, %v370
  %v372 = vpop.f32.mrf.mxu0
  %373 = vmatprep.mubr.bf16.mxu0 0
  %374 = vmatmul.mubr.bf16.gmra.mxu0 %v181
  %v375 = vpop.f32.mrf.mxu0
  %v376 = vadd.f32 0.0, %v375
  %v377 = vpop.f32.mrf.mxu0
  %v378 = vpop.f32.mrf.mxu0
  %v379 = vadd.f32 0.0, %v378
  %v380 = vpop.f32.mrf.mxu0
  %381 = vmatprep.mubr.bf16.mxu0 0
  %382 = vmatmul.mubr.bf16.gmra.mxu0 %v184
  %v383 = vpop.f32.mrf.mxu0
  %v384 = vadd.f32 0.0, %v383
  %v385 = vpop.f32.mrf.mxu0
  %v386 = vpop.f32.mrf.mxu0
  %v387 = vadd.f32 0.0, %v386
  %v388 = vpop.f32.mrf.mxu0
  %389 = vmatprep.mubr.bf16.mxu0 0
  %390 = vmatmul.mubr.bf16.gmra.mxu0 %v187
  %v391 = vpop.f32.mrf.mxu0
  %v392 = vadd.f32 0.0, %v391
  %v393 = vpop.f32.mrf.mxu0
  %v394 = vpop.f32.mrf.mxu0
  %v395 = vadd.f32 0.0, %v394
  %v396 = vpop.f32.mrf.mxu0
  %397 = vmatprep.mubr.bf16.mxu0 0
  %398 = vmatmul.mubr.bf16.gmra.mxu0 %v190
  %v399 = vpop.f32.mrf.mxu0
  %v400 = vadd.f32 0.0, %v399
  %v401 = vpop.f32.mrf.mxu0
  %v402 = vpop.f32.mrf.mxu0
  %v403 = vadd.f32 0.0, %v402
  %v404 = vpop.f32.mrf.mxu0
  %405 = vmatprep.mubr.bf16.mxu0 0
  %406 = vmatmul.mubr.bf16.gmra.mxu0 %v193
  %v407 = vpop.f32.mrf.mxu0
  %v408 = vadd.f32 0.0, %v407
  %v409 = vpop.f32.mrf.mxu0
  %v410 = vpop.f32.mrf.mxu0
  %v411 = vadd.f32 0.0, %v410
  %v412 = vpop.f32.mrf.mxu0
  %413 = vmatprep.mubr.bf16.mxu0 0
  %414 = vmatmul.mubr.bf16.gmra.mxu0 %v196
  %v415 = vpop.f32.mrf.mxu0
  %v416 = vadd.f32 0.0, %v415
  %v417 = vpop.f32.mrf.mxu0
  %v418 = vpop.f32.mrf.mxu0
  %v419 = vadd.f32 0.0, %v418
  %v420 = vpop.f32.mrf.mxu0
  %421 = vmatprep.mubr.bf16.mxu0 0
  %422 = vmatmul.mubr.bf16.gmra.mxu0 %v199
  %v423 = vpop.f32.mrf.mxu0
  %v424 = vadd.f32 0.0, %v423
  %v425 = vpop.f32.mrf.mxu0
  %v426 = vpop.f32.mrf.mxu0
  %v427 = vadd.f32 0.0, %v426
  %v428 = vpop.f32.mrf.mxu0
  %429 = vmatprep.mubr.bf16.mxu0 0
  %430 = vmatmul.mubr.bf16.gmra.mxu0 %v202
  %v431 = vpop.f32.mrf.mxu0
  %v432 = vadd.f32 0.0, %v431
  %v433 = vpop.f32.mrf.mxu0
  %v434 = vpop.f32.mrf.mxu0
  %v435 = vadd.f32 0.0, %v434
  %v436 = vpop.f32.mrf.mxu0
  %437 = vmatprep.mubr.bf16.mxu0 0
  %438 = vmatmul.mubr.bf16.gmra.mxu0 %v205
  %v439 = vpop.f32.mrf.mxu0
  %v440 = vadd.f32 0.0, %v439
  %v441 = vpop.f32.mrf.mxu0
  %v442 = vpop.f32.mrf.mxu0
  %v443 = vadd.f32 0.0, %v442
  %v444 = vpop.f32.mrf.mxu0
  %445 = vmatprep.mubr.bf16.mxu0 0
  %446 = vmatmul.mubr.bf16.gmra.mxu0 %v208
  %v447 = vpop.f32.mrf.mxu0
  %v448 = vadd.f32 0.0, %v447
  %v449 = vpop.f32.mrf.mxu0
  %v450 = vpop.f32.mrf.mxu0
  %v451 = vadd.f32 0.0, %v450
  %v452 = vpop.f32.mrf.mxu0
  %453 = vmatprep.mubr.bf16.mxu0 0
  %454 = vmatmul.mubr.bf16.gmra.mxu0 %v211
  %v455 = vpop.f32.mrf.mxu0
  %v456 = vadd.f32 0.0, %v455
  %v457 = vpop.f32.mrf.mxu0
  %v458 = vpop.f32.mrf.mxu0
  %v459 = vadd.f32 0.0, %v458
  %v460 = vpop.f32.mrf.mxu0
  %461 = vmatprep.mubr.bf16.mxu0 0
  %462 = vmatmul.mubr.bf16.gmra.mxu0 %v214
  %v463 = vpop.f32.mrf.mxu0
  %v464 = vadd.f32 0.0, %v463
  %v465 = vpop.f32.mrf.mxu0
  %v466 = vpop.f32.mrf.mxu0
  %v467 = vadd.f32 0.0, %v466
  %v468 = vpop.f32.mrf.mxu0
  %469 = vmatprep.mubr.bf16.mxu0 0
  %470 = vmatmul.mubr.bf16.gmra.mxu0 %v217
  %v471 = vpop.f32.mrf.mxu0
  %v472 = vadd.f32 0.0, %v471
  %v473 = vpop.f32.mrf.mxu0
  %v474 = vpop.f32.mrf.mxu0
  %v475 = vadd.f32 0.0, %v474
  %v476 = vpop.f32.mrf.mxu0
  %477 = vmatprep.mubr.bf16.mxu0 0
  %478 = vmatmul.mubr.bf16.gmra.mxu0 %v220
  %v479 = vpop.f32.mrf.mxu0
  %v480 = vadd.f32 0.0, %v479
  %v481 = vpop.f32.mrf.mxu0
  %v482 = vpop.f32.mrf.mxu0
  %v483 = vadd.f32 0.0, %v482
  %v484 = vpop.f32.mrf.mxu0
  %485 = vmatprep.mubr.bf16.mxu0 0
  %486 = vmatmul.mubr.bf16.gmra.mxu0 %v223
  %v487 = vpop.f32.mrf.mxu0
  %v488 = vadd.f32 0.0, %v487
  %v489 = vpop.f32.mrf.mxu0
  %v490 = vpop.f32.mrf.mxu0
  %v491 = vadd.f32 0.0, %v490
  %v492 = vpop.f32.mrf.mxu0
  %493 = vmatprep.mubr.bf16.mxu0 0
  %494 = vmatmul.mubr.bf16.gmra.mxu0 %v226
  %v495 = vpop.f32.mrf.mxu0
  %v496 = vadd.f32 0.0, %v495
  %v497 = vpop.f32.mrf.mxu0
  %v498 = vpop.f32.mrf.mxu0
  %v499 = vadd.f32 0.0, %v498
  %v500 = vpop.f32.mrf.mxu0
  %501 = vmatprep.mubr.bf16.mxu0 0
  %502 = vmatmul.mubr.bf16.gmra.mxu0 %v229
  %v503 = vpop.f32.mrf.mxu0
  %v504 = vadd.f32 0.0, %v503
  %v505 = vpop.f32.mrf.mxu0
  %v506 = vpop.f32.mrf.mxu0
  %v507 = vadd.f32 0.0, %v506
  %v508 = vpop.f32.mrf.mxu0
  %509 = vmatprep.mubr.bf16.mxu0 0
  %510 = vmatmul.mubr.bf16.gmra.mxu0 %v232
  %v511 = vpop.f32.mrf.mxu0
  %v512 = vadd.f32 0.0, %v511
  %v513 = vpop.f32.mrf.mxu0
  %v514 = vpop.f32.mrf.mxu0
  %v515 = vadd.f32 0.0, %v514
  %v516 = vpop.f32.mrf.mxu0
  %517 = vmatprep.mubr.bf16.mxu0 0
  %518 = vmatmul.mubr.bf16.gmra.mxu0 %v235
  %v519 = vpop.f32.mrf.mxu0
  %v520 = vadd.f32 0.0, %v519
  %v521 = vpop.f32.mrf.mxu0
  %v522 = vpop.f32.mrf.mxu0
  %v523 = vadd.f32 0.0, %v522
  %v524 = vpop.f32.mrf.mxu0
  %525 = vdwg.mxu0
  %v526 = vld [vmem:[%s2] sm:$0x1]
  %v527 = vld [vmem:[%s3] sm:$0x1]
  %vm528 = vcmask 31744
  %v529 = vsel %vm528, %v272, 0.0
  %v530 = vsel %vm528, %v275, 0.0
  %v531 = vadd.f32 %v529, %v530
  %v532 = vsel %vm528, %v280, 0.0
  %v533 = vadd.f32 %v531, %v532
  %v534 = vsel %vm528, %v283, 0.0
  %v535 = vadd.f32 %v533, %v534
  %v536 = vsel %vm528, %v288, 0.0
  %v537 = vadd.f32 %v535, %v536
  %v538 = vsel %vm528, %v291, 0.0
  %v539 = vadd.f32 %v537, %v538
  %v540 = vsel %vm528, %v296, 0.0
  %v541 = vadd.f32 %v539, %v540
  %v542 = vsel %vm528, %v299, 0.0
  %v543 = vadd.f32 %v541, %v542
  %v544 = vsel %vm528, %v304, 0.0
  %v545 = vadd.f32 %v543, %v544
  %v546 = vsel %vm528, %v307, 0.0
  %v547 = vadd.f32 %v545, %v546
  %v548 = vsel %vm528, %v312, 0.0
  %v549 = vadd.f32 %v547, %v548
  %v550 = vsel %vm528, %v315, 0.0
  %v551 = vadd.f32 %v549, %v550
  %v552 = vsel %vm528, %v320, 0.0
  %v553 = vadd.f32 %v551, %v552
  %v554 = vsel %vm528, %v323, 0.0
  %v555 = vadd.f32 %v553, %v554
  %v556 = vsel %vm528, %v328, 0.0
  %v557 = vadd.f32 %v555, %v556
  %v558 = vsel %vm528, %v331, 0.0
  %v559 = vadd.f32 %v557, %v558
  %v560 = vsel %vm528, %v336, 0.0
  %v561 = vadd.f32 %v559, %v560
  %v562 = vsel %vm528, %v339, 0.0
  %v563 = vadd.f32 %v561, %v562
  %v564 = vsel %vm528, %v344, 0.0
  %v565 = vadd.f32 %v563, %v564
  %v566 = vsel %vm528, %v347, 0.0
  %v567 = vadd.f32 %v565, %v566
  %v568 = vsel %vm528, %v352, 0.0
  %v569 = vadd.f32 %v567, %v568
  %v570 = vsel %vm528, %v355, 0.0
  %v571 = vadd.f32 %v569, %v570
  %v572 = vsel %vm528, %v360, 0.0
  %v573 = vadd.f32 %v571, %v572
  %v574 = vsel %vm528, %v363, 0.0
  %v575 = vadd.f32 %v573, %v574
  %v576 = vsel %vm528, %v368, 0.0
  %v577 = vadd.f32 %v575, %v576
  %v578 = vsel %vm528, %v371, 0.0
  %v579 = vadd.f32 %v577, %v578
  %v580 = vsel %vm528, %v376, 0.0
  %v581 = vadd.f32 %v579, %v580
  %v582 = vsel %vm528, %v379, 0.0
  %v583 = vadd.f32 %v581, %v582
  %v584 = vsel %vm528, %v384, 0.0
  %v585 = vadd.f32 %v583, %v584
  %v586 = vsel %vm528, %v387, 0.0
  %v587 = vadd.f32 %v585, %v586
  %v588 = vsel %vm528, %v392, 0.0
  %v589 = vadd.f32 %v587, %v588
  %v590 = vsel %vm528, %v395, 0.0
  %v591 = vadd.f32 %v589, %v590
  %v592 = vsel %vm528, %v400, 0.0
  %v593 = vadd.f32 %v591, %v592
  %v594 = vsel %vm528, %v403, 0.0
  %v595 = vadd.f32 %v593, %v594
  %v596 = vsel %vm528, %v408, 0.0
  %v597 = vadd.f32 %v595, %v596
  %v598 = vsel %vm528, %v411, 0.0
  %v599 = vadd.f32 %v597, %v598
  %v600 = vsel %vm528, %v416, 0.0
  %v601 = vadd.f32 %v599, %v600
  %v602 = vsel %vm528, %v419, 0.0
  %v603 = vadd.f32 %v601, %v602
  %v604 = vsel %vm528, %v424, 0.0
  %v605 = vadd.f32 %v603, %v604
  %v606 = vsel %vm528, %v427, 0.0
  %v607 = vadd.f32 %v605, %v606
  %v608 = vsel %vm528, %v432, 0.0
  %v609 = vadd.f32 %v607, %v608
  %v610 = vsel %vm528, %v435, 0.0
  %v611 = vadd.f32 %v609, %v610
  %v612 = vsel %vm528, %v440, 0.0
  %v613 = vadd.f32 %v611, %v612
  %v614 = vsel %vm528, %v443, 0.0
  %v615 = vadd.f32 %v613, %v614
  %v616 = vsel %vm528, %v448, 0.0
  %v617 = vadd.f32 %v615, %v616
  %v618 = vsel %vm528, %v451, 0.0
  %v619 = vadd.f32 %v617, %v618
  %v620 = vsel %vm528, %v456, 0.0
  %v621 = vadd.f32 %v619, %v620
  %v622 = vsel %vm528, %v459, 0.0
  %v623 = vadd.f32 %v621, %v622
  %v624 = vsel %vm528, %v464, 0.0
  %v625 = vadd.f32 %v623, %v624
  %v626 = vsel %vm528, %v467, 0.0
  %v627 = vadd.f32 %v625, %v626
  %v628 = vsel %vm528, %v472, 0.0
  %v629 = vadd.f32 %v627, %v628
  %v630 = vsel %vm528, %v475, 0.0
  %v631 = vadd.f32 %v629, %v630
  %v632 = vsel %vm528, %v480, 0.0
  %v633 = vadd.f32 %v631, %v632
  %v634 = vsel %vm528, %v483, 0.0
  %v635 = vadd.f32 %v633, %v634
  %v636 = vsel %vm528, %v488, 0.0
  %v637 = vadd.f32 %v635, %v636
  %v638 = vsel %vm528, %v491, 0.0
  %v639 = vadd.f32 %v637, %v638
  %v640 = vsel %vm528, %v496, 0.0
  %v641 = vadd.f32 %v639, %v640
  %v642 = vsel %vm528, %v499, 0.0
  %v643 = vadd.f32 %v641, %v642
  %v644 = vsel %vm528, %v504, 0.0
  %v645 = vadd.f32 %v643, %v644
  %v646 = vsel %vm528, %v507, 0.0
  %v647 = vadd.f32 %v645, %v646
  %v648 = vsel %vm528, %v512, 0.0
  %v649 = vadd.f32 %v647, %v648
  %v650 = vsel %vm528, %v515, 0.0
  %v651 = vadd.f32 %v649, %v650
  %v652 = vsel %vm528, %v520, 0.0
  %v653 = vadd.f32 %v651, %v652
  %v654 = vsel %vm528, %v523, 0.0
  %v655 = vadd.f32 %v653, %v654
  %v656 = vrot.slane %v655, 4
  %v657 = vadd.f32 %v655, %v656
  %v658 = vrot.slane %v657, 2
  %v659 = vadd.f32 %v657, %v658
  %v660 = vrot.slane %v659, 1
  %v661 = vadd.f32 %v659, %v660
  %v662 = vmul.f32 %v272, %v272
  %v663 = vmul.f32 %v275, %v275
  %v664 = vmul.f32 %v280, %v280
  %v665 = vmul.f32 %v283, %v283
  %v666 = vmul.f32 %v288, %v288
  %v667 = vmul.f32 %v291, %v291
  %v668 = vmul.f32 %v296, %v296
  %v669 = vmul.f32 %v299, %v299
  %v670 = vmul.f32 %v304, %v304
  %v671 = vmul.f32 %v307, %v307
  %v672 = vmul.f32 %v312, %v312
  %v673 = vmul.f32 %v315, %v315
  %v674 = vmul.f32 %v320, %v320
  %v675 = vmul.f32 %v323, %v323
  %v676 = vmul.f32 %v328, %v328
  %v677 = vmul.f32 %v331, %v331
  %v678 = vmul.f32 %v336, %v336
  %v679 = vmul.f32 %v339, %v339
  %v680 = vmul.f32 %v344, %v344
  %v681 = vmul.f32 %v347, %v347
  %v682 = vmul.f32 %v352, %v352
  %v683 = vmul.f32 %v355, %v355
  %v684 = vmul.f32 %v360, %v360
  %v685 = vmul.f32 %v363, %v363
  %v686 = vmul.f32 %v368, %v368
  %v687 = vmul.f32 %v371, %v371
  %v688 = vmul.f32 %v376, %v376
  %v689 = vmul.f32 %v379, %v379
  %v690 = vmul.f32 %v384, %v384
  %v691 = vmul.f32 %v387, %v387
  %v692 = vmul.f32 %v392, %v392
  %v693 = vmul.f32 %v395, %v395
  %v694 = vmul.f32 %v400, %v400
  %v695 = vmul.f32 %v403, %v403
  %v696 = vmul.f32 %v408, %v408
  %v697 = vmul.f32 %v411, %v411
  %v698 = vmul.f32 %v416, %v416
  %v699 = vmul.f32 %v419, %v419
  %v700 = vmul.f32 %v424, %v424
  %v701 = vmul.f32 %v427, %v427
  %v702 = vmul.f32 %v432, %v432
  %v703 = vmul.f32 %v435, %v435
  %v704 = vmul.f32 %v440, %v440
  %v705 = vmul.f32 %v443, %v443
  %v706 = vmul.f32 %v448, %v448
  %v707 = vmul.f32 %v451, %v451
  %v708 = vmul.f32 %v456, %v456
  %v709 = vmul.f32 %v459, %v459
  %v710 = vmul.f32 %v464, %v464
  %v711 = vmul.f32 %v467, %v467
  %v712 = vmul.f32 %v472, %v472
  %v713 = vmul.f32 %v475, %v475
  %v714 = vmul.f32 %v480, %v480
  %v715 = vmul.f32 %v483, %v483
  %v716 = vmul.f32 %v488, %v488
  %v717 = vmul.f32 %v491, %v491
  %v718 = vmul.f32 %v496, %v496
  %v719 = vmul.f32 %v499, %v499
  %v720 = vmul.f32 %v504, %v504
  %v721 = vmul.f32 %v507, %v507
  %v722 = vmul.f32 %v512, %v512
  %v723 = vmul.f32 %v515, %v515
  %v724 = vmul.f32 %v520, %v520
  %v725 = vmul.f32 %v523, %v523
  %v726 = vsel %vm528, %v662, 0.0
  %v727 = vsel %vm528, %v663, 0.0
  %v728 = vadd.f32 %v726, %v727
  %v729 = vsel %vm528, %v664, 0.0
  %v730 = vadd.f32 %v728, %v729
  %v731 = vsel %vm528, %v665, 0.0
  %v732 = vadd.f32 %v730, %v731
  %v733 = vsel %vm528, %v666, 0.0
  %v734 = vadd.f32 %v732, %v733
  %v735 = vsel %vm528, %v667, 0.0
  %v736 = vadd.f32 %v734, %v735
  %v737 = vsel %vm528, %v668, 0.0
  %v738 = vadd.f32 %v736, %v737
  %v739 = vsel %vm528, %v669, 0.0
  %v740 = vadd.f32 %v738, %v739
  %v741 = vsel %vm528, %v670, 0.0
  %v742 = vadd.f32 %v740, %v741
  %v743 = vsel %vm528, %v671, 0.0
  %v744 = vadd.f32 %v742, %v743
  %v745 = vsel %vm528, %v672, 0.0
  %v746 = vadd.f32 %v744, %v745
  %v747 = vsel %vm528, %v673, 0.0
  %v748 = vadd.f32 %v746, %v747
  %v749 = vsel %vm528, %v674, 0.0
  %v750 = vadd.f32 %v748, %v749
  %v751 = vsel %vm528, %v675, 0.0
  %v752 = vadd.f32 %v750, %v751
  %v753 = vsel %vm528, %v676, 0.0
  %v754 = vadd.f32 %v752, %v753
  %v755 = vsel %vm528, %v677, 0.0
  %v756 = vadd.f32 %v754, %v755
  %v757 = vsel %vm528, %v678, 0.0
  %v758 = vadd.f32 %v756, %v757
  %v759 = vsel %vm528, %v679, 0.0
  %v760 = vadd.f32 %v758, %v759
  %v761 = vsel %vm528, %v680, 0.0
  %v762 = vadd.f32 %v760, %v761
  %v763 = vsel %vm528, %v681, 0.0
  %v764 = vadd.f32 %v762, %v763
  %v765 = vsel %vm528, %v682, 0.0
  %v766 = vadd.f32 %v764, %v765
  %v767 = vsel %vm528, %v683, 0.0
  %v768 = vadd.f32 %v766, %v767
  %v769 = vsel %vm528, %v684, 0.0
  %v770 = vadd.f32 %v768, %v769
  %v771 = vsel %vm528, %v685, 0.0
  %v772 = vadd.f32 %v770, %v771
  %v773 = vsel %vm528, %v686, 0.0
  %v774 = vadd.f32 %v772, %v773
  %v775 = vsel %vm528, %v687, 0.0
  %v776 = vadd.f32 %v774, %v775
  %v777 = vsel %vm528, %v688, 0.0
  %v778 = vadd.f32 %v776, %v777
  %v779 = vsel %vm528, %v689, 0.0
  %v780 = vadd.f32 %v778, %v779
  %v781 = vsel %vm528, %v690, 0.0
  %v782 = vadd.f32 %v780, %v781
  %v783 = vsel %vm528, %v691, 0.0
  %v784 = vadd.f32 %v782, %v783
  %v785 = vsel %vm528, %v692, 0.0
  %v786 = vadd.f32 %v784, %v785
  %v787 = vsel %vm528, %v693, 0.0
  %v788 = vadd.f32 %v786, %v787
  %v789 = vsel %vm528, %v694, 0.0
  %v790 = vadd.f32 %v788, %v789
  %v791 = vsel %vm528, %v695, 0.0
  %v792 = vadd.f32 %v790, %v791
  %v793 = vsel %vm528, %v696, 0.0
  %v794 = vadd.f32 %v792, %v793
  %v795 = vsel %vm528, %v697, 0.0
  %v796 = vadd.f32 %v794, %v795
  %v797 = vsel %vm528, %v698, 0.0
  %v798 = vadd.f32 %v796, %v797
  %v799 = vsel %vm528, %v699, 0.0
  %v800 = vadd.f32 %v798, %v799
  %v801 = vsel %vm528, %v700, 0.0
  %v802 = vadd.f32 %v800, %v801
  %v803 = vsel %vm528, %v701, 0.0
  %v804 = vadd.f32 %v802, %v803
  %v805 = vsel %vm528, %v702, 0.0
  %v806 = vadd.f32 %v804, %v805
  %v807 = vsel %vm528, %v703, 0.0
  %v808 = vadd.f32 %v806, %v807
  %v809 = vsel %vm528, %v704, 0.0
  %v810 = vadd.f32 %v808, %v809
  %v811 = vsel %vm528, %v705, 0.0
  %v812 = vadd.f32 %v810, %v811
  %v813 = vsel %vm528, %v706, 0.0
  %v814 = vadd.f32 %v812, %v813
  %v815 = vsel %vm528, %v707, 0.0
  %v816 = vadd.f32 %v814, %v815
  %v817 = vsel %vm528, %v708, 0.0
  %v818 = vadd.f32 %v816, %v817
  %v819 = vsel %vm528, %v709, 0.0
  %v820 = vadd.f32 %v818, %v819
  %v821 = vsel %vm528, %v710, 0.0
  %v822 = vadd.f32 %v820, %v821
  %v823 = vsel %vm528, %v711, 0.0
  %v824 = vadd.f32 %v822, %v823
  %v825 = vsel %vm528, %v712, 0.0
  %v826 = vadd.f32 %v824, %v825
  %v827 = vsel %vm528, %v713, 0.0
  %v828 = vadd.f32 %v826, %v827
  %v829 = vsel %vm528, %v714, 0.0
  %v830 = vadd.f32 %v828, %v829
  %v831 = vsel %vm528, %v715, 0.0
  %v832 = vadd.f32 %v830, %v831
  %v833 = vsel %vm528, %v716, 0.0
  %v834 = vadd.f32 %v832, %v833
  %v835 = vsel %vm528, %v717, 0.0
  %v836 = vadd.f32 %v834, %v835
  %v837 = vsel %vm528, %v718, 0.0
  %v838 = vadd.f32 %v836, %v837
  %v839 = vsel %vm528, %v719, 0.0
  %v840 = vadd.f32 %v838, %v839
  %v841 = vsel %vm528, %v720, 0.0
  %v842 = vadd.f32 %v840, %v841
  %v843 = vsel %vm528, %v721, 0.0
  %v844 = vadd.f32 %v842, %v843
  %v845 = vsel %vm528, %v722, 0.0
  %v846 = vadd.f32 %v844, %v845
  %v847 = vsel %vm528, %v723, 0.0
  %v848 = vadd.f32 %v846, %v847
  %v849 = vsel %vm528, %v724, 0.0
  %v850 = vadd.f32 %v848, %v849
  %v851 = vsel %vm528, %v725, 0.0
  %v852 = vadd.f32 %v850, %v851
  %v853 = vrot.slane %v852, 4
  %v854 = vadd.f32 %v852, %v853
  %v855 = vrot.slane %v854, 2
  %v856 = vadd.f32 %v854, %v855
  %v857 = vrot.slane %v856, 1
  %v858 = vadd.f32 %v856, %v857
  %v859 = vmul.f32 %v661, 0.001953125
  %v860 = vmul.f32 %v858, 0.001953125
  %v861 = vmul.f32 %v859, %v859
  %v862 = vsub.f32 %v860, %v861
  %v863 = vadd.f32 %v862, 1e-05
  %v864 = vrsqrt.pop %v863
  %v865 = vmul.f32 %v526, %v864
  %v866 = vmul.f32 %v859, %v865
  %v867 = vsub.f32 %v527, %v866
  %v869 = vlaneseq
  %v870 = vshrl.u32 %v869, 7
  %v871 = vsub.s32 0, %v870
  %v872 = vrot.slane %v865, %v871
  %v874 = vmul.f32 %v272, %v872
  %v875 = vmul.f32 %v275, %v872
  %v876 = vmul.f32 %v280, %v872
  %v877 = vmul.f32 %v283, %v872
  %v878 = vmul.f32 %v288, %v872
  %v879 = vmul.f32 %v291, %v872
  %v880 = vmul.f32 %v296, %v872
  %v881 = vmul.f32 %v299, %v872
  %v882 = vmul.f32 %v304, %v872
  %v883 = vmul.f32 %v307, %v872
  %v884 = vmul.f32 %v312, %v872
  %v885 = vmul.f32 %v315, %v872
  %v886 = vmul.f32 %v320, %v872
  %v887 = vmul.f32 %v323, %v872
  %v888 = vmul.f32 %v328, %v872
  %v889 = vmul.f32 %v331, %v872
  %v890 = vmul.f32 %v336, %v872
  %v891 = vmul.f32 %v339, %v872
  %v892 = vmul.f32 %v344, %v872
  %v893 = vmul.f32 %v347, %v872
  %v894 = vmul.f32 %v352, %v872
  %v895 = vmul.f32 %v355, %v872
  %v896 = vmul.f32 %v360, %v872
  %v897 = vmul.f32 %v363, %v872
  %v898 = vmul.f32 %v368, %v872
  %v899 = vmul.f32 %v371, %v872
  %v900 = vmul.f32 %v376, %v872
  %v901 = vmul.f32 %v379, %v872
  %v902 = vmul.f32 %v384, %v872
  %v903 = vmul.f32 %v387, %v872
  %v904 = vmul.f32 %v392, %v872
  %v905 = vmul.f32 %v395, %v872
  %v906 = vmul.f32 %v400, %v872
  %v907 = vmul.f32 %v403, %v872
  %v908 = vmul.f32 %v408, %v872
  %v909 = vmul.f32 %v411, %v872
  %v910 = vmul.f32 %v416, %v872
  %v911 = vmul.f32 %v419, %v872
  %v912 = vmul.f32 %v424, %v872
  %v913 = vmul.f32 %v427, %v872
  %v914 = vmul.f32 %v432, %v872
  %v915 = vmul.f32 %v435, %v872
  %v916 = vmul.f32 %v440, %v872
  %v917 = vmul.f32 %v443, %v872
  %v918 = vmul.f32 %v448, %v872
  %v919 = vmul.f32 %v451, %v872
  %v920 = vmul.f32 %v456, %v872
  %v921 = vmul.f32 %v459, %v872
  %v922 = vmul.f32 %v464, %v872
  %v923 = vmul.f32 %v467, %v872
  %v924 = vmul.f32 %v472, %v872
  %v925 = vmul.f32 %v475, %v872
  %v926 = vmul.f32 %v480, %v872
  %v927 = vmul.f32 %v483, %v872
  %v928 = vmul.f32 %v488, %v872
  %v929 = vmul.f32 %v491, %v872
  %v930 = vmul.f32 %v496, %v872
  %v931 = vmul.f32 %v499, %v872
  %v932 = vmul.f32 %v504, %v872
  %v933 = vmul.f32 %v507, %v872
  %v934 = vmul.f32 %v512, %v872
  %v935 = vmul.f32 %v515, %v872
  %v936 = vmul.f32 %v520, %v872
  %v937 = vmul.f32 %v523, %v872
  %v939 = vlaneseq
  %v940 = vshrl.u32 %v939, 7
  %v941 = vsub.s32 0, %v940
  %v942 = vrot.slane %v867, %v941
  %v944 = vadd.f32 %v874, %v942
  %v945 = vadd.f32 %v875, %v942
  %v946 = vadd.f32 %v876, %v942
  %v947 = vadd.f32 %v877, %v942
  %v948 = vadd.f32 %v878, %v942
  %v949 = vadd.f32 %v879, %v942
  %v950 = vadd.f32 %v880, %v942
  %v951 = vadd.f32 %v881, %v942
  %v952 = vadd.f32 %v882, %v942
  %v953 = vadd.f32 %v883, %v942
  %v954 = vadd.f32 %v884, %v942
  %v955 = vadd.f32 %v885, %v942
  %v956 = vadd.f32 %v886, %v942
  %v957 = vadd.f32 %v887, %v942
  %v958 = vadd.f32 %v888, %v942
  %v959 = vadd.f32 %v889, %v942
  %v960 = vadd.f32 %v890, %v942
  %v961 = vadd.f32 %v891, %v942
  %v962 = vadd.f32 %v892, %v942
  %v963 = vadd.f32 %v893, %v942
  %v964 = vadd.f32 %v894, %v942
  %v965 = vadd.f32 %v895, %v942
  %v966 = vadd.f32 %v896, %v942
  %v967 = vadd.f32 %v897, %v942
  %v968 = vadd.f32 %v898, %v942
  %v969 = vadd.f32 %v899, %v942
  %v970 = vadd.f32 %v900, %v942
  %v971 = vadd.f32 %v901, %v942
  %v972 = vadd.f32 %v902, %v942
  %v973 = vadd.f32 %v903, %v942
  %v974 = vadd.f32 %v904, %v942
  %v975 = vadd.f32 %v905, %v942
  %v976 = vadd.f32 %v906, %v942
  %v977 = vadd.f32 %v907, %v942
  %v978 = vadd.f32 %v908, %v942
  %v979 = vadd.f32 %v909, %v942
  %v980 = vadd.f32 %v910, %v942
  %v981 = vadd.f32 %v911, %v942
  %v982 = vadd.f32 %v912, %v942
  %v983 = vadd.f32 %v913, %v942
  %v984 = vadd.f32 %v914, %v942
  %v985 = vadd.f32 %v915, %v942
  %v986 = vadd.f32 %v916, %v942
  %v987 = vadd.f32 %v917, %v942
  %v988 = vadd.f32 %v918, %v942
  %v989 = vadd.f32 %v919, %v942
  %v990 = vadd.f32 %v920, %v942
  %v991 = vadd.f32 %v921, %v942
  %v992 = vadd.f32 %v922, %v942
  %v993 = vadd.f32 %v923, %v942
  %v994 = vadd.f32 %v924, %v942
  %v995 = vadd.f32 %v925, %v942
  %v996 = vadd.f32 %v926, %v942
  %v997 = vadd.f32 %v927, %v942
  %v998 = vadd.f32 %v928, %v942
  %v999 = vadd.f32 %v929, %v942
  %v1000 = vadd.f32 %v930, %v942
  %v1001 = vadd.f32 %v931, %v942
  %v1002 = vadd.f32 %v932, %v942
  %v1003 = vadd.f32 %v933, %v942
  %v1004 = vadd.f32 %v934, %v942
  %v1005 = vadd.f32 %v935, %v942
  %v1006 = vadd.f32 %v936, %v942
  %v1007 = vadd.f32 %v937, %v942
  %v1008 = vmax.f32 %v944, 0.0
  %v1009 = vmax.f32 %v945, 0.0
  %v1010 = vmax.f32 %v946, 0.0
  %v1011 = vmax.f32 %v947, 0.0
  %v1012 = vmax.f32 %v948, 0.0
  %v1013 = vmax.f32 %v949, 0.0
  %v1014 = vmax.f32 %v950, 0.0
  %v1015 = vmax.f32 %v951, 0.0
  %v1016 = vmax.f32 %v952, 0.0
  %v1017 = vmax.f32 %v953, 0.0
  %v1018 = vmax.f32 %v954, 0.0
  %v1019 = vmax.f32 %v955, 0.0
  %v1020 = vmax.f32 %v956, 0.0
  %v1021 = vmax.f32 %v957, 0.0
  %v1022 = vmax.f32 %v958, 0.0
  %v1023 = vmax.f32 %v959, 0.0
  %v1024 = vmax.f32 %v960, 0.0
  %v1025 = vmax.f32 %v961, 0.0
  %v1026 = vmax.f32 %v962, 0.0
  %v1027 = vmax.f32 %v963, 0.0
  %v1028 = vmax.f32 %v964, 0.0
  %v1029 = vmax.f32 %v965, 0.0
  %v1030 = vmax.f32 %v966, 0.0
  %v1031 = vmax.f32 %v967, 0.0
  %v1032 = vmax.f32 %v968, 0.0
  %v1033 = vmax.f32 %v969, 0.0
  %v1034 = vmax.f32 %v970, 0.0
  %v1035 = vmax.f32 %v971, 0.0
  %v1036 = vmax.f32 %v972, 0.0
  %v1037 = vmax.f32 %v973, 0.0
  %v1038 = vmax.f32 %v974, 0.0
  %v1039 = vmax.f32 %v975, 0.0
  %v1040 = vmax.f32 %v976, 0.0
  %v1041 = vmax.f32 %v977, 0.0
  %v1042 = vmax.f32 %v978, 0.0
  %v1043 = vmax.f32 %v979, 0.0
  %v1044 = vmax.f32 %v980, 0.0
  %v1045 = vmax.f32 %v981, 0.0
  %v1046 = vmax.f32 %v982, 0.0
  %v1047 = vmax.f32 %v983, 0.0
  %v1048 = vmax.f32 %v984, 0.0
  %v1049 = vmax.f32 %v985, 0.0
  %v1050 = vmax.f32 %v986, 0.0
  %v1051 = vmax.f32 %v987, 0.0
  %v1052 = vmax.f32 %v988, 0.0
  %v1053 = vmax.f32 %v989, 0.0
  %v1054 = vmax.f32 %v990, 0.0
  %v1055 = vmax.f32 %v991, 0.0
  %v1056 = vmax.f32 %v992, 0.0
  %v1057 = vmax.f32 %v993, 0.0
  %v1058 = vmax.f32 %v994, 0.0
  %v1059 = vmax.f32 %v995, 0.0
  %v1060 = vmax.f32 %v996, 0.0
  %v1061 = vmax.f32 %v997, 0.0
  %v1062 = vmax.f32 %v998, 0.0
  %v1063 = vmax.f32 %v999, 0.0
  %v1064 = vmax.f32 %v1000, 0.0
  %v1065 = vmax.f32 %v1001, 0.0
  %v1066 = vmax.f32 %v1002, 0.0
  %v1067 = vmax.f32 %v1003, 0.0
  %v1068 = vmax.f32 %v1004, 0.0
  %v1069 = vmax.f32 %v1005, 0.0
  %v1070 = vmax.f32 %v1006, 0.0
  %v1071 = vmax.f32 %v1007, 0.0
  %1072 = vst.msk [vmem:[#allocation2] sm:$0xff] %vm528, 0.0
  %1073 = vst.msk [vmem:[#allocation2 + $0x8] sm:$0xff] %vm528, 0.0
  %vm1074 = vcmask 25600
  %1075 = vst.msk [vmem:[#allocation2 + $0x10] sm:$0x3] %vm1074, 0.0
  %1076 = vst.msk [vmem:[#allocation2 + $0x1b0] sm:$0xff] %vm528, 0.0
  %1077 = vst.msk [vmem:[#allocation2 + $0x1b8] sm:$0xff] %vm528, 0.0
  %1078 = vst.msk [vmem:[#allocation2 + $0x1c0] sm:$0x3] %vm1074, 0.0
  %s1079 = scalar_lea.vmem [#allocation2], 408
  %1080 = vst.msk [vmem:[%s1079] sm:$0xff] %vm528, 0.0
  %1081 = vst.msk [vmem:[%s1079 + $0x8] sm:$0xff] %vm528, 0.0
  %1082 = vst.msk [vmem:[%s1079 + $0x10] sm:$0x3] %vm1074, 0.0
  %1083 = vst.msk [vmem:[%s1079 + $0x1b0] sm:$0xff] %vm528, 0.0
  %1084 = vst.msk [vmem:[%s1079 + $0x1b8] sm:$0xff] %vm528, 0.0
  %1085 = vst.msk [vmem:[%s1079 + $0x1c0] sm:$0x3] %vm1074, 0.0
  %vm1086 = vcmask 24576
  %1087 = vst.msk [vmem:[#allocation2] sm:$0x1] %vm1086, 0.0
  %1088 = vst.msk [vmem:[#allocation2 + $0x18] sm:$0x1] %vm1086, 0.0
  %1089 = vst.msk [vmem:[#allocation2 + $0x30] sm:$0x1] %vm1086, 0.0
  %1090 = vst.msk [vmem:[#allocation2 + $0x48] sm:$0x1] %vm1086, 0.0
  %1091 = vst.msk [vmem:[#allocation2 + $0x60] sm:$0x1] %vm1086, 0.0
  %1092 = vst.msk [vmem:[#allocation2 + $0x78] sm:$0x1] %vm1086, 0.0
  %1093 = vst.msk [vmem:[#allocation2 + $0x90] sm:$0x1] %vm1086, 0.0
  %1094 = vst.msk [vmem:[#allocation2 + $0xa8] sm:$0x1] %vm1086, 0.0
  %1095 = vst.msk [vmem:[#allocation2 + $0xc0] sm:$0x1] %vm1086, 0.0
  %1096 = vst.msk [vmem:[#allocation2 + $0xd8] sm:$0x1] %vm1086, 0.0
  %1097 = vst.msk [vmem:[#allocation2 + $0xf0] sm:$0x1] %vm1086, 0.0
  %1098 = vst.msk [vmem:[#allocation2 + $0x108] sm:$0x1] %vm1086, 0.0
  %1099 = vst.msk [vmem:[#allocation2 + $0x120] sm:$0x1] %vm1086, 0.0
  %1100 = vst.msk [vmem:[#allocation2 + $0x138] sm:$0x1] %vm1086, 0.0
  %1101 = vst.msk [vmem:[#allocation2 + $0x150] sm:$0x1] %vm1086, 0.0
  %1102 = vst.msk [vmem:[#allocation2 + $0x168] sm:$0x1] %vm1086, 0.0
  %1103 = vst.msk [vmem:[#allocation2 + $0x180] sm:$0x1] %vm1086, 0.0
  %1104 = vst.msk [vmem:[#allocation2 + $0x198] sm:$0x1] %vm1086, 0.0
  %1105 = vst.msk [vmem:[#allocation2 + $0x1b0] sm:$0x1] %vm1086, 0.0
  %1106 = vst.msk [vmem:[#allocation2 + $0x1c8] sm:$0x1] %vm1086, 0.0
  %1107 = vst.msk [vmem:[#allocation2 + $0x1e0] sm:$0x1] %vm1086, 0.0
  %1108 = vst.msk [vmem:[#allocation2 + $0x1f8] sm:$0x1] %vm1086, 0.0
  %1109 = vst.msk [vmem:[#allocation2 + $0x210] sm:$0x1] %vm1086, 0.0
  %1110 = vst.msk [vmem:[#allocation2 + $0x228] sm:$0x1] %vm1086, 0.0
  %1111 = vst.msk [vmem:[#allocation2 + $0x240] sm:$0x1] %vm1086, 0.0
  %1112 = vst.msk [vmem:[#allocation2 + $0x258] sm:$0x1] %vm1086, 0.0
  %1113 = vst.msk [vmem:[#allocation2 + $0x270] sm:$0x1] %vm1086, 0.0
  %1114 = vst.msk [vmem:[#allocation2 + $0x288] sm:$0x1] %vm1086, 0.0
  %1115 = vst.msk [vmem:[#allocation2 + $0x2a0] sm:$0x1] %vm1086, 0.0
  %1116 = vst.msk [vmem:[#allocation2 + $0x2b8] sm:$0x1] %vm1086, 0.0
  %1117 = vst.msk [vmem:[#allocation2 + $0x2d0] sm:$0x1] %vm1086, 0.0
  %1118 = vst.msk [vmem:[#allocation2 + $0x2e8] sm:$0x1] %vm1086, 0.0
  %1119 = vst.msk [vmem:[#allocation2 + $0x300] sm:$0x1] %vm1086, 0.0
  %1120 = vst.msk [vmem:[#allocation2 + $0x318] sm:$0x1] %vm1086, 0.0
  %1121 = vst.msk [vmem:[#allocation2 + $0x330] sm:$0x1] %vm1086, 0.0
  %1122 = vst.msk [vmem:[#allocation2 + $0x348] sm:$0x1] %vm1086, 0.0
  %1123 = vst.msk [vmem:[#allocation2 + $0x11] sm:$0x1] %vm1086, 0.0
  %1124 = vst.msk [vmem:[#allocation2 + $0x29] sm:$0x1] %vm1086, 0.0
  %1125 = vst.msk [vmem:[#allocation2 + $0x41] sm:$0x1] %vm1086, 0.0
  %1126 = vst.msk [vmem:[#allocation2 + $0x59] sm:$0x1] %vm1086, 0.0
  %1127 = vst.msk [vmem:[#allocation2 + $0x71] sm:$0x1] %vm1086, 0.0
  %1128 = vst.msk [vmem:[#allocation2 + $0x89] sm:$0x1] %vm1086, 0.0
  %1129 = vst.msk [vmem:[#allocation2 + $0xa1] sm:$0x1] %vm1086, 0.0
  %1130 = vst.msk [vmem:[#allocation2 + $0xb9] sm:$0x1] %vm1086, 0.0
  %1131 = vst.msk [vmem:[#allocation2 + $0xd1] sm:$0x1] %vm1086, 0.0
  %1132 = vst.msk [vmem:[#allocation2 + $0xe9] sm:$0x1] %vm1086, 0.0
  %1133 = vst.msk [vmem:[#allocation2 + $0x101] sm:$0x1] %vm1086, 0.0
  %1134 = vst.msk [vmem:[#allocation2 + $0x119] sm:$0x1] %vm1086, 0.0
  %1135 = vst.msk [vmem:[#allocation2 + $0x131] sm:$0x1] %vm1086, 0.0
  %1136 = vst.msk [vmem:[#allocation2 + $0x149] sm:$0x1] %vm1086, 0.0
  %1137 = vst.msk [vmem:[#allocation2 + $0x161] sm:$0x1] %vm1086, 0.0
  %1138 = vst.msk [vmem:[#allocation2 + $0x179] sm:$0x1] %vm1086, 0.0
  %1139 = vst.msk [vmem:[#allocation2 + $0x191] sm:$0x1] %vm1086, 0.0
  %1140 = vst.msk [vmem:[#allocation2 + $0x1a9] sm:$0x1] %vm1086, 0.0
  %1141 = vst.msk [vmem:[#allocation2 + $0x1c1] sm:$0x1] %vm1086, 0.0
  %1142 = vst.msk [vmem:[#allocation2 + $0x1d9] sm:$0x1] %vm1086, 0.0
  %1143 = vst.msk [vmem:[#allocation2 + $0x1f1] sm:$0x1] %vm1086, 0.0
  %1144 = vst.msk [vmem:[#allocation2 + $0x209] sm:$0x1] %vm1086, 0.0
  %1145 = vst.msk [vmem:[#allocation2 + $0x221] sm:$0x1] %vm1086, 0.0
  %1146 = vst.msk [vmem:[#allocation2 + $0x239] sm:$0x1] %vm1086, 0.0
  %1147 = vst.msk [vmem:[#allocation2 + $0x251] sm:$0x1] %vm1086, 0.0
  %1148 = vst.msk [vmem:[#allocation2 + $0x269] sm:$0x1] %vm1086, 0.0
  %1149 = vst.msk [vmem:[#allocation2 + $0x281] sm:$0x1] %vm1086, 0.0
  %1150 = vst.msk [vmem:[#allocation2 + $0x299] sm:$0x1] %vm1086, 0.0
  %1151 = vst.msk [vmem:[#allocation2 + $0x2b1] sm:$0x1] %vm1086, 0.0
  %1152 = vst.msk [vmem:[#allocation2 + $0x2c9] sm:$0x1] %vm1086, 0.0
  %1153 = vst.msk [vmem:[#allocation2 + $0x2e1] sm:$0x1] %vm1086, 0.0
  %1154 = vst.msk [vmem:[#allocation2 + $0x2f9] sm:$0x1] %vm1086, 0.0
  %1155 = vst.msk [vmem:[#allocation2 + $0x311] sm:$0x1] %vm1086, 0.0
  %1156 = vst.msk [vmem:[#allocation2 + $0x329] sm:$0x1] %vm1086, 0.0
  %1157 = vst.msk [vmem:[#allocation2 + $0x341] sm:$0x1] %vm1086, 0.0
  %1158 = vst.msk [vmem:[#allocation2 + $0x359] sm:$0x1] %vm1086, 0.0
  %s1159 = scalar_lea.vmem [#allocation2], 24
  %1160 = vst.msk [vmem:[%s1159 + $0x1] sm:$0xff] %vm528, %v1008
  %1161 = vst.msk [vmem:[%s1159 + $0x9] sm:$0xff] %vm528, %v1009
  %1162 = vst.msk [vmem:[%s1159 + $0x19] sm:$0xff] %vm528, %v1010
  %1163 = vst.msk [vmem:[%s1159 + $0x21] sm:$0xff] %vm528, %v1011
  %1164 = vst.msk [vmem:[%s1159 + $0x31] sm:$0xff] %vm528, %v1012
  %1165 = vst.msk [vmem:[%s1159 + $0x39] sm:$0xff] %vm528, %v1013
  %1166 = vst.msk [vmem:[%s1159 + $0x49] sm:$0xff] %vm528, %v1014
  %1167 = vst.msk [vmem:[%s1159 + $0x51] sm:$0xff] %vm528, %v1015
  %1168 = vst.msk [vmem:[%s1159 + $0x61] sm:$0xff] %vm528, %v1016
  %1169 = vst.msk [vmem:[%s1159 + $0x69] sm:$0xff] %vm528, %v1017
  %1170 = vst.msk [vmem:[%s1159 + $0x79] sm:$0xff] %vm528, %v1018
  %1171 = vst.msk [vmem:[%s1159 + $0x81] sm:$0xff] %vm528, %v1019
  %1172 = vst.msk [vmem:[%s1159 + $0x91] sm:$0xff] %vm528, %v1020
  %1173 = vst.msk [vmem:[%s1159 + $0x99] sm:$0xff] %vm528, %v1021
  %1174 = vst.msk [vmem:[%s1159 + $0xa9] sm:$0xff] %vm528, %v1022
  %1175 = vst.msk [vmem:[%s1159 + $0xb1] sm:$0xff] %vm528, %v1023
  %1176 = vst.msk [vmem:[%s1159 + $0xc1] sm:$0xff] %vm528, %v1024
  %1177 = vst.msk [vmem:[%s1159 + $0xc9] sm:$0xff] %vm528, %v1025
  %1178 = vst.msk [vmem:[%s1159 + $0xd9] sm:$0xff] %vm528, %v1026
  %1179 = vst.msk [vmem:[%s1159 + $0xe1] sm:$0xff] %vm528, %v1027
  %1180 = vst.msk [vmem:[%s1159 + $0xf1] sm:$0xff] %vm528, %v1028
  %1181 = vst.msk [vmem:[%s1159 + $0xf9] sm:$0xff] %vm528, %v1029
  %1182 = vst.msk [vmem:[%s1159 + $0x109] sm:$0xff] %vm528, %v1030
  %1183 = vst.msk [vmem:[%s1159 + $0x111] sm:$0xff] %vm528, %v1031
  %1184 = vst.msk [vmem:[%s1159 + $0x121] sm:$0xff] %vm528, %v1032
  %1185 = vst.msk [vmem:[%s1159 + $0x129] sm:$0xff] %vm528, %v1033
  %1186 = vst.msk [vmem:[%s1159 + $0x139] sm:$0xff] %vm528, %v1034
  %1187 = vst.msk [vmem:[%s1159 + $0x141] sm:$0xff] %vm528, %v1035
  %1188 = vst.msk [vmem:[%s1159 + $0x151] sm:$0xff] %vm528, %v1036
  %1189 = vst.msk [vmem:[%s1159 + $0x159] sm:$0xff] %vm528, %v1037
  %1190 = vst.msk [vmem:[%s1159 + $0x169] sm:$0xff] %vm528, %v1038
  %1191 = vst.msk [vmem:[%s1159 + $0x171] sm:$0xff] %vm528, %v1039
  %1192 = vst.msk [vmem:[%s1159 + $0x1b1] sm:$0xff] %vm528, %v1040
  %1193 = vst.msk [vmem:[%s1159 + $0x1b9] sm:$0xff] %vm528, %v1041
  %1194 = vst.msk [vmem:[%s1159 + $0x1c9] sm:$0xff] %vm528, %v1042
  %1195 = vst.msk [vmem:[%s1159 + $0x1d1] sm:$0xff] %vm528, %v1043
  %1196 = vst.msk [vmem:[%s1159 + $0x1e1] sm:$0xff] %vm528, %v1044
  %1197 = vst.msk [vmem:[%s1159 + $0x1e9] sm:$0xff] %vm528, %v1045
  %1198 = vst.msk [vmem:[%s1159 + $0x1f9] sm:$0xff] %vm528, %v1046
  %1199 = vst.msk [vmem:[%s1159 + $0x201] sm:$0xff] %vm528, %v1047
  %1200 = vst.msk [vmem:[%s1159 + $0x211] sm:$0xff] %vm528, %v1048
  %1201 = vst.msk [vmem:[%s1159 + $0x219] sm:$0xff] %vm528, %v1049
  %1202 = vst.msk [vmem:[%s1159 + $0x229] sm:$0xff] %vm528, %v1050
  %1203 = vst.msk [vmem:[%s1159 + $0x231] sm:$0xff] %vm528, %v1051
  %1204 = vst.msk [vmem:[%s1159 + $0x241] sm:$0xff] %vm528, %v1052
  %1205 = vst.msk [vmem:[%s1159 + $0x249] sm:$0xff] %vm528, %v1053
  %1206 = vst.msk [vmem:[%s1159 + $0x259] sm:$0xff] %vm528, %v1054
  %1207 = vst.msk [vmem:[%s1159 + $0x261] sm:$0xff] %vm528, %v1055
  %1208 = vst.msk [vmem:[%s1159 + $0x271] sm:$0xff] %vm528, %v1056
  %1209 = vst.msk [vmem:[%s1159 + $0x279] sm:$0xff] %vm528, %v1057
  %1210 = vst.msk [vmem:[%s1159 + $0x289] sm:$0xff] %vm528, %v1058
  %1211 = vst.msk [vmem:[%s1159 + $0x291] sm:$0xff] %vm528, %v1059
  %1212 = vst.msk [vmem:[%s1159 + $0x2a1] sm:$0xff] %vm528, %v1060
  %1213 = vst.msk [vmem:[%s1159 + $0x2a9] sm:$0xff] %vm528, %v1061
  %1214 = vst.msk [vmem:[%s1159 + $0x2b9] sm:$0xff] %vm528, %v1062
  %1215 = vst.msk [vmem:[%s1159 + $0x2c1] sm:$0xff] %vm528, %v1063
  %1216 = vst.msk [vmem:[%s1159 + $0x2d1] sm:$0xff] %vm528, %v1064
  %1217 = vst.msk [vmem:[%s1159 + $0x2d9] sm:$0xff] %vm528, %v1065
  %1218 = vst.msk [vmem:[%s1159 + $0x2e9] sm:$0xff] %vm528, %v1066
  %1219 = vst.msk [vmem:[%s1159 + $0x2f1] sm:$0xff] %vm528, %v1067
  %1220 = vst.msk [vmem:[%s1159 + $0x301] sm:$0xff] %vm528, %v1068
  %1221 = vst.msk [vmem:[%s1159 + $0x309] sm:$0xff] %vm528, %v1069
  %1222 = vst.msk [vmem:[%s1159 + $0x319] sm:$0xff] %vm528, %v1070
  %1223 = vst.msk [vmem:[%s1159 + $0x321] sm:$0xff] %vm528, %v1071
  %v1224 = vld [vmem:[#allocation2] sm:$0xff]
  %v1225 = vld [vmem:[#allocation2 + $0x8] sm:$0xff]
  %v1226 = vld [vmem:[#allocation2 + $0x18] sm:$0xff]
  %v1227 = vld [vmem:[#allocation2 + $0x20] sm:$0xff]
  %v1228 = vld [vmem:[#allocation2 + $0x30] sm:$0xff]
  %v1229 = vld [vmem:[#allocation2 + $0x38] sm:$0xff]
  %v1230 = vld [vmem:[#allocation2 + $0x48] sm:$0xff]
  %v1231 = vld [vmem:[#allocation2 + $0x50] sm:$0xff]
  %v1232 = vld [vmem:[#allocation2 + $0x60] sm:$0xff]
  %v1233 = vld [vmem:[#allocation2 + $0x68] sm:$0xff]
  %v1234 = vld [vmem:[#allocation2 + $0x78] sm:$0xff]
  %v1235 = vld [vmem:[#allocation2 + $0x80] sm:$0xff]
  %v1236 = vld [vmem:[#allocation2 + $0x90] sm:$0xff]
  %v1237 = vld [vmem:[#allocation2 + $0x98] sm:$0xff]
  %v1238 = vld [vmem:[#allocation2 + $0xa8] sm:$0xff]
  %v1239 = vld [vmem:[#allocation2 + $0xb0] sm:$0xff]
  %v1240 = vld [vmem:[#allocation2 + $0xc0] sm:$0xff]
  %v1241 = vld [vmem:[#allocation2 + $0xc8] sm:$0xff]
  %v1242 = vld [vmem:[#allocation2 + $0xd8] sm:$0xff]
  %v1243 = vld [vmem:[#allocation2 + $0xe0] sm:$0xff]
  %v1244 = vld [vmem:[#allocation2 + $0xf0] sm:$0xff]
  %v1245 = vld [vmem:[#allocation2 + $0xf8] sm:$0xff]
  %v1246 = vld [vmem:[#allocation2 + $0x108] sm:$0xff]
  %v1247 = vld [vmem:[#allocation2 + $0x110] sm:$0xff]
  %v1248 = vld [vmem:[#allocation2 + $0x120] sm:$0xff]
  %v1249 = vld [vmem:[#allocation2 + $0x128] sm:$0xff]
  %v1250 = vld [vmem:[#allocation2 + $0x138] sm:$0xff]
  %v1251 = vld [vmem:[#allocation2 + $0x140] sm:$0xff]
  %v1252 = vld [vmem:[#allocation2 + $0x150] sm:$0xff]
  %v1253 = vld [vmem:[#allocation2 + $0x158] sm:$0xff]
  %v1254 = vld [vmem:[#allocation2 + $0x168] sm:$0xff]
  %v1255 = vld [vmem:[#allocation2 + $0x170] sm:$0xff]
  %v1256 = vld [vmem:[#allocation2 + $0x1b0] sm:$0xff]
  %v1257 = vld [vmem:[#allocation2 + $0x1b8] sm:$0xff]
  %v1258 = vld [vmem:[#allocation2 + $0x1c8] sm:$0xff]
  %v1259 = vld [vmem:[#allocation2 + $0x1d0] sm:$0xff]
  %v1260 = vld [vmem:[#allocation2 + $0x1e0] sm:$0xff]
  %v1261 = vld [vmem:[#allocation2 + $0x1e8] sm:$0xff]
  %v1262 = vld [vmem:[#allocation2 + $0x1f8] sm:$0xff]
  %v1263 = vld [vmem:[#allocation2 + $0x200] sm:$0xff]
  %v1264 = vld [vmem:[#allocation2 + $0x210] sm:$0xff]
  %v1265 = vld [vmem:[#allocation2 + $0x218] sm:$0xff]
  %v1266 = vld [vmem:[#allocation2 + $0x228] sm:$0xff]
  %v1267 = vld [vmem:[#allocation2 + $0x230] sm:$0xff]
  %v1268 = vld [vmem:[#allocation2 + $0x240] sm:$0xff]
  %v1269 = vld [vmem:[#allocation2 + $0x248] sm:$0xff]
  %v1270 = vld [vmem:[#allocation2 + $0x258] sm:$0xff]
  %v1271 = vld [vmem:[#allocation2 + $0x260] sm:$0xff]
  %v1272 = vld [vmem:[#allocation2 + $0x270] sm:$0xff]
  %v1273 = vld [vmem:[#allocation2 + $0x278] sm:$0xff]
  %v1274 = vld [vmem:[#allocation2 + $0x288] sm:$0xff]
  %v1275 = vld [vmem:[#allocation2 + $0x290] sm:$0xff]
  %v1276 = vld [vmem:[#allocation2 + $0x2a0] sm:$0xff]
  %v1277 = vld [vmem:[#allocation2 + $0x2a8] sm:$0xff]
  %v1278 = vld [vmem:[#allocation2 + $0x2b8] sm:$0xff]
  %v1279 = vld [vmem:[#allocation2 + $0x2c0] sm:$0xff]
  %v1280 = vld [vmem:[#allocation2 + $0x2d0] sm:$0xff]
  %v1281 = vld [vmem:[#allocation2 + $0x2d8] sm:$0xff]
  %v1282 = vld [vmem:[#allocation2 + $0x2e8] sm:$0xff]
  %v1283 = vld [vmem:[#allocation2 + $0x2f0] sm:$0xff]
  %v1284 = vld [vmem:[#allocation2 + $0x300] sm:$0xff]
  %v1285 = vld [vmem:[#allocation2 + $0x308] sm:$0xff]
  %v1286 = vld [vmem:[#allocation2 + $0x318] sm:$0xff]
  %v1287 = vld [vmem:[#allocation2 + $0x320] sm:$0xff]
  %1288 = vst.msk [vmem:[#allocation3] sm:$0xff] %vm528, %v1224
  %1289 = vst.msk [vmem:[#allocation3 + $0x8] sm:$0xff] %vm528, %v1225
  %1290 = vst.msk [vmem:[#allocation3 + $0x10] sm:$0xff] %vm528, %v1226
  %1291 = vst.msk [vmem:[#allocation3 + $0x18] sm:$0xff] %vm528, %v1227
  %1292 = vst.msk [vmem:[#allocation3 + $0x20] sm:$0xff] %vm528, %v1228
  %1293 = vst.msk [vmem:[#allocation3 + $0x28] sm:$0xff] %vm528, %v1229
  %1294 = vst.msk [vmem:[#allocation3 + $0x30] sm:$0xff] %vm528, %v1230
  %1295 = vst.msk [vmem:[#allocation3 + $0x38] sm:$0xff] %vm528, %v1231
  %1296 = vst.msk [vmem:[#allocation3 + $0x40] sm:$0xff] %vm528, %v1232
  %1297 = vst.msk [vmem:[#allocation3 + $0x48] sm:$0xff] %vm528, %v1233
  %1298 = vst.msk [vmem:[#allocation3 + $0x50] sm:$0xff] %vm528, %v1234
  %1299 = vst.msk [vmem:[#allocation3 + $0x58] sm:$0xff] %vm528, %v1235
  %1300 = vst.msk [vmem:[#allocation3 + $0x60] sm:$0xff] %vm528, %v1236
  %1301 = vst.msk [vmem:[#allocation3 + $0x68] sm:$0xff] %vm528, %v1237
  %1302 = vst.msk [vmem:[#allocation3 + $0x70] sm:$0xff] %vm528, %v1238
  %1303 = vst.msk [vmem:[#allocation3 + $0x78] sm:$0xff] %vm528, %v1239
  %1304 = vst.msk [vmem:[#allocation3 + $0x80] sm:$0xff] %vm528, %v1240
  %1305 = vst.msk [vmem:[#allocation3 + $0x88] sm:$0xff] %vm528, %v1241
  %1306 = vst.msk [vmem:[#allocation3 + $0x90] sm:$0xff] %vm528, %v1242
  %1307 = vst.msk [vmem:[#allocation3 + $0x98] sm:$0xff] %vm528, %v1243
  %1308 = vst.msk [vmem:[#allocation3 + $0xa0] sm:$0xff] %vm528, %v1244
  %1309 = vst.msk [vmem:[#allocation3 + $0xa8] sm:$0xff] %vm528, %v1245
  %1310 = vst.msk [vmem:[#allocation3 + $0xb0] sm:$0xff] %vm528, %v1246
  %1311 = vst.msk [vmem:[#allocation3 + $0xb8] sm:$0xff] %vm528, %v1247
  %1312 = vst.msk [vmem:[#allocation3 + $0xc0] sm:$0xff] %vm528, %v1248
  %1313 = vst.msk [vmem:[#allocation3 + $0xc8] sm:$0xff] %vm528, %v1249
  %1314 = vst.msk [vmem:[#allocation3 + $0xd0] sm:$0xff] %vm528, %v1250
  %1315 = vst.msk [vmem:[#allocation3 + $0xd8] sm:$0xff] %vm528, %v1251
  %1316 = vst.msk [vmem:[#allocation3 + $0xe0] sm:$0xff] %vm528, %v1252
  %1317 = vst.msk [vmem:[#allocation3 + $0xe8] sm:$0xff] %vm528, %v1253
  %1318 = vst.msk [vmem:[#allocation3 + $0xf0] sm:$0xff] %vm528, %v1254
  %1319 = vst.msk [vmem:[#allocation3 + $0xf8] sm:$0xff] %vm528, %v1255
  %1320 = vst.msk [vmem:[#allocation3 + $0x100] sm:$0xff] %vm528, %v1256
  %1321 = vst.msk [vmem:[#allocation3 + $0x108] sm:$0xff] %vm528, %v1257
  %1322 = vst.msk [vmem:[#allocation3 + $0x110] sm:$0xff] %vm528, %v1258
  %1323 = vst.msk [vmem:[#allocation3 + $0x118] sm:$0xff] %vm528, %v1259
  %1324 = vst.msk [vmem:[#allocation3 + $0x120] sm:$0xff] %vm528, %v1260
  %1325 = vst.msk [vmem:[#allocation3 + $0x128] sm:$0xff] %vm528, %v1261
  %1326 = vst.msk [vmem:[#allocation3 + $0x130] sm:$0xff] %vm528, %v1262
  %1327 = vst.msk [vmem:[#allocation3 + $0x138] sm:$0xff] %vm528, %v1263
  %1328 = vst.msk [vmem:[#allocation3 + $0x140] sm:$0xff] %vm528, %v1264
  %1329 = vst.msk [vmem:[#allocation3 + $0x148] sm:$0xff] %vm528, %v1265
  %1330 = vst.msk [vmem:[#allocation3 + $0x150] sm:$0xff] %vm528, %v1266
  %1331 = vst.msk [vmem:[#allocation3 + $0x158] sm:$0xff] %vm528, %v1267
  %1332 = vst.msk [vmem:[#allocation3 + $0x160] sm:$0xff] %vm528, %v1268
  %1333 = vst.msk [vmem:[#allocation3 + $0x168] sm:$0xff] %vm528, %v1269
  %1334 = vst.msk [vmem:[#allocation3 + $0x170] sm:$0xff] %vm528, %v1270
  %1335 = vst.msk [vmem:[#allocation3 + $0x178] sm:$0xff] %vm528, %v1271
  %1336 = vst.msk [vmem:[#allocation3 + $0x180] sm:$0xff] %vm528, %v1272
  %1337 = vst.msk [vmem:[#allocation3 + $0x188] sm:$0xff] %vm528, %v1273
  %1338 = vst.msk [vmem:[#allocation3 + $0x190] sm:$0xff] %vm528, %v1274
  %1339 = vst.msk [vmem:[#allocation3 + $0x198] sm:$0xff] %vm528, %v1275
  %1340 = vst.msk [vmem:[#allocation3 + $0x1a0] sm:$0xff] %vm528, %v1276
  %1341 = vst.msk [vmem:[#allocation3 + $0x1a8] sm:$0xff] %vm528, %v1277
  %1342 = vst.msk [vmem:[#allocation3 + $0x1b0] sm:$0xff] %vm528, %v1278
  %1343 = vst.msk [vmem:[#allocation3 + $0x1b8] sm:$0xff] %vm528, %v1279
  %1344 = vst.msk [vmem:[#allocation3 + $0x1c0] sm:$0xff] %vm528, %v1280
  %1345 = vst.msk [vmem:[#allocation3 + $0x1c8] sm:$0xff] %vm528, %v1281
  %1346 = vst.msk [vmem:[#allocation3 + $0x1d0] sm:$0xff] %vm528, %v1282
  %1347 = vst.msk [vmem:[#allocation3 + $0x1d8] sm:$0xff] %vm528, %v1283
  %1348 = vst.msk [vmem:[#allocation3 + $0x1e0] sm:$0xff] %vm528, %v1284
  %1349 = vst.msk [vmem:[#allocation3 + $0x1e8] sm:$0xff] %vm528, %v1285
  %1350 = vst.msk [vmem:[#allocation3 + $0x1f0] sm:$0xff] %vm528, %v1286
  %1351 = vst.msk [vmem:[#allocation3 + $0x1f8] sm:$0xff] %vm528, %v1287
  %v1352 = vld [vmem:[#allocation2 + $0x1] sm:$0xff]
  %v1353 = vld [vmem:[#allocation2 + $0x9] sm:$0xff]
  %v1354 = vld [vmem:[#allocation2 + $0x19] sm:$0xff]
  %v1355 = vld [vmem:[#allocation2 + $0x21] sm:$0xff]
  %v1356 = vld [vmem:[#allocation2 + $0x31] sm:$0xff]
  %v1357 = vld [vmem:[#allocation2 + $0x39] sm:$0xff]
  %v1358 = vld [vmem:[#allocation2 + $0x49] sm:$0xff]
  %v1359 = vld [vmem:[#allocation2 + $0x51] sm:$0xff]
  %v1360 = vld [vmem:[#allocation2 + $0x61] sm:$0xff]
  %v1361 = vld [vmem:[#allocation2 + $0x69] sm:$0xff]
  %v1362 = vld [vmem:[#allocation2 + $0x79] sm:$0xff]
  %v1363 = vld [vmem:[#allocation2 + $0x81] sm:$0xff]
  %v1364 = vld [vmem:[#allocation2 + $0x91] sm:$0xff]
  %v1365 = vld [vmem:[#allocation2 + $0x99] sm:$0xff]
  %v1366 = vld [vmem:[#allocation2 + $0xa9] sm:$0xff]
  %v1367 = vld [vmem:[#allocation2 + $0xb1] sm:$0xff]
  %v1368 = vld [vmem:[#allocation2 + $0xc1] sm:$0xff]
  %v1369 = vld [vmem:[#allocation2 + $0xc9] sm:$0xff]
  %v1370 = vld [vmem:[#allocation2 + $0xd9] sm:$0xff]
  %v1371 = vld [vmem:[#allocation2 + $0xe1] sm:$0xff]
  %v1372 = vld [vmem:[#allocation2 + $0xf1] sm:$0xff]
  %v1373 = vld [vmem:[#allocation2 + $0xf9] sm:$0xff]
  %v1374 = vld [vmem:[#allocation2 + $0x109] sm:$0xff]
  %v1375 = vld [vmem:[#allocation2 + $0x111] sm:$0xff]
  %v1376 = vld [vmem:[#allocation2 + $0x121] sm:$0xff]
  %v1377 = vld [vmem:[#allocation2 + $0x129] sm:$0xff]
  %v1378 = vld [vmem:[#allocation2 + $0x139] sm:$0xff]
  %v1379 = vld [vmem:[#allocation2 + $0x141] sm:$0xff]
  %v1380 = vld [vmem:[#allocation2 + $0x151] sm:$0xff]
  %v1381 = vld [vmem:[#allocation2 + $0x159] sm:$0xff]
  %v1382 = vld [vmem:[#allocation2 + $0x169] sm:$0xff]
  %v1383 = vld [vmem:[#allocation2 + $0x171] sm:$0xff]
  %v1384 = vld [vmem:[#allocation2 + $0x1b1] sm:$0xff]
  %v1385 = vld [vmem:[#allocation2 + $0x1b9] sm:$0xff]
  %v1386 = vld [vmem:[#allocation2 + $0x1c9] sm:$0xff]
  %v1387 = vld [vmem:[#allocation2 + $0x1d1] sm:$0xff]
  %v1388 = vld [vmem:[#allocation2 + $0x1e1] sm:$0xff]
  %v1389 = vld [vmem:[#allocation2 + $0x1e9] sm:$0xff]
  %v1390 = vld [vmem:[#allocation2 + $0x1f9] sm:$0xff]
  %v1391 = vld [vmem:[#allocation2 + $0x201] sm:$0xff]
  %v1392 = vld [vmem:[#allocation2 + $0x211] sm:$0xff]
  %v1393 = vld [vmem:[#allocation2 + $0x219] sm:$0xff]
  %v1394 = vld [vmem:[#allocation2 + $0x229] sm:$0xff]
  %v1395 = vld [vmem:[#allocation2 + $0x231] sm:$0xff]
  %v1396 = vld [vmem:[#allocation2 + $0x241] sm:$0xff]
  %v1397 = vld [vmem:[#allocation2 + $0x249] sm:$0xff]
  %v1398 = vld [vmem:[#allocation2 + $0x259] sm:$0xff]
  %v1399 = vld [vmem:[#allocation2 + $0x261] sm:$0xff]
  %v1400 = vld [vmem:[#allocation2 + $0x271] sm:$0xff]
  %v1401 = vld [vmem:[#allocation2 + $0x279] sm:$0xff]
  %v1402 = vld [vmem:[#allocation2 + $0x289] sm:$0xff]
  %v1403 = vld [vmem:[#allocation2 + $0x291] sm:$0xff]
  %v1404 = vld [vmem:[#allocation2 + $0x2a1] sm:$0xff]
  %v1405 = vld [vmem:[#allocation2 + $0x2a9] sm:$0xff]
  %v1406 = vld [vmem:[#allocation2 + $0x2b9] sm:$0xff]
  %v1407 = vld [vmem:[#allocation2 + $0x2c1] sm:$0xff]
  %v1408 = vld [vmem:[#allocation2 + $0x2d1] sm:$0xff]
  %v1409 = vld [vmem:[#allocation2 + $0x2d9] sm:$0xff]
  %v1410 = vld [vmem:[#allocation2 + $0x2e9] sm:$0xff]
  %v1411 = vld [vmem:[#allocation2 + $0x2f1] sm:$0xff]
  %v1412 = vld [vmem:[#allocation2 + $0x301] sm:$0xff]
  %v1413 = vld [vmem:[#allocation2 + $0x309] sm:$0xff]
  %v1414 = vld [vmem:[#allocation2 + $0x319] sm:$0xff]
  %v1415 = vld [vmem:[#allocation2 + $0x321] sm:$0xff]
  %1480 = vrot.lane.b32.xlu0 %v1352, 4
  %v1481 = vpop.permute.xlu0 %1480
  %1482 = vrot.lane.b32.xlu0 %v1353, 4
  %v1483 = vpop.permute.xlu0 %1482
  %1484 = vrot.lane.b32.xlu0 %v1354, 4
  %v1485 = vpop.permute.xlu0 %1484
  %1486 = vrot.lane.b32.xlu0 %v1355, 4
  %v1487 = vpop.permute.xlu0 %1486
  %1488 = vrot.lane.b32.xlu0 %v1356, 4
  %v1489 = vpop.permute.xlu0 %1488
  %1490 = vrot.lane.b32.xlu0 %v1357, 4
  %v1491 = vpop.permute.xlu0 %1490
  %1492 = vrot.lane.b32.xlu0 %v1358, 4
  %v1493 = vpop.permute.xlu0 %1492
  %1494 = vrot.lane.b32.xlu0 %v1359, 4
  %v1495 = vpop.permute.xlu0 %1494
  %1496 = vrot.lane.b32.xlu0 %v1360, 4
  %v1497 = vpop.permute.xlu0 %1496
  %1498 = vrot.lane.b32.xlu0 %v1361, 4
  %v1499 = vpop.permute.xlu0 %1498
  %1500 = vrot.lane.b32.xlu0 %v1362, 4
  %v1501 = vpop.permute.xlu0 %1500
  %1502 = vrot.lane.b32.xlu0 %v1363, 4
  %v1503 = vpop.permute.xlu0 %1502
  %1504 = vrot.lane.b32.xlu0 %v1364, 4
  %v1505 = vpop.permute.xlu0 %1504
  %1506 = vrot.lane.b32.xlu0 %v1365, 4
  %v1507 = vpop.permute.xlu0 %1506
  %1508 = vrot.lane.b32.xlu0 %v1366, 4
  %v1509 = vpop.permute.xlu0 %1508
  %1510 = vrot.lane.b32.xlu0 %v1367, 4
  %v1511 = vpop.permute.xlu0 %1510
  %1512 = vrot.lane.b32.xlu0 %v1368, 4
  %v1513 = vpop.permute.xlu0 %1512
  %1514 = vrot.lane.b32.xlu0 %v1369, 4
  %v1515 = vpop.permute.xlu0 %1514
  %1516 = vrot.lane.b32.xlu0 %v1370, 4
  %v1517 = vpop.permute.xlu0 %1516
  %1518 = vrot.lane.b32.xlu0 %v1371, 4
  %v1519 = vpop.permute.xlu0 %1518
  %1520 = vrot.lane.b32.xlu0 %v1372, 4
  %v1521 = vpop.permute.xlu0 %1520
  %1522 = vrot.lane.b32.xlu0 %v1373, 4
  %v1523 = vpop.permute.xlu0 %1522
  %1524 = vrot.lane.b32.xlu0 %v1374, 4
  %v1525 = vpop.permute.xlu0 %1524
  %1526 = vrot.lane.b32.xlu0 %v1375, 4
  %v1527 = vpop.permute.xlu0 %1526
  %1528 = vrot.lane.b32.xlu0 %v1376, 4
  %v1529 = vpop.permute.xlu0 %1528
  %1530 = vrot.lane.b32.xlu0 %v1377, 4
  %v1531 = vpop.permute.xlu0 %1530
  %1532 = vrot.lane.b32.xlu0 %v1378, 4
  %v1533 = vpop.permute.xlu0 %1532
  %1534 = vrot.lane.b32.xlu0 %v1379, 4
  %v1535 = vpop.permute.xlu0 %1534
  %1536 = vrot.lane.b32.xlu0 %v1380, 4
  %v1537 = vpop.permute.xlu0 %1536
  %1538 = vrot.lane.b32.xlu0 %v1381, 4
  %v1539 = vpop.permute.xlu0 %1538
  %1540 = vrot.lane.b32.xlu0 %v1382, 4
  %v1541 = vpop.permute.xlu0 %1540
  %1542 = vrot.lane.b32.xlu0 %v1383, 4
  %v1543 = vpop.permute.xlu0 %1542
  %1544 = vrot.lane.b32.xlu0 %v1384, 4
  %v1545 = vpop.permute.xlu0 %1544
  %1546 = vrot.lane.b32.xlu0 %v1385, 4
  %v1547 = vpop.permute.xlu0 %1546
  %1548 = vrot.lane.b32.xlu0 %v1386, 4
  %v1549 = vpop.permute.xlu0 %1548
  %1550 = vrot.lane.b32.xlu0 %v1387, 4
  %v1551 = vpop.permute.xlu0 %1550
  %1552 = vrot.lane.b32.xlu0 %v1388, 4
  %v1553 = vpop.permute.xlu0 %1552
  %1554 = vrot.lane.b32.xlu0 %v1389, 4
  %v1555 = vpop.permute.xlu0 %1554
  %1556 = vrot.lane.b32.xlu0 %v1390, 4
  %v1557 = vpop.permute.xlu0 %1556
  %1558 = vrot.lane.b32.xlu0 %v1391, 4
  %v1559 = vpop.permute.xlu0 %1558
  %1560 = vrot.lane.b32.xlu0 %v1392, 4
  %v1561 = vpop.permute.xlu0 %1560
  %1562 = vrot.lane.b32.xlu0 %v1393, 4
  %v1563 = vpop.permute.xlu0 %1562
  %1564 = vrot.lane.b32.xlu0 %v1394, 4
  %v1565 = vpop.permute.xlu0 %1564
  %1566 = vrot.lane.b32.xlu0 %v1395, 4
  %v1567 = vpop.permute.xlu0 %1566
  %1568 = vrot.lane.b32.xlu0 %v1396, 4
  %v1569 = vpop.permute.xlu0 %1568
  %1570 = vrot.lane.b32.xlu0 %v1397, 4
  %v1571 = vpop.permute.xlu0 %1570
  %1572 = vrot.lane.b32.xlu0 %v1398, 4
  %v1573 = vpop.permute.xlu0 %1572
  %1574 = vrot.lane.b32.xlu0 %v1399, 4
  %v1575 = vpop.permute.xlu0 %1574
  %1576 = vrot.lane.b32.xlu0 %v1400, 4
  %v1577 = vpop.permute.xlu0 %1576
  %1578 = vrot.lane.b32.xlu0 %v1401, 4
  %v1579 = vpop.permute.xlu0 %1578
  %1580 = vrot.lane.b32.xlu0 %v1402, 4
  %v1581 = vpop.permute.xlu0 %1580
  %1582 = vrot.lane.b32.xlu0 %v1403, 4
  %v1583 = vpop.permute.xlu0 %1582
  %1584 = vrot.lane.b32.xlu0 %v1404, 4
  %v1585 = vpop.permute.xlu0 %1584
  %1586 = vrot.lane.b32.xlu0 %v1405, 4
  %v1587 = vpop.permute.xlu0 %1586
  %1588 = vrot.lane.b32.xlu0 %v1406, 4
  %v1589 = vpop.permute.xlu0 %1588
  %1590 = vrot.lane.b32.xlu0 %v1407, 4
  %v1591 = vpop.permute.xlu0 %1590
  %1592 = vrot.lane.b32.xlu0 %v1408, 4
  %v1593 = vpop.permute.xlu0 %1592
  %1594 = vrot.lane.b32.xlu0 %v1409, 4
  %v1595 = vpop.permute.xlu0 %1594
  %1596 = vrot.lane.b32.xlu0 %v1410, 4
  %v1597 = vpop.permute.xlu0 %1596
  %1598 = vrot.lane.b32.xlu0 %v1411, 4
  %v1599 = vpop.permute.xlu0 %1598
  %1600 = vrot.lane.b32.xlu0 %v1412, 4
  %v1601 = vpop.permute.xlu0 %1600
  %1602 = vrot.lane.b32.xlu0 %v1413, 4
  %v1603 = vpop.permute.xlu0 %1602
  %1604 = vrot.lane.b32.xlu0 %v1414, 4
  %v1605 = vpop.permute.xlu0 %1604
  %1606 = vrot.lane.b32.xlu0 %v1415, 4
  %v1607 = vpop.permute.xlu0 %1606
  %vm1672 = vcmask 64544
  %1673 = vst.msk [vmem:[#allocation3] sm:$0xff] %vm1672, %v1481
  %1674 = vst.msk [vmem:[#allocation3 + $0x8] sm:$0xff] %vm1672, %v1483
  %1675 = vst.msk [vmem:[#allocation3 + $0x10] sm:$0xff] %vm1672, %v1485
  %1676 = vst.msk [vmem:[#allocation3 + $0x18] sm:$0xff] %vm1672, %v1487
  %1677 = vst.msk [vmem:[#allocation3 + $0x20] sm:$0xff] %vm1672, %v1489
  %1678 = vst.msk [vmem:[#allocation3 + $0x28] sm:$0xff] %vm1672, %v1491
  %1679 = vst.msk [vmem:[#allocation3 + $0x30] sm:$0xff] %vm1672, %v1493
  %1680 = vst.msk [vmem:[#allocation3 + $0x38] sm:$0xff] %vm1672, %v1495
  %1681 = vst.msk [vmem:[#allocation3 + $0x40] sm:$0xff] %vm1672, %v1497
  %1682 = vst.msk [vmem:[#allocation3 + $0x48] sm:$0xff] %vm1672, %v1499
  %1683 = vst.msk [vmem:[#allocation3 + $0x50] sm:$0xff] %vm1672, %v1501
  %1684 = vst.msk [vmem:[#allocation3 + $0x58] sm:$0xff] %vm1672, %v1503
  %1685 = vst.msk [vmem:[#allocation3 + $0x60] sm:$0xff] %vm1672, %v1505
  %1686 = vst.msk [vmem:[#allocation3 + $0x68] sm:$0xff] %vm1672, %v1507
  %1687 = vst.msk [vmem:[#allocation3 + $0x70] sm:$0xff] %vm1672, %v1509
  %1688 = vst.msk [vmem:[#allocation3 + $0x78] sm:$0xff] %vm1672, %v1511
  %1689 = vst.msk [vmem:[#allocation3 + $0x80] sm:$0xff] %vm1672, %v1513
  %1690 = vst.msk [vmem:[#allocation3 + $0x88] sm:$0xff] %vm1672, %v1515
  %1691 = vst.msk [vmem:[#allocation3 + $0x90] sm:$0xff] %vm1672, %v1517
  %1692 = vst.msk [vmem:[#allocation3 + $0x98] sm:$0xff] %vm1672, %v1519
  %1693 = vst.msk [vmem:[#allocation3 + $0xa0] sm:$0xff] %vm1672, %v1521
  %1694 = vst.msk [vmem:[#allocation3 + $0xa8] sm:$0xff] %vm1672, %v1523
  %1695 = vst.msk [vmem:[#allocation3 + $0xb0] sm:$0xff] %vm1672, %v1525
  %1696 = vst.msk [vmem:[#allocation3 + $0xb8] sm:$0xff] %vm1672, %v1527
  %1697 = vst.msk [vmem:[#allocation3 + $0xc0] sm:$0xff] %vm1672, %v1529
  %1698 = vst.msk [vmem:[#allocation3 + $0xc8] sm:$0xff] %vm1672, %v1531
  %1699 = vst.msk [vmem:[#allocation3 + $0xd0] sm:$0xff] %vm1672, %v1533
  %1700 = vst.msk [vmem:[#allocation3 + $0xd8] sm:$0xff] %vm1672, %v1535
  %1701 = vst.msk [vmem:[#allocation3 + $0xe0] sm:$0xff] %vm1672, %v1537
  %1702 = vst.msk [vmem:[#allocation3 + $0xe8] sm:$0xff] %vm1672, %v1539
  %1703 = vst.msk [vmem:[#allocation3 + $0xf0] sm:$0xff] %vm1672, %v1541
  %1704 = vst.msk [vmem:[#allocation3 + $0xf8] sm:$0xff] %vm1672, %v1543
  %1705 = vst.msk [vmem:[#allocation3 + $0x100] sm:$0xff] %vm1672, %v1545
  %1706 = vst.msk [vmem:[#allocation3 + $0x108] sm:$0xff] %vm1672, %v1547
  %1707 = vst.msk [vmem:[#allocation3 + $0x110] sm:$0xff] %vm1672, %v1549
  %1708 = vst.msk [vmem:[#allocation3 + $0x118] sm:$0xff] %vm1672, %v1551
  %1709 = vst.msk [vmem:[#allocation3 + $0x120] sm:$0xff] %vm1672, %v1553
  %1710 = vst.msk [vmem:[#allocation3 + $0x128] sm:$0xff] %vm1672, %v1555
  %1711 = vst.msk [vmem:[#allocation3 + $0x130] sm:$0xff] %vm1672, %v1557
  %1712 = vst.msk [vmem:[#allocation3 + $0x138] sm:$0xff] %vm1672, %v1559
  %1713 = vst.msk [vmem:[#allocation3 + $0x140] sm:$0xff] %vm1672, %v1561
  %1714 = vst.msk [vmem:[#allocation3 + $0x148] sm:$0xff] %vm1672, %v1563
  %1715 = vst.msk [vmem:[#allocation3 + $0x150] sm:$0xff] %vm1672, %v1565
  %1716 = vst.msk [vmem:[#allocation3 + $0x158] sm:$0xff] %vm1672, %v1567
  %1717 = vst.msk [vmem:[#allocation3 + $0x160] sm:$0xff] %vm1672, %v1569
  %1718 = vst.msk [vmem:[#allocation3 + $0x168] sm:$0xff] %vm1672, %v1571
  %1719 = vst.msk [vmem:[#allocation3 + $0x170] sm:$0xff] %vm1672, %v1573
  %1720 = vst.msk [vmem:[#allocation3 + $0x178] sm:$0xff] %vm1672, %v1575
  %1721 = vst.msk [vmem:[#allocation3 + $0x180] sm:$0xff] %vm1672, %v1577
  %1722 = vst.msk [vmem:[#allocation3 + $0x188] sm:$0xff] %vm1672, %v1579
  %1723 = vst.msk [vmem:[#allocation3 + $0x190] sm:$0xff] %vm1672, %v1581
  %1724 = vst.msk [vmem:[#allocation3 + $0x198] sm:$0xff] %vm1672, %v1583
  %1725 = vst.msk [vmem:[#allocation3 + $0x1a0] sm:$0xff] %vm1672, %v1585
  %1726 = vst.msk [vmem:[#allocation3 + $0x1a8] sm:$0xff] %vm1672, %v1587
  %1727 = vst.msk [vmem:[#allocation3 + $0x1b0] sm:$0xff] %vm1672, %v1589
  %1728 = vst.msk [vmem:[#allocation3 + $0x1b8] sm:$0xff] %vm1672, %v1591
  %1729 = vst.msk [vmem:[#allocation3 + $0x1c0] sm:$0xff] %vm1672, %v1593
  %1730 = vst.msk [vmem:[#allocation3 + $0x1c8] sm:$0xff] %vm1672, %v1595
  %1731 = vst.msk [vmem:[#allocation3 + $0x1d0] sm:$0xff] %vm1672, %v1597
  %1732 = vst.msk [vmem:[#allocation3 + $0x1d8] sm:$0xff] %vm1672, %v1599
  %1733 = vst.msk [vmem:[#allocation3 + $0x1e0] sm:$0xff] %vm1672, %v1601
  %1734 = vst.msk [vmem:[#allocation3 + $0x1e8] sm:$0xff] %vm1672, %v1603
  %1735 = vst.msk [vmem:[#allocation3 + $0x1f0] sm:$0xff] %vm1672, %v1605
  %1736 = vst.msk [vmem:[#allocation3 + $0x1f8] sm:$0xff] %vm1672, %v1607
  %v1737 = vld [vmem:[#allocation2 + $0x2] sm:$0xff]
  %v1738 = vld [vmem:[#allocation2 + $0xa] sm:$0xff]
  %v1739 = vld [vmem:[#allocation2 + $0x1a] sm:$0xff]
  %v1740 = vld [vmem:[#allocation2 + $0x22] sm:$0xff]
  %v1741 = vld [vmem:[#allocation2 + $0x32] sm:$0xff]
  %v1742 = vld [vmem:[#allocation2 + $0x3a] sm:$0xff]
  %v1743 = vld [vmem:[#allocation2 + $0x4a] sm:$0xff]
  %v1744 = vld [vmem:[#allocation2 + $0x52] sm:$0xff]
  %v1745 = vld [vmem:[#allocation2 + $0x62] sm:$0xff]
  %v1746 = vld [vmem:[#allocation2 + $0x6a] sm:$0xff]
  %v1747 = vld [vmem:[#allocation2 + $0x7a] sm:$0xff]
  %v1748 = vld [vmem:[#allocation2 + $0x82] sm:$0xff]
  %v1749 = vld [vmem:[#allocation2 + $0x92] sm:$0xff]
  %v1750 = vld [vmem:[#allocation2 + $0x9a] sm:$0xff]
  %v1751 = vld [vmem:[#allocation2 + $0xaa] sm:$0xff]
  %v1752 = vld [vmem:[#allocation2 + $0xb2] sm:$0xff]
  %v1753 = vld [vmem:[#allocation2 + $0xc2] sm:$0xff]
  %v1754 = vld [vmem:[#allocation2 + $0xca] sm:$0xff]
  %v1755 = vld [vmem:[#allocation2 + $0xda] sm:$0xff]
  %v1756 = vld [vmem:[#allocation2 + $0xe2] sm:$0xff]
  %v1757 = vld [vmem:[#allocation2 + $0xf2] sm:$0xff]
  %v1758 = vld [vmem:[#allocation2 + $0xfa] sm:$0xff]
  %v1759 = vld [vmem:[#allocation2 + $0x10a] sm:$0xff]
  %v1760 = vld [vmem:[#allocation2 + $0x112] sm:$0xff]
  %v1761 = vld [vmem:[#allocation2 + $0x122] sm:$0xff]
  %v1762 = vld [vmem:[#allocation2 + $0x12a] sm:$0xff]
  %v1763 = vld [vmem:[#allocation2 + $0x13a] sm:$0xff]
  %v1764 = vld [vmem:[#allocation2 + $0x142] sm:$0xff]
  %v1765 = vld [vmem:[#allocation2 + $0x152] sm:$0xff]
  %v1766 = vld [vmem:[#allocation2 + $0x15a] sm:$0xff]
  %v1767 = vld [vmem:[#allocation2 + $0x16a] sm:$0xff]
  %v1768 = vld [vmem:[#allocation2 + $0x172] sm:$0xff]
  %v1769 = vld [vmem:[#allocation2 + $0x1b2] sm:$0xff]
  %v1770 = vld [vmem:[#allocation2 + $0x1ba] sm:$0xff]
  %v1771 = vld [vmem:[#allocation2 + $0x1ca] sm:$0xff]
  %v1772 = vld [vmem:[#allocation2 + $0x1d2] sm:$0xff]
  %v1773 = vld [vmem:[#allocation2 + $0x1e2] sm:$0xff]
  %v1774 = vld [vmem:[#allocation2 + $0x1ea] sm:$0xff]
  %v1775 = vld [vmem:[#allocation2 + $0x1fa] sm:$0xff]
  %v1776 = vld [vmem:[#allocation2 + $0x202] sm:$0xff]
  %v1777 = vld [vmem:[#allocation2 + $0x212] sm:$0xff]
  %v1778 = vld [vmem:[#allocation2 + $0x21a] sm:$0xff]
  %v1779 = vld [vmem:[#allocation2 + $0x22a] sm:$0xff]
  %v1780 = vld [vmem:[#allocation2 + $0x232] sm:$0xff]
  %v1781 = vld [vmem:[#allocation2 + $0x242] sm:$0xff]
  %v1782 = vld [vmem:[#allocation2 + $0x24a] sm:$0xff]
  %v1783 = vld [vmem:[#allocation2 + $0x25a] sm:$0xff]
  %v1784 = vld [vmem:[#allocation2 + $0x262] sm:$0xff]
  %v1785 = vld [vmem:[#allocation2 + $0x272] sm:$0xff]
  %v1786 = vld [vmem:[#allocation2 + $0x27a] sm:$0xff]
  %v1787 = vld [vmem:[#allocation2 + $0x28a] sm:$0xff]
  %v1788 = vld [vmem:[#allocation2 + $0x292] sm:$0xff]
  %v1789 = vld [vmem:[#allocation2 + $0x2a2] sm:$0xff]
  %v1790 = vld [vmem:[#allocation2 + $0x2aa] sm:$0xff]
  %v1791 = vld [vmem:[#allocation2 + $0x2ba] sm:$0xff]
  %v1792 = vld [vmem:[#allocation2 + $0x2c2] sm:$0xff]
  %v1793 = vld [vmem:[#allocation2 + $0x2d2] sm:$0xff]
  %v1794 = vld [vmem:[#allocation2 + $0x2da] sm:$0xff]
  %v1795 = vld [vmem:[#allocation2 + $0x2ea] sm:$0xff]
  %v1796 = vld [vmem:[#allocation2 + $0x2f2] sm:$0xff]
  %v1797 = vld [vmem:[#allocation2 + $0x302] sm:$0xff]
  %v1798 = vld [vmem:[#allocation2 + $0x30a] sm:$0xff]
  %v1799 = vld [vmem:[#allocation2 + $0x31a] sm:$0xff]
  %v1800 = vld [vmem:[#allocation2 + $0x322] sm:$0xff]
  %1865 = vrot.lane.b32.xlu0 %v1737, 8
  %v1866 = vpop.permute.xlu0 %1865
  %1867 = vrot.lane.b32.xlu0 %v1738, 8
  %v1868 = vpop.permute.xlu0 %1867
  %1869 = vrot.lane.b32.xlu0 %v1739, 8
  %v1870 = vpop.permute.xlu0 %1869
  %1871 = vrot.lane.b32.xlu0 %v1740, 8
  %v1872 = vpop.permute.xlu0 %1871
  %1873 = vrot.lane.b32.xlu0 %v1741, 8
  %v1874 = vpop.permute.xlu0 %1873
  %1875 = vrot.lane.b32.xlu0 %v1742, 8
  %v1876 = vpop.permute.xlu0 %1875
  %1877 = vrot.lane.b32.xlu0 %v1743, 8
  %v1878 = vpop.permute.xlu0 %1877
  %1879 = vrot.lane.b32.xlu0 %v1744, 8
  %v1880 = vpop.permute.xlu0 %1879
  %1881 = vrot.lane.b32.xlu0 %v1745, 8
  %v1882 = vpop.permute.xlu0 %1881
  %1883 = vrot.lane.b32.xlu0 %v1746, 8
  %v1884 = vpop.permute.xlu0 %1883
  %1885 = vrot.lane.b32.xlu0 %v1747, 8
  %v1886 = vpop.permute.xlu0 %1885
  %1887 = vrot.lane.b32.xlu0 %v1748, 8
  %v1888 = vpop.permute.xlu0 %1887
  %1889 = vrot.lane.b32.xlu0 %v1749, 8
  %v1890 = vpop.permute.xlu0 %1889
  %1891 = vrot.lane.b32.xlu0 %v1750, 8
  %v1892 = vpop.permute.xlu0 %1891
  %1893 = vrot.lane.b32.xlu0 %v1751, 8
  %v1894 = vpop.permute.xlu0 %1893
  %1895 = vrot.lane.b32.xlu0 %v1752, 8
  %v1896 = vpop.permute.xlu0 %1895
  %1897 = vrot.lane.b32.xlu0 %v1753, 8
  %v1898 = vpop.permute.xlu0 %1897
  %1899 = vrot.lane.b32.xlu0 %v1754, 8
  %v1900 = vpop.permute.xlu0 %1899
  %1901 = vrot.lane.b32.xlu0 %v1755, 8
  %v1902 = vpop.permute.xlu0 %1901
  %1903 = vrot.lane.b32.xlu0 %v1756, 8
  %v1904 = vpop.permute.xlu0 %1903
  %1905 = vrot.lane.b32.xlu0 %v1757, 8
  %v1906 = vpop.permute.xlu0 %1905
  %1907 = vrot.lane.b32.xlu0 %v1758, 8
  %v1908 = vpop.permute.xlu0 %1907
  %1909 = vrot.lane.b32.xlu0 %v1759, 8
  %v1910 = vpop.permute.xlu0 %1909
  %1911 = vrot.lane.b32.xlu0 %v1760, 8
  %v1912 = vpop.permute.xlu0 %1911
  %1913 = vrot.lane.b32.xlu0 %v1761, 8
  %v1914 = vpop.permute.xlu0 %1913
  %1915 = vrot.lane.b32.xlu0 %v1762, 8
  %v1916 = vpop.permute.xlu0 %1915
  %1917 = vrot.lane.b32.xlu0 %v1763, 8
  %v1918 = vpop.permute.xlu0 %1917
  %1919 = vrot.lane.b32.xlu0 %v1764, 8
  %v1920 = vpop.permute.xlu0 %1919
  %1921 = vrot.lane.b32.xlu0 %v1765, 8
  %v1922 = vpop.permute.xlu0 %1921
  %1923 = vrot.lane.b32.xlu0 %v1766, 8
  %v1924 = vpop.permute.xlu0 %1923
  %1925 = vrot.lane.b32.xlu0 %v1767, 8
  %v1926 = vpop.permute.xlu0 %1925
  %1927 = vrot.lane.b32.xlu0 %v1768, 8
  %v1928 = vpop.permute.xlu0 %1927
  %1929 = vrot.lane.b32.xlu0 %v1769, 8
  %v1930 = vpop.permute.xlu0 %1929
  %1931 = vrot.lane.b32.xlu0 %v1770, 8
  %v1932 = vpop.permute.xlu0 %1931
  %1933 = vrot.lane.b32.xlu0 %v1771, 8
  %v1934 = vpop.permute.xlu0 %1933
  %1935 = vrot.lane.b32.xlu0 %v1772, 8
  %v1936 = vpop.permute.xlu0 %1935
  %1937 = vrot.lane.b32.xlu0 %v1773, 8
  %v1938 = vpop.permute.xlu0 %1937
  %1939 = vrot.lane.b32.xlu0 %v1774, 8
  %v1940 = vpop.permute.xlu0 %1939
  %1941 = vrot.lane.b32.xlu0 %v1775, 8
  %v1942 = vpop.permute.xlu0 %1941
  %1943 = vrot.lane.b32.xlu0 %v1776, 8
  %v1944 = vpop.permute.xlu0 %1943
  %1945 = vrot.lane.b32.xlu0 %v1777, 8
  %v1946 = vpop.permute.xlu0 %1945
  %1947 = vrot.lane.b32.xlu0 %v1778, 8
  %v1948 = vpop.permute.xlu0 %1947
  %1949 = vrot.lane.b32.xlu0 %v1779, 8
  %v1950 = vpop.permute.xlu0 %1949
  %1951 = vrot.lane.b32.xlu0 %v1780, 8
  %v1952 = vpop.permute.xlu0 %1951
  %1953 = vrot.lane.b32.xlu0 %v1781, 8
  %v1954 = vpop.permute.xlu0 %1953
  %1955 = vrot.lane.b32.xlu0 %v1782, 8
  %v1956 = vpop.permute.xlu0 %1955
  %1957 = vrot.lane.b32.xlu0 %v1783, 8
  %v1958 = vpop.permute.xlu0 %1957
  %1959 = vrot.lane.b32.xlu0 %v1784, 8
  %v1960 = vpop.permute.xlu0 %1959
  %1961 = vrot.lane.b32.xlu0 %v1785, 8
  %v1962 = vpop.permute.xlu0 %1961
  %1963 = vrot.lane.b32.xlu0 %v1786, 8
  %v1964 = vpop.permute.xlu0 %1963
  %1965 = vrot.lane.b32.xlu0 %v1787, 8
  %v1966 = vpop.permute.xlu0 %1965
  %1967 = vrot.lane.b32.xlu0 %v1788, 8
  %v1968 = vpop.permute.xlu0 %1967
  %1969 = vrot.lane.b32.xlu0 %v1789, 8
  %v1970 = vpop.permute.xlu0 %1969
  %1971 = vrot.lane.b32.xlu0 %v1790, 8
  %v1972 = vpop.permute.xlu0 %1971
  %1973 = vrot.lane.b32.xlu0 %v1791, 8
  %v1974 = vpop.permute.xlu0 %1973
  %1975 = vrot.lane.b32.xlu0 %v1792, 8
  %v1976 = vpop.permute.xlu0 %1975
  %1977 = vrot.lane.b32.xlu0 %v1793, 8
  %v1978 = vpop.permute.xlu0 %1977
  %1979 = vrot.lane.b32.xlu0 %v1794, 8
  %v1980 = vpop.permute.xlu0 %1979
  %1981 = vrot.lane.b32.xlu0 %v1795, 8
  %v1982 = vpop.permute.xlu0 %1981
  %1983 = vrot.lane.b32.xlu0 %v1796, 8
  %v1984 = vpop.permute.xlu0 %1983
  %1985 = vrot.lane.b32.xlu0 %v1797, 8
  %v1986 = vpop.permute.xlu0 %1985
  %1987 = vrot.lane.b32.xlu0 %v1798, 8
  %v1988 = vpop.permute.xlu0 %1987
  %1989 = vrot.lane.b32.xlu0 %v1799, 8
  %v1990 = vpop.permute.xlu0 %1989
  %1991 = vrot.lane.b32.xlu0 %v1800, 8
  %v1992 = vpop.permute.xlu0 %1991
  %vm2057 = vcmask 97344
  %2058 = vst.msk [vmem:[#allocation3] sm:$0xff] %vm2057, %v1866
  %2059 = vst.msk [vmem:[#allocation3 + $0x8] sm:$0xff] %vm2057, %v1868
  %2060 = vst.msk [vmem:[#allocation3 + $0x10] sm:$0xff] %vm2057, %v1870
  %2061 = vst.msk [vmem:[#allocation3 + $0x18] sm:$0xff] %vm2057, %v1872
  %2062 = vst.msk [vmem:[#allocation3 + $0x20] sm:$0xff] %vm2057, %v1874
  %2063 = vst.msk [vmem:[#allocation3 + $0x28] sm:$0xff] %vm2057, %v1876
  %2064 = vst.msk [vmem:[#allocation3 + $0x30] sm:$0xff] %vm2057, %v1878
  %2065 = vst.msk [vmem:[#allocation3 + $0x38] sm:$0xff] %vm2057, %v1880
  %2066 = vst.msk [vmem:[#allocation3 + $0x40] sm:$0xff] %vm2057, %v1882
  %2067 = vst.msk [vmem:[#allocation3 + $0x48] sm:$0xff] %vm2057, %v1884
  %2068 = vst.msk [vmem:[#allocation3 + $0x50] sm:$0xff] %vm2057, %v1886
  %2069 = vst.msk [vmem:[#allocation3 + $0x58] sm:$0xff] %vm2057, %v1888
  %2070 = vst.msk [vmem:[#allocation3 + $0x60] sm:$0xff] %vm2057, %v1890
  %2071 = vst.msk [vmem:[#allocation3 + $0x68] sm:$0xff] %vm2057, %v1892
  %2072 = vst.msk [vmem:[#allocation3 + $0x70] sm:$0xff] %vm2057, %v1894
  %2073 = vst.msk [vmem:[#allocation3 + $0x78] sm:$0xff] %vm2057, %v1896
  %2074 = vst.msk [vmem:[#allocation3 + $0x80] sm:$0xff] %vm2057, %v1898
  %2075 = vst.msk [vmem:[#allocation3 + $0x88] sm:$0xff] %vm2057, %v1900
  %2076 = vst.msk [vmem:[#allocation3 + $0x90] sm:$0xff] %vm2057, %v1902
  %2077 = vst.msk [vmem:[#allocation3 + $0x98] sm:$0xff] %vm2057, %v1904
  %2078 = vst.msk [vmem:[#allocation3 + $0xa0] sm:$0xff] %vm2057, %v1906
  %2079 = vst.msk [vmem:[#allocation3 + $0xa8] sm:$0xff] %vm2057, %v1908
  %2080 = vst.msk [vmem:[#allocation3 + $0xb0] sm:$0xff] %vm2057, %v1910
  %2081 = vst.msk [vmem:[#allocation3 + $0xb8] sm:$0xff] %vm2057, %v1912
  %2082 = vst.msk [vmem:[#allocation3 + $0xc0] sm:$0xff] %vm2057, %v1914
  %2083 = vst.msk [vmem:[#allocation3 + $0xc8] sm:$0xff] %vm2057, %v1916
  %2084 = vst.msk [vmem:[#allocation3 + $0xd0] sm:$0xff] %vm2057, %v1918
  %2085 = vst.msk [vmem:[#allocation3 + $0xd8] sm:$0xff] %vm2057, %v1920
  %2086 = vst.msk [vmem:[#allocation3 + $0xe0] sm:$0xff] %vm2057, %v1922
  %2087 = vst.msk [vmem:[#allocation3 + $0xe8] sm:$0xff] %vm2057, %v1924
  %2088 = vst.msk [vmem:[#allocation3 + $0xf0] sm:$0xff] %vm2057, %v1926
  %2089 = vst.msk [vmem:[#allocation3 + $0xf8] sm:$0xff] %vm2057, %v1928
  %2090 = vst.msk [vmem:[#allocation3 + $0x100] sm:$0xff] %vm2057, %v1930
  %2091 = vst.msk [vmem:[#allocation3 + $0x108] sm:$0xff] %vm2057, %v1932
  %2092 = vst.msk [vmem:[#allocation3 + $0x110] sm:$0xff] %vm2057, %v1934
  %2093 = vst.msk [vmem:[#allocation3 + $0x118] sm:$0xff] %vm2057, %v1936
  %2094 = vst.msk [vmem:[#allocation3 + $0x120] sm:$0xff] %vm2057, %v1938
  %2095 = vst.msk [vmem:[#allocation3 + $0x128] sm:$0xff] %vm2057, %v1940
  %2096 = vst.msk [vmem:[#allocation3 + $0x130] sm:$0xff] %vm2057, %v1942
  %2097 = vst.msk [vmem:[#allocation3 + $0x138] sm:$0xff] %vm2057, %v1944
  %2098 = vst.msk [vmem:[#allocation3 + $0x140] sm:$0xff] %vm2057, %v1946
  %2099 = vst.msk [vmem:[#allocation3 + $0x148] sm:$0xff] %vm2057, %v1948
  %2100 = vst.msk [vmem:[#allocation3 + $0x150] sm:$0xff] %vm2057, %v1950
  %2101 = vst.msk [vmem:[#allocation3 + $0x158] sm:$0xff] %vm2057, %v1952
  %2102 = vst.msk [vmem:[#allocation3 + $0x160] sm:$0xff] %vm2057, %v1954
  %2103 = vst.msk [vmem:[#allocation3 + $0x168] sm:$0xff] %vm2057, %v1956
  %2104 = vst.msk [vmem:[#allocation3 + $0x170] sm:$0xff] %vm2057, %v1958
  %2105 = vst.msk [vmem:[#allocation3 + $0x178] sm:$0xff] %vm2057, %v1960
  %2106 = vst.msk [vmem:[#allocation3 + $0x180] sm:$0xff] %vm2057, %v1962
  %2107 = vst.msk [vmem:[#allocation3 + $0x188] sm:$0xff] %vm2057, %v1964
  %2108 = vst.msk [vmem:[#allocation3 + $0x190] sm:$0xff] %vm2057, %v1966
  %2109 = vst.msk [vmem:[#allocation3 + $0x198] sm:$0xff] %vm2057, %v1968
  %2110 = vst.msk [vmem:[#allocation3 + $0x1a0] sm:$0xff] %vm2057, %v1970
  %2111 = vst.msk [vmem:[#allocation3 + $0x1a8] sm:$0xff] %vm2057, %v1972
  %2112 = vst.msk [vmem:[#allocation3 + $0x1b0] sm:$0xff] %vm2057, %v1974
  %2113 = vst.msk [vmem:[#allocation3 + $0x1b8] sm:$0xff] %vm2057, %v1976
  %2114 = vst.msk [vmem:[#allocation3 + $0x1c0] sm:$0xff] %vm2057, %v1978
  %2115 = vst.msk [vmem:[#allocation3 + $0x1c8] sm:$0xff] %vm2057, %v1980
  %2116 = vst.msk [vmem:[#allocation3 + $0x1d0] sm:$0xff] %vm2057, %v1982
  %2117 = vst.msk [vmem:[#allocation3 + $0x1d8] sm:$0xff] %vm2057, %v1984
  %2118 = vst.msk [vmem:[#allocation3 + $0x1e0] sm:$0xff] %vm2057, %v1986
  %2119 = vst.msk [vmem:[#allocation3 + $0x1e8] sm:$0xff] %vm2057, %v1988
  %2120 = vst.msk [vmem:[#allocation3 + $0x1f0] sm:$0xff] %vm2057, %v1990
  %2121 = vst.msk [vmem:[#allocation3 + $0x1f8] sm:$0xff] %vm2057, %v1992
  %v2122 = vld [vmem:[%s1159] sm:$0xff]
  %v2123 = vld [vmem:[%s1159 + $0x8] sm:$0xff]
  %v2124 = vld [vmem:[%s1159 + $0x18] sm:$0xff]
  %v2125 = vld [vmem:[%s1159 + $0x20] sm:$0xff]
  %v2126 = vld [vmem:[%s1159 + $0x30] sm:$0xff]
  %v2127 = vld [vmem:[%s1159 + $0x38] sm:$0xff]
  %v2128 = vld [vmem:[%s1159 + $0x48] sm:$0xff]
  %v2129 = vld [vmem:[%s1159 + $0x50] sm:$0xff]
  %v2130 = vld [vmem:[%s1159 + $0x60] sm:$0xff]
  %v2131 = vld [vmem:[%s1159 + $0x68] sm:$0xff]
  %v2132 = vld [vmem:[%s1159 + $0x78] sm:$0xff]
  %v2133 = vld [vmem:[%s1159 + $0x80] sm:$0xff]
  %v2134 = vld [vmem:[%s1159 + $0x90] sm:$0xff]
  %v2135 = vld [vmem:[%s1159 + $0x98] sm:$0xff]
  %v2136 = vld [vmem:[%s1159 + $0xa8] sm:$0xff]
  %v2137 = vld [vmem:[%s1159 + $0xb0] sm:$0xff]
  %v2138 = vld [vmem:[%s1159 + $0xc0] sm:$0xff]
  %v2139 = vld [vmem:[%s1159 + $0xc8] sm:$0xff]
  %v2140 = vld [vmem:[%s1159 + $0xd8] sm:$0xff]
  %v2141 = vld [vmem:[%s1159 + $0xe0] sm:$0xff]
  %v2142 = vld [vmem:[%s1159 + $0xf0] sm:$0xff]
  %v2143 = vld [vmem:[%s1159 + $0xf8] sm:$0xff]
  %v2144 = vld [vmem:[%s1159 + $0x108] sm:$0xff]
  %v2145 = vld [vmem:[%s1159 + $0x110] sm:$0xff]
  %v2146 = vld [vmem:[%s1159 + $0x120] sm:$0xff]
  %v2147 = vld [vmem:[%s1159 + $0x128] sm:$0xff]
  %v2148 = vld [vmem:[%s1159 + $0x138] sm:$0xff]
  %v2149 = vld [vmem:[%s1159 + $0x140] sm:$0xff]
  %v2150 = vld [vmem:[%s1159 + $0x150] sm:$0xff]
  %v2151 = vld [vmem:[%s1159 + $0x158] sm:$0xff]
  %v2152 = vld [vmem:[%s1159 + $0x168] sm:$0xff]
  %v2153 = vld [vmem:[%s1159 + $0x170] sm:$0xff]
  %v2154 = vld [vmem:[%s1159 + $0x1b0] sm:$0xff]
  %v2155 = vld [vmem:[%s1159 + $0x1b8] sm:$0xff]
  %v2156 = vld [vmem:[%s1159 + $0x1c8] sm:$0xff]
  %v2157 = vld [vmem:[%s1159 + $0x1d0] sm:$0xff]
  %v2158 = vld [vmem:[%s1159 + $0x1e0] sm:$0xff]
  %v2159 = vld [vmem:[%s1159 + $0x1e8] sm:$0xff]
  %v2160 = vld [vmem:[%s1159 + $0x1f8] sm:$0xff]
  %v2161 = vld [vmem:[%s1159 + $0x200] sm:$0xff]
  %v2162 = vld [vmem:[%s1159 + $0x210] sm:$0xff]
  %v2163 = vld [vmem:[%s1159 + $0x218] sm:$0xff]
  %v2164 = vld [vmem:[%s1159 + $0x228] sm:$0xff]
  %v2165 = vld [vmem:[%s1159 + $0x230] sm:$0xff]
  %v2166 = vld [vmem:[%s1159 + $0x240] sm:$0xff]
  %v2167 = vld [vmem:[%s1159 + $0x248] sm:$0xff]
  %v2168 = vld [vmem:[%s1159 + $0x258] sm:$0xff]
  %v2169 = vld [vmem:[%s1159 + $0x260] sm:$0xff]
  %v2170 = vld [vmem:[%s1159 + $0x270] sm:$0xff]
  %v2171 = vld [vmem:[%s1159 + $0x278] sm:$0xff]
  %v2172 = vld [vmem:[%s1159 + $0x288] sm:$0xff]
  %v2173 = vld [vmem:[%s1159 + $0x290] sm:$0xff]
  %v2174 = vld [vmem:[%s1159 + $0x2a0] sm:$0xff]
  %v2175 = vld [vmem:[%s1159 + $0x2a8] sm:$0xff]
  %v2176 = vld [vmem:[%s1159 + $0x2b8] sm:$0xff]
  %v2177 = vld [vmem:[%s1159 + $0x2c0] sm:$0xff]
  %v2178 = vld [vmem:[%s1159 + $0x2d0] sm:$0xff]
  %v2179 = vld [vmem:[%s1159 + $0x2d8] sm:$0xff]
  %v2180 = vld [vmem:[%s1159 + $0x2e8] sm:$0xff]
  %v2181 = vld [vmem:[%s1159 + $0x2f0] sm:$0xff]
  %v2182 = vld [vmem:[%s1159 + $0x300] sm:$0xff]
  %v2183 = vld [vmem:[%s1159 + $0x308] sm:$0xff]
  %v2184 = vld [vmem:[%s1159 + $0x318] sm:$0xff]
  %v2185 = vld [vmem:[%s1159 + $0x320] sm:$0xff]
  %2250 = vrot.lane.b32.xlu0 %v2122, 12
  %v2251 = vpop.permute.xlu0 %2250
  %2252 = vrot.lane.b32.xlu0 %v2123, 12
  %v2253 = vpop.permute.xlu0 %2252
  %2254 = vrot.lane.b32.xlu0 %v2124, 12
  %v2255 = vpop.permute.xlu0 %2254
  %2256 = vrot.lane.b32.xlu0 %v2125, 12
  %v2257 = vpop.permute.xlu0 %2256
  %2258 = vrot.lane.b32.xlu0 %v2126, 12
  %v2259 = vpop.permute.xlu0 %2258
  %2260 = vrot.lane.b32.xlu0 %v2127, 12
  %v2261 = vpop.permute.xlu0 %2260
  %2262 = vrot.lane.b32.xlu0 %v2128, 12
  %v2263 = vpop.permute.xlu0 %2262
  %2264 = vrot.lane.b32.xlu0 %v2129, 12
  %v2265 = vpop.permute.xlu0 %2264
  %2266 = vrot.lane.b32.xlu0 %v2130, 12
  %v2267 = vpop.permute.xlu0 %2266
  %2268 = vrot.lane.b32.xlu0 %v2131, 12
  %v2269 = vpop.permute.xlu0 %2268
  %2270 = vrot.lane.b32.xlu0 %v2132, 12
  %v2271 = vpop.permute.xlu0 %2270
  %2272 = vrot.lane.b32.xlu0 %v2133, 12
  %v2273 = vpop.permute.xlu0 %2272
  %2274 = vrot.lane.b32.xlu0 %v2134, 12
  %v2275 = vpop.permute.xlu0 %2274
  %2276 = vrot.lane.b32.xlu0 %v2135, 12
  %v2277 = vpop.permute.xlu0 %2276
  %2278 = vrot.lane.b32.xlu0 %v2136, 12
  %v2279 = vpop.permute.xlu0 %2278
  %2280 = vrot.lane.b32.xlu0 %v2137, 12
  %v2281 = vpop.permute.xlu0 %2280
  %2282 = vrot.lane.b32.xlu0 %v2138, 12
  %v2283 = vpop.permute.xlu0 %2282
  %2284 = vrot.lane.b32.xlu0 %v2139, 12
  %v2285 = vpop.permute.xlu0 %2284
  %2286 = vrot.lane.b32.xlu0 %v2140, 12
  %v2287 = vpop.permute.xlu0 %2286
  %2288 = vrot.lane.b32.xlu0 %v2141, 12
  %v2289 = vpop.permute.xlu0 %2288
  %2290 = vrot.lane.b32.xlu0 %v2142, 12
  %v2291 = vpop.permute.xlu0 %2290
  %2292 = vrot.lane.b32.xlu0 %v2143, 12
  %v2293 = vpop.permute.xlu0 %2292
  %2294 = vrot.lane.b32.xlu0 %v2144, 12
  %v2295 = vpop.permute.xlu0 %2294
  %2296 = vrot.lane.b32.xlu0 %v2145, 12
  %v2297 = vpop.permute.xlu0 %2296
  %2298 = vrot.lane.b32.xlu0 %v2146, 12
  %v2299 = vpop.permute.xlu0 %2298
  %2300 = vrot.lane.b32.xlu0 %v2147, 12
  %v2301 = vpop.permute.xlu0 %2300
  %2302 = vrot.lane.b32.xlu0 %v2148, 12
  %v2303 = vpop.permute.xlu0 %2302
  %2304 = vrot.lane.b32.xlu0 %v2149, 12
  %v2305 = vpop.permute.xlu0 %2304
  %2306 = vrot.lane.b32.xlu0 %v2150, 12
  %v2307 = vpop.permute.xlu0 %2306
  %2308 = vrot.lane.b32.xlu0 %v2151, 12
  %v2309 = vpop.permute.xlu0 %2308
  %2310 = vrot.lane.b32.xlu0 %v2152, 12
  %v2311 = vpop.permute.xlu0 %2310
  %2312 = vrot.lane.b32.xlu0 %v2153, 12
  %v2313 = vpop.permute.xlu0 %2312
  %2314 = vrot.lane.b32.xlu0 %v2154, 12
  %v2315 = vpop.permute.xlu0 %2314
  %2316 = vrot.lane.b32.xlu0 %v2155, 12
  %v2317 = vpop.permute.xlu0 %2316
  %2318 = vrot.lane.b32.xlu0 %v2156, 12
  %v2319 = vpop.permute.xlu0 %2318
  %2320 = vrot.lane.b32.xlu0 %v2157, 12
  %v2321 = vpop.permute.xlu0 %2320
  %2322 = vrot.lane.b32.xlu0 %v2158, 12
  %v2323 = vpop.permute.xlu0 %2322
  %2324 = vrot.lane.b32.xlu0 %v2159, 12
  %v2325 = vpop.permute.xlu0 %2324
  %2326 = vrot.lane.b32.xlu0 %v2160, 12
  %v2327 = vpop.permute.xlu0 %2326
  %2328 = vrot.lane.b32.xlu0 %v2161, 12
  %v2329 = vpop.permute.xlu0 %2328
  %2330 = vrot.lane.b32.xlu0 %v2162, 12
  %v2331 = vpop.permute.xlu0 %2330
  %2332 = vrot.lane.b32.xlu0 %v2163, 12
  %v2333 = vpop.permute.xlu0 %2332
  %2334 = vrot.lane.b32.xlu0 %v2164, 12
  %v2335 = vpop.permute.xlu0 %2334
  %2336 = vrot.lane.b32.xlu0 %v2165, 12
  %v2337 = vpop.permute.xlu0 %2336
  %2338 = vrot.lane.b32.xlu0 %v2166, 12
  %v2339 = vpop.permute.xlu0 %2338
  %2340 = vrot.lane.b32.xlu0 %v2167, 12
  %v2341 = vpop.permute.xlu0 %2340
  %2342 = vrot.lane.b32.xlu0 %v2168, 12
  %v2343 = vpop.permute.xlu0 %2342
  %2344 = vrot.lane.b32.xlu0 %v2169, 12
  %v2345 = vpop.permute.xlu0 %2344
  %2346 = vrot.lane.b32.xlu0 %v2170, 12
  %v2347 = vpop.permute.xlu0 %2346
  %2348 = vrot.lane.b32.xlu0 %v2171, 12
  %v2349 = vpop.permute.xlu0 %2348
  %2350 = vrot.lane.b32.xlu0 %v2172, 12
  %v2351 = vpop.permute.xlu0 %2350
  %2352 = vrot.lane.b32.xlu0 %v2173, 12
  %v2353 = vpop.permute.xlu0 %2352
  %2354 = vrot.lane.b32.xlu0 %v2174, 12
  %v2355 = vpop.permute.xlu0 %2354
  %2356 = vrot.lane.b32.xlu0 %v2175, 12
  %v2357 = vpop.permute.xlu0 %2356
  %2358 = vrot.lane.b32.xlu0 %v2176, 12
  %v2359 = vpop.permute.xlu0 %2358
  %2360 = vrot.lane.b32.xlu0 %v2177, 12
  %v2361 = vpop.permute.xlu0 %2360
  %2362 = vrot.lane.b32.xlu0 %v2178, 12
  %v2363 = vpop.permute.xlu0 %2362
  %2364 = vrot.lane.b32.xlu0 %v2179, 12
  %v2365 = vpop.permute.xlu0 %2364
  %2366 = vrot.lane.b32.xlu0 %v2180, 12
  %v2367 = vpop.permute.xlu0 %2366
  %2368 = vrot.lane.b32.xlu0 %v2181, 12
  %v2369 = vpop.permute.xlu0 %2368
  %2370 = vrot.lane.b32.xlu0 %v2182, 12
  %v2371 = vpop.permute.xlu0 %2370
  %2372 = vrot.lane.b32.xlu0 %v2183, 12
  %v2373 = vpop.permute.xlu0 %2372
  %2374 = vrot.lane.b32.xlu0 %v2184, 12
  %v2375 = vpop.permute.xlu0 %2374
  %2376 = vrot.lane.b32.xlu0 %v2185, 12
  %v2377 = vpop.permute.xlu0 %2376
  %vm2442 = vcmask 130144
  %2443 = vst.msk [vmem:[#allocation3] sm:$0xff] %vm2442, %v2251
  %2444 = vst.msk [vmem:[#allocation3 + $0x8] sm:$0xff] %vm2442, %v2253
  %2445 = vst.msk [vmem:[#allocation3 + $0x10] sm:$0xff] %vm2442, %v2255
  %2446 = vst.msk [vmem:[#allocation3 + $0x18] sm:$0xff] %vm2442, %v2257
  %2447 = vst.msk [vmem:[#allocation3 + $0x20] sm:$0xff] %vm2442, %v2259
  %2448 = vst.msk [vmem:[#allocation3 + $0x28] sm:$0xff] %vm2442, %v2261
  %2449 = vst.msk [vmem:[#allocation3 + $0x30] sm:$0xff] %vm2442, %v2263
  %2450 = vst.msk [vmem:[#allocation3 + $0x38] sm:$0xff] %vm2442, %v2265
  %2451 = vst.msk [vmem:[#allocation3 + $0x40] sm:$0xff] %vm2442, %v2267
  %2452 = vst.msk [vmem:[#allocation3 + $0x48] sm:$0xff] %vm2442, %v2269
  %2453 = vst.msk [vmem:[#allocation3 + $0x50] sm:$0xff] %vm2442, %v2271
  %2454 = vst.msk [vmem:[#allocation3 + $0x58] sm:$0xff] %vm2442, %v2273
  %2455 = vst.msk [vmem:[#allocation3 + $0x60] sm:$0xff] %vm2442, %v2275
  %2456 = vst.msk [vmem:[#allocation3 + $0x68] sm:$0xff] %vm2442, %v2277
  %2457 = vst.msk [vmem:[#allocation3 + $0x70] sm:$0xff] %vm2442, %v2279
  %2458 = vst.msk [vmem:[#allocation3 + $0x78] sm:$0xff] %vm2442, %v2281
  %2459 = vst.msk [vmem:[#allocation3 + $0x80] sm:$0xff] %vm2442, %v2283
  %2460 = vst.msk [vmem:[#allocation3 + $0x88] sm:$0xff] %vm2442, %v2285
  %2461 = vst.msk [vmem:[#allocation3 + $0x90] sm:$0xff] %vm2442, %v2287
  %2462 = vst.msk [vmem:[#allocation3 + $0x98] sm:$0xff] %vm2442, %v2289
  %2463 = vst.msk [vmem:[#allocation3 + $0xa0] sm:$0xff] %vm2442, %v2291
  %2464 = vst.msk [vmem:[#allocation3 + $0xa8] sm:$0xff] %vm2442, %v2293
  %2465 = vst.msk [vmem:[#allocation3 + $0xb0] sm:$0xff] %vm2442, %v2295
  %2466 = vst.msk [vmem:[#allocation3 + $0xb8] sm:$0xff] %vm2442, %v2297
  %2467 = vst.msk [vmem:[#allocation3 + $0xc0] sm:$0xff] %vm2442, %v2299
  %2468 = vst.msk [vmem:[#allocation3 + $0xc8] sm:$0xff] %vm2442, %v2301
  %2469 = vst.msk [vmem:[#allocation3 + $0xd0] sm:$0xff] %vm2442, %v2303
  %2470 = vst.msk [vmem:[#allocation3 + $0xd8] sm:$0xff] %vm2442, %v2305
  %2471 = vst.msk [vmem:[#allocation3 + $0xe0] sm:$0xff] %vm2442, %v2307
  %2472 = vst.msk [vmem:[#allocation3 + $0xe8] sm:$0xff] %vm2442, %v2309
  %2473 = vst.msk [vmem:[#allocation3 + $0xf0] sm:$0xff] %vm2442, %v2311
  %2474 = vst.msk [vmem:[#allocation3 + $0xf8] sm:$0xff] %vm2442, %v2313
  %2475 = vst.msk [vmem:[#allocation3 + $0x100] sm:$0xff] %vm2442, %v2315
  %2476 = vst.msk [vmem:[#allocation3 + $0x108] sm:$0xff] %vm2442, %v2317
  %2477 = vst.msk [vmem:[#allocation3 + $0x110] sm:$0xff] %vm2442, %v2319
  %2478 = vst.msk [vmem:[#allocation3 + $0x118] sm:$0xff] %vm2442, %v2321
  %2479 = vst.msk [vmem:[#allocation3 + $0x120] sm:$0xff] %vm2442, %v2323
  %2480 = vst.msk [vmem:[#allocation3 + $0x128] sm:$0xff] %vm2442, %v2325
  %2481 = vst.msk [vmem:[#allocation3 + $0x130] sm:$0xff] %vm2442, %v2327
  %2482 = vst.msk [vmem:[#allocation3 + $0x138] sm:$0xff] %vm2442, %v2329
  %2483 = vst.msk [vmem:[#allocation3 + $0x140] sm:$0xff] %vm2442, %v2331
  %2484 = vst.msk [vmem:[#allocation3 + $0x148] sm:$0xff] %vm2442, %v2333
  %2485 = vst.msk [vmem:[#allocation3 + $0x150] sm:$0xff] %vm2442, %v2335
  %2486 = vst.msk [vmem:[#allocation3 + $0x158] sm:$0xff] %vm2442, %v2337
  %2487 = vst.msk [vmem:[#allocation3 + $0x160] sm:$0xff] %vm2442, %v2339
  %2488 = vst.msk [vmem:[#allocation3 + $0x168] sm:$0xff] %vm2442, %v2341
  %2489 = vst.msk [vmem:[#allocation3 + $0x170] sm:$0xff] %vm2442, %v2343
  %2490 = vst.msk [vmem:[#allocation3 + $0x178] sm:$0xff] %vm2442, %v2345
  %2491 = vst.msk [vmem:[#allocation3 + $0x180] sm:$0xff] %vm2442, %v2347
  %2492 = vst.msk [vmem:[#allocation3 + $0x188] sm:$0xff] %vm2442, %v2349
  %2493 = vst.msk [vmem:[#allocation3 + $0x190] sm:$0xff] %vm2442, %v2351
  %2494 = vst.msk [vmem:[#allocation3 + $0x198] sm:$0xff] %vm2442, %v2353
  %2495 = vst.msk [vmem:[#allocation3 + $0x1a0] sm:$0xff] %vm2442, %v2355
  %2496 = vst.msk [vmem:[#allocation3 + $0x1a8] sm:$0xff] %vm2442, %v2357
  %2497 = vst.msk [vmem:[#allocation3 + $0x1b0] sm:$0xff] %vm2442, %v2359
  %2498 = vst.msk [vmem:[#allocation3 + $0x1b8] sm:$0xff] %vm2442, %v2361
  %2499 = vst.msk [vmem:[#allocation3 + $0x1c0] sm:$0xff] %vm2442, %v2363
  %2500 = vst.msk [vmem:[#allocation3 + $0x1c8] sm:$0xff] %vm2442, %v2365
  %2501 = vst.msk [vmem:[#allocation3 + $0x1d0] sm:$0xff] %vm2442, %v2367
  %2502 = vst.msk [vmem:[#allocation3 + $0x1d8] sm:$0xff] %vm2442, %v2369
  %2503 = vst.msk [vmem:[#allocation3 + $0x1e0] sm:$0xff] %vm2442, %v2371
  %2504 = vst.msk [vmem:[#allocation3 + $0x1e8] sm:$0xff] %vm2442, %v2373
  %2505 = vst.msk [vmem:[#allocation3 + $0x1f0] sm:$0xff] %vm2442, %v2375
  %2506 = vst.msk [vmem:[#allocation3 + $0x1f8] sm:$0xff] %vm2442, %v2377
  %v2507 = vld [vmem:[%s1159 + $0x1] sm:$0xff]
  %v2508 = vld [vmem:[%s1159 + $0x9] sm:$0xff]
  %v2509 = vld [vmem:[%s1159 + $0x19] sm:$0xff]
  %v2510 = vld [vmem:[%s1159 + $0x21] sm:$0xff]
  %v2511 = vld [vmem:[%s1159 + $0x31] sm:$0xff]
  %v2512 = vld [vmem:[%s1159 + $0x39] sm:$0xff]
  %v2513 = vld [vmem:[%s1159 + $0x49] sm:$0xff]
  %v2514 = vld [vmem:[%s1159 + $0x51] sm:$0xff]
  %v2515 = vld [vmem:[%s1159 + $0x61] sm:$0xff]
  %v2516 = vld [vmem:[%s1159 + $0x69] sm:$0xff]
  %v2517 = vld [vmem:[%s1159 + $0x79] sm:$0xff]
  %v2518 = vld [vmem:[%s1159 + $0x81] sm:$0xff]
  %v2519 = vld [vmem:[%s1159 + $0x91] sm:$0xff]
  %v2520 = vld [vmem:[%s1159 + $0x99] sm:$0xff]
  %v2521 = vld [vmem:[%s1159 + $0xa9] sm:$0xff]
  %v2522 = vld [vmem:[%s1159 + $0xb1] sm:$0xff]
  %v2523 = vld [vmem:[%s1159 + $0xc1] sm:$0xff]
  %v2524 = vld [vmem:[%s1159 + $0xc9] sm:$0xff]
  %v2525 = vld [vmem:[%s1159 + $0xd9] sm:$0xff]
  %v2526 = vld [vmem:[%s1159 + $0xe1] sm:$0xff]
  %v2527 = vld [vmem:[%s1159 + $0xf1] sm:$0xff]
  %v2528 = vld [vmem:[%s1159 + $0xf9] sm:$0xff]
  %v2529 = vld [vmem:[%s1159 + $0x109] sm:$0xff]
  %v2530 = vld [vmem:[%s1159 + $0x111] sm:$0xff]
  %v2531 = vld [vmem:[%s1159 + $0x121] sm:$0xff]
  %v2532 = vld [vmem:[%s1159 + $0x129] sm:$0xff]
  %v2533 = vld [vmem:[%s1159 + $0x139] sm:$0xff]
  %v2534 = vld [vmem:[%s1159 + $0x141] sm:$0xff]
  %v2535 = vld [vmem:[%s1159 + $0x151] sm:$0xff]
  %v2536 = vld [vmem:[%s1159 + $0x159] sm:$0xff]
  %v2537 = vld [vmem:[%s1159 + $0x169] sm:$0xff]
  %v2538 = vld [vmem:[%s1159 + $0x171] sm:$0xff]
  %v2539 = vld [vmem:[%s1159 + $0x1b1] sm:$0xff]
  %v2540 = vld [vmem:[%s1159 + $0x1b9] sm:$0xff]
  %v2541 = vld [vmem:[%s1159 + $0x1c9] sm:$0xff]
  %v2542 = vld [vmem:[%s1159 + $0x1d1] sm:$0xff]
  %v2543 = vld [vmem:[%s1159 + $0x1e1] sm:$0xff]
  %v2544 = vld [vmem:[%s1159 + $0x1e9] sm:$0xff]
  %v2545 = vld [vmem:[%s1159 + $0x1f9] sm:$0xff]
  %v2546 = vld [vmem:[%s1159 + $0x201] sm:$0xff]
  %v2547 = vld [vmem:[%s1159 + $0x211] sm:$0xff]
  %v2548 = vld [vmem:[%s1159 + $0x219] sm:$0xff]
  %v2549 = vld [vmem:[%s1159 + $0x229] sm:$0xff]
  %v2550 = vld [vmem:[%s1159 + $0x231] sm:$0xff]
  %v2551 = vld [vmem:[%s1159 + $0x241] sm:$0xff]
  %v2552 = vld [vmem:[%s1159 + $0x249] sm:$0xff]
  %v2553 = vld [vmem:[%s1159 + $0x259] sm:$0xff]
  %v2554 = vld [vmem:[%s1159 + $0x261] sm:$0xff]
  %v2555 = vld [vmem:[%s1159 + $0x271] sm:$0xff]
  %v2556 = vld [vmem:[%s1159 + $0x279] sm:$0xff]
  %v2557 = vld [vmem:[%s1159 + $0x289] sm:$0xff]
  %v2558 = vld [vmem:[%s1159 + $0x291] sm:$0xff]
  %v2559 = vld [vmem:[%s1159 + $0x2a1] sm:$0xff]
  %v2560 = vld [vmem:[%s1159 + $0x2a9] sm:$0xff]
  %v2561 = vld [vmem:[%s1159 + $0x2b9] sm:$0xff]
  %v2562 = vld [vmem:[%s1159 + $0x2c1] sm:$0xff]
  %v2563 = vld [vmem:[%s1159 + $0x2d1] sm:$0xff]
  %v2564 = vld [vmem:[%s1159 + $0x2d9] sm:$0xff]
  %v2565 = vld [vmem:[%s1159 + $0x2e9] sm:$0xff]
  %v2566 = vld [vmem:[%s1159 + $0x2f1] sm:$0xff]
  %v2567 = vld [vmem:[%s1159 + $0x301] sm:$0xff]
  %v2568 = vld [vmem:[%s1159 + $0x309] sm:$0xff]
  %v2569 = vld [vmem:[%s1159 + $0x319] sm:$0xff]
  %v2570 = vld [vmem:[%s1159 + $0x321] sm:$0xff]
  %2635 = vrot.lane.b32.xlu0 %v2507, 16
  %v2636 = vpop.permute.xlu0 %2635
  %2637 = vrot.lane.b32.xlu0 %v2508, 16
  %v2638 = vpop.permute.xlu0 %2637
  %2639 = vrot.lane.b32.xlu0 %v2509, 16
  %v2640 = vpop.permute.xlu0 %2639
  %2641 = vrot.lane.b32.xlu0 %v2510, 16
  %v2642 = vpop.permute.xlu0 %2641
  %2643 = vrot.lane.b32.xlu0 %v2511, 16
  %v2644 = vpop.permute.xlu0 %2643
  %2645 = vrot.lane.b32.xlu0 %v2512, 16
  %v2646 = vpop.permute.xlu0 %2645
  %2647 = vrot.lane.b32.xlu0 %v2513, 16
  %v2648 = vpop.permute.xlu0 %2647
  %2649 = vrot.lane.b32.xlu0 %v2514, 16
  %v2650 = vpop.permute.xlu0 %2649
  %2651 = vrot.lane.b32.xlu0 %v2515, 16
  %v2652 = vpop.permute.xlu0 %2651
  %2653 = vrot.lane.b32.xlu0 %v2516, 16
  %v2654 = vpop.permute.xlu0 %2653
  %2655 = vrot.lane.b32.xlu0 %v2517, 16
  %v2656 = vpop.permute.xlu0 %2655
  %2657 = vrot.lane.b32.xlu0 %v2518, 16
  %v2658 = vpop.permute.xlu0 %2657
  %2659 = vrot.lane.b32.xlu0 %v2519, 16
  %v2660 = vpop.permute.xlu0 %2659
  %2661 = vrot.lane.b32.xlu0 %v2520, 16
  %v2662 = vpop.permute.xlu0 %2661
  %2663 = vrot.lane.b32.xlu0 %v2521, 16
  %v2664 = vpop.permute.xlu0 %2663
  %2665 = vrot.lane.b32.xlu0 %v2522, 16
  %v2666 = vpop.permute.xlu0 %2665
  %2667 = vrot.lane.b32.xlu0 %v2523, 16
  %v2668 = vpop.permute.xlu0 %2667
  %2669 = vrot.lane.b32.xlu0 %v2524, 16
  %v2670 = vpop.permute.xlu0 %2669
  %2671 = vrot.lane.b32.xlu0 %v2525, 16
  %v2672 = vpop.permute.xlu0 %2671
  %2673 = vrot.lane.b32.xlu0 %v2526, 16
  %v2674 = vpop.permute.xlu0 %2673
  %2675 = vrot.lane.b32.xlu0 %v2527, 16
  %v2676 = vpop.permute.xlu0 %2675
  %2677 = vrot.lane.b32.xlu0 %v2528, 16
  %v2678 = vpop.permute.xlu0 %2677
  %2679 = vrot.lane.b32.xlu0 %v2529, 16
  %v2680 = vpop.permute.xlu0 %2679
  %2681 = vrot.lane.b32.xlu0 %v2530, 16
  %v2682 = vpop.permute.xlu0 %2681
  %2683 = vrot.lane.b32.xlu0 %v2531, 16
  %v2684 = vpop.permute.xlu0 %2683
  %2685 = vrot.lane.b32.xlu0 %v2532, 16
  %v2686 = vpop.permute.xlu0 %2685
  %2687 = vrot.lane.b32.xlu0 %v2533, 16
  %v2688 = vpop.permute.xlu0 %2687
  %2689 = vrot.lane.b32.xlu0 %v2534, 16
  %v2690 = vpop.permute.xlu0 %2689
  %2691 = vrot.lane.b32.xlu0 %v2535, 16
  %v2692 = vpop.permute.xlu0 %2691
  %2693 = vrot.lane.b32.xlu0 %v2536, 16
  %v2694 = vpop.permute.xlu0 %2693
  %2695 = vrot.lane.b32.xlu0 %v2537, 16
  %v2696 = vpop.permute.xlu0 %2695
  %2697 = vrot.lane.b32.xlu0 %v2538, 16
  %v2698 = vpop.permute.xlu0 %2697
  %2699 = vrot.lane.b32.xlu0 %v2539, 16
  %v2700 = vpop.permute.xlu0 %2699
  %2701 = vrot.lane.b32.xlu0 %v2540, 16
  %v2702 = vpop.permute.xlu0 %2701
  %2703 = vrot.lane.b32.xlu0 %v2541, 16
  %v2704 = vpop.permute.xlu0 %2703
  %2705 = vrot.lane.b32.xlu0 %v2542, 16
  %v2706 = vpop.permute.xlu0 %2705
  %2707 = vrot.lane.b32.xlu0 %v2543, 16
  %v2708 = vpop.permute.xlu0 %2707
  %2709 = vrot.lane.b32.xlu0 %v2544, 16
  %v2710 = vpop.permute.xlu0 %2709
  %2711 = vrot.lane.b32.xlu0 %v2545, 16
  %v2712 = vpop.permute.xlu0 %2711
  %2713 = vrot.lane.b32.xlu0 %v2546, 16
  %v2714 = vpop.permute.xlu0 %2713
  %2715 = vrot.lane.b32.xlu0 %v2547, 16
  %v2716 = vpop.permute.xlu0 %2715
  %2717 = vrot.lane.b32.xlu0 %v2548, 16
  %v2718 = vpop.permute.xlu0 %2717
  %2719 = vrot.lane.b32.xlu0 %v2549, 16
  %v2720 = vpop.permute.xlu0 %2719
  %2721 = vrot.lane.b32.xlu0 %v2550, 16
  %v2722 = vpop.permute.xlu0 %2721
  %2723 = vrot.lane.b32.xlu0 %v2551, 16
  %v2724 = vpop.permute.xlu0 %2723
  %2725 = vrot.lane.b32.xlu0 %v2552, 16
  %v2726 = vpop.permute.xlu0 %2725
  %2727 = vrot.lane.b32.xlu0 %v2553, 16
  %v2728 = vpop.permute.xlu0 %2727
  %2729 = vrot.lane.b32.xlu0 %v2554, 16
  %v2730 = vpop.permute.xlu0 %2729
  %2731 = vrot.lane.b32.xlu0 %v2555, 16
  %v2732 = vpop.permute.xlu0 %2731
  %2733 = vrot.lane.b32.xlu0 %v2556, 16
  %v2734 = vpop.permute.xlu0 %2733
  %2735 = vrot.lane.b32.xlu0 %v2557, 16
  %v2736 = vpop.permute.xlu0 %2735
  %2737 = vrot.lane.b32.xlu0 %v2558, 16
  %v2738 = vpop.permute.xlu0 %2737
  %2739 = vrot.lane.b32.xlu0 %v2559, 16
  %v2740 = vpop.permute.xlu0 %2739
  %2741 = vrot.lane.b32.xlu0 %v2560, 16
  %v2742 = vpop.permute.xlu0 %2741
  %2743 = vrot.lane.b32.xlu0 %v2561, 16
  %v2744 = vpop.permute.xlu0 %2743
  %2745 = vrot.lane.b32.xlu0 %v2562, 16
  %v2746 = vpop.permute.xlu0 %2745
  %2747 = vrot.lane.b32.xlu0 %v2563, 16
  %v2748 = vpop.permute.xlu0 %2747
  %2749 = vrot.lane.b32.xlu0 %v2564, 16
  %v2750 = vpop.permute.xlu0 %2749
  %2751 = vrot.lane.b32.xlu0 %v2565, 16
  %v2752 = vpop.permute.xlu0 %2751
  %2753 = vrot.lane.b32.xlu0 %v2566, 16
  %v2754 = vpop.permute.xlu0 %2753
  %2755 = vrot.lane.b32.xlu0 %v2567, 16
  %v2756 = vpop.permute.xlu0 %2755
  %2757 = vrot.lane.b32.xlu0 %v2568, 16
  %v2758 = vpop.permute.xlu0 %2757
  %2759 = vrot.lane.b32.xlu0 %v2569, 16
  %v2760 = vpop.permute.xlu0 %2759
  %2761 = vrot.lane.b32.xlu0 %v2570, 16
  %v2762 = vpop.permute.xlu0 %2761
  %vm2827 = vcmask 162944
  %2828 = vst.msk [vmem:[#allocation3] sm:$0xff] %vm2827, %v2636
  %2829 = vst.msk [vmem:[#allocation3 + $0x8] sm:$0xff] %vm2827, %v2638
  %2830 = vst.msk [vmem:[#allocation3 + $0x10] sm:$0xff] %vm2827, %v2640
  %2831 = vst.msk [vmem:[#allocation3 + $0x18] sm:$0xff] %vm2827, %v2642
  %2832 = vst.msk [vmem:[#allocation3 + $0x20] sm:$0xff] %vm2827, %v2644
  %2833 = vst.msk [vmem:[#allocation3 + $0x28] sm:$0xff] %vm2827, %v2646
  %2834 = vst.msk [vmem:[#allocation3 + $0x30] sm:$0xff] %vm2827, %v2648
  %2835 = vst.msk [vmem:[#allocation3 + $0x38] sm:$0xff] %vm2827, %v2650
  %2836 = vst.msk [vmem:[#allocation3 + $0x40] sm:$0xff] %vm2827, %v2652
  %2837 = vst.msk [vmem:[#allocation3 + $0x48] sm:$0xff] %vm2827, %v2654
  %2838 = vst.msk [vmem:[#allocation3 + $0x50] sm:$0xff] %vm2827, %v2656
  %2839 = vst.msk [vmem:[#allocation3 + $0x58] sm:$0xff] %vm2827, %v2658
  %2840 = vst.msk [vmem:[#allocation3 + $0x60] sm:$0xff] %vm2827, %v2660
  %2841 = vst.msk [vmem:[#allocation3 + $0x68] sm:$0xff] %vm2827, %v2662
  %2842 = vst.msk [vmem:[#allocation3 + $0x70] sm:$0xff] %vm2827, %v2664
  %2843 = vst.msk [vmem:[#allocation3 + $0x78] sm:$0xff] %vm2827, %v2666
  %2844 = vst.msk [vmem:[#allocation3 + $0x80] sm:$0xff] %vm2827, %v2668
  %2845 = vst.msk [vmem:[#allocation3 + $0x88] sm:$0xff] %vm2827, %v2670
  %2846 = vst.msk [vmem:[#allocation3 + $0x90] sm:$0xff] %vm2827, %v2672
  %2847 = vst.msk [vmem:[#allocation3 + $0x98] sm:$0xff] %vm2827, %v2674
  %2848 = vst.msk [vmem:[#allocation3 + $0xa0] sm:$0xff] %vm2827, %v2676
  %2849 = vst.msk [vmem:[#allocation3 + $0xa8] sm:$0xff] %vm2827, %v2678
  %2850 = vst.msk [vmem:[#allocation3 + $0xb0] sm:$0xff] %vm2827, %v2680
  %2851 = vst.msk [vmem:[#allocation3 + $0xb8] sm:$0xff] %vm2827, %v2682
  %2852 = vst.msk [vmem:[#allocation3 + $0xc0] sm:$0xff] %vm2827, %v2684
  %2853 = vst.msk [vmem:[#allocation3 + $0xc8] sm:$0xff] %vm2827, %v2686
  %2854 = vst.msk [vmem:[#allocation3 + $0xd0] sm:$0xff] %vm2827, %v2688
  %2855 = vst.msk [vmem:[#allocation3 + $0xd8] sm:$0xff] %vm2827, %v2690
  %2856 = vst.msk [vmem:[#allocation3 + $0xe0] sm:$0xff] %vm2827, %v2692
  %2857 = vst.msk [vmem:[#allocation3 + $0xe8] sm:$0xff] %vm2827, %v2694
  %2858 = vst.msk [vmem:[#allocation3 + $0xf0] sm:$0xff] %vm2827, %v2696
  %2859 = vst.msk [vmem:[#allocation3 + $0xf8] sm:$0xff] %vm2827, %v2698
  %2860 = vst.msk [vmem:[#allocation3 + $0x100] sm:$0xff] %vm2827, %v2700
  %2861 = vst.msk [vmem:[#allocation3 + $0x108] sm:$0xff] %vm2827, %v2702
  %2862 = vst.msk [vmem:[#allocation3 + $0x110] sm:$0xff] %vm2827, %v2704
  %2863 = vst.msk [vmem:[#allocation3 + $0x118] sm:$0xff] %vm2827, %v2706
  %2864 = vst.msk [vmem:[#allocation3 + $0x120] sm:$0xff] %vm2827, %v2708
  %2865 = vst.msk [vmem:[#allocation3 + $0x128] sm:$0xff] %vm2827, %v2710
  %2866 = vst.msk [vmem:[#allocation3 + $0x130] sm:$0xff] %vm2827, %v2712
  %2867 = vst.msk [vmem:[#allocation3 + $0x138] sm:$0xff] %vm2827, %v2714
  %2868 = vst.msk [vmem:[#allocation3 + $0x140] sm:$0xff] %vm2827, %v2716
  %2869 = vst.msk [vmem:[#allocation3 + $0x148] sm:$0xff] %vm2827, %v2718
  %2870 = vst.msk [vmem:[#allocation3 + $0x150] sm:$0xff] %vm2827, %v2720
  %2871 = vst.msk [vmem:[#allocation3 + $0x158] sm:$0xff] %vm2827, %v2722
  %2872 = vst.msk [vmem:[#allocation3 + $0x160] sm:$0xff] %vm2827, %v2724
  %2873 = vst.msk [vmem:[#allocation3 + $0x168] sm:$0xff] %vm2827, %v2726
  %2874 = vst.msk [vmem:[#allocation3 + $0x170] sm:$0xff] %vm2827, %v2728
  %2875 = vst.msk [vmem:[#allocation3 + $0x178] sm:$0xff] %vm2827, %v2730
  %2876 = vst.msk [vmem:[#allocation3 + $0x180] sm:$0xff] %vm2827, %v2732
  %2877 = vst.msk [vmem:[#allocation3 + $0x188] sm:$0xff] %vm2827, %v2734
  %2878 = vst.msk [vmem:[#allocation3 + $0x190] sm:$0xff] %vm2827, %v2736
  %2879 = vst.msk [vmem:[#allocation3 + $0x198] sm:$0xff] %vm2827, %v2738
  %2880 = vst.msk [vmem:[#allocation3 + $0x1a0] sm:$0xff] %vm2827, %v2740
  %2881 = vst.msk [vmem:[#allocation3 + $0x1a8] sm:$0xff] %vm2827, %v2742
  %2882 = vst.msk [vmem:[#allocation3 + $0x1b0] sm:$0xff] %vm2827, %v2744
  %2883 = vst.msk [vmem:[#allocation3 + $0x1b8] sm:$0xff] %vm2827, %v2746
  %2884 = vst.msk [vmem:[#allocation3 + $0x1c0] sm:$0xff] %vm2827, %v2748
  %2885 = vst.msk [vmem:[#allocation3 + $0x1c8] sm:$0xff] %vm2827, %v2750
  %2886 = vst.msk [vmem:[#allocation3 + $0x1d0] sm:$0xff] %vm2827, %v2752
  %2887 = vst.msk [vmem:[#allocation3 + $0x1d8] sm:$0xff] %vm2827, %v2754
  %2888 = vst.msk [vmem:[#allocation3 + $0x1e0] sm:$0xff] %vm2827, %v2756
  %2889 = vst.msk [vmem:[#allocation3 + $0x1e8] sm:$0xff] %vm2827, %v2758
  %2890 = vst.msk [vmem:[#allocation3 + $0x1f0] sm:$0xff] %vm2827, %v2760
  %2891 = vst.msk [vmem:[#allocation3 + $0x1f8] sm:$0xff] %vm2827, %v2762
  %v2892 = vld [vmem:[%s1159 + $0x2] sm:$0xff]
  %v2893 = vld [vmem:[%s1159 + $0xa] sm:$0xff]
  %v2894 = vld [vmem:[%s1159 + $0x1a] sm:$0xff]
  %v2895 = vld [vmem:[%s1159 + $0x22] sm:$0xff]
  %v2896 = vld [vmem:[%s1159 + $0x32] sm:$0xff]
  %v2897 = vld [vmem:[%s1159 + $0x3a] sm:$0xff]
  %v2898 = vld [vmem:[%s1159 + $0x4a] sm:$0xff]
  %v2899 = vld [vmem:[%s1159 + $0x52] sm:$0xff]
  %v2900 = vld [vmem:[%s1159 + $0x62] sm:$0xff]
  %v2901 = vld [vmem:[%s1159 + $0x6a] sm:$0xff]
  %v2902 = vld [vmem:[%s1159 + $0x7a] sm:$0xff]
  %v2903 = vld [vmem:[%s1159 + $0x82] sm:$0xff]
  %v2904 = vld [vmem:[%s1159 + $0x92] sm:$0xff]
  %v2905 = vld [vmem:[%s1159 + $0x9a] sm:$0xff]
  %v2906 = vld [vmem:[%s1159 + $0xaa] sm:$0xff]
  %v2907 = vld [vmem:[%s1159 + $0xb2] sm:$0xff]
  %v2908 = vld [vmem:[%s1159 + $0xc2] sm:$0xff]
  %v2909 = vld [vmem:[%s1159 + $0xca] sm:$0xff]
  %v2910 = vld [vmem:[%s1159 + $0xda] sm:$0xff]
  %v2911 = vld [vmem:[%s1159 + $0xe2] sm:$0xff]
  %v2912 = vld [vmem:[%s1159 + $0xf2] sm:$0xff]
  %v2913 = vld [vmem:[%s1159 + $0xfa] sm:$0xff]
  %v2914 = vld [vmem:[%s1159 + $0x10a] sm:$0xff]
  %v2915 = vld [vmem:[%s1159 + $0x112] sm:$0xff]
  %v2916 = vld [vmem:[%s1159 + $0x122] sm:$0xff]
  %v2917 = vld [vmem:[%s1159 + $0x12a] sm:$0xff]
  %v2918 = vld [vmem:[%s1159 + $0x13a] sm:$0xff]
  %v2919 = vld [vmem:[%s1159 + $0x142] sm:$0xff]
  %v2920 = vld [vmem:[%s1159 + $0x152] sm:$0xff]
  %v2921 = vld [vmem:[%s1159 + $0x15a] sm:$0xff]
  %v2922 = vld [vmem:[%s1159 + $0x16a] sm:$0xff]
  %v2923 = vld [vmem:[%s1159 + $0x172] sm:$0xff]
  %v2924 = vld [vmem:[%s1159 + $0x1b2] sm:$0xff]
  %v2925 = vld [vmem:[%s1159 + $0x1ba] sm:$0xff]
  %v2926 = vld [vmem:[%s1159 + $0x1ca] sm:$0xff]
  %v2927 = vld [vmem:[%s1159 + $0x1d2] sm:$0xff]
  %v2928 = vld [vmem:[%s1159 + $0x1e2] sm:$0xff]
  %v2929 = vld [vmem:[%s1159 + $0x1ea] sm:$0xff]
  %v2930 = vld [vmem:[%s1159 + $0x1fa] sm:$0xff]
  %v2931 = vld [vmem:[%s1159 + $0x202] sm:$0xff]
  %v2932 = vld [vmem:[%s1159 + $0x212] sm:$0xff]
  %v2933 = vld [vmem:[%s1159 + $0x21a] sm:$0xff]
  %v2934 = vld [vmem:[%s1159 + $0x22a] sm:$0xff]
  %v2935 = vld [vmem:[%s1159 + $0x232] sm:$0xff]
  %v2936 = vld [vmem:[%s1159 + $0x242] sm:$0xff]
  %v2937 = vld [vmem:[%s1159 + $0x24a] sm:$0xff]
  %v2938 = vld [vmem:[%s1159 + $0x25a] sm:$0xff]
  %v2939 = vld [vmem:[%s1159 + $0x262] sm:$0xff]
  %v2940 = vld [vmem:[%s1159 + $0x272] sm:$0xff]
  %v2941 = vld [vmem:[%s1159 + $0x27a] sm:$0xff]
  %v2942 = vld [vmem:[%s1159 + $0x28a] sm:$0xff]
  %v2943 = vld [vmem:[%s1159 + $0x292] sm:$0xff]
  %v2944 = vld [vmem:[%s1159 + $0x2a2] sm:$0xff]
  %v2945 = vld [vmem:[%s1159 + $0x2aa] sm:$0xff]
  %v2946 = vld [vmem:[%s1159 + $0x2ba] sm:$0xff]
  %v2947 = vld [vmem:[%s1159 + $0x2c2] sm:$0xff]
  %v2948 = vld [vmem:[%s1159 + $0x2d2] sm:$0xff]
  %v2949 = vld [vmem:[%s1159 + $0x2da] sm:$0xff]
  %v2950 = vld [vmem:[%s1159 + $0x2ea] sm:$0xff]
  %v2951 = vld [vmem:[%s1159 + $0x2f2] sm:$0xff]
  %v2952 = vld [vmem:[%s1159 + $0x302] sm:$0xff]
  %v2953 = vld [vmem:[%s1159 + $0x30a] sm:$0xff]
  %v2954 = vld [vmem:[%s1159 + $0x31a] sm:$0xff]
  %v2955 = vld [vmem:[%s1159 + $0x322] sm:$0xff]
  %3020 = vrot.lane.b32.xlu0 %v2892, 20
  %v3021 = vpop.permute.xlu0 %3020
  %3022 = vrot.lane.b32.xlu0 %v2893, 20
  %v3023 = vpop.permute.xlu0 %3022
  %3024 = vrot.lane.b32.xlu0 %v2894, 20
  %v3025 = vpop.permute.xlu0 %3024
  %3026 = vrot.lane.b32.xlu0 %v2895, 20
  %v3027 = vpop.permute.xlu0 %3026
  %3028 = vrot.lane.b32.xlu0 %v2896, 20
  %v3029 = vpop.permute.xlu0 %3028
  %3030 = vrot.lane.b32.xlu0 %v2897, 20
  %v3031 = vpop.permute.xlu0 %3030
  %3032 = vrot.lane.b32.xlu0 %v2898, 20
  %v3033 = vpop.permute.xlu0 %3032
  %3034 = vrot.lane.b32.xlu0 %v2899, 20
  %v3035 = vpop.permute.xlu0 %3034
  %3036 = vrot.lane.b32.xlu0 %v2900, 20
  %v3037 = vpop.permute.xlu0 %3036
  %3038 = vrot.lane.b32.xlu0 %v2901, 20
  %v3039 = vpop.permute.xlu0 %3038
  %3040 = vrot.lane.b32.xlu0 %v2902, 20
  %v3041 = vpop.permute.xlu0 %3040
  %3042 = vrot.lane.b32.xlu0 %v2903, 20
  %v3043 = vpop.permute.xlu0 %3042
  %3044 = vrot.lane.b32.xlu0 %v2904, 20
  %v3045 = vpop.permute.xlu0 %3044
  %3046 = vrot.lane.b32.xlu0 %v2905, 20
  %v3047 = vpop.permute.xlu0 %3046
  %3048 = vrot.lane.b32.xlu0 %v2906, 20
  %v3049 = vpop.permute.xlu0 %3048
  %3050 = vrot.lane.b32.xlu0 %v2907, 20
  %v3051 = vpop.permute.xlu0 %3050
  %3052 = vrot.lane.b32.xlu0 %v2908, 20
  %v3053 = vpop.permute.xlu0 %3052
  %3054 = vrot.lane.b32.xlu0 %v2909, 20
  %v3055 = vpop.permute.xlu0 %3054
  %3056 = vrot.lane.b32.xlu0 %v2910, 20
  %v3057 = vpop.permute.xlu0 %3056
  %3058 = vrot.lane.b32.xlu0 %v2911, 20
  %v3059 = vpop.permute.xlu0 %3058
  %3060 = vrot.lane.b32.xlu0 %v2912, 20
  %v3061 = vpop.permute.xlu0 %3060
  %3062 = vrot.lane.b32.xlu0 %v2913, 20
  %v3063 = vpop.permute.xlu0 %3062
  %3064 = vrot.lane.b32.xlu0 %v2914, 20
  %v3065 = vpop.permute.xlu0 %3064
  %3066 = vrot.lane.b32.xlu0 %v2915, 20
  %v3067 = vpop.permute.xlu0 %3066
  %3068 = vrot.lane.b32.xlu0 %v2916, 20
  %v3069 = vpop.permute.xlu0 %3068
  %3070 = vrot.lane.b32.xlu0 %v2917, 20
  %v3071 = vpop.permute.xlu0 %3070
  %3072 = vrot.lane.b32.xlu0 %v2918, 20
  %v3073 = vpop.permute.xlu0 %3072
  %3074 = vrot.lane.b32.xlu0 %v2919, 20
  %v3075 = vpop.permute.xlu0 %3074
  %3076 = vrot.lane.b32.xlu0 %v2920, 20
  %v3077 = vpop.permute.xlu0 %3076
  %3078 = vrot.lane.b32.xlu0 %v2921, 20
  %v3079 = vpop.permute.xlu0 %3078
  %3080 = vrot.lane.b32.xlu0 %v2922, 20
  %v3081 = vpop.permute.xlu0 %3080
  %3082 = vrot.lane.b32.xlu0 %v2923, 20
  %v3083 = vpop.permute.xlu0 %3082
  %3084 = vrot.lane.b32.xlu0 %v2924, 20
  %v3085 = vpop.permute.xlu0 %3084
  %3086 = vrot.lane.b32.xlu0 %v2925, 20
  %v3087 = vpop.permute.xlu0 %3086
  %3088 = vrot.lane.b32.xlu0 %v2926, 20
  %v3089 = vpop.permute.xlu0 %3088
  %3090 = vrot.lane.b32.xlu0 %v2927, 20
  %v3091 = vpop.permute.xlu0 %3090
  %3092 = vrot.lane.b32.xlu0 %v2928, 20
  %v3093 = vpop.permute.xlu0 %3092
  %3094 = vrot.lane.b32.xlu0 %v2929, 20
  %v3095 = vpop.permute.xlu0 %3094
  %3096 = vrot.lane.b32.xlu0 %v2930, 20
  %v3097 = vpop.permute.xlu0 %3096
  %3098 = vrot.lane.b32.xlu0 %v2931, 20
  %v3099 = vpop.permute.xlu0 %3098
  %3100 = vrot.lane.b32.xlu0 %v2932, 20
  %v3101 = vpop.permute.xlu0 %3100
  %3102 = vrot.lane.b32.xlu0 %v2933, 20
  %v3103 = vpop.permute.xlu0 %3102
  %3104 = vrot.lane.b32.xlu0 %v2934, 20
  %v3105 = vpop.permute.xlu0 %3104
  %3106 = vrot.lane.b32.xlu0 %v2935, 20
  %v3107 = vpop.permute.xlu0 %3106
  %3108 = vrot.lane.b32.xlu0 %v2936, 20
  %v3109 = vpop.permute.xlu0 %3108
  %3110 = vrot.lane.b32.xlu0 %v2937, 20
  %v3111 = vpop.permute.xlu0 %3110
  %3112 = vrot.lane.b32.xlu0 %v2938, 20
  %v3113 = vpop.permute.xlu0 %3112
  %3114 = vrot.lane.b32.xlu0 %v2939, 20
  %v3115 = vpop.permute.xlu0 %3114
  %3116 = vrot.lane.b32.xlu0 %v2940, 20
  %v3117 = vpop.permute.xlu0 %3116
  %3118 = vrot.lane.b32.xlu0 %v2941, 20
  %v3119 = vpop.permute.xlu0 %3118
  %3120 = vrot.lane.b32.xlu0 %v2942, 20
  %v3121 = vpop.permute.xlu0 %3120
  %3122 = vrot.lane.b32.xlu0 %v2943, 20
  %v3123 = vpop.permute.xlu0 %3122
  %3124 = vrot.lane.b32.xlu0 %v2944, 20
  %v3125 = vpop.permute.xlu0 %3124
  %3126 = vrot.lane.b32.xlu0 %v2945, 20
  %v3127 = vpop.permute.xlu0 %3126
  %3128 = vrot.lane.b32.xlu0 %v2946, 20
  %v3129 = vpop.permute.xlu0 %3128
  %3130 = vrot.lane.b32.xlu0 %v2947, 20
  %v3131 = vpop.permute.xlu0 %3130
  %3132 = vrot.lane.b32.xlu0 %v2948, 20
  %v3133 = vpop.permute.xlu0 %3132
  %3134 = vrot.lane.b32.xlu0 %v2949, 20
  %v3135 = vpop.permute.xlu0 %3134
  %3136 = vrot.lane.b32.xlu0 %v2950, 20
  %v3137 = vpop.permute.xlu0 %3136
  %3138 = vrot.lane.b32.xlu0 %v2951, 20
  %v3139 = vpop.permute.xlu0 %3138
  %3140 = vrot.lane.b32.xlu0 %v2952, 20
  %v3141 = vpop.permute.xlu0 %3140
  %3142 = vrot.lane.b32.xlu0 %v2953, 20
  %v3143 = vpop.permute.xlu0 %3142
  %3144 = vrot.lane.b32.xlu0 %v2954, 20
  %v3145 = vpop.permute.xlu0 %3144
  %3146 = vrot.lane.b32.xlu0 %v2955, 20
  %v3147 = vpop.permute.xlu0 %3146
  %vm3212 = vcmask 195744
  %3213 = vst.msk [vmem:[#allocation3] sm:$0xff] %vm3212, %v3021
  %3214 = vst.msk [vmem:[#allocation3 + $0x8] sm:$0xff] %vm3212, %v3023
  %3215 = vst.msk [vmem:[#allocation3 + $0x10] sm:$0xff] %vm3212, %v3025
  %3216 = vst.msk [vmem:[#allocation3 + $0x18] sm:$0xff] %vm3212, %v3027
  %3217 = vst.msk [vmem:[#allocation3 + $0x20] sm:$0xff] %vm3212, %v3029
  %3218 = vst.msk [vmem:[#allocation3 + $0x28] sm:$0xff] %vm3212, %v3031
  %3219 = vst.msk [vmem:[#allocation3 + $0x30] sm:$0xff] %vm3212, %v3033
  %3220 = vst.msk [vmem:[#allocation3 + $0x38] sm:$0xff] %vm3212, %v3035
  %3221 = vst.msk [vmem:[#allocation3 + $0x40] sm:$0xff] %vm3212, %v3037
  %3222 = vst.msk [vmem:[#allocation3 + $0x48] sm:$0xff] %vm3212, %v3039
  %3223 = vst.msk [vmem:[#allocation3 + $0x50] sm:$0xff] %vm3212, %v3041
  %3224 = vst.msk [vmem:[#allocation3 + $0x58] sm:$0xff] %vm3212, %v3043
  %3225 = vst.msk [vmem:[#allocation3 + $0x60] sm:$0xff] %vm3212, %v3045
  %3226 = vst.msk [vmem:[#allocation3 + $0x68] sm:$0xff] %vm3212, %v3047
  %3227 = vst.msk [vmem:[#allocation3 + $0x70] sm:$0xff] %vm3212, %v3049
  %3228 = vst.msk [vmem:[#allocation3 + $0x78] sm:$0xff] %vm3212, %v3051
  %3229 = vst.msk [vmem:[#allocation3 + $0x80] sm:$0xff] %vm3212, %v3053
  %3230 = vst.msk [vmem:[#allocation3 + $0x88] sm:$0xff] %vm3212, %v3055
  %3231 = vst.msk [vmem:[#allocation3 + $0x90] sm:$0xff] %vm3212, %v3057
  %3232 = vst.msk [vmem:[#allocation3 + $0x98] sm:$0xff] %vm3212, %v3059
  %3233 = vst.msk [vmem:[#allocation3 + $0xa0] sm:$0xff] %vm3212, %v3061
  %3234 = vst.msk [vmem:[#allocation3 + $0xa8] sm:$0xff] %vm3212, %v3063
  %3235 = vst.msk [vmem:[#allocation3 + $0xb0] sm:$0xff] %vm3212, %v3065
  %3236 = vst.msk [vmem:[#allocation3 + $0xb8] sm:$0xff] %vm3212, %v3067
  %3237 = vst.msk [vmem:[#allocation3 + $0xc0] sm:$0xff] %vm3212, %v3069
  %3238 = vst.msk [vmem:[#allocation3 + $0xc8] sm:$0xff] %vm3212, %v3071
  %3239 = vst.msk [vmem:[#allocation3 + $0xd0] sm:$0xff] %vm3212, %v3073
  %3240 = vst.msk [vmem:[#allocation3 + $0xd8] sm:$0xff] %vm3212, %v3075
  %3241 = vst.msk [vmem:[#allocation3 + $0xe0] sm:$0xff] %vm3212, %v3077
  %3242 = vst.msk [vmem:[#allocation3 + $0xe8] sm:$0xff] %vm3212, %v3079
  %3243 = vst.msk [vmem:[#allocation3 + $0xf0] sm:$0xff] %vm3212, %v3081
  %3244 = vst.msk [vmem:[#allocation3 + $0xf8] sm:$0xff] %vm3212, %v3083
  %3245 = vst.msk [vmem:[#allocation3 + $0x100] sm:$0xff] %vm3212, %v3085
  %3246 = vst.msk [vmem:[#allocation3 + $0x108] sm:$0xff] %vm3212, %v3087
  %3247 = vst.msk [vmem:[#allocation3 + $0x110] sm:$0xff] %vm3212, %v3089
  %3248 = vst.msk [vmem:[#allocation3 + $0x118] sm:$0xff] %vm3212, %v3091
  %3249 = vst.msk [vmem:[#allocation3 + $0x120] sm:$0xff] %vm3212, %v3093
  %3250 = vst.msk [vmem:[#allocation3 + $0x128] sm:$0xff] %vm3212, %v3095
  %3251 = vst.msk [vmem:[#allocation3 + $0x130] sm:$0xff] %vm3212, %v3097
  %3252 = vst.msk [vmem:[#allocation3 + $0x138] sm:$0xff] %vm3212, %v3099
  %3253 = vst.msk [vmem:[#allocation3 + $0x140] sm:$0xff] %vm3212, %v3101
  %3254 = vst.msk [vmem:[#allocation3 + $0x148] sm:$0xff] %vm3212, %v3103
  %3255 = vst.msk [vmem:[#allocation3 + $0x150] sm:$0xff] %vm3212, %v3105
  %3256 = vst.msk [vmem:[#allocation3 + $0x158] sm:$0xff] %vm3212, %v3107
  %3257 = vst.msk [vmem:[#allocation3 + $0x160] sm:$0xff] %vm3212, %v3109
  %3258 = vst.msk [vmem:[#allocation3 + $0x168] sm:$0xff] %vm3212, %v3111
  %3259 = vst.msk [vmem:[#allocation3 + $0x170] sm:$0xff] %vm3212, %v3113
  %3260 = vst.msk [vmem:[#allocation3 + $0x178] sm:$0xff] %vm3212, %v3115
  %3261 = vst.msk [vmem:[#allocation3 + $0x180] sm:$0xff] %vm3212, %v3117
  %3262 = vst.msk [vmem:[#allocation3 + $0x188] sm:$0xff] %vm3212, %v3119
  %3263 = vst.msk [vmem:[#allocation3 + $0x190] sm:$0xff] %vm3212, %v3121
  %3264 = vst.msk [vmem:[#allocation3 + $0x198] sm:$0xff] %vm3212, %v3123
  %3265 = vst.msk [vmem:[#allocation3 + $0x1a0] sm:$0xff] %vm3212, %v3125
  %3266 = vst.msk [vmem:[#allocation3 + $0x1a8] sm:$0xff] %vm3212, %v3127
  %3267 = vst.msk [vmem:[#allocation3 + $0x1b0] sm:$0xff] %vm3212, %v3129
  %3268 = vst.msk [vmem:[#allocation3 + $0x1b8] sm:$0xff] %vm3212, %v3131
  %3269 = vst.msk [vmem:[#allocation3 + $0x1c0] sm:$0xff] %vm3212, %v3133
  %3270 = vst.msk [vmem:[#allocation3 + $0x1c8] sm:$0xff] %vm3212, %v3135
  %3271 = vst.msk [vmem:[#allocation3 + $0x1d0] sm:$0xff] %vm3212, %v3137
  %3272 = vst.msk [vmem:[#allocation3 + $0x1d8] sm:$0xff] %vm3212, %v3139
  %3273 = vst.msk [vmem:[#allocation3 + $0x1e0] sm:$0xff] %vm3212, %v3141
  %3274 = vst.msk [vmem:[#allocation3 + $0x1e8] sm:$0xff] %vm3212, %v3143
  %3275 = vst.msk [vmem:[#allocation3 + $0x1f0] sm:$0xff] %vm3212, %v3145
  %3276 = vst.msk [vmem:[#allocation3 + $0x1f8] sm:$0xff] %vm3212, %v3147
  %s3277 = scalar_lea.vmem [#allocation2], 48
  %v3278 = vld [vmem:[%s3277] sm:$0xff]
  %v3279 = vld [vmem:[%s3277 + $0x8] sm:$0xff]
  %v3280 = vld [vmem:[%s3277 + $0x18] sm:$0xff]
  %v3281 = vld [vmem:[%s3277 + $0x20] sm:$0xff]
  %v3282 = vld [vmem:[%s3277 + $0x30] sm:$0xff]
  %v3283 = vld [vmem:[%s3277 + $0x38] sm:$0xff]
  %v3284 = vld [vmem:[%s3277 + $0x48] sm:$0xff]
  %v3285 = vld [vmem:[%s3277 + $0x50] sm:$0xff]
  %v3286 = vld [vmem:[%s3277 + $0x60] sm:$0xff]
  %v3287 = vld [vmem:[%s3277 + $0x68] sm:$0xff]
  %v3288 = vld [vmem:[%s3277 + $0x78] sm:$0xff]
  %v3289 = vld [vmem:[%s3277 + $0x80] sm:$0xff]
  %v3290 = vld [vmem:[%s3277 + $0x90] sm:$0xff]
  %v3291 = vld [vmem:[%s3277 + $0x98] sm:$0xff]
  %v3292 = vld [vmem:[%s3277 + $0xa8] sm:$0xff]
  %v3293 = vld [vmem:[%s3277 + $0xb0] sm:$0xff]
  %v3294 = vld [vmem:[%s3277 + $0xc0] sm:$0xff]
  %v3295 = vld [vmem:[%s3277 + $0xc8] sm:$0xff]
  %v3296 = vld [vmem:[%s3277 + $0xd8] sm:$0xff]
  %v3297 = vld [vmem:[%s3277 + $0xe0] sm:$0xff]
  %v3298 = vld [vmem:[%s3277 + $0xf0] sm:$0xff]
  %v3299 = vld [vmem:[%s3277 + $0xf8] sm:$0xff]
  %v3300 = vld [vmem:[%s3277 + $0x108] sm:$0xff]
  %v3301 = vld [vmem:[%s3277 + $0x110] sm:$0xff]
  %v3302 = vld [vmem:[%s3277 + $0x120] sm:$0xff]
  %v3303 = vld [vmem:[%s3277 + $0x128] sm:$0xff]
  %v3304 = vld [vmem:[%s3277 + $0x138] sm:$0xff]
  %v3305 = vld [vmem:[%s3277 + $0x140] sm:$0xff]
  %v3306 = vld [vmem:[%s3277 + $0x150] sm:$0xff]
  %v3307 = vld [vmem:[%s3277 + $0x158] sm:$0xff]
  %v3308 = vld [vmem:[%s3277 + $0x168] sm:$0xff]
  %v3309 = vld [vmem:[%s3277 + $0x170] sm:$0xff]
  %v3310 = vld [vmem:[%s3277 + $0x1b0] sm:$0xff]
  %v3311 = vld [vmem:[%s3277 + $0x1b8] sm:$0xff]
  %v3312 = vld [vmem:[%s3277 + $0x1c8] sm:$0xff]
  %v3313 = vld [vmem:[%s3277 + $0x1d0] sm:$0xff]
  %v3314 = vld [vmem:[%s3277 + $0x1e0] sm:$0xff]
  %v3315 = vld [vmem:[%s3277 + $0x1e8] sm:$0xff]
  %v3316 = vld [vmem:[%s3277 + $0x1f8] sm:$0xff]
  %v3317 = vld [vmem:[%s3277 + $0x200] sm:$0xff]
  %v3318 = vld [vmem:[%s3277 + $0x210] sm:$0xff]
  %v3319 = vld [vmem:[%s3277 + $0x218] sm:$0xff]
  %v3320 = vld [vmem:[%s3277 + $0x228] sm:$0xff]
  %v3321 = vld [vmem:[%s3277 + $0x230] sm:$0xff]
  %v3322 = vld [vmem:[%s3277 + $0x240] sm:$0xff]
  %v3323 = vld [vmem:[%s3277 + $0x248] sm:$0xff]
  %v3324 = vld [vmem:[%s3277 + $0x258] sm:$0xff]
  %v3325 = vld [vmem:[%s3277 + $0x260] sm:$0xff]
  %v3326 = vld [vmem:[%s3277 + $0x270] sm:$0xff]
  %v3327 = vld [vmem:[%s3277 + $0x278] sm:$0xff]
  %v3328 = vld [vmem:[%s3277 + $0x288] sm:$0xff]
  %v3329 = vld [vmem:[%s3277 + $0x290] sm:$0xff]
  %v3330 = vld [vmem:[%s3277 + $0x2a0] sm:$0xff]
  %v3331 = vld [vmem:[%s3277 + $0x2a8] sm:$0xff]
  %v3332 = vld [vmem:[%s3277 + $0x2b8] sm:$0xff]
  %v3333 = vld [vmem:[%s3277 + $0x2c0] sm:$0xff]
  %v3334 = vld [vmem:[%s3277 + $0x2d0] sm:$0xff]
  %v3335 = vld [vmem:[%s3277 + $0x2d8] sm:$0xff]
  %v3336 = vld [vmem:[%s3277 + $0x2e8] sm:$0xff]
  %v3337 = vld [vmem:[%s3277 + $0x2f0] sm:$0xff]
  %v3338 = vld [vmem:[%s3277 + $0x300] sm:$0xff]
  %v3339 = vld [vmem:[%s3277 + $0x308] sm:$0xff]
  %v3340 = vld [vmem:[%s3277 + $0x318] sm:$0xff]
  %v3341 = vld [vmem:[%s3277 + $0x320] sm:$0xff]
  %3406 = vrot.lane.b32.xlu0 %v3278, 24
  %v3407 = vpop.permute.xlu0 %3406
  %3408 = vrot.lane.b32.xlu0 %v3279, 24
  %v3409 = vpop.permute.xlu0 %3408
  %3410 = vrot.lane.b32.xlu0 %v3280, 24
  %v3411 = vpop.permute.xlu0 %3410
  %3412 = vrot.lane.b32.xlu0 %v3281, 24
  %v3413 = vpop.permute.xlu0 %3412
  %3414 = vrot.lane.b32.xlu0 %v3282, 24
  %v3415 = vpop.permute.xlu0 %3414
  %3416 = vrot.lane.b32.xlu0 %v3283, 24
  %v3417 = vpop.permute.xlu0 %3416
  %3418 = vrot.lane.b32.xlu0 %v3284, 24
  %v3419 = vpop.permute.xlu0 %3418
  %3420 = vrot.lane.b32.xlu0 %v3285, 24
  %v3421 = vpop.permute.xlu0 %3420
  %3422 = vrot.lane.b32.xlu0 %v3286, 24
  %v3423 = vpop.permute.xlu0 %3422
  %3424 = vrot.lane.b32.xlu0 %v3287, 24
  %v3425 = vpop.permute.xlu0 %3424
  %3426 = vrot.lane.b32.xlu0 %v3288, 24
  %v3427 = vpop.permute.xlu0 %3426
  %3428 = vrot.lane.b32.xlu0 %v3289, 24
  %v3429 = vpop.permute.xlu0 %3428
  %3430 = vrot.lane.b32.xlu0 %v3290, 24
  %v3431 = vpop.permute.xlu0 %3430
  %3432 = vrot.lane.b32.xlu0 %v3291, 24
  %v3433 = vpop.permute.xlu0 %3432
  %3434 = vrot.lane.b32.xlu0 %v3292, 24
  %v3435 = vpop.permute.xlu0 %3434
  %3436 = vrot.lane.b32.xlu0 %v3293, 24
  %v3437 = vpop.permute.xlu0 %3436
  %3438 = vrot.lane.b32.xlu0 %v3294, 24
  %v3439 = vpop.permute.xlu0 %3438
  %3440 = vrot.lane.b32.xlu0 %v3295, 24
  %v3441 = vpop.permute.xlu0 %3440
  %3442 = vrot.lane.b32.xlu0 %v3296, 24
  %v3443 = vpop.permute.xlu0 %3442
  %3444 = vrot.lane.b32.xlu0 %v3297, 24
  %v3445 = vpop.permute.xlu0 %3444
  %3446 = vrot.lane.b32.xlu0 %v3298, 24
  %v3447 = vpop.permute.xlu0 %3446
  %3448 = vrot.lane.b32.xlu0 %v3299, 24
  %v3449 = vpop.permute.xlu0 %3448
  %3450 = vrot.lane.b32.xlu0 %v3300, 24
  %v3451 = vpop.permute.xlu0 %3450
  %3452 = vrot.lane.b32.xlu0 %v3301, 24
  %v3453 = vpop.permute.xlu0 %3452
  %3454 = vrot.lane.b32.xlu0 %v3302, 24
  %v3455 = vpop.permute.xlu0 %3454
  %3456 = vrot.lane.b32.xlu0 %v3303, 24
  %v3457 = vpop.permute.xlu0 %3456
  %3458 = vrot.lane.b32.xlu0 %v3304, 24
  %v3459 = vpop.permute.xlu0 %3458
  %3460 = vrot.lane.b32.xlu0 %v3305, 24
  %v3461 = vpop.permute.xlu0 %3460
  %3462 = vrot.lane.b32.xlu0 %v3306, 24
  %v3463 = vpop.permute.xlu0 %3462
  %3464 = vrot.lane.b32.xlu0 %v3307, 24
  %v3465 = vpop.permute.xlu0 %3464
  %3466 = vrot.lane.b32.xlu0 %v3308, 24
  %v3467 = vpop.permute.xlu0 %3466
  %3468 = vrot.lane.b32.xlu0 %v3309, 24
  %v3469 = vpop.permute.xlu0 %3468
  %3470 = vrot.lane.b32.xlu0 %v3310, 24
  %v3471 = vpop.permute.xlu0 %3470
  %3472 = vrot.lane.b32.xlu0 %v3311, 24
  %v3473 = vpop.permute.xlu0 %3472
  %3474 = vrot.lane.b32.xlu0 %v3312, 24
  %v3475 = vpop.permute.xlu0 %3474
  %3476 = vrot.lane.b32.xlu0 %v3313, 24
  %v3477 = vpop.permute.xlu0 %3476
  %3478 = vrot.lane.b32.xlu0 %v3314, 24
  %v3479 = vpop.permute.xlu0 %3478
  %3480 = vrot.lane.b32.xlu0 %v3315, 24
  %v3481 = vpop.permute.xlu0 %3480
  %3482 = vrot.lane.b32.xlu0 %v3316, 24
  %v3483 = vpop.permute.xlu0 %3482
  %3484 = vrot.lane.b32.xlu0 %v3317, 24
  %v3485 = vpop.permute.xlu0 %3484
  %3486 = vrot.lane.b32.xlu0 %v3318, 24
  %v3487 = vpop.permute.xlu0 %3486
  %3488 = vrot.lane.b32.xlu0 %v3319, 24
  %v3489 = vpop.permute.xlu0 %3488
  %3490 = vrot.lane.b32.xlu0 %v3320, 24
  %v3491 = vpop.permute.xlu0 %3490
  %3492 = vrot.lane.b32.xlu0 %v3321, 24
  %v3493 = vpop.permute.xlu0 %3492
  %3494 = vrot.lane.b32.xlu0 %v3322, 24
  %v3495 = vpop.permute.xlu0 %3494
  %3496 = vrot.lane.b32.xlu0 %v3323, 24
  %v3497 = vpop.permute.xlu0 %3496
  %3498 = vrot.lane.b32.xlu0 %v3324, 24
  %v3499 = vpop.permute.xlu0 %3498
  %3500 = vrot.lane.b32.xlu0 %v3325, 24
  %v3501 = vpop.permute.xlu0 %3500
  %3502 = vrot.lane.b32.xlu0 %v3326, 24
  %v3503 = vpop.permute.xlu0 %3502
  %3504 = vrot.lane.b32.xlu0 %v3327, 24
  %v3505 = vpop.permute.xlu0 %3504
  %3506 = vrot.lane.b32.xlu0 %v3328, 24
  %v3507 = vpop.permute.xlu0 %3506
  %3508 = vrot.lane.b32.xlu0 %v3329, 24
  %v3509 = vpop.permute.xlu0 %3508
  %3510 = vrot.lane.b32.xlu0 %v3330, 24
  %v3511 = vpop.permute.xlu0 %3510
  %3512 = vrot.lane.b32.xlu0 %v3331, 24
  %v3513 = vpop.permute.xlu0 %3512
  %3514 = vrot.lane.b32.xlu0 %v3332, 24
  %v3515 = vpop.permute.xlu0 %3514
  %3516 = vrot.lane.b32.xlu0 %v3333, 24
  %v3517 = vpop.permute.xlu0 %3516
  %3518 = vrot.lane.b32.xlu0 %v3334, 24
  %v3519 = vpop.permute.xlu0 %3518
  %3520 = vrot.lane.b32.xlu0 %v3335, 24
  %v3521 = vpop.permute.xlu0 %3520
  %3522 = vrot.lane.b32.xlu0 %v3336, 24
  %v3523 = vpop.permute.xlu0 %3522
  %3524 = vrot.lane.b32.xlu0 %v3337, 24
  %v3525 = vpop.permute.xlu0 %3524
  %3526 = vrot.lane.b32.xlu0 %v3338, 24
  %v3527 = vpop.permute.xlu0 %3526
  %3528 = vrot.lane.b32.xlu0 %v3339, 24
  %v3529 = vpop.permute.xlu0 %3528
  %3530 = vrot.lane.b32.xlu0 %v3340, 24
  %v3531 = vpop.permute.xlu0 %3530
  %3532 = vrot.lane.b32.xlu0 %v3341, 24
  %v3533 = vpop.permute.xlu0 %3532
  %vm3598 = vcmask 228544
  %3599 = vst.msk [vmem:[#allocation3] sm:$0xff] %vm3598, %v3407
  %3600 = vst.msk [vmem:[#allocation3 + $0x8] sm:$0xff] %vm3598, %v3409
  %3601 = vst.msk [vmem:[#allocation3 + $0x10] sm:$0xff] %vm3598, %v3411
  %3602 = vst.msk [vmem:[#allocation3 + $0x18] sm:$0xff] %vm3598, %v3413
  %3603 = vst.msk [vmem:[#allocation3 + $0x20] sm:$0xff] %vm3598, %v3415
  %3604 = vst.msk [vmem:[#allocation3 + $0x28] sm:$0xff] %vm3598, %v3417
  %3605 = vst.msk [vmem:[#allocation3 + $0x30] sm:$0xff] %vm3598, %v3419
  %3606 = vst.msk [vmem:[#allocation3 + $0x38] sm:$0xff] %vm3598, %v3421
  %3607 = vst.msk [vmem:[#allocation3 + $0x40] sm:$0xff] %vm3598, %v3423
  %3608 = vst.msk [vmem:[#allocation3 + $0x48] sm:$0xff] %vm3598, %v3425
  %3609 = vst.msk [vmem:[#allocation3 + $0x50] sm:$0xff] %vm3598, %v3427
  %3610 = vst.msk [vmem:[#allocation3 + $0x58] sm:$0xff] %vm3598, %v3429
  %3611 = vst.msk [vmem:[#allocation3 + $0x60] sm:$0xff] %vm3598, %v3431
  %3612 = vst.msk [vmem:[#allocation3 + $0x68] sm:$0xff] %vm3598, %v3433
  %3613 = vst.msk [vmem:[#allocation3 + $0x70] sm:$0xff] %vm3598, %v3435
  %3614 = vst.msk [vmem:[#allocation3 + $0x78] sm:$0xff] %vm3598, %v3437
  %3615 = vst.msk [vmem:[#allocation3 + $0x80] sm:$0xff] %vm3598, %v3439
  %3616 = vst.msk [vmem:[#allocation3 + $0x88] sm:$0xff] %vm3598, %v3441
  %3617 = vst.msk [vmem:[#allocation3 + $0x90] sm:$0xff] %vm3598, %v3443
  %3618 = vst.msk [vmem:[#allocation3 + $0x98] sm:$0xff] %vm3598, %v3445
  %3619 = vst.msk [vmem:[#allocation3 + $0xa0] sm:$0xff] %vm3598, %v3447
  %3620 = vst.msk [vmem:[#allocation3 + $0xa8] sm:$0xff] %vm3598, %v3449
  %3621 = vst.msk [vmem:[#allocation3 + $0xb0] sm:$0xff] %vm3598, %v3451
  %3622 = vst.msk [vmem:[#allocation3 + $0xb8] sm:$0xff] %vm3598, %v3453
  %3623 = vst.msk [vmem:[#allocation3 + $0xc0] sm:$0xff] %vm3598, %v3455
  %3624 = vst.msk [vmem:[#allocation3 + $0xc8] sm:$0xff] %vm3598, %v3457
  %3625 = vst.msk [vmem:[#allocation3 + $0xd0] sm:$0xff] %vm3598, %v3459
  %3626 = vst.msk [vmem:[#allocation3 + $0xd8] sm:$0xff] %vm3598, %v3461
  %3627 = vst.msk [vmem:[#allocation3 + $0xe0] sm:$0xff] %vm3598, %v3463
  %3628 = vst.msk [vmem:[#allocation3 + $0xe8] sm:$0xff] %vm3598, %v3465
  %3629 = vst.msk [vmem:[#allocation3 + $0xf0] sm:$0xff] %vm3598, %v3467
  %3630 = vst.msk [vmem:[#allocation3 + $0xf8] sm:$0xff] %vm3598, %v3469
  %3631 = vst.msk [vmem:[#allocation3 + $0x100] sm:$0xff] %vm3598, %v3471
  %3632 = vst.msk [vmem:[#allocation3 + $0x108] sm:$0xff] %vm3598, %v3473
  %3633 = vst.msk [vmem:[#allocation3 + $0x110] sm:$0xff] %vm3598, %v3475
  %3634 = vst.msk [vmem:[#allocation3 + $0x118] sm:$0xff] %vm3598, %v3477
  %3635 = vst.msk [vmem:[#allocation3 + $0x120] sm:$0xff] %vm3598, %v3479
  %3636 = vst.msk [vmem:[#allocation3 + $0x128] sm:$0xff] %vm3598, %v3481
  %3637 = vst.msk [vmem:[#allocation3 + $0x130] sm:$0xff] %vm3598, %v3483
  %3638 = vst.msk [vmem:[#allocation3 + $0x138] sm:$0xff] %vm3598, %v3485
  %3639 = vst.msk [vmem:[#allocation3 + $0x140] sm:$0xff] %vm3598, %v3487
  %3640 = vst.msk [vmem:[#allocation3 + $0x148] sm:$0xff] %vm3598, %v3489
  %3641 = vst.msk [vmem:[#allocation3 + $0x150] sm:$0xff] %vm3598, %v3491
  %3642 = vst.msk [vmem:[#allocation3 + $0x158] sm:$0xff] %vm3598, %v3493
  %3643 = vst.msk [vmem:[#allocation3 + $0x160] sm:$0xff] %vm3598, %v3495
  %3644 = vst.msk [vmem:[#allocation3 + $0x168] sm:$0xff] %vm3598, %v3497
  %3645 = vst.msk [vmem:[#allocation3 + $0x170] sm:$0xff] %vm3598, %v3499
  %3646 = vst.msk [vmem:[#allocation3 + $0x178] sm:$0xff] %vm3598, %v3501
  %3647 = vst.msk [vmem:[#allocation3 + $0x180] sm:$0xff] %vm3598, %v3503
  %3648 = vst.msk [vmem:[#allocation3 + $0x188] sm:$0xff] %vm3598, %v3505
  %3649 = vst.msk [vmem:[#allocation3 + $0x190] sm:$0xff] %vm3598, %v3507
  %3650 = vst.msk [vmem:[#allocation3 + $0x198] sm:$0xff] %vm3598, %v3509
  %3651 = vst.msk [vmem:[#allocation3 + $0x1a0] sm:$0xff] %vm3598, %v3511
  %3652 = vst.msk [vmem:[#allocation3 + $0x1a8] sm:$0xff] %vm3598, %v3513
  %3653 = vst.msk [vmem:[#allocation3 + $0x1b0] sm:$0xff] %vm3598, %v3515
  %3654 = vst.msk [vmem:[#allocation3 + $0x1b8] sm:$0xff] %vm3598, %v3517
  %3655 = vst.msk [vmem:[#allocation3 + $0x1c0] sm:$0xff] %vm3598, %v3519
  %3656 = vst.msk [vmem:[#allocation3 + $0x1c8] sm:$0xff] %vm3598, %v3521
  %3657 = vst.msk [vmem:[#allocation3 + $0x1d0] sm:$0xff] %vm3598, %v3523
  %3658 = vst.msk [vmem:[#allocation3 + $0x1d8] sm:$0xff] %vm3598, %v3525
  %3659 = vst.msk [vmem:[#allocation3 + $0x1e0] sm:$0xff] %vm3598, %v3527
  %3660 = vst.msk [vmem:[#allocation3 + $0x1e8] sm:$0xff] %vm3598, %v3529
  %3661 = vst.msk [vmem:[#allocation3 + $0x1f0] sm:$0xff] %vm3598, %v3531
  %3662 = vst.msk [vmem:[#allocation3 + $0x1f8] sm:$0xff] %vm3598, %v3533
  %v3663 = vld [vmem:[%s3277 + $0x1] sm:$0xff]
  %v3664 = vld [vmem:[%s3277 + $0x9] sm:$0xff]
  %v3665 = vld [vmem:[%s3277 + $0x19] sm:$0xff]
  %v3666 = vld [vmem:[%s3277 + $0x21] sm:$0xff]
  %v3667 = vld [vmem:[%s3277 + $0x31] sm:$0xff]
  %v3668 = vld [vmem:[%s3277 + $0x39] sm:$0xff]
  %v3669 = vld [vmem:[%s3277 + $0x49] sm:$0xff]
  %v3670 = vld [vmem:[%s3277 + $0x51] sm:$0xff]
  %v3671 = vld [vmem:[%s3277 + $0x61] sm:$0xff]
  %v3672 = vld [vmem:[%s3277 + $0x69] sm:$0xff]
  %v3673 = vld [vmem:[%s3277 + $0x79] sm:$0xff]
  %v3674 = vld [vmem:[%s3277 + $0x81] sm:$0xff]
  %v3675 = vld [vmem:[%s3277 + $0x91] sm:$0xff]
  %v3676 = vld [vmem:[%s3277 + $0x99] sm:$0xff]
  %v3677 = vld [vmem:[%s3277 + $0xa9] sm:$0xff]
  %v3678 = vld [vmem:[%s3277 + $0xb1] sm:$0xff]
  %v3679 = vld [vmem:[%s3277 + $0xc1] sm:$0xff]
  %v3680 = vld [vmem:[%s3277 + $0xc9] sm:$0xff]
  %v3681 = vld [vmem:[%s3277 + $0xd9] sm:$0xff]
  %v3682 = vld [vmem:[%s3277 + $0xe1] sm:$0xff]
  %v3683 = vld [vmem:[%s3277 + $0xf1] sm:$0xff]
  %v3684 = vld [vmem:[%s3277 + $0xf9] sm:$0xff]
  %v3685 = vld [vmem:[%s3277 + $0x109] sm:$0xff]
  %v3686 = vld [vmem:[%s3277 + $0x111] sm:$0xff]
  %v3687 = vld [vmem:[%s3277 + $0x121] sm:$0xff]
  %v3688 = vld [vmem:[%s3277 + $0x129] sm:$0xff]
  %v3689 = vld [vmem:[%s3277 + $0x139] sm:$0xff]
  %v3690 = vld [vmem:[%s3277 + $0x141] sm:$0xff]
  %v3691 = vld [vmem:[%s3277 + $0x151] sm:$0xff]
  %v3692 = vld [vmem:[%s3277 + $0x159] sm:$0xff]
  %v3693 = vld [vmem:[%s3277 + $0x169] sm:$0xff]
  %v3694 = vld [vmem:[%s3277 + $0x171] sm:$0xff]
  %v3695 = vld [vmem:[%s3277 + $0x1b1] sm:$0xff]
  %v3696 = vld [vmem:[%s3277 + $0x1b9] sm:$0xff]
  %v3697 = vld [vmem:[%s3277 + $0x1c9] sm:$0xff]
  %v3698 = vld [vmem:[%s3277 + $0x1d1] sm:$0xff]
  %v3699 = vld [vmem:[%s3277 + $0x1e1] sm:$0xff]
  %v3700 = vld [vmem:[%s3277 + $0x1e9] sm:$0xff]
  %v3701 = vld [vmem:[%s3277 + $0x1f9] sm:$0xff]
  %v3702 = vld [vmem:[%s3277 + $0x201] sm:$0xff]
  %v3703 = vld [vmem:[%s3277 + $0x211] sm:$0xff]
  %v3704 = vld [vmem:[%s3277 + $0x219] sm:$0xff]
  %v3705 = vld [vmem:[%s3277 + $0x229] sm:$0xff]
  %v3706 = vld [vmem:[%s3277 + $0x231] sm:$0xff]
  %v3707 = vld [vmem:[%s3277 + $0x241] sm:$0xff]
  %v3708 = vld [vmem:[%s3277 + $0x249] sm:$0xff]
  %v3709 = vld [vmem:[%s3277 + $0x259] sm:$0xff]
  %v3710 = vld [vmem:[%s3277 + $0x261] sm:$0xff]
  %v3711 = vld [vmem:[%s3277 + $0x271] sm:$0xff]
  %v3712 = vld [vmem:[%s3277 + $0x279] sm:$0xff]
  %v3713 = vld [vmem:[%s3277 + $0x289] sm:$0xff]
  %v3714 = vld [vmem:[%s3277 + $0x291] sm:$0xff]
  %v3715 = vld [vmem:[%s3277 + $0x2a1] sm:$0xff]
  %v3716 = vld [vmem:[%s3277 + $0x2a9] sm:$0xff]
  %v3717 = vld [vmem:[%s3277 + $0x2b9] sm:$0xff]
  %v3718 = vld [vmem:[%s3277 + $0x2c1] sm:$0xff]
  %v3719 = vld [vmem:[%s3277 + $0x2d1] sm:$0xff]
  %v3720 = vld [vmem:[%s3277 + $0x2d9] sm:$0xff]
  %v3721 = vld [vmem:[%s3277 + $0x2e9] sm:$0xff]
  %v3722 = vld [vmem:[%s3277 + $0x2f1] sm:$0xff]
  %v3723 = vld [vmem:[%s3277 + $0x301] sm:$0xff]
  %v3724 = vld [vmem:[%s3277 + $0x309] sm:$0xff]
  %v3725 = vld [vmem:[%s3277 + $0x319] sm:$0xff]
  %v3726 = vld [vmem:[%s3277 + $0x321] sm:$0xff]
  %3791 = vrot.lane.b32.xlu0 %v3663, 28
  %v3792 = vpop.permute.xlu0 %3791
  %3793 = vrot.lane.b32.xlu0 %v3664, 28
  %v3794 = vpop.permute.xlu0 %3793
  %3795 = vrot.lane.b32.xlu0 %v3665, 28
  %v3796 = vpop.permute.xlu0 %3795
  %3797 = vrot.lane.b32.xlu0 %v3666, 28
  %v3798 = vpop.permute.xlu0 %3797
  %3799 = vrot.lane.b32.xlu0 %v3667, 28
  %v3800 = vpop.permute.xlu0 %3799
  %3801 = vrot.lane.b32.xlu0 %v3668, 28
  %v3802 = vpop.permute.xlu0 %3801
  %3803 = vrot.lane.b32.xlu0 %v3669, 28
  %v3804 = vpop.permute.xlu0 %3803
  %3805 = vrot.lane.b32.xlu0 %v3670, 28
  %v3806 = vpop.permute.xlu0 %3805
  %3807 = vrot.lane.b32.xlu0 %v3671, 28
  %v3808 = vpop.permute.xlu0 %3807
  %3809 = vrot.lane.b32.xlu0 %v3672, 28
  %v3810 = vpop.permute.xlu0 %3809
  %3811 = vrot.lane.b32.xlu0 %v3673, 28
  %v3812 = vpop.permute.xlu0 %3811
  %3813 = vrot.lane.b32.xlu0 %v3674, 28
  %v3814 = vpop.permute.xlu0 %3813
  %3815 = vrot.lane.b32.xlu0 %v3675, 28
  %v3816 = vpop.permute.xlu0 %3815
  %3817 = vrot.lane.b32.xlu0 %v3676, 28
  %v3818 = vpop.permute.xlu0 %3817
  %3819 = vrot.lane.b32.xlu0 %v3677, 28
  %v3820 = vpop.permute.xlu0 %3819
  %3821 = vrot.lane.b32.xlu0 %v3678, 28
  %v3822 = vpop.permute.xlu0 %3821
  %3823 = vrot.lane.b32.xlu0 %v3679, 28
  %v3824 = vpop.permute.xlu0 %3823
  %3825 = vrot.lane.b32.xlu0 %v3680, 28
  %v3826 = vpop.permute.xlu0 %3825
  %3827 = vrot.lane.b32.xlu0 %v3681, 28
  %v3828 = vpop.permute.xlu0 %3827
  %3829 = vrot.lane.b32.xlu0 %v3682, 28
  %v3830 = vpop.permute.xlu0 %3829
  %3831 = vrot.lane.b32.xlu0 %v3683, 28
  %v3832 = vpop.permute.xlu0 %3831
  %3833 = vrot.lane.b32.xlu0 %v3684, 28
  %v3834 = vpop.permute.xlu0 %3833
  %3835 = vrot.lane.b32.xlu0 %v3685, 28
  %v3836 = vpop.permute.xlu0 %3835
  %3837 = vrot.lane.b32.xlu0 %v3686, 28
  %v3838 = vpop.permute.xlu0 %3837
  %3839 = vrot.lane.b32.xlu0 %v3687, 28
  %v3840 = vpop.permute.xlu0 %3839
  %3841 = vrot.lane.b32.xlu0 %v3688, 28
  %v3842 = vpop.permute.xlu0 %3841
  %3843 = vrot.lane.b32.xlu0 %v3689, 28
  %v3844 = vpop.permute.xlu0 %3843
  %3845 = vrot.lane.b32.xlu0 %v3690, 28
  %v3846 = vpop.permute.xlu0 %3845
  %3847 = vrot.lane.b32.xlu0 %v3691, 28
  %v3848 = vpop.permute.xlu0 %3847
  %3849 = vrot.lane.b32.xlu0 %v3692, 28
  %v3850 = vpop.permute.xlu0 %3849
  %3851 = vrot.lane.b32.xlu0 %v3693, 28
  %v3852 = vpop.permute.xlu0 %3851
  %3853 = vrot.lane.b32.xlu0 %v3694, 28
  %v3854 = vpop.permute.xlu0 %3853
  %3855 = vrot.lane.b32.xlu0 %v3695, 28
  %v3856 = vpop.permute.xlu0 %3855
  %3857 = vrot.lane.b32.xlu0 %v3696, 28
  %v3858 = vpop.permute.xlu0 %3857
  %3859 = vrot.lane.b32.xlu0 %v3697, 28
  %v3860 = vpop.permute.xlu0 %3859
  %3861 = vrot.lane.b32.xlu0 %v3698, 28
  %v3862 = vpop.permute.xlu0 %3861
  %3863 = vrot.lane.b32.xlu0 %v3699, 28
  %v3864 = vpop.permute.xlu0 %3863
  %3865 = vrot.lane.b32.xlu0 %v3700, 28
  %v3866 = vpop.permute.xlu0 %3865
  %3867 = vrot.lane.b32.xlu0 %v3701, 28
  %v3868 = vpop.permute.xlu0 %3867
  %3869 = vrot.lane.b32.xlu0 %v3702, 28
  %v3870 = vpop.permute.xlu0 %3869
  %3871 = vrot.lane.b32.xlu0 %v3703, 28
  %v3872 = vpop.permute.xlu0 %3871
  %3873 = vrot.lane.b32.xlu0 %v3704, 28
  %v3874 = vpop.permute.xlu0 %3873
  %3875 = vrot.lane.b32.xlu0 %v3705, 28
  %v3876 = vpop.permute.xlu0 %3875
  %3877 = vrot.lane.b32.xlu0 %v3706, 28
  %v3878 = vpop.permute.xlu0 %3877
  %3879 = vrot.lane.b32.xlu0 %v3707, 28
  %v3880 = vpop.permute.xlu0 %3879
  %3881 = vrot.lane.b32.xlu0 %v3708, 28
  %v3882 = vpop.permute.xlu0 %3881
  %3883 = vrot.lane.b32.xlu0 %v3709, 28
  %v3884 = vpop.permute.xlu0 %3883
  %3885 = vrot.lane.b32.xlu0 %v3710, 28
  %v3886 = vpop.permute.xlu0 %3885
  %3887 = vrot.lane.b32.xlu0 %v3711, 28
  %v3888 = vpop.permute.xlu0 %3887
  %3889 = vrot.lane.b32.xlu0 %v3712, 28
  %v3890 = vpop.permute.xlu0 %3889
  %3891 = vrot.lane.b32.xlu0 %v3713, 28
  %v3892 = vpop.permute.xlu0 %3891
  %3893 = vrot.lane.b32.xlu0 %v3714, 28
  %v3894 = vpop.permute.xlu0 %3893
  %3895 = vrot.lane.b32.xlu0 %v3715, 28
  %v3896 = vpop.permute.xlu0 %3895
  %3897 = vrot.lane.b32.xlu0 %v3716, 28
  %v3898 = vpop.permute.xlu0 %3897
  %3899 = vrot.lane.b32.xlu0 %v3717, 28
  %v3900 = vpop.permute.xlu0 %3899
  %3901 = vrot.lane.b32.xlu0 %v3718, 28
  %v3902 = vpop.permute.xlu0 %3901
  %3903 = vrot.lane.b32.xlu0 %v3719, 28
  %v3904 = vpop.permute.xlu0 %3903
  %3905 = vrot.lane.b32.xlu0 %v3720, 28
  %v3906 = vpop.permute.xlu0 %3905
  %3907 = vrot.lane.b32.xlu0 %v3721, 28
  %v3908 = vpop.permute.xlu0 %3907
  %3909 = vrot.lane.b32.xlu0 %v3722, 28
  %v3910 = vpop.permute.xlu0 %3909
  %3911 = vrot.lane.b32.xlu0 %v3723, 28
  %v3912 = vpop.permute.xlu0 %3911
  %3913 = vrot.lane.b32.xlu0 %v3724, 28
  %v3914 = vpop.permute.xlu0 %3913
  %3915 = vrot.lane.b32.xlu0 %v3725, 28
  %v3916 = vpop.permute.xlu0 %3915
  %3917 = vrot.lane.b32.xlu0 %v3726, 28
  %v3918 = vpop.permute.xlu0 %3917
  %vm3983 = vcmask 261344
  %3984 = vst.msk [vmem:[#allocation3] sm:$0xff] %vm3983, %v3792
  %3985 = vst.msk [vmem:[#allocation3 + $0x8] sm:$0xff] %vm3983, %v3794
  %3986 = vst.msk [vmem:[#allocation3 + $0x10] sm:$0xff] %vm3983, %v3796
  %3987 = vst.msk [vmem:[#allocation3 + $0x18] sm:$0xff] %vm3983, %v3798
  %3988 = vst.msk [vmem:[#allocation3 + $0x20] sm:$0xff] %vm3983, %v3800
  %3989 = vst.msk [vmem:[#allocation3 + $0x28] sm:$0xff] %vm3983, %v3802
  %3990 = vst.msk [vmem:[#allocation3 + $0x30] sm:$0xff] %vm3983, %v3804
  %3991 = vst.msk [vmem:[#allocation3 + $0x38] sm:$0xff] %vm3983, %v3806
  %3992 = vst.msk [vmem:[#allocation3 + $0x40] sm:$0xff] %vm3983, %v3808
  %3993 = vst.msk [vmem:[#allocation3 + $0x48] sm:$0xff] %vm3983, %v3810
  %3994 = vst.msk [vmem:[#allocation3 + $0x50] sm:$0xff] %vm3983, %v3812
  %3995 = vst.msk [vmem:[#allocation3 + $0x58] sm:$0xff] %vm3983, %v3814
  %3996 = vst.msk [vmem:[#allocation3 + $0x60] sm:$0xff] %vm3983, %v3816
  %3997 = vst.msk [vmem:[#allocation3 + $0x68] sm:$0xff] %vm3983, %v3818
  %3998 = vst.msk [vmem:[#allocation3 + $0x70] sm:$0xff] %vm3983, %v3820
  %3999 = vst.msk [vmem:[#allocation3 + $0x78] sm:$0xff] %vm3983, %v3822
  %4000 = vst.msk [vmem:[#allocation3 + $0x80] sm:$0xff] %vm3983, %v3824
  %4001 = vst.msk [vmem:[#allocation3 + $0x88] sm:$0xff] %vm3983, %v3826
  %4002 = vst.msk [vmem:[#allocation3 + $0x90] sm:$0xff] %vm3983, %v3828
  %4003 = vst.msk [vmem:[#allocation3 + $0x98] sm:$0xff] %vm3983, %v3830
  %4004 = vst.msk [vmem:[#allocation3 + $0xa0] sm:$0xff] %vm3983, %v3832
  %4005 = vst.msk [vmem:[#allocation3 + $0xa8] sm:$0xff] %vm3983, %v3834
  %4006 = vst.msk [vmem:[#allocation3 + $0xb0] sm:$0xff] %vm3983, %v3836
  %4007 = vst.msk [vmem:[#allocation3 + $0xb8] sm:$0xff] %vm3983, %v3838
  %4008 = vst.msk [vmem:[#allocation3 + $0xc0] sm:$0xff] %vm3983, %v3840
  %4009 = vst.msk [vmem:[#allocation3 + $0xc8] sm:$0xff] %vm3983, %v3842
  %4010 = vst.msk [vmem:[#allocation3 + $0xd0] sm:$0xff] %vm3983, %v3844
  %4011 = vst.msk [vmem:[#allocation3 + $0xd8] sm:$0xff] %vm3983, %v3846
  %4012 = vst.msk [vmem:[#allocation3 + $0xe0] sm:$0xff] %vm3983, %v3848
  %4013 = vst.msk [vmem:[#allocation3 + $0xe8] sm:$0xff] %vm3983, %v3850
  %4014 = vst.msk [vmem:[#allocation3 + $0xf0] sm:$0xff] %vm3983, %v3852
  %4015 = vst.msk [vmem:[#allocation3 + $0xf8] sm:$0xff] %vm3983, %v3854
  %4016 = vst.msk [vmem:[#allocation3 + $0x100] sm:$0xff] %vm3983, %v3856
  %4017 = vst.msk [vmem:[#allocation3 + $0x108] sm:$0xff] %vm3983, %v3858
  %4018 = vst.msk [vmem:[#allocation3 + $0x110] sm:$0xff] %vm3983, %v3860
  %4019 = vst.msk [vmem:[#allocation3 + $0x118] sm:$0xff] %vm3983, %v3862
  %4020 = vst.msk [vmem:[#allocation3 + $0x120] sm:$0xff] %vm3983, %v3864
  %4021 = vst.msk [vmem:[#allocation3 + $0x128] sm:$0xff] %vm3983, %v3866
  %4022 = vst.msk [vmem:[#allocation3 + $0x130] sm:$0xff] %vm3983, %v3868
  %4023 = vst.msk [vmem:[#allocation3 + $0x138] sm:$0xff] %vm3983, %v3870
  %4024 = vst.msk [vmem:[#allocation3 + $0x140] sm:$0xff] %vm3983, %v3872
  %4025 = vst.msk [vmem:[#allocation3 + $0x148] sm:$0xff] %vm3983, %v3874
  %4026 = vst.msk [vmem:[#allocation3 + $0x150] sm:$0xff] %vm3983, %v3876
  %4027 = vst.msk [vmem:[#allocation3 + $0x158] sm:$0xff] %vm3983, %v3878
  %4028 = vst.msk [vmem:[#allocation3 + $0x160] sm:$0xff] %vm3983, %v3880
  %4029 = vst.msk [vmem:[#allocation3 + $0x168] sm:$0xff] %vm3983, %v3882
  %4030 = vst.msk [vmem:[#allocation3 + $0x170] sm:$0xff] %vm3983, %v3884
  %4031 = vst.msk [vmem:[#allocation3 + $0x178] sm:$0xff] %vm3983, %v3886
  %4032 = vst.msk [vmem:[#allocation3 + $0x180] sm:$0xff] %vm3983, %v3888
  %4033 = vst.msk [vmem:[#allocation3 + $0x188] sm:$0xff] %vm3983, %v3890
  %4034 = vst.msk [vmem:[#allocation3 + $0x190] sm:$0xff] %vm3983, %v3892
  %4035 = vst.msk [vmem:[#allocation3 + $0x198] sm:$0xff] %vm3983, %v3894
  %4036 = vst.msk [vmem:[#allocation3 + $0x1a0] sm:$0xff] %vm3983, %v3896
  %4037 = vst.msk [vmem:[#allocation3 + $0x1a8] sm:$0xff] %vm3983, %v3898
  %4038 = vst.msk [vmem:[#allocation3 + $0x1b0] sm:$0xff] %vm3983, %v3900
  %4039 = vst.msk [vmem:[#allocation3 + $0x1b8] sm:$0xff] %vm3983, %v3902
  %4040 = vst.msk [vmem:[#allocation3 + $0x1c0] sm:$0xff] %vm3983, %v3904
  %4041 = vst.msk [vmem:[#allocation3 + $0x1c8] sm:$0xff] %vm3983, %v3906
  %4042 = vst.msk [vmem:[#allocation3 + $0x1d0] sm:$0xff] %vm3983, %v3908
  %4043 = vst.msk [vmem:[#allocation3 + $0x1d8] sm:$0xff] %vm3983, %v3910
  %4044 = vst.msk [vmem:[#allocation3 + $0x1e0] sm:$0xff] %vm3983, %v3912
  %4045 = vst.msk [vmem:[#allocation3 + $0x1e8] sm:$0xff] %vm3983, %v3914
  %4046 = vst.msk [vmem:[#allocation3 + $0x1f0] sm:$0xff] %vm3983, %v3916
  %4047 = vst.msk [vmem:[#allocation3 + $0x1f8] sm:$0xff] %vm3983, %v3918
  %v4048 = vld [vmem:[%s3277 + $0x2] sm:$0xff]
  %v4049 = vld [vmem:[%s3277 + $0xa] sm:$0xff]
  %v4050 = vld [vmem:[%s3277 + $0x1a] sm:$0xff]
  %v4051 = vld [vmem:[%s3277 + $0x22] sm:$0xff]
  %v4052 = vld [vmem:[%s3277 + $0x32] sm:$0xff]
  %v4053 = vld [vmem:[%s3277 + $0x3a] sm:$0xff]
  %v4054 = vld [vmem:[%s3277 + $0x4a] sm:$0xff]
  %v4055 = vld [vmem:[%s3277 + $0x52] sm:$0xff]
  %v4056 = vld [vmem:[%s3277 + $0x62] sm:$0xff]
  %v4057 = vld [vmem:[%s3277 + $0x6a] sm:$0xff]
  %v4058 = vld [vmem:[%s3277 + $0x7a] sm:$0xff]
  %v4059 = vld [vmem:[%s3277 + $0x82] sm:$0xff]
  %v4060 = vld [vmem:[%s3277 + $0x92] sm:$0xff]
  %v4061 = vld [vmem:[%s3277 + $0x9a] sm:$0xff]
  %v4062 = vld [vmem:[%s3277 + $0xaa] sm:$0xff]
  %v4063 = vld [vmem:[%s3277 + $0xb2] sm:$0xff]
  %v4064 = vld [vmem:[%s3277 + $0xc2] sm:$0xff]
  %v4065 = vld [vmem:[%s3277 + $0xca] sm:$0xff]
  %v4066 = vld [vmem:[%s3277 + $0xda] sm:$0xff]
  %v4067 = vld [vmem:[%s3277 + $0xe2] sm:$0xff]
  %v4068 = vld [vmem:[%s3277 + $0xf2] sm:$0xff]
  %v4069 = vld [vmem:[%s3277 + $0xfa] sm:$0xff]
  %v4070 = vld [vmem:[%s3277 + $0x10a] sm:$0xff]
  %v4071 = vld [vmem:[%s3277 + $0x112] sm:$0xff]
  %v4072 = vld [vmem:[%s3277 + $0x122] sm:$0xff]
  %v4073 = vld [vmem:[%s3277 + $0x12a] sm:$0xff]
  %v4074 = vld [vmem:[%s3277 + $0x13a] sm:$0xff]
  %v4075 = vld [vmem:[%s3277 + $0x142] sm:$0xff]
  %v4076 = vld [vmem:[%s3277 + $0x152] sm:$0xff]
  %v4077 = vld [vmem:[%s3277 + $0x15a] sm:$0xff]
  %v4078 = vld [vmem:[%s3277 + $0x16a] sm:$0xff]
  %v4079 = vld [vmem:[%s3277 + $0x172] sm:$0xff]
  %v4080 = vld [vmem:[%s3277 + $0x1b2] sm:$0xff]
  %v4081 = vld [vmem:[%s3277 + $0x1ba] sm:$0xff]
  %v4082 = vld [vmem:[%s3277 + $0x1ca] sm:$0xff]
  %v4083 = vld [vmem:[%s3277 + $0x1d2] sm:$0xff]
  %v4084 = vld [vmem:[%s3277 + $0x1e2] sm:$0xff]
  %v4085 = vld [vmem:[%s3277 + $0x1ea] sm:$0xff]
  %v4086 = vld [vmem:[%s3277 + $0x1fa] sm:$0xff]
  %v4087 = vld [vmem:[%s3277 + $0x202] sm:$0xff]
  %v4088 = vld [vmem:[%s3277 + $0x212] sm:$0xff]
  %v4089 = vld [vmem:[%s3277 + $0x21a] sm:$0xff]
  %v4090 = vld [vmem:[%s3277 + $0x22a] sm:$0xff]
  %v4091 = vld [vmem:[%s3277 + $0x232] sm:$0xff]
  %v4092 = vld [vmem:[%s3277 + $0x242] sm:$0xff]
  %v4093 = vld [vmem:[%s3277 + $0x24a] sm:$0xff]
  %v4094 = vld [vmem:[%s3277 + $0x25a] sm:$0xff]
  %v4095 = vld [vmem:[%s3277 + $0x262] sm:$0xff]
  %v4096 = vld [vmem:[%s3277 + $0x272] sm:$0xff]
  %v4097 = vld [vmem:[%s3277 + $0x27a] sm:$0xff]
  %v4098 = vld [vmem:[%s3277 + $0x28a] sm:$0xff]
  %v4099 = vld [vmem:[%s3277 + $0x292] sm:$0xff]
  %v4100 = vld [vmem:[%s3277 + $0x2a2] sm:$0xff]
  %v4101 = vld [vmem:[%s3277 + $0x2aa] sm:$0xff]
  %v4102 = vld [vmem:[%s3277 + $0x2ba] sm:$0xff]
  %v4103 = vld [vmem:[%s3277 + $0x2c2] sm:$0xff]
  %v4104 = vld [vmem:[%s3277 + $0x2d2] sm:$0xff]
  %v4105 = vld [vmem:[%s3277 + $0x2da] sm:$0xff]
  %v4106 = vld [vmem:[%s3277 + $0x2ea] sm:$0xff]
  %v4107 = vld [vmem:[%s3277 + $0x2f2] sm:$0xff]
  %v4108 = vld [vmem:[%s3277 + $0x302] sm:$0xff]
  %v4109 = vld [vmem:[%s3277 + $0x30a] sm:$0xff]
  %v4110 = vld [vmem:[%s3277 + $0x31a] sm:$0xff]
  %v4111 = vld [vmem:[%s3277 + $0x322] sm:$0xff]
  %4176 = vrot.lane.b32.xlu0 %v4048, 32
  %v4177 = vpop.permute.xlu0 %4176
  %4178 = vrot.lane.b32.xlu0 %v4049, 32
  %v4179 = vpop.permute.xlu0 %4178
  %4180 = vrot.lane.b32.xlu0 %v4050, 32
  %v4181 = vpop.permute.xlu0 %4180
  %4182 = vrot.lane.b32.xlu0 %v4051, 32
  %v4183 = vpop.permute.xlu0 %4182
  %4184 = vrot.lane.b32.xlu0 %v4052, 32
  %v4185 = vpop.permute.xlu0 %4184
  %4186 = vrot.lane.b32.xlu0 %v4053, 32
  %v4187 = vpop.permute.xlu0 %4186
  %4188 = vrot.lane.b32.xlu0 %v4054, 32
  %v4189 = vpop.permute.xlu0 %4188
  %4190 = vrot.lane.b32.xlu0 %v4055, 32
  %v4191 = vpop.permute.xlu0 %4190
  %4192 = vrot.lane.b32.xlu0 %v4056, 32
  %v4193 = vpop.permute.xlu0 %4192
  %4194 = vrot.lane.b32.xlu0 %v4057, 32
  %v4195 = vpop.permute.xlu0 %4194
  %4196 = vrot.lane.b32.xlu0 %v4058, 32
  %v4197 = vpop.permute.xlu0 %4196
  %4198 = vrot.lane.b32.xlu0 %v4059, 32
  %v4199 = vpop.permute.xlu0 %4198
  %4200 = vrot.lane.b32.xlu0 %v4060, 32
  %v4201 = vpop.permute.xlu0 %4200
  %4202 = vrot.lane.b32.xlu0 %v4061, 32
  %v4203 = vpop.permute.xlu0 %4202
  %4204 = vrot.lane.b32.xlu0 %v4062, 32
  %v4205 = vpop.permute.xlu0 %4204
  %4206 = vrot.lane.b32.xlu0 %v4063, 32
  %v4207 = vpop.permute.xlu0 %4206
  %4208 = vrot.lane.b32.xlu0 %v4064, 32
  %v4209 = vpop.permute.xlu0 %4208
  %4210 = vrot.lane.b32.xlu0 %v4065, 32
  %v4211 = vpop.permute.xlu0 %4210
  %4212 = vrot.lane.b32.xlu0 %v4066, 32
  %v4213 = vpop.permute.xlu0 %4212
  %4214 = vrot.lane.b32.xlu0 %v4067, 32
  %v4215 = vpop.permute.xlu0 %4214
  %4216 = vrot.lane.b32.xlu0 %v4068, 32
  %v4217 = vpop.permute.xlu0 %4216
  %4218 = vrot.lane.b32.xlu0 %v4069, 32
  %v4219 = vpop.permute.xlu0 %4218
  %4220 = vrot.lane.b32.xlu0 %v4070, 32
  %v4221 = vpop.permute.xlu0 %4220
  %4222 = vrot.lane.b32.xlu0 %v4071, 32
  %v4223 = vpop.permute.xlu0 %4222
  %4224 = vrot.lane.b32.xlu0 %v4072, 32
  %v4225 = vpop.permute.xlu0 %4224
  %4226 = vrot.lane.b32.xlu0 %v4073, 32
  %v4227 = vpop.permute.xlu0 %4226
  %4228 = vrot.lane.b32.xlu0 %v4074, 32
  %v4229 = vpop.permute.xlu0 %4228
  %4230 = vrot.lane.b32.xlu0 %v4075, 32
  %v4231 = vpop.permute.xlu0 %4230
  %4232 = vrot.lane.b32.xlu0 %v4076, 32
  %v4233 = vpop.permute.xlu0 %4232
  %4234 = vrot.lane.b32.xlu0 %v4077, 32
  %v4235 = vpop.permute.xlu0 %4234
  %4236 = vrot.lane.b32.xlu0 %v4078, 32
  %v4237 = vpop.permute.xlu0 %4236
  %4238 = vrot.lane.b32.xlu0 %v4079, 32
  %v4239 = vpop.permute.xlu0 %4238
  %4240 = vrot.lane.b32.xlu0 %v4080, 32
  %v4241 = vpop.permute.xlu0 %4240
  %4242 = vrot.lane.b32.xlu0 %v4081, 32
  %v4243 = vpop.permute.xlu0 %4242
  %4244 = vrot.lane.b32.xlu0 %v4082, 32
  %v4245 = vpop.permute.xlu0 %4244
  %4246 = vrot.lane.b32.xlu0 %v4083, 32
  %v4247 = vpop.permute.xlu0 %4246
  %4248 = vrot.lane.b32.xlu0 %v4084, 32
  %v4249 = vpop.permute.xlu0 %4248
  %4250 = vrot.lane.b32.xlu0 %v4085, 32
  %v4251 = vpop.permute.xlu0 %4250
  %4252 = vrot.lane.b32.xlu0 %v4086, 32
  %v4253 = vpop.permute.xlu0 %4252
  %4254 = vrot.lane.b32.xlu0 %v4087, 32
  %v4255 = vpop.permute.xlu0 %4254
  %4256 = vrot.lane.b32.xlu0 %v4088, 32
  %v4257 = vpop.permute.xlu0 %4256
  %4258 = vrot.lane.b32.xlu0 %v4089, 32
  %v4259 = vpop.permute.xlu0 %4258
  %4260 = vrot.lane.b32.xlu0 %v4090, 32
  %v4261 = vpop.permute.xlu0 %4260
  %4262 = vrot.lane.b32.xlu0 %v4091, 32
  %v4263 = vpop.permute.xlu0 %4262
  %4264 = vrot.lane.b32.xlu0 %v4092, 32
  %v4265 = vpop.permute.xlu0 %4264
  %4266 = vrot.lane.b32.xlu0 %v4093, 32
  %v4267 = vpop.permute.xlu0 %4266
  %4268 = vrot.lane.b32.xlu0 %v4094, 32
  %v4269 = vpop.permute.xlu0 %4268
  %4270 = vrot.lane.b32.xlu0 %v4095, 32
  %v4271 = vpop.permute.xlu0 %4270
  %4272 = vrot.lane.b32.xlu0 %v4096, 32
  %v4273 = vpop.permute.xlu0 %4272
  %4274 = vrot.lane.b32.xlu0 %v4097, 32
  %v4275 = vpop.permute.xlu0 %4274
  %4276 = vrot.lane.b32.xlu0 %v4098, 32
  %v4277 = vpop.permute.xlu0 %4276
  %4278 = vrot.lane.b32.xlu0 %v4099, 32
  %v4279 = vpop.permute.xlu0 %4278
  %4280 = vrot.lane.b32.xlu0 %v4100, 32
  %v4281 = vpop.permute.xlu0 %4280
  %4282 = vrot.lane.b32.xlu0 %v4101, 32
  %v4283 = vpop.permute.xlu0 %4282
  %4284 = vrot.lane.b32.xlu0 %v4102, 32
  %v4285 = vpop.permute.xlu0 %4284
  %4286 = vrot.lane.b32.xlu0 %v4103, 32
  %v4287 = vpop.permute.xlu0 %4286
  %4288 = vrot.lane.b32.xlu0 %v4104, 32
  %v4289 = vpop.permute.xlu0 %4288
  %4290 = vrot.lane.b32.xlu0 %v4105, 32
  %v4291 = vpop.permute.xlu0 %4290
  %4292 = vrot.lane.b32.xlu0 %v4106, 32
  %v4293 = vpop.permute.xlu0 %4292
  %4294 = vrot.lane.b32.xlu0 %v4107, 32
  %v4295 = vpop.permute.xlu0 %4294
  %4296 = vrot.lane.b32.xlu0 %v4108, 32
  %v4297 = vpop.permute.xlu0 %4296
  %4298 = vrot.lane.b32.xlu0 %v4109, 32
  %v4299 = vpop.permute.xlu0 %4298
  %4300 = vrot.lane.b32.xlu0 %v4110, 32
  %v4301 = vpop.permute.xlu0 %4300
  %4302 = vrot.lane.b32.xlu0 %v4111, 32
  %v4303 = vpop.permute.xlu0 %4302
  %vm4368 = vcmask 294144
  %4369 = vst.msk [vmem:[#allocation3] sm:$0xff] %vm4368, %v4177
  %4370 = vst.msk [vmem:[#allocation3 + $0x8] sm:$0xff] %vm4368, %v4179
  %4371 = vst.msk [vmem:[#allocation3 + $0x10] sm:$0xff] %vm4368, %v4181
  %4372 = vst.msk [vmem:[#allocation3 + $0x18] sm:$0xff] %vm4368, %v4183
  %4373 = vst.msk [vmem:[#allocation3 + $0x20] sm:$0xff] %vm4368, %v4185
  %4374 = vst.msk [vmem:[#allocation3 + $0x28] sm:$0xff] %vm4368, %v4187
  %4375 = vst.msk [vmem:[#allocation3 + $0x30] sm:$0xff] %vm4368, %v4189
  %4376 = vst.msk [vmem:[#allocation3 + $0x38] sm:$0xff] %vm4368, %v4191
  %4377 = vst.msk [vmem:[#allocation3 + $0x40] sm:$0xff] %vm4368, %v4193
  %4378 = vst.msk [vmem:[#allocation3 + $0x48] sm:$0xff] %vm4368, %v4195
  %4379 = vst.msk [vmem:[#allocation3 + $0x50] sm:$0xff] %vm4368, %v4197
  %4380 = vst.msk [vmem:[#allocation3 + $0x58] sm:$0xff] %vm4368, %v4199
  %4381 = vst.msk [vmem:[#allocation3 + $0x60] sm:$0xff] %vm4368, %v4201
  %4382 = vst.msk [vmem:[#allocation3 + $0x68] sm:$0xff] %vm4368, %v4203
  %4383 = vst.msk [vmem:[#allocation3 + $0x70] sm:$0xff] %vm4368, %v4205
  %4384 = vst.msk [vmem:[#allocation3 + $0x78] sm:$0xff] %vm4368, %v4207
  %4385 = vst.msk [vmem:[#allocation3 + $0x80] sm:$0xff] %vm4368, %v4209
  %4386 = vst.msk [vmem:[#allocation3 + $0x88] sm:$0xff] %vm4368, %v4211
  %4387 = vst.msk [vmem:[#allocation3 + $0x90] sm:$0xff] %vm4368, %v4213
  %4388 = vst.msk [vmem:[#allocation3 + $0x98] sm:$0xff] %vm4368, %v4215
  %4389 = vst.msk [vmem:[#allocation3 + $0xa0] sm:$0xff] %vm4368, %v4217
  %4390 = vst.msk [vmem:[#allocation3 + $0xa8] sm:$0xff] %vm4368, %v4219
  %4391 = vst.msk [vmem:[#allocation3 + $0xb0] sm:$0xff] %vm4368, %v4221
  %4392 = vst.msk [vmem:[#allocation3 + $0xb8] sm:$0xff] %vm4368, %v4223
  %4393 = vst.msk [vmem:[#allocation3 + $0xc0] sm:$0xff] %vm4368, %v4225
  %4394 = vst.msk [vmem:[#allocation3 + $0xc8] sm:$0xff] %vm4368, %v4227
  %4395 = vst.msk [vmem:[#allocation3 + $0xd0] sm:$0xff] %vm4368, %v4229
  %4396 = vst.msk [vmem:[#allocation3 + $0xd8] sm:$0xff] %vm4368, %v4231
  %4397 = vst.msk [vmem:[#allocation3 + $0xe0] sm:$0xff] %vm4368, %v4233
  %4398 = vst.msk [vmem:[#allocation3 + $0xe8] sm:$0xff] %vm4368, %v4235
  %4399 = vst.msk [vmem:[#allocation3 + $0xf0] sm:$0xff] %vm4368, %v4237
  %4400 = vst.msk [vmem:[#allocation3 + $0xf8] sm:$0xff] %vm4368, %v4239
  %4401 = vst.msk [vmem:[#allocation3 + $0x100] sm:$0xff] %vm4368, %v4241
  %4402 = vst.msk [vmem:[#allocation3 + $0x108] sm:$0xff] %vm4368, %v4243
  %4403 = vst.msk [vmem:[#allocation3 + $0x110] sm:$0xff] %vm4368, %v4245
  %4404 = vst.msk [vmem:[#allocation3 + $0x118] sm:$0xff] %vm4368, %v4247
  %4405 = vst.msk [vmem:[#allocation3 + $0x120] sm:$0xff] %vm4368, %v4249
  %4406 = vst.msk [vmem:[#allocation3 + $0x128] sm:$0xff] %vm4368, %v4251
  %4407 = vst.msk [vmem:[#allocation3 + $0x130] sm:$0xff] %vm4368, %v4253
  %4408 = vst.msk [vmem:[#allocation3 + $0x138] sm:$0xff] %vm4368, %v4255
  %4409 = vst.msk [vmem:[#allocation3 + $0x140] sm:$0xff] %vm4368, %v4257
  %4410 = vst.msk [vmem:[#allocation3 + $0x148] sm:$0xff] %vm4368, %v4259
  %4411 = vst.msk [vmem:[#allocation3 + $0x150] sm:$0xff] %vm4368, %v4261
  %4412 = vst.msk [vmem:[#allocation3 + $0x158] sm:$0xff] %vm4368, %v4263
  %4413 = vst.msk [vmem:[#allocation3 + $0x160] sm:$0xff] %vm4368, %v4265
  %4414 = vst.msk [vmem:[#allocation3 + $0x168] sm:$0xff] %vm4368, %v4267
  %4415 = vst.msk [vmem:[#allocation3 + $0x170] sm:$0xff] %vm4368, %v4269
  %4416 = vst.msk [vmem:[#allocation3 + $0x178] sm:$0xff] %vm4368, %v4271
  %4417 = vst.msk [vmem:[#allocation3 + $0x180] sm:$0xff] %vm4368, %v4273
  %4418 = vst.msk [vmem:[#allocation3 + $0x188] sm:$0xff] %vm4368, %v4275
  %4419 = vst.msk [vmem:[#allocation3 + $0x190] sm:$0xff] %vm4368, %v4277
  %4420 = vst.msk [vmem:[#allocation3 + $0x198] sm:$0xff] %vm4368, %v4279
  %4421 = vst.msk [vmem:[#allocation3 + $0x1a0] sm:$0xff] %vm4368, %v4281
  %4422 = vst.msk [vmem:[#allocation3 + $0x1a8] sm:$0xff] %vm4368, %v4283
  %4423 = vst.msk [vmem:[#allocation3 + $0x1b0] sm:$0xff] %vm4368, %v4285
  %4424 = vst.msk [vmem:[#allocation3 + $0x1b8] sm:$0xff] %vm4368, %v4287
  %4425 = vst.msk [vmem:[#allocation3 + $0x1c0] sm:$0xff] %vm4368, %v4289
  %4426 = vst.msk [vmem:[#allocation3 + $0x1c8] sm:$0xff] %vm4368, %v4291
  %4427 = vst.msk [vmem:[#allocation3 + $0x1d0] sm:$0xff] %vm4368, %v4293
  %4428 = vst.msk [vmem:[#allocation3 + $0x1d8] sm:$0xff] %vm4368, %v4295
  %4429 = vst.msk [vmem:[#allocation3 + $0x1e0] sm:$0xff] %vm4368, %v4297
  %4430 = vst.msk [vmem:[#allocation3 + $0x1e8] sm:$0xff] %vm4368, %v4299
  %4431 = vst.msk [vmem:[#allocation3 + $0x1f0] sm:$0xff] %vm4368, %v4301
  %4432 = vst.msk [vmem:[#allocation3 + $0x1f8] sm:$0xff] %vm4368, %v4303
  %v4433 = vld [vmem:[#allocation3] sm:$0xff]
  %v4434 = vld [vmem:[#allocation3 + $0x8] sm:$0xff]
  %v4435 = vld [vmem:[#allocation3 + $0x10] sm:$0xff]
  %v4436 = vld [vmem:[#allocation3 + $0x18] sm:$0xff]
  %v4437 = vld [vmem:[#allocation3 + $0x20] sm:$0xff]
  %v4438 = vld [vmem:[#allocation3 + $0x28] sm:$0xff]
  %v4439 = vld [vmem:[#allocation3 + $0x30] sm:$0xff]
  %v4440 = vld [vmem:[#allocation3 + $0x38] sm:$0xff]
  %v4441 = vld [vmem:[#allocation3 + $0x40] sm:$0xff]
  %v4442 = vld [vmem:[#allocation3 + $0x48] sm:$0xff]
  %v4443 = vld [vmem:[#allocation3 + $0x50] sm:$0xff]
  %v4444 = vld [vmem:[#allocation3 + $0x58] sm:$0xff]
  %v4445 = vld [vmem:[#allocation3 + $0x60] sm:$0xff]
  %v4446 = vld [vmem:[#allocation3 + $0x68] sm:$0xff]
  %v4447 = vld [vmem:[#allocation3 + $0x70] sm:$0xff]
  %v4448 = vld [vmem:[#allocation3 + $0x78] sm:$0xff]
  %v4449 = vld [vmem:[#allocation3 + $0x80] sm:$0xff]
  %v4450 = vld [vmem:[#allocation3 + $0x88] sm:$0xff]
  %v4451 = vld [vmem:[#allocation3 + $0x90] sm:$0xff]
  %v4452 = vld [vmem:[#allocation3 + $0x98] sm:$0xff]
  %v4453 = vld [vmem:[#allocation3 + $0xa0] sm:$0xff]
  %v4454 = vld [vmem:[#allocation3 + $0xa8] sm:$0xff]
  %v4455 = vld [vmem:[#allocation3 + $0xb0] sm:$0xff]
  %v4456 = vld [vmem:[#allocation3 + $0xb8] sm:$0xff]
  %v4457 = vld [vmem:[#allocation3 + $0xc0] sm:$0xff]
  %v4458 = vld [vmem:[#allocation3 + $0xc8] sm:$0xff]
  %v4459 = vld [vmem:[#allocation3 + $0xd0] sm:$0xff]
  %v4460 = vld [vmem:[#allocation3 + $0xd8] sm:$0xff]
  %v4461 = vld [vmem:[#allocation3 + $0xe0] sm:$0xff]
  %v4462 = vld [vmem:[#allocation3 + $0xe8] sm:$0xff]
  %v4463 = vld [vmem:[#allocation3 + $0xf0] sm:$0xff]
  %v4464 = vld [vmem:[#allocation3 + $0xf8] sm:$0xff]
  %v4465 = vld [vmem:[#allocation3 + $0x100] sm:$0xff]
  %v4466 = vld [vmem:[#allocation3 + $0x108] sm:$0xff]
  %v4467 = vld [vmem:[#allocation3 + $0x110] sm:$0xff]
  %v4468 = vld [vmem:[#allocation3 + $0x118] sm:$0xff]
  %v4469 = vld [vmem:[#allocation3 + $0x120] sm:$0xff]
  %v4470 = vld [vmem:[#allocation3 + $0x128] sm:$0xff]
  %v4471 = vld [vmem:[#allocation3 + $0x130] sm:$0xff]
  %v4472 = vld [vmem:[#allocation3 + $0x138] sm:$0xff]
  %v4473 = vld [vmem:[#allocation3 + $0x140] sm:$0xff]
  %v4474 = vld [vmem:[#allocation3 + $0x148] sm:$0xff]
  %v4475 = vld [vmem:[#allocation3 + $0x150] sm:$0xff]
  %v4476 = vld [vmem:[#allocation3 + $0x158] sm:$0xff]
  %v4477 = vld [vmem:[#allocation3 + $0x160] sm:$0xff]
  %v4478 = vld [vmem:[#allocation3 + $0x168] sm:$0xff]
  %v4479 = vld [vmem:[#allocation3 + $0x170] sm:$0xff]
  %v4480 = vld [vmem:[#allocation3 + $0x178] sm:$0xff]
  %v4481 = vld [vmem:[#allocation3 + $0x180] sm:$0xff]
  %v4482 = vld [vmem:[#allocation3 + $0x188] sm:$0xff]
  %v4483 = vld [vmem:[#allocation3 + $0x190] sm:$0xff]
  %v4484 = vld [vmem:[#allocation3 + $0x198] sm:$0xff]
  %v4485 = vld [vmem:[#allocation3 + $0x1a0] sm:$0xff]
  %v4486 = vld [vmem:[#allocation3 + $0x1a8] sm:$0xff]
  %v4487 = vld [vmem:[#allocation3 + $0x1b0] sm:$0xff]
  %v4488 = vld [vmem:[#allocation3 + $0x1b8] sm:$0xff]
  %v4489 = vld [vmem:[#allocation3 + $0x1c0] sm:$0xff]
  %v4490 = vld [vmem:[#allocation3 + $0x1c8] sm:$0xff]
  %v4491 = vld [vmem:[#allocation3 + $0x1d0] sm:$0xff]
  %v4492 = vld [vmem:[#allocation3 + $0x1d8] sm:$0xff]
  %v4493 = vld [vmem:[#allocation3 + $0x1e0] sm:$0xff]
  %v4494 = vld [vmem:[#allocation3 + $0x1e8] sm:$0xff]
  %v4495 = vld [vmem:[#allocation3 + $0x1f0] sm:$0xff]
  %v4496 = vld [vmem:[#allocation3 + $0x1f8] sm:$0xff]
  %v4497 = vpack.c.bf16 %v4434, %v4433
  %v4498 = vpack.c.bf16 %v4436, %v4435
  %v4499 = vpack.c.bf16 %v4438, %v4437
  %v4500 = vpack.c.bf16 %v4440, %v4439
  %v4501 = vpack.c.bf16 %v4442, %v4441
  %v4502 = vpack.c.bf16 %v4444, %v4443
  %v4503 = vpack.c.bf16 %v4446, %v4445
  %v4504 = vpack.c.bf16 %v4448, %v4447
  %v4505 = vpack.c.bf16 %v4450, %v4449
  %v4506 = vpack.c.bf16 %v4452, %v4451
  %v4507 = vpack.c.bf16 %v4454, %v4453
  %v4508 = vpack.c.bf16 %v4456, %v4455
  %v4509 = vpack.c.bf16 %v4458, %v4457
  %v4510 = vpack.c.bf16 %v4460, %v4459
  %v4511 = vpack.c.bf16 %v4462, %v4461
  %v4512 = vpack.c.bf16 %v4464, %v4463
  %v4513 = vpack.c.bf16 %v4466, %v4465
  %v4514 = vpack.c.bf16 %v4468, %v4467
  %v4515 = vpack.c.bf16 %v4470, %v4469
  %v4516 = vpack.c.bf16 %v4472, %v4471
  %v4517 = vpack.c.bf16 %v4474, %v4473
  %v4518 = vpack.c.bf16 %v4476, %v4475
  %v4519 = vpack.c.bf16 %v4478, %v4477
  %v4520 = vpack.c.bf16 %v4480, %v4479
  %v4521 = vpack.c.bf16 %v4482, %v4481
  %v4522 = vpack.c.bf16 %v4484, %v4483
  %v4523 = vpack.c.bf16 %v4486, %v4485
  %v4524 = vpack.c.bf16 %v4488, %v4487
  %v4525 = vpack.c.bf16 %v4490, %v4489
  %v4526 = vpack.c.bf16 %v4492, %v4491
  %v4527 = vpack.c.bf16 %v4494, %v4493
  %v4528 = vpack.c.bf16 %v4496, %v4495
  %v4529 = vld [vmem:[%s4] sm:$0xf]
  %v4530 = vld [vmem:[%s4 + $0x4] sm:$0xf]
  %v4531 = vld [vmem:[%s4 + $0x8] sm:$0xf]
  %v4532 = vld [vmem:[%s4 + $0xc] sm:$0xf]
  %v4533 = vld [vmem:[%s4 + $0x10] sm:$0x3]
  %v4539 = vunpack.c.l.b16 %v4529
  %v4540 = vunpack.c.l.b16 %v4530
  %v4541 = vunpack.c.l.b16 %v4531
  %v4542 = vunpack.c.l.b16 %v4532
  %v4543 = vunpack.c.l.b16 %v4533
  %v4544 = vpack.c.b16 %v4540, %v4539
  %v4545 = vpack.c.b16 %v4542, %v4541
  %v4546 = vpack.c.b16 %v4543, %v4543
  %vm4549 = vcmask 293888
  %v4551 = vsel %vm4549, %v4497, 0
  %v4554 = vsel %vm4549, %v4498, 0
  %v4557 = vsel %vm4549, %v4499, 0
  %v4560 = vsel %vm4549, %v4500, 0
  %v4563 = vsel %vm4549, %v4501, 0
  %v4566 = vsel %vm4549, %v4502, 0
  %v4569 = vsel %vm4549, %v4503, 0
  %v4572 = vsel %vm4549, %v4504, 0
  %v4575 = vsel %vm4549, %v4505, 0
  %v4578 = vsel %vm4549, %v4506, 0
  %v4581 = vsel %vm4549, %v4507, 0
  %v4584 = vsel %vm4549, %v4508, 0
  %v4587 = vsel %vm4549, %v4509, 0
  %v4590 = vsel %vm4549, %v4510, 0
  %v4593 = vsel %vm4549, %v4511, 0
  %v4596 = vsel %vm4549, %v4512, 0
  %v4599 = vsel %vm4549, %v4513, 0
  %v4602 = vsel %vm4549, %v4514, 0
  %v4605 = vsel %vm4549, %v4515, 0
  %v4608 = vsel %vm4549, %v4516, 0
  %v4611 = vsel %vm4549, %v4517, 0
  %v4614 = vsel %vm4549, %v4518, 0
  %v4617 = vsel %vm4549, %v4519, 0
  %v4620 = vsel %vm4549, %v4520, 0
  %v4623 = vsel %vm4549, %v4521, 0
  %v4626 = vsel %vm4549, %v4522, 0
  %v4629 = vsel %vm4549, %v4523, 0
  %v4632 = vsel %vm4549, %v4524, 0
  %v4635 = vsel %vm4549, %v4525, 0
  %v4638 = vsel %vm4549, %v4526, 0
  %v4641 = vsel %vm4549, %v4527, 0
  %v4644 = vsel %vm4549, %v4528, 0
  %vm4646 = vcmask 1041408
  %v4648 = vsel %vm4646, %v4546, 0
  %4650 = vmatprep.subr.bf16.mxu0 0
  %4651 = vmatpush1.bf16.msra.mxu0 0
  %4652 = vmatprep.subr.bf16.mxu0 0
  %4653 = vmatpush1.bf16.msra.mxu0 0
  %4654 = vmatprep.subr.bf16.mxu0 0
  %4655 = vmatpush1.bf16.msra.mxu0 0
  %4656 = vmatprep.subr.bf16.mxu0 0
  %4657 = vmatpush1.bf16.msra.mxu0 0
  %4658 = vmatprep.subr.bf16.mxu0 0
  %4659 = vmatpush1.bf16.msra.mxu0 0
  %4660 = vmatprep.subr.bf16.mxu0 0
  %4661 = vmatpush1.bf16.msra.mxu0 %v4648
  %4662 = vmatprep.subr.bf16.mxu0 0
  %4663 = vmatpush1.bf16.msra.mxu0 %v4545
  %4664 = vmatprep.subr.bf16.mxu0 0
  %4665 = vmatpush1.bf16.msra.mxu0 %v4544
  %4666 = vmatprep.subr.bf16.mxu0 0
  %4667 = vmatpush2.bf16.msra.mxu0 0
  %4668 = vmatprep.subr.bf16.mxu0 0
  %4669 = vmatpush2.bf16.msra.mxu0 0
  %4670 = vmatprep.subr.bf16.mxu0 0
  %4671 = vmatpush2.bf16.msra.mxu0 0
  %4672 = vmatprep.subr.bf16.mxu0 0
  %4673 = vmatpush2.bf16.msra.mxu0 0
  %4674 = vmatprep.subr.bf16.mxu0 0
  %4675 = vmatpush2.bf16.msra.mxu0 0
  %4676 = vmatprep.subr.bf16.mxu0 0
  %4677 = vmatpush2.bf16.msra.mxu0 0
  %4678 = vmatprep.subr.bf16.mxu0 0
  %4679 = vmatpush2.bf16.msra.mxu0 0
  %4680 = vmatprep.subr.bf16.mxu0 0
  %4681 = vmatpush2.bf16.msra.mxu0 0
  %4682 = vmatprep.mubr.bf16.mxu0 0
  %4683 = vmatmul.mubr.bf16.gmra.mxu0 %v4551
  %v4684 = vpop.f32.mrf.mxu0
  %v4685 = vadd.f32 0.0, %v4684
  %v4686 = vpop.f32.mrf.mxu0
  %v4687 = vpop.f32.mrf.mxu0
  %v4688 = vadd.f32 0.0, %v4687
  %v4689 = vpop.f32.mrf.mxu0
  %4690 = vmatprep.mubr.bf16.mxu0 0
  %4691 = vmatmul.mubr.bf16.gmra.mxu0 %v4554
  %v4692 = vpop.f32.mrf.mxu0
  %v4693 = vadd.f32 0.0, %v4692
  %v4694 = vpop.f32.mrf.mxu0
  %v4695 = vpop.f32.mrf.mxu0
  %v4696 = vadd.f32 0.0, %v4695
  %v4697 = vpop.f32.mrf.mxu0
  %4698 = vmatprep.mubr.bf16.mxu0 0
  %4699 = vmatmul.mubr.bf16.gmra.mxu0 %v4557
  %v4700 = vpop.f32.mrf.mxu0
  %v4701 = vadd.f32 0.0, %v4700
  %v4702 = vpop.f32.mrf.mxu0
  %v4703 = vpop.f32.mrf.mxu0
  %v4704 = vadd.f32 0.0, %v4703
  %v4705 = vpop.f32.mrf.mxu0
  %4706 = vmatprep.mubr.bf16.mxu0 0
  %4707 = vmatmul.mubr.bf16.gmra.mxu0 %v4560
  %v4708 = vpop.f32.mrf.mxu0
  %v4709 = vadd.f32 0.0, %v4708
  %v4710 = vpop.f32.mrf.mxu0
  %v4711 = vpop.f32.mrf.mxu0
  %v4712 = vadd.f32 0.0, %v4711
  %v4713 = vpop.f32.mrf.mxu0
  %4714 = vmatprep.mubr.bf16.mxu0 0
  %4715 = vmatmul.mubr.bf16.gmra.mxu0 %v4563
  %v4716 = vpop.f32.mrf.mxu0
  %v4717 = vadd.f32 0.0, %v4716
  %v4718 = vpop.f32.mrf.mxu0
  %v4719 = vpop.f32.mrf.mxu0
  %v4720 = vadd.f32 0.0, %v4719
  %v4721 = vpop.f32.mrf.mxu0
  %4722 = vmatprep.mubr.bf16.mxu0 0
  %4723 = vmatmul.mubr.bf16.gmra.mxu0 %v4566
  %v4724 = vpop.f32.mrf.mxu0
  %v4725 = vadd.f32 0.0, %v4724
  %v4726 = vpop.f32.mrf.mxu0
  %v4727 = vpop.f32.mrf.mxu0
  %v4728 = vadd.f32 0.0, %v4727
  %v4729 = vpop.f32.mrf.mxu0
  %4730 = vmatprep.mubr.bf16.mxu0 0
  %4731 = vmatmul.mubr.bf16.gmra.mxu0 %v4569
  %v4732 = vpop.f32.mrf.mxu0
  %v4733 = vadd.f32 0.0, %v4732
  %v4734 = vpop.f32.mrf.mxu0
  %v4735 = vpop.f32.mrf.mxu0
  %v4736 = vadd.f32 0.0, %v4735
  %v4737 = vpop.f32.mrf.mxu0
  %4738 = vmatprep.mubr.bf16.mxu0 0
  %4739 = vmatmul.mubr.bf16.gmra.mxu0 %v4572
  %v4740 = vpop.f32.mrf.mxu0
  %v4741 = vadd.f32 0.0, %v4740
  %v4742 = vpop.f32.mrf.mxu0
  %v4743 = vpop.f32.mrf.mxu0
  %v4744 = vadd.f32 0.0, %v4743
  %v4745 = vpop.f32.mrf.mxu0
  %4746 = vmatprep.mubr.bf16.mxu0 0
  %4747 = vmatmul.mubr.bf16.gmra.mxu0 %v4575
  %v4748 = vpop.f32.mrf.mxu0
  %v4749 = vadd.f32 0.0, %v4748
  %v4750 = vpop.f32.mrf.mxu0
  %v4751 = vpop.f32.mrf.mxu0
  %v4752 = vadd.f32 0.0, %v4751
  %v4753 = vpop.f32.mrf.mxu0
  %4754 = vmatprep.mubr.bf16.mxu0 0
  %4755 = vmatmul.mubr.bf16.gmra.mxu0 %v4578
  %v4756 = vpop.f32.mrf.mxu0
  %v4757 = vadd.f32 0.0, %v4756
  %v4758 = vpop.f32.mrf.mxu0
  %v4759 = vpop.f32.mrf.mxu0
  %v4760 = vadd.f32 0.0, %v4759
  %v4761 = vpop.f32.mrf.mxu0
  %4762 = vmatprep.mubr.bf16.mxu0 0
  %4763 = vmatmul.mubr.bf16.gmra.mxu0 %v4581
  %v4764 = vpop.f32.mrf.mxu0
  %v4765 = vadd.f32 0.0, %v4764
  %v4766 = vpop.f32.mrf.mxu0
  %v4767 = vpop.f32.mrf.mxu0
  %v4768 = vadd.f32 0.0, %v4767
  %v4769 = vpop.f32.mrf.mxu0
  %4770 = vmatprep.mubr.bf16.mxu0 0
  %4771 = vmatmul.mubr.bf16.gmra.mxu0 %v4584
  %v4772 = vpop.f32.mrf.mxu0
  %v4773 = vadd.f32 0.0, %v4772
  %v4774 = vpop.f32.mrf.mxu0
  %v4775 = vpop.f32.mrf.mxu0
  %v4776 = vadd.f32 0.0, %v4775
  %v4777 = vpop.f32.mrf.mxu0
  %4778 = vmatprep.mubr.bf16.mxu0 0
  %4779 = vmatmul.mubr.bf16.gmra.mxu0 %v4587
  %v4780 = vpop.f32.mrf.mxu0
  %v4781 = vadd.f32 0.0, %v4780
  %v4782 = vpop.f32.mrf.mxu0
  %v4783 = vpop.f32.mrf.mxu0
  %v4784 = vadd.f32 0.0, %v4783
  %v4785 = vpop.f32.mrf.mxu0
  %4786 = vmatprep.mubr.bf16.mxu0 0
  %4787 = vmatmul.mubr.bf16.gmra.mxu0 %v4590
  %v4788 = vpop.f32.mrf.mxu0
  %v4789 = vadd.f32 0.0, %v4788
  %v4790 = vpop.f32.mrf.mxu0
  %v4791 = vpop.f32.mrf.mxu0
  %v4792 = vadd.f32 0.0, %v4791
  %v4793 = vpop.f32.mrf.mxu0
  %4794 = vmatprep.mubr.bf16.mxu0 0
  %4795 = vmatmul.mubr.bf16.gmra.mxu0 %v4593
  %v4796 = vpop.f32.mrf.mxu0
  %v4797 = vadd.f32 0.0, %v4796
  %v4798 = vpop.f32.mrf.mxu0
  %v4799 = vpop.f32.mrf.mxu0
  %v4800 = vadd.f32 0.0, %v4799
  %v4801 = vpop.f32.mrf.mxu0
  %4802 = vmatprep.mubr.bf16.mxu0 0
  %4803 = vmatmul.mubr.bf16.gmra.mxu0 %v4596
  %v4804 = vpop.f32.mrf.mxu0
  %v4805 = vadd.f32 0.0, %v4804
  %v4806 = vpop.f32.mrf.mxu0
  %v4807 = vpop.f32.mrf.mxu0
  %v4808 = vadd.f32 0.0, %v4807
  %v4809 = vpop.f32.mrf.mxu0
  %4810 = vmatprep.mubr.bf16.mxu0 0
  %4811 = vmatmul.mubr.bf16.gmra.mxu0 %v4599
  %v4812 = vpop.f32.mrf.mxu0
  %v4813 = vadd.f32 0.0, %v4812
  %v4814 = vpop.f32.mrf.mxu0
  %v4815 = vpop.f32.mrf.mxu0
  %v4816 = vadd.f32 0.0, %v4815
  %v4817 = vpop.f32.mrf.mxu0
  %4818 = vmatprep.mubr.bf16.mxu0 0
  %4819 = vmatmul.mubr.bf16.gmra.mxu0 %v4602
  %v4820 = vpop.f32.mrf.mxu0
  %v4821 = vadd.f32 0.0, %v4820
  %v4822 = vpop.f32.mrf.mxu0
  %v4823 = vpop.f32.mrf.mxu0
  %v4824 = vadd.f32 0.0, %v4823
  %v4825 = vpop.f32.mrf.mxu0
  %4826 = vmatprep.mubr.bf16.mxu0 0
  %4827 = vmatmul.mubr.bf16.gmra.mxu0 %v4605
  %v4828 = vpop.f32.mrf.mxu0
  %v4829 = vadd.f32 0.0, %v4828
  %v4830 = vpop.f32.mrf.mxu0
  %v4831 = vpop.f32.mrf.mxu0
  %v4832 = vadd.f32 0.0, %v4831
  %v4833 = vpop.f32.mrf.mxu0
  %4834 = vmatprep.mubr.bf16.mxu0 0
  %4835 = vmatmul.mubr.bf16.gmra.mxu0 %v4608
  %v4836 = vpop.f32.mrf.mxu0
  %v4837 = vadd.f32 0.0, %v4836
  %v4838 = vpop.f32.mrf.mxu0
  %v4839 = vpop.f32.mrf.mxu0
  %v4840 = vadd.f32 0.0, %v4839
  %v4841 = vpop.f32.mrf.mxu0
  %4842 = vmatprep.mubr.bf16.mxu0 0
  %4843 = vmatmul.mubr.bf16.gmra.mxu0 %v4611
  %v4844 = vpop.f32.mrf.mxu0
  %v4845 = vadd.f32 0.0, %v4844
  %v4846 = vpop.f32.mrf.mxu0
  %v4847 = vpop.f32.mrf.mxu0
  %v4848 = vadd.f32 0.0, %v4847
  %v4849 = vpop.f32.mrf.mxu0
  %4850 = vmatprep.mubr.bf16.mxu0 0
  %4851 = vmatmul.mubr.bf16.gmra.mxu0 %v4614
  %v4852 = vpop.f32.mrf.mxu0
  %v4853 = vadd.f32 0.0, %v4852
  %v4854 = vpop.f32.mrf.mxu0
  %v4855 = vpop.f32.mrf.mxu0
  %v4856 = vadd.f32 0.0, %v4855
  %v4857 = vpop.f32.mrf.mxu0
  %4858 = vmatprep.mubr.bf16.mxu0 0
  %4859 = vmatmul.mubr.bf16.gmra.mxu0 %v4617
  %v4860 = vpop.f32.mrf.mxu0
  %v4861 = vadd.f32 0.0, %v4860
  %v4862 = vpop.f32.mrf.mxu0
  %v4863 = vpop.f32.mrf.mxu0
  %v4864 = vadd.f32 0.0, %v4863
  %v4865 = vpop.f32.mrf.mxu0
  %4866 = vmatprep.mubr.bf16.mxu0 0
  %4867 = vmatmul.mubr.bf16.gmra.mxu0 %v4620
  %v4868 = vpop.f32.mrf.mxu0
  %v4869 = vadd.f32 0.0, %v4868
  %v4870 = vpop.f32.mrf.mxu0
  %v4871 = vpop.f32.mrf.mxu0
  %v4872 = vadd.f32 0.0, %v4871
  %v4873 = vpop.f32.mrf.mxu0
  %4874 = vmatprep.mubr.bf16.mxu0 0
  %4875 = vmatmul.mubr.bf16.gmra.mxu0 %v4623
  %v4876 = vpop.f32.mrf.mxu0
  %v4877 = vadd.f32 0.0, %v4876
  %v4878 = vpop.f32.mrf.mxu0
  %v4879 = vpop.f32.mrf.mxu0
  %v4880 = vadd.f32 0.0, %v4879
  %v4881 = vpop.f32.mrf.mxu0
  %4882 = vmatprep.mubr.bf16.mxu0 0
  %4883 = vmatmul.mubr.bf16.gmra.mxu0 %v4626
  %v4884 = vpop.f32.mrf.mxu0
  %v4885 = vadd.f32 0.0, %v4884
  %v4886 = vpop.f32.mrf.mxu0
  %v4887 = vpop.f32.mrf.mxu0
  %v4888 = vadd.f32 0.0, %v4887
  %v4889 = vpop.f32.mrf.mxu0
  %4890 = vmatprep.mubr.bf16.mxu0 0
  %4891 = vmatmul.mubr.bf16.gmra.mxu0 %v4629
  %v4892 = vpop.f32.mrf.mxu0
  %v4893 = vadd.f32 0.0, %v4892
  %v4894 = vpop.f32.mrf.mxu0
  %v4895 = vpop.f32.mrf.mxu0
  %v4896 = vadd.f32 0.0, %v4895
  %v4897 = vpop.f32.mrf.mxu0
  %4898 = vmatprep.mubr.bf16.mxu0 0
  %4899 = vmatmul.mubr.bf16.gmra.mxu0 %v4632
  %v4900 = vpop.f32.mrf.mxu0
  %v4901 = vadd.f32 0.0, %v4900
  %v4902 = vpop.f32.mrf.mxu0
  %v4903 = vpop.f32.mrf.mxu0
  %v4904 = vadd.f32 0.0, %v4903
  %v4905 = vpop.f32.mrf.mxu0
  %4906 = vmatprep.mubr.bf16.mxu0 0
  %4907 = vmatmul.mubr.bf16.gmra.mxu0 %v4635
  %v4908 = vpop.f32.mrf.mxu0
  %v4909 = vadd.f32 0.0, %v4908
  %v4910 = vpop.f32.mrf.mxu0
  %v4911 = vpop.f32.mrf.mxu0
  %v4912 = vadd.f32 0.0, %v4911
  %v4913 = vpop.f32.mrf.mxu0
  %4914 = vmatprep.mubr.bf16.mxu0 0
  %4915 = vmatmul.mubr.bf16.gmra.mxu0 %v4638
  %v4916 = vpop.f32.mrf.mxu0
  %v4917 = vadd.f32 0.0, %v4916
  %v4918 = vpop.f32.mrf.mxu0
  %v4919 = vpop.f32.mrf.mxu0
  %v4920 = vadd.f32 0.0, %v4919
  %v4921 = vpop.f32.mrf.mxu0
  %4922 = vmatprep.mubr.bf16.mxu0 0
  %4923 = vmatmul.mubr.bf16.gmra.mxu0 %v4641
  %v4924 = vpop.f32.mrf.mxu0
  %v4925 = vadd.f32 0.0, %v4924
  %v4926 = vpop.f32.mrf.mxu0
  %v4927 = vpop.f32.mrf.mxu0
  %v4928 = vadd.f32 0.0, %v4927
  %v4929 = vpop.f32.mrf.mxu0
  %4930 = vmatprep.mubr.bf16.mxu0 0
  %4931 = vmatmul.mubr.bf16.gmra.mxu0 %v4644
  %v4932 = vpop.f32.mrf.mxu0
  %v4933 = vadd.f32 0.0, %v4932
  %v4934 = vpop.f32.mrf.mxu0
  %v4935 = vpop.f32.mrf.mxu0
  %v4936 = vadd.f32 0.0, %v4935
  %v4937 = vpop.f32.mrf.mxu0
  %4938 = vdwg.mxu0
  %v4939 = vld [vmem:[%s5] sm:$0x1]
  %v4940 = vld [vmem:[%s6] sm:$0x1]
  %v4941 = vsel %vm528, %v4685, 0.0
  %v4942 = vsel %vm528, %v4688, 0.0
  %v4943 = vadd.f32 %v4941, %v4942
  %v4944 = vsel %vm528, %v4693, 0.0
  %v4945 = vadd.f32 %v4943, %v4944
  %v4946 = vsel %vm528, %v4696, 0.0
  %v4947 = vadd.f32 %v4945, %v4946
  %v4948 = vsel %vm528, %v4701, 0.0
  %v4949 = vadd.f32 %v4947, %v4948
  %v4950 = vsel %vm528, %v4704, 0.0
  %v4951 = vadd.f32 %v4949, %v4950
  %v4952 = vsel %vm528, %v4709, 0.0
  %v4953 = vadd.f32 %v4951, %v4952
  %v4954 = vsel %vm528, %v4712, 0.0
  %v4955 = vadd.f32 %v4953, %v4954
  %v4956 = vsel %vm528, %v4717, 0.0
  %v4957 = vadd.f32 %v4955, %v4956
  %v4958 = vsel %vm528, %v4720, 0.0
  %v4959 = vadd.f32 %v4957, %v4958
  %v4960 = vsel %vm528, %v4725, 0.0
  %v4961 = vadd.f32 %v4959, %v4960
  %v4962 = vsel %vm528, %v4728, 0.0
  %v4963 = vadd.f32 %v4961, %v4962
  %v4964 = vsel %vm528, %v4733, 0.0
  %v4965 = vadd.f32 %v4963, %v4964
  %v4966 = vsel %vm528, %v4736, 0.0
  %v4967 = vadd.f32 %v4965, %v4966
  %v4968 = vsel %vm528, %v4741, 0.0
  %v4969 = vadd.f32 %v4967, %v4968
  %v4970 = vsel %vm528, %v4744, 0.0
  %v4971 = vadd.f32 %v4969, %v4970
  %v4972 = vsel %vm528, %v4749, 0.0
  %v4973 = vadd.f32 %v4971, %v4972
  %v4974 = vsel %vm528, %v4752, 0.0
  %v4975 = vadd.f32 %v4973, %v4974
  %v4976 = vsel %vm528, %v4757, 0.0
  %v4977 = vadd.f32 %v4975, %v4976
  %v4978 = vsel %vm528, %v4760, 0.0
  %v4979 = vadd.f32 %v4977, %v4978
  %v4980 = vsel %vm528, %v4765, 0.0
  %v4981 = vadd.f32 %v4979, %v4980
  %v4982 = vsel %vm528, %v4768, 0.0
  %v4983 = vadd.f32 %v4981, %v4982
  %v4984 = vsel %vm528, %v4773, 0.0
  %v4985 = vadd.f32 %v4983, %v4984
  %v4986 = vsel %vm528, %v4776, 0.0
  %v4987 = vadd.f32 %v4985, %v4986
  %v4988 = vsel %vm528, %v4781, 0.0
  %v4989 = vadd.f32 %v4987, %v4988
  %v4990 = vsel %vm528, %v4784, 0.0
  %v4991 = vadd.f32 %v4989, %v4990
  %v4992 = vsel %vm528, %v4789, 0.0
  %v4993 = vadd.f32 %v4991, %v4992
  %v4994 = vsel %vm528, %v4792, 0.0
  %v4995 = vadd.f32 %v4993, %v4994
  %v4996 = vsel %vm528, %v4797, 0.0
  %v4997 = vadd.f32 %v4995, %v4996
  %v4998 = vsel %vm528, %v4800, 0.0
  %v4999 = vadd.f32 %v4997, %v4998
  %v5000 = vsel %vm528, %v4805, 0.0
  %v5001 = vadd.f32 %v4999, %v5000
  %v5002 = vsel %vm528, %v4808, 0.0
  %v5003 = vadd.f32 %v5001, %v5002
  %v5004 = vsel %vm528, %v4813, 0.0
  %v5005 = vadd.f32 %v5003, %v5004
  %v5006 = vsel %vm528, %v4816, 0.0
  %v5007 = vadd.f32 %v5005, %v5006
  %v5008 = vsel %vm528, %v4821, 0.0
  %v5009 = vadd.f32 %v5007, %v5008
  %v5010 = vsel %vm528, %v4824, 0.0
  %v5011 = vadd.f32 %v5009, %v5010
  %v5012 = vsel %vm528, %v4829, 0.0
  %v5013 = vadd.f32 %v5011, %v5012
  %v5014 = vsel %vm528, %v4832, 0.0
  %v5015 = vadd.f32 %v5013, %v5014
  %v5016 = vsel %vm528, %v4837, 0.0
  %v5017 = vadd.f32 %v5015, %v5016
  %v5018 = vsel %vm528, %v4840, 0.0
  %v5019 = vadd.f32 %v5017, %v5018
  %v5020 = vsel %vm528, %v4845, 0.0
  %v5021 = vadd.f32 %v5019, %v5020
  %v5022 = vsel %vm528, %v4848, 0.0
  %v5023 = vadd.f32 %v5021, %v5022
  %v5024 = vsel %vm528, %v4853, 0.0
  %v5025 = vadd.f32 %v5023, %v5024
  %v5026 = vsel %vm528, %v4856, 0.0
  %v5027 = vadd.f32 %v5025, %v5026
  %v5028 = vsel %vm528, %v4861, 0.0
  %v5029 = vadd.f32 %v5027, %v5028
  %v5030 = vsel %vm528, %v4864, 0.0
  %v5031 = vadd.f32 %v5029, %v5030
  %v5032 = vsel %vm528, %v4869, 0.0
  %v5033 = vadd.f32 %v5031, %v5032
  %v5034 = vsel %vm528, %v4872, 0.0
  %v5035 = vadd.f32 %v5033, %v5034
  %v5036 = vsel %vm528, %v4877, 0.0
  %v5037 = vadd.f32 %v5035, %v5036
  %v5038 = vsel %vm528, %v4880, 0.0
  %v5039 = vadd.f32 %v5037, %v5038
  %v5040 = vsel %vm528, %v4885, 0.0
  %v5041 = vadd.f32 %v5039, %v5040
  %v5042 = vsel %vm528, %v4888, 0.0
  %v5043 = vadd.f32 %v5041, %v5042
  %v5044 = vsel %vm528, %v4893, 0.0
  %v5045 = vadd.f32 %v5043, %v5044
  %v5046 = vsel %vm528, %v4896, 0.0
  %v5047 = vadd.f32 %v5045, %v5046
  %v5048 = vsel %vm528, %v4901, 0.0
  %v5049 = vadd.f32 %v5047, %v5048
  %v5050 = vsel %vm528, %v4904, 0.0
  %v5051 = vadd.f32 %v5049, %v5050
  %v5052 = vsel %vm528, %v4909, 0.0
  %v5053 = vadd.f32 %v5051, %v5052
  %v5054 = vsel %vm528, %v4912, 0.0
  %v5055 = vadd.f32 %v5053, %v5054
  %v5056 = vsel %vm528, %v4917, 0.0
  %v5057 = vadd.f32 %v5055, %v5056
  %v5058 = vsel %vm528, %v4920, 0.0
  %v5059 = vadd.f32 %v5057, %v5058
  %v5060 = vsel %vm528, %v4925, 0.0
  %v5061 = vadd.f32 %v5059, %v5060
  %v5062 = vsel %vm528, %v4928, 0.0
  %v5063 = vadd.f32 %v5061, %v5062
  %v5064 = vsel %vm528, %v4933, 0.0
  %v5065 = vadd.f32 %v5063, %v5064
  %v5066 = vsel %vm528, %v4936, 0.0
  %v5067 = vadd.f32 %v5065, %v5066
  %v5068 = vrot.slane %v5067, 4
  %v5069 = vadd.f32 %v5067, %v5068
  %v5070 = vrot.slane %v5069, 2
  %v5071 = vadd.f32 %v5069, %v5070
  %v5072 = vrot.slane %v5071, 1
  %v5073 = vadd.f32 %v5071, %v5072
  %v5074 = vmul.f32 %v4685, %v4685
  %v5075 = vmul.f32 %v4688, %v4688
  %v5076 = vmul.f32 %v4693, %v4693
  %v5077 = vmul.f32 %v4696, %v4696
  %v5078 = vmul.f32 %v4701, %v4701
  %v5079 = vmul.f32 %v4704, %v4704
  %v5080 = vmul.f32 %v4709, %v4709
  %v5081 = vmul.f32 %v4712, %v4712
  %v5082 = vmul.f32 %v4717, %v4717
  %v5083 = vmul.f32 %v4720, %v4720
  %v5084 = vmul.f32 %v4725, %v4725
  %v5085 = vmul.f32 %v4728, %v4728
  %v5086 = vmul.f32 %v4733, %v4733
  %v5087 = vmul.f32 %v4736, %v4736
  %v5088 = vmul.f32 %v4741, %v4741
  %v5089 = vmul.f32 %v4744, %v4744
  %v5090 = vmul.f32 %v4749, %v4749
  %v5091 = vmul.f32 %v4752, %v4752
  %v5092 = vmul.f32 %v4757, %v4757
  %v5093 = vmul.f32 %v4760, %v4760
  %v5094 = vmul.f32 %v4765, %v4765
  %v5095 = vmul.f32 %v4768, %v4768
  %v5096 = vmul.f32 %v4773, %v4773
  %v5097 = vmul.f32 %v4776, %v4776
  %v5098 = vmul.f32 %v4781, %v4781
  %v5099 = vmul.f32 %v4784, %v4784
  %v5100 = vmul.f32 %v4789, %v4789
  %v5101 = vmul.f32 %v4792, %v4792
  %v5102 = vmul.f32 %v4797, %v4797
  %v5103 = vmul.f32 %v4800, %v4800
  %v5104 = vmul.f32 %v4805, %v4805
  %v5105 = vmul.f32 %v4808, %v4808
  %v5106 = vmul.f32 %v4813, %v4813
  %v5107 = vmul.f32 %v4816, %v4816
  %v5108 = vmul.f32 %v4821, %v4821
  %v5109 = vmul.f32 %v4824, %v4824
  %v5110 = vmul.f32 %v4829, %v4829
  %v5111 = vmul.f32 %v4832, %v4832
  %v5112 = vmul.f32 %v4837, %v4837
  %v5113 = vmul.f32 %v4840, %v4840
  %v5114 = vmul.f32 %v4845, %v4845
  %v5115 = vmul.f32 %v4848, %v4848
  %v5116 = vmul.f32 %v4853, %v4853
  %v5117 = vmul.f32 %v4856, %v4856
  %v5118 = vmul.f32 %v4861, %v4861
  %v5119 = vmul.f32 %v4864, %v4864
  %v5120 = vmul.f32 %v4869, %v4869
  %v5121 = vmul.f32 %v4872, %v4872
  %v5122 = vmul.f32 %v4877, %v4877
  %v5123 = vmul.f32 %v4880, %v4880
  %v5124 = vmul.f32 %v4885, %v4885
  %v5125 = vmul.f32 %v4888, %v4888
  %v5126 = vmul.f32 %v4893, %v4893
  %v5127 = vmul.f32 %v4896, %v4896
  %v5128 = vmul.f32 %v4901, %v4901
  %v5129 = vmul.f32 %v4904, %v4904
  %v5130 = vmul.f32 %v4909, %v4909
  %v5131 = vmul.f32 %v4912, %v4912
  %v5132 = vmul.f32 %v4917, %v4917
  %v5133 = vmul.f32 %v4920, %v4920
  %v5134 = vmul.f32 %v4925, %v4925
  %v5135 = vmul.f32 %v4928, %v4928
  %v5136 = vmul.f32 %v4933, %v4933
  %v5137 = vmul.f32 %v4936, %v4936
  %v5138 = vsel %vm528, %v5074, 0.0
  %v5139 = vsel %vm528, %v5075, 0.0
  %v5140 = vadd.f32 %v5138, %v5139
  %v5141 = vsel %vm528, %v5076, 0.0
  %v5142 = vadd.f32 %v5140, %v5141
  %v5143 = vsel %vm528, %v5077, 0.0
  %v5144 = vadd.f32 %v5142, %v5143
  %v5145 = vsel %vm528, %v5078, 0.0
  %v5146 = vadd.f32 %v5144, %v5145
  %v5147 = vsel %vm528, %v5079, 0.0
  %v5148 = vadd.f32 %v5146, %v5147
  %v5149 = vsel %vm528, %v5080, 0.0
  %v5150 = vadd.f32 %v5148, %v5149
  %v5151 = vsel %vm528, %v5081, 0.0
  %v5152 = vadd.f32 %v5150, %v5151
  %v5153 = vsel %vm528, %v5082, 0.0
  %v5154 = vadd.f32 %v5152, %v5153
  %v5155 = vsel %vm528, %v5083, 0.0
  %v5156 = vadd.f32 %v5154, %v5155
  %v5157 = vsel %vm528, %v5084, 0.0
  %v5158 = vadd.f32 %v5156, %v5157
  %v5159 = vsel %vm528, %v5085, 0.0
  %v5160 = vadd.f32 %v5158, %v5159
  %v5161 = vsel %vm528, %v5086, 0.0
  %v5162 = vadd.f32 %v5160, %v5161
  %v5163 = vsel %vm528, %v5087, 0.0
  %v5164 = vadd.f32 %v5162, %v5163
  %v5165 = vsel %vm528, %v5088, 0.0
  %v5166 = vadd.f32 %v5164, %v5165
  %v5167 = vsel %vm528, %v5089, 0.0
  %v5168 = vadd.f32 %v5166, %v5167
  %v5169 = vsel %vm528, %v5090, 0.0
  %v5170 = vadd.f32 %v5168, %v5169
  %v5171 = vsel %vm528, %v5091, 0.0
  %v5172 = vadd.f32 %v5170, %v5171
  %v5173 = vsel %vm528, %v5092, 0.0
  %v5174 = vadd.f32 %v5172, %v5173
  %v5175 = vsel %vm528, %v5093, 0.0
  %v5176 = vadd.f32 %v5174, %v5175
  %v5177 = vsel %vm528, %v5094, 0.0
  %v5178 = vadd.f32 %v5176, %v5177
  %v5179 = vsel %vm528, %v5095, 0.0
  %v5180 = vadd.f32 %v5178, %v5179
  %v5181 = vsel %vm528, %v5096, 0.0
  %v5182 = vadd.f32 %v5180, %v5181
  %v5183 = vsel %vm528, %v5097, 0.0
  %v5184 = vadd.f32 %v5182, %v5183
  %v5185 = vsel %vm528, %v5098, 0.0
  %v5186 = vadd.f32 %v5184, %v5185
  %v5187 = vsel %vm528, %v5099, 0.0
  %v5188 = vadd.f32 %v5186, %v5187
  %v5189 = vsel %vm528, %v5100, 0.0
  %v5190 = vadd.f32 %v5188, %v5189
  %v5191 = vsel %vm528, %v5101, 0.0
  %v5192 = vadd.f32 %v5190, %v5191
  %v5193 = vsel %vm528, %v5102, 0.0
  %v5194 = vadd.f32 %v5192, %v5193
  %v5195 = vsel %vm528, %v5103, 0.0
  %v5196 = vadd.f32 %v5194, %v5195
  %v5197 = vsel %vm528, %v5104, 0.0
  %v5198 = vadd.f32 %v5196, %v5197
  %v5199 = vsel %vm528, %v5105, 0.0
  %v5200 = vadd.f32 %v5198, %v5199
  %v5201 = vsel %vm528, %v5106, 0.0
  %v5202 = vadd.f32 %v5200, %v5201
  %v5203 = vsel %vm528, %v5107, 0.0
  %v5204 = vadd.f32 %v5202, %v5203
  %v5205 = vsel %vm528, %v5108, 0.0
  %v5206 = vadd.f32 %v5204, %v5205
  %v5207 = vsel %vm528, %v5109, 0.0
  %v5208 = vadd.f32 %v5206, %v5207
  %v5209 = vsel %vm528, %v5110, 0.0
  %v5210 = vadd.f32 %v5208, %v5209
  %v5211 = vsel %vm528, %v5111, 0.0
  %v5212 = vadd.f32 %v5210, %v5211
  %v5213 = vsel %vm528, %v5112, 0.0
  %v5214 = vadd.f32 %v5212, %v5213
  %v5215 = vsel %vm528, %v5113, 0.0
  %v5216 = vadd.f32 %v5214, %v5215
  %v5217 = vsel %vm528, %v5114, 0.0
  %v5218 = vadd.f32 %v5216, %v5217
  %v5219 = vsel %vm528, %v5115, 0.0
  %v5220 = vadd.f32 %v5218, %v5219
  %v5221 = vsel %vm528, %v5116, 0.0
  %v5222 = vadd.f32 %v5220, %v5221
  %v5223 = vsel %vm528, %v5117, 0.0
  %v5224 = vadd.f32 %v5222, %v5223
  %v5225 = vsel %vm528, %v5118, 0.0
  %v5226 = vadd.f32 %v5224, %v5225
  %v5227 = vsel %vm528, %v5119, 0.0
  %v5228 = vadd.f32 %v5226, %v5227
  %v5229 = vsel %vm528, %v5120, 0.0
  %v5230 = vadd.f32 %v5228, %v5229
  %v5231 = vsel %vm528, %v5121, 0.0
  %v5232 = vadd.f32 %v5230, %v5231
  %v5233 = vsel %vm528, %v5122, 0.0
  %v5234 = vadd.f32 %v5232, %v5233
  %v5235 = vsel %vm528, %v5123, 0.0
  %v5236 = vadd.f32 %v5234, %v5235
  %v5237 = vsel %vm528, %v5124, 0.0
  %v5238 = vadd.f32 %v5236, %v5237
  %v5239 = vsel %vm528, %v5125, 0.0
  %v5240 = vadd.f32 %v5238, %v5239
  %v5241 = vsel %vm528, %v5126, 0.0
  %v5242 = vadd.f32 %v5240, %v5241
  %v5243 = vsel %vm528, %v5127, 0.0
  %v5244 = vadd.f32 %v5242, %v5243
  %v5245 = vsel %vm528, %v5128, 0.0
  %v5246 = vadd.f32 %v5244, %v5245
  %v5247 = vsel %vm528, %v5129, 0.0
  %v5248 = vadd.f32 %v5246, %v5247
  %v5249 = vsel %vm528, %v5130, 0.0
  %v5250 = vadd.f32 %v5248, %v5249
  %v5251 = vsel %vm528, %v5131, 0.0
  %v5252 = vadd.f32 %v5250, %v5251
  %v5253 = vsel %vm528, %v5132, 0.0
  %v5254 = vadd.f32 %v5252, %v5253
  %v5255 = vsel %vm528, %v5133, 0.0
  %v5256 = vadd.f32 %v5254, %v5255
  %v5257 = vsel %vm528, %v5134, 0.0
  %v5258 = vadd.f32 %v5256, %v5257
  %v5259 = vsel %vm528, %v5135, 0.0
  %v5260 = vadd.f32 %v5258, %v5259
  %v5261 = vsel %vm528, %v5136, 0.0
  %v5262 = vadd.f32 %v5260, %v5261
  %v5263 = vsel %vm528, %v5137, 0.0
  %v5264 = vadd.f32 %v5262, %v5263
  %v5265 = vrot.slane %v5264, 4
  %v5266 = vadd.f32 %v5264, %v5265
  %v5267 = vrot.slane %v5266, 2
  %v5268 = vadd.f32 %v5266, %v5267
  %v5269 = vrot.slane %v5268, 1
  %v5270 = vadd.f32 %v5268, %v5269
  %v5271 = vmul.f32 %v5073, 0.001953125
  %v5272 = vmul.f32 %v5270, 0.001953125
  %v5273 = vmul.f32 %v5271, %v5271
  %v5274 = vsub.f32 %v5272, %v5273
  %v5275 = vadd.f32 %v5274, 1e-05
  %v5276 = vrsqrt.pop %v5275
  %v5277 = vmul.f32 %v4939, %v5276
  %v5278 = vmul.f32 %v5271, %v5277
  %v5279 = vsub.f32 %v4940, %v5278
  %v5281 = vlaneseq
  %v5282 = vshrl.u32 %v5281, 7
  %v5283 = vsub.s32 0, %v5282
  %v5284 = vrot.slane %v5277, %v5283
  %v5286 = vmul.f32 %v4685, %v5284
  %v5287 = vmul.f32 %v4688, %v5284
  %v5288 = vmul.f32 %v4693, %v5284
  %v5289 = vmul.f32 %v4696, %v5284
  %v5290 = vmul.f32 %v4701, %v5284
  %v5291 = vmul.f32 %v4704, %v5284
  %v5292 = vmul.f32 %v4709, %v5284
  %v5293 = vmul.f32 %v4712, %v5284
  %v5294 = vmul.f32 %v4717, %v5284
  %v5295 = vmul.f32 %v4720, %v5284
  %v5296 = vmul.f32 %v4725, %v5284
  %v5297 = vmul.f32 %v4728, %v5284
  %v5298 = vmul.f32 %v4733, %v5284
  %v5299 = vmul.f32 %v4736, %v5284
  %v5300 = vmul.f32 %v4741, %v5284
  %v5301 = vmul.f32 %v4744, %v5284
  %v5302 = vmul.f32 %v4749, %v5284
  %v5303 = vmul.f32 %v4752, %v5284
  %v5304 = vmul.f32 %v4757, %v5284
  %v5305 = vmul.f32 %v4760, %v5284
  %v5306 = vmul.f32 %v4765, %v5284
  %v5307 = vmul.f32 %v4768, %v5284
  %v5308 = vmul.f32 %v4773, %v5284
  %v5309 = vmul.f32 %v4776, %v5284
  %v5310 = vmul.f32 %v4781, %v5284
  %v5311 = vmul.f32 %v4784, %v5284
  %v5312 = vmul.f32 %v4789, %v5284
  %v5313 = vmul.f32 %v4792, %v5284
  %v5314 = vmul.f32 %v4797, %v5284
  %v5315 = vmul.f32 %v4800, %v5284
  %v5316 = vmul.f32 %v4805, %v5284
  %v5317 = vmul.f32 %v4808, %v5284
  %v5318 = vmul.f32 %v4813, %v5284
  %v5319 = vmul.f32 %v4816, %v5284
  %v5320 = vmul.f32 %v4821, %v5284
  %v5321 = vmul.f32 %v4824, %v5284
  %v5322 = vmul.f32 %v4829, %v5284
  %v5323 = vmul.f32 %v4832, %v5284
  %v5324 = vmul.f32 %v4837, %v5284
  %v5325 = vmul.f32 %v4840, %v5284
  %v5326 = vmul.f32 %v4845, %v5284
  %v5327 = vmul.f32 %v4848, %v5284
  %v5328 = vmul.f32 %v4853, %v5284
  %v5329 = vmul.f32 %v4856, %v5284
  %v5330 = vmul.f32 %v4861, %v5284
  %v5331 = vmul.f32 %v4864, %v5284
  %v5332 = vmul.f32 %v4869, %v5284
  %v5333 = vmul.f32 %v4872, %v5284
  %v5334 = vmul.f32 %v4877, %v5284
  %v5335 = vmul.f32 %v4880, %v5284
  %v5336 = vmul.f32 %v4885, %v5284
  %v5337 = vmul.f32 %v4888, %v5284
  %v5338 = vmul.f32 %v4893, %v5284
  %v5339 = vmul.f32 %v4896, %v5284
  %v5340 = vmul.f32 %v4901, %v5284
  %v5341 = vmul.f32 %v4904, %v5284
  %v5342 = vmul.f32 %v4909, %v5284
  %v5343 = vmul.f32 %v4912, %v5284
  %v5344 = vmul.f32 %v4917, %v5284
  %v5345 = vmul.f32 %v4920, %v5284
  %v5346 = vmul.f32 %v4925, %v5284
  %v5347 = vmul.f32 %v4928, %v5284
  %v5348 = vmul.f32 %v4933, %v5284
  %v5349 = vmul.f32 %v4936, %v5284
  %v5351 = vlaneseq
  %v5352 = vshrl.u32 %v5351, 7
  %v5353 = vsub.s32 0, %v5352
  %v5354 = vrot.slane %v5279, %v5353
  %v5356 = vadd.f32 %v5286, %v5354
  %v5357 = vadd.f32 %v5287, %v5354
  %v5358 = vadd.f32 %v5288, %v5354
  %v5359 = vadd.f32 %v5289, %v5354
  %v5360 = vadd.f32 %v5290, %v5354
  %v5361 = vadd.f32 %v5291, %v5354
  %v5362 = vadd.f32 %v5292, %v5354
  %v5363 = vadd.f32 %v5293, %v5354
  %v5364 = vadd.f32 %v5294, %v5354
  %v5365 = vadd.f32 %v5295, %v5354
  %v5366 = vadd.f32 %v5296, %v5354
  %v5367 = vadd.f32 %v5297, %v5354
  %v5368 = vadd.f32 %v5298, %v5354
  %v5369 = vadd.f32 %v5299, %v5354
  %v5370 = vadd.f32 %v5300, %v5354
  %v5371 = vadd.f32 %v5301, %v5354
  %v5372 = vadd.f32 %v5302, %v5354
  %v5373 = vadd.f32 %v5303, %v5354
  %v5374 = vadd.f32 %v5304, %v5354
  %v5375 = vadd.f32 %v5305, %v5354
  %v5376 = vadd.f32 %v5306, %v5354
  %v5377 = vadd.f32 %v5307, %v5354
  %v5378 = vadd.f32 %v5308, %v5354
  %v5379 = vadd.f32 %v5309, %v5354
  %v5380 = vadd.f32 %v5310, %v5354
  %v5381 = vadd.f32 %v5311, %v5354
  %v5382 = vadd.f32 %v5312, %v5354
  %v5383 = vadd.f32 %v5313, %v5354
  %v5384 = vadd.f32 %v5314, %v5354
  %v5385 = vadd.f32 %v5315, %v5354
  %v5386 = vadd.f32 %v5316, %v5354
  %v5387 = vadd.f32 %v5317, %v5354
  %v5388 = vadd.f32 %v5318, %v5354
  %v5389 = vadd.f32 %v5319, %v5354
  %v5390 = vadd.f32 %v5320, %v5354
  %v5391 = vadd.f32 %v5321, %v5354
  %v5392 = vadd.f32 %v5322, %v5354
  %v5393 = vadd.f32 %v5323, %v5354
  %v5394 = vadd.f32 %v5324, %v5354
  %v5395 = vadd.f32 %v5325, %v5354
  %v5396 = vadd.f32 %v5326, %v5354
  %v5397 = vadd.f32 %v5327, %v5354
  %v5398 = vadd.f32 %v5328, %v5354
  %v5399 = vadd.f32 %v5329, %v5354
  %v5400 = vadd.f32 %v5330, %v5354
  %v5401 = vadd.f32 %v5331, %v5354
  %v5402 = vadd.f32 %v5332, %v5354
  %v5403 = vadd.f32 %v5333, %v5354
  %v5404 = vadd.f32 %v5334, %v5354
  %v5405 = vadd.f32 %v5335, %v5354
  %v5406 = vadd.f32 %v5336, %v5354
  %v5407 = vadd.f32 %v5337, %v5354
  %v5408 = vadd.f32 %v5338, %v5354
  %v5409 = vadd.f32 %v5339, %v5354
  %v5410 = vadd.f32 %v5340, %v5354
  %v5411 = vadd.f32 %v5341, %v5354
  %v5412 = vadd.f32 %v5342, %v5354
  %v5413 = vadd.f32 %v5343, %v5354
  %v5414 = vadd.f32 %v5344, %v5354
  %v5415 = vadd.f32 %v5345, %v5354
  %v5416 = vadd.f32 %v5346, %v5354
  %v5417 = vadd.f32 %v5347, %v5354
  %v5418 = vadd.f32 %v5348, %v5354
  %v5419 = vadd.f32 %v5349, %v5354
  %v5420 = vmax.f32 %v5356, 0.0
  %v5421 = vmax.f32 %v5357, 0.0
  %v5422 = vmax.f32 %v5358, 0.0
  %v5423 = vmax.f32 %v5359, 0.0
  %v5424 = vmax.f32 %v5360, 0.0
  %v5425 = vmax.f32 %v5361, 0.0
  %v5426 = vmax.f32 %v5362, 0.0
  %v5427 = vmax.f32 %v5363, 0.0
  %v5428 = vmax.f32 %v5364, 0.0
  %v5429 = vmax.f32 %v5365, 0.0
  %v5430 = vmax.f32 %v5366, 0.0
  %v5431 = vmax.f32 %v5367, 0.0
  %v5432 = vmax.f32 %v5368, 0.0
  %v5433 = vmax.f32 %v5369, 0.0
  %v5434 = vmax.f32 %v5370, 0.0
  %v5435 = vmax.f32 %v5371, 0.0
  %v5436 = vmax.f32 %v5372, 0.0
  %v5437 = vmax.f32 %v5373, 0.0
  %v5438 = vmax.f32 %v5374, 0.0
  %v5439 = vmax.f32 %v5375, 0.0
  %v5440 = vmax.f32 %v5376, 0.0
  %v5441 = vmax.f32 %v5377, 0.0
  %v5442 = vmax.f32 %v5378, 0.0
  %v5443 = vmax.f32 %v5379, 0.0
  %v5444 = vmax.f32 %v5380, 0.0
  %v5445 = vmax.f32 %v5381, 0.0
  %v5446 = vmax.f32 %v5382, 0.0
  %v5447 = vmax.f32 %v5383, 0.0
  %v5448 = vmax.f32 %v5384, 0.0
  %v5449 = vmax.f32 %v5385, 0.0
  %v5450 = vmax.f32 %v5386, 0.0
  %v5451 = vmax.f32 %v5387, 0.0
  %v5452 = vmax.f32 %v5388, 0.0
  %v5453 = vmax.f32 %v5389, 0.0
  %v5454 = vmax.f32 %v5390, 0.0
  %v5455 = vmax.f32 %v5391, 0.0
  %v5456 = vmax.f32 %v5392, 0.0
  %v5457 = vmax.f32 %v5393, 0.0
  %v5458 = vmax.f32 %v5394, 0.0
  %v5459 = vmax.f32 %v5395, 0.0
  %v5460 = vmax.f32 %v5396, 0.0
  %v5461 = vmax.f32 %v5397, 0.0
  %v5462 = vmax.f32 %v5398, 0.0
  %v5463 = vmax.f32 %v5399, 0.0
  %v5464 = vmax.f32 %v5400, 0.0
  %v5465 = vmax.f32 %v5401, 0.0
  %v5466 = vmax.f32 %v5402, 0.0
  %v5467 = vmax.f32 %v5403, 0.0
  %v5468 = vmax.f32 %v5404, 0.0
  %v5469 = vmax.f32 %v5405, 0.0
  %v5470 = vmax.f32 %v5406, 0.0
  %v5471 = vmax.f32 %v5407, 0.0
  %v5472 = vmax.f32 %v5408, 0.0
  %v5473 = vmax.f32 %v5409, 0.0
  %v5474 = vmax.f32 %v5410, 0.0
  %v5475 = vmax.f32 %v5411, 0.0
  %v5476 = vmax.f32 %v5412, 0.0
  %v5477 = vmax.f32 %v5413, 0.0
  %v5478 = vmax.f32 %v5414, 0.0
  %v5479 = vmax.f32 %v5415, 0.0
  %v5480 = vmax.f32 %v5416, 0.0
  %v5481 = vmax.f32 %v5417, 0.0
  %v5482 = vmax.f32 %v5418, 0.0
  %v5483 = vmax.f32 %v5419, 0.0
  %v5484 = vpack.c.bf16 %v5421, %v5420
  %v5485 = vpack.c.bf16 %v5423, %v5422
  %v5486 = vpack.c.bf16 %v5425, %v5424
  %v5487 = vpack.c.bf16 %v5427, %v5426
  %v5488 = vpack.c.bf16 %v5429, %v5428
  %v5489 = vpack.c.bf16 %v5431, %v5430
  %v5490 = vpack.c.bf16 %v5433, %v5432
  %v5491 = vpack.c.bf16 %v5435, %v5434
  %v5492 = vpack.c.bf16 %v5437, %v5436
  %v5493 = vpack.c.bf16 %v5439, %v5438
  %v5494 = vpack.c.bf16 %v5441, %v5440
  %v5495 = vpack.c.bf16 %v5443, %v5442
  %v5496 = vpack.c.bf16 %v5445, %v5444
  %v5497 = vpack.c.bf16 %v5447, %v5446
  %v5498 = vpack.c.bf16 %v5449, %v5448
  %v5499 = vpack.c.bf16 %v5451, %v5450
  %v5500 = vpack.c.bf16 %v5453, %v5452
  %v5501 = vpack.c.bf16 %v5455, %v5454
  %v5502 = vpack.c.bf16 %v5457, %v5456
  %v5503 = vpack.c.bf16 %v5459, %v5458
  %v5504 = vpack.c.bf16 %v5461, %v5460
  %v5505 = vpack.c.bf16 %v5463, %v5462
  %v5506 = vpack.c.bf16 %v5465, %v5464
  %v5507 = vpack.c.bf16 %v5467, %v5466
  %v5508 = vpack.c.bf16 %v5469, %v5468
  %v5509 = vpack.c.bf16 %v5471, %v5470
  %v5510 = vpack.c.bf16 %v5473, %v5472
  %v5511 = vpack.c.bf16 %v5475, %v5474
  %v5512 = vpack.c.bf16 %v5477, %v5476
  %v5513 = vpack.c.bf16 %v5479, %v5478
  %v5514 = vpack.c.bf16 %v5481, %v5480
  %v5515 = vpack.c.bf16 %v5483, %v5482
  %v5516 = vld [vmem:[%s7] sm:$0x3]
  %v5518 = vsel %vm528, %v5484, 0
  %v5521 = vsel %vm528, %v5485, 0
  %v5524 = vsel %vm528, %v5486, 0
  %v5527 = vsel %vm528, %v5487, 0
  %v5530 = vsel %vm528, %v5488, 0
  %v5533 = vsel %vm528, %v5489, 0
  %v5536 = vsel %vm528, %v5490, 0
  %v5539 = vsel %vm528, %v5491, 0
  %v5542 = vsel %vm528, %v5492, 0
  %v5545 = vsel %vm528, %v5493, 0
  %v5548 = vsel %vm528, %v5494, 0
  %v5551 = vsel %vm528, %v5495, 0
  %v5554 = vsel %vm528, %v5496, 0
  %v5557 = vsel %vm528, %v5497, 0
  %v5560 = vsel %vm528, %v5498, 0
  %v5563 = vsel %vm528, %v5499, 0
  %v5566 = vsel %vm528, %v5500, 0
  %v5569 = vsel %vm528, %v5501, 0
  %v5572 = vsel %vm528, %v5502, 0
  %v5575 = vsel %vm528, %v5503, 0
  %v5578 = vsel %vm528, %v5504, 0
  %v5581 = vsel %vm528, %v5505, 0
  %v5584 = vsel %vm528, %v5506, 0
  %v5587 = vsel %vm528, %v5507, 0
  %v5590 = vsel %vm528, %v5508, 0
  %v5593 = vsel %vm528, %v5509, 0
  %v5596 = vsel %vm528, %v5510, 0
  %v5599 = vsel %vm528, %v5511, 0
  %v5602 = vsel %vm528, %v5512, 0
  %v5605 = vsel %vm528, %v5513, 0
  %v5608 = vsel %vm528, %v5514, 0
  %v5611 = vsel %vm528, %v5515, 0
  %v5614 = vsel %vm4646, %v5516, 0
  %5616 = vmatprep.subr.bf16.mxu0 0
  %5617 = vmatpush1.bf16.msra.mxu0 0
  %5618 = vmatprep.subr.bf16.mxu0 0
  %5619 = vmatpush1.bf16.msra.mxu0 0
  %5620 = vmatprep.subr.bf16.mxu0 0
  %5621 = vmatpush1.bf16.msra.mxu0 0
  %5622 = vmatprep.subr.bf16.mxu0 0
  %5623 = vmatpush1.bf16.msra.mxu0 0
  %5624 = vmatprep.subr.bf16.mxu0 0
  %5625 = vmatpush1.bf16.msra.mxu0 0
  %5626 = vmatprep.subr.bf16.mxu0 0
  %5627 = vmatpush1.bf16.msra.mxu0 0
  %5628 = vmatprep.subr.bf16.mxu0 0
  %5629 = vmatpush1.bf16.msra.mxu0 0
  %5630 = vmatprep.subr.bf16.mxu0 0
  %5631 = vmatpush1.bf16.msra.mxu0 %v5614
  %5632 = vmatprep.subr.bf16.mxu0 0
  %5633 = vmatpush2.bf16.msra.mxu0 0
  %5634 = vmatprep.subr.bf16.mxu0 0
  %5635 = vmatpush2.bf16.msra.mxu0 0
  %5636 = vmatprep.subr.bf16.mxu0 0
  %5637 = vmatpush2.bf16.msra.mxu0 0
  %5638 = vmatprep.subr.bf16.mxu0 0
  %5639 = vmatpush2.bf16.msra.mxu0 0
  %5640 = vmatprep.subr.bf16.mxu0 0
  %5641 = vmatpush2.bf16.msra.mxu0 0
  %5642 = vmatprep.subr.bf16.mxu0 0
  %5643 = vmatpush2.bf16.msra.mxu0 0
  %5644 = vmatprep.subr.bf16.mxu0 0
  %5645 = vmatpush2.bf16.msra.mxu0 0
  %5646 = vmatprep.subr.bf16.mxu0 0
  %5647 = vmatpush2.bf16.msra.mxu0 0
  %5648 = vmatprep.mubr.bf16.mxu0 0
  %5649 = vmatmul.mubr.bf16.gmra.mxu0 %v5518
  %v5650 = vpop.f32.mrf.mxu0
  %v5651 = vadd.f32 0.0, %v5650
  %v5652 = vpop.f32.mrf.mxu0
  %v5653 = vpop.f32.mrf.mxu0
  %v5654 = vadd.f32 0.0, %v5653
  %v5655 = vpop.f32.mrf.mxu0
  %5656 = vmatprep.mubr.bf16.mxu0 0
  %5657 = vmatmul.mubr.bf16.gmra.mxu0 %v5521
  %v5658 = vpop.f32.mrf.mxu0
  %v5659 = vadd.f32 0.0, %v5658
  %v5660 = vpop.f32.mrf.mxu0
  %v5661 = vpop.f32.mrf.mxu0
  %v5662 = vadd.f32 0.0, %v5661
  %v5663 = vpop.f32.mrf.mxu0
  %5664 = vmatprep.mubr.bf16.mxu0 0
  %5665 = vmatmul.mubr.bf16.gmra.mxu0 %v5524
  %v5666 = vpop.f32.mrf.mxu0
  %v5667 = vadd.f32 0.0, %v5666
  %v5668 = vpop.f32.mrf.mxu0
  %v5669 = vpop.f32.mrf.mxu0
  %v5670 = vadd.f32 0.0, %v5669
  %v5671 = vpop.f32.mrf.mxu0
  %5672 = vmatprep.mubr.bf16.mxu0 0
  %5673 = vmatmul.mubr.bf16.gmra.mxu0 %v5527
  %v5674 = vpop.f32.mrf.mxu0
  %v5675 = vadd.f32 0.0, %v5674
  %v5676 = vpop.f32.mrf.mxu0
  %v5677 = vpop.f32.mrf.mxu0
  %v5678 = vadd.f32 0.0, %v5677
  %v5679 = vpop.f32.mrf.mxu0
  %5680 = vmatprep.mubr.bf16.mxu0 0
  %5681 = vmatmul.mubr.bf16.gmra.mxu0 %v5530
  %v5682 = vpop.f32.mrf.mxu0
  %v5683 = vadd.f32 0.0, %v5682
  %v5684 = vpop.f32.mrf.mxu0
  %v5685 = vpop.f32.mrf.mxu0
  %v5686 = vadd.f32 0.0, %v5685
  %v5687 = vpop.f32.mrf.mxu0
  %5688 = vmatprep.mubr.bf16.mxu0 0
  %5689 = vmatmul.mubr.bf16.gmra.mxu0 %v5533
  %v5690 = vpop.f32.mrf.mxu0
  %v5691 = vadd.f32 0.0, %v5690
  %v5692 = vpop.f32.mrf.mxu0
  %v5693 = vpop.f32.mrf.mxu0
  %v5694 = vadd.f32 0.0, %v5693
  %v5695 = vpop.f32.mrf.mxu0
  %5696 = vmatprep.mubr.bf16.mxu0 0
  %5697 = vmatmul.mubr.bf16.gmra.mxu0 %v5536
  %v5698 = vpop.f32.mrf.mxu0
  %v5699 = vadd.f32 0.0, %v5698
  %v5700 = vpop.f32.mrf.mxu0
  %v5701 = vpop.f32.mrf.mxu0
  %v5702 = vadd.f32 0.0, %v5701
  %v5703 = vpop.f32.mrf.mxu0
  %5704 = vmatprep.mubr.bf16.mxu0 0
  %5705 = vmatmul.mubr.bf16.gmra.mxu0 %v5539
  %v5706 = vpop.f32.mrf.mxu0
  %v5707 = vadd.f32 0.0, %v5706
  %v5708 = vpop.f32.mrf.mxu0
  %v5709 = vpop.f32.mrf.mxu0
  %v5710 = vadd.f32 0.0, %v5709
  %v5711 = vpop.f32.mrf.mxu0
  %5712 = vmatprep.mubr.bf16.mxu0 0
  %5713 = vmatmul.mubr.bf16.gmra.mxu0 %v5542
  %v5714 = vpop.f32.mrf.mxu0
  %v5715 = vadd.f32 0.0, %v5714
  %v5716 = vpop.f32.mrf.mxu0
  %v5717 = vpop.f32.mrf.mxu0
  %v5718 = vadd.f32 0.0, %v5717
  %v5719 = vpop.f32.mrf.mxu0
  %5720 = vmatprep.mubr.bf16.mxu0 0
  %5721 = vmatmul.mubr.bf16.gmra.mxu0 %v5545
  %v5722 = vpop.f32.mrf.mxu0
  %v5723 = vadd.f32 0.0, %v5722
  %v5724 = vpop.f32.mrf.mxu0
  %v5725 = vpop.f32.mrf.mxu0
  %v5726 = vadd.f32 0.0, %v5725
  %v5727 = vpop.f32.mrf.mxu0
  %5728 = vmatprep.mubr.bf16.mxu0 0
  %5729 = vmatmul.mubr.bf16.gmra.mxu0 %v5548
  %v5730 = vpop.f32.mrf.mxu0
  %v5731 = vadd.f32 0.0, %v5730
  %v5732 = vpop.f32.mrf.mxu0
  %v5733 = vpop.f32.mrf.mxu0
  %v5734 = vadd.f32 0.0, %v5733
  %v5735 = vpop.f32.mrf.mxu0
  %5736 = vmatprep.mubr.bf16.mxu0 0
  %5737 = vmatmul.mubr.bf16.gmra.mxu0 %v5551
  %v5738 = vpop.f32.mrf.mxu0
  %v5739 = vadd.f32 0.0, %v5738
  %v5740 = vpop.f32.mrf.mxu0
  %v5741 = vpop.f32.mrf.mxu0
  %v5742 = vadd.f32 0.0, %v5741
  %v5743 = vpop.f32.mrf.mxu0
  %5744 = vmatprep.mubr.bf16.mxu0 0
  %5745 = vmatmul.mubr.bf16.gmra.mxu0 %v5554
  %v5746 = vpop.f32.mrf.mxu0
  %v5747 = vadd.f32 0.0, %v5746
  %v5748 = vpop.f32.mrf.mxu0
  %v5749 = vpop.f32.mrf.mxu0
  %v5750 = vadd.f32 0.0, %v5749
  %v5751 = vpop.f32.mrf.mxu0
  %5752 = vmatprep.mubr.bf16.mxu0 0
  %5753 = vmatmul.mubr.bf16.gmra.mxu0 %v5557
  %v5754 = vpop.f32.mrf.mxu0
  %v5755 = vadd.f32 0.0, %v5754
  %v5756 = vpop.f32.mrf.mxu0
  %v5757 = vpop.f32.mrf.mxu0
  %v5758 = vadd.f32 0.0, %v5757
  %v5759 = vpop.f32.mrf.mxu0
  %5760 = vmatprep.mubr.bf16.mxu0 0
  %5761 = vmatmul.mubr.bf16.gmra.mxu0 %v5560
  %v5762 = vpop.f32.mrf.mxu0
  %v5763 = vadd.f32 0.0, %v5762
  %v5764 = vpop.f32.mrf.mxu0
  %v5765 = vpop.f32.mrf.mxu0
  %v5766 = vadd.f32 0.0, %v5765
  %v5767 = vpop.f32.mrf.mxu0
  %5768 = vmatprep.mubr.bf16.mxu0 0
  %5769 = vmatmul.mubr.bf16.gmra.mxu0 %v5563
  %v5770 = vpop.f32.mrf.mxu0
  %v5771 = vadd.f32 0.0, %v5770
  %v5772 = vpop.f32.mrf.mxu0
  %v5773 = vpop.f32.mrf.mxu0
  %v5774 = vadd.f32 0.0, %v5773
  %v5775 = vpop.f32.mrf.mxu0
  %5776 = vmatprep.mubr.bf16.mxu0 0
  %5777 = vmatmul.mubr.bf16.gmra.mxu0 %v5566
  %v5778 = vpop.f32.mrf.mxu0
  %v5779 = vadd.f32 0.0, %v5778
  %v5780 = vpop.f32.mrf.mxu0
  %v5781 = vpop.f32.mrf.mxu0
  %v5782 = vadd.f32 0.0, %v5781
  %v5783 = vpop.f32.mrf.mxu0
  %5784 = vmatprep.mubr.bf16.mxu0 0
  %5785 = vmatmul.mubr.bf16.gmra.mxu0 %v5569
  %v5786 = vpop.f32.mrf.mxu0
  %v5787 = vadd.f32 0.0, %v5786
  %v5788 = vpop.f32.mrf.mxu0
  %v5789 = vpop.f32.mrf.mxu0
  %v5790 = vadd.f32 0.0, %v5789
  %v5791 = vpop.f32.mrf.mxu0
  %5792 = vmatprep.mubr.bf16.mxu0 0
  %5793 = vmatmul.mubr.bf16.gmra.mxu0 %v5572
  %v5794 = vpop.f32.mrf.mxu0
  %v5795 = vadd.f32 0.0, %v5794
  %v5796 = vpop.f32.mrf.mxu0
  %v5797 = vpop.f32.mrf.mxu0
  %v5798 = vadd.f32 0.0, %v5797
  %v5799 = vpop.f32.mrf.mxu0
  %5800 = vmatprep.mubr.bf16.mxu0 0
  %5801 = vmatmul.mubr.bf16.gmra.mxu0 %v5575
  %v5802 = vpop.f32.mrf.mxu0
  %v5803 = vadd.f32 0.0, %v5802
  %v5804 = vpop.f32.mrf.mxu0
  %v5805 = vpop.f32.mrf.mxu0
  %v5806 = vadd.f32 0.0, %v5805
  %v5807 = vpop.f32.mrf.mxu0
  %5808 = vmatprep.mubr.bf16.mxu0 0
  %5809 = vmatmul.mubr.bf16.gmra.mxu0 %v5578
  %v5810 = vpop.f32.mrf.mxu0
  %v5811 = vadd.f32 0.0, %v5810
  %v5812 = vpop.f32.mrf.mxu0
  %v5813 = vpop.f32.mrf.mxu0
  %v5814 = vadd.f32 0.0, %v5813
  %v5815 = vpop.f32.mrf.mxu0
  %5816 = vmatprep.mubr.bf16.mxu0 0
  %5817 = vmatmul.mubr.bf16.gmra.mxu0 %v5581
  %v5818 = vpop.f32.mrf.mxu0
  %v5819 = vadd.f32 0.0, %v5818
  %v5820 = vpop.f32.mrf.mxu0
  %v5821 = vpop.f32.mrf.mxu0
  %v5822 = vadd.f32 0.0, %v5821
  %v5823 = vpop.f32.mrf.mxu0
  %5824 = vmatprep.mubr.bf16.mxu0 0
  %5825 = vmatmul.mubr.bf16.gmra.mxu0 %v5584
  %v5826 = vpop.f32.mrf.mxu0
  %v5827 = vadd.f32 0.0, %v5826
  %v5828 = vpop.f32.mrf.mxu0
  %v5829 = vpop.f32.mrf.mxu0
  %v5830 = vadd.f32 0.0, %v5829
  %v5831 = vpop.f32.mrf.mxu0
  %5832 = vmatprep.mubr.bf16.mxu0 0
  %5833 = vmatmul.mubr.bf16.gmra.mxu0 %v5587
  %v5834 = vpop.f32.mrf.mxu0
  %v5835 = vadd.f32 0.0, %v5834
  %v5836 = vpop.f32.mrf.mxu0
  %v5837 = vpop.f32.mrf.mxu0
  %v5838 = vadd.f32 0.0, %v5837
  %v5839 = vpop.f32.mrf.mxu0
  %5840 = vmatprep.mubr.bf16.mxu0 0
  %5841 = vmatmul.mubr.bf16.gmra.mxu0 %v5590
  %v5842 = vpop.f32.mrf.mxu0
  %v5843 = vadd.f32 0.0, %v5842
  %v5844 = vpop.f32.mrf.mxu0
  %v5845 = vpop.f32.mrf.mxu0
  %v5846 = vadd.f32 0.0, %v5845
  %v5847 = vpop.f32.mrf.mxu0
  %5848 = vmatprep.mubr.bf16.mxu0 0
  %5849 = vmatmul.mubr.bf16.gmra.mxu0 %v5593
  %v5850 = vpop.f32.mrf.mxu0
  %v5851 = vadd.f32 0.0, %v5850
  %v5852 = vpop.f32.mrf.mxu0
  %v5853 = vpop.f32.mrf.mxu0
  %v5854 = vadd.f32 0.0, %v5853
  %v5855 = vpop.f32.mrf.mxu0
  %5856 = vmatprep.mubr.bf16.mxu0 0
  %5857 = vmatmul.mubr.bf16.gmra.mxu0 %v5596
  %v5858 = vpop.f32.mrf.mxu0
  %v5859 = vadd.f32 0.0, %v5858
  %v5860 = vpop.f32.mrf.mxu0
  %v5861 = vpop.f32.mrf.mxu0
  %v5862 = vadd.f32 0.0, %v5861
  %v5863 = vpop.f32.mrf.mxu0
  %5864 = vmatprep.mubr.bf16.mxu0 0
  %5865 = vmatmul.mubr.bf16.gmra.mxu0 %v5599
  %v5866 = vpop.f32.mrf.mxu0
  %v5867 = vadd.f32 0.0, %v5866
  %v5868 = vpop.f32.mrf.mxu0
  %v5869 = vpop.f32.mrf.mxu0
  %v5870 = vadd.f32 0.0, %v5869
  %v5871 = vpop.f32.mrf.mxu0
  %5872 = vmatprep.mubr.bf16.mxu0 0
  %5873 = vmatmul.mubr.bf16.gmra.mxu0 %v5602
  %v5874 = vpop.f32.mrf.mxu0
  %v5875 = vadd.f32 0.0, %v5874
  %v5876 = vpop.f32.mrf.mxu0
  %v5877 = vpop.f32.mrf.mxu0
  %v5878 = vadd.f32 0.0, %v5877
  %v5879 = vpop.f32.mrf.mxu0
  %5880 = vmatprep.mubr.bf16.mxu0 0
  %5881 = vmatmul.mubr.bf16.gmra.mxu0 %v5605
  %v5882 = vpop.f32.mrf.mxu0
  %v5883 = vadd.f32 0.0, %v5882
  %v5884 = vpop.f32.mrf.mxu0
  %v5885 = vpop.f32.mrf.mxu0
  %v5886 = vadd.f32 0.0, %v5885
  %v5887 = vpop.f32.mrf.mxu0
  %5888 = vmatprep.mubr.bf16.mxu0 0
  %5889 = vmatmul.mubr.bf16.gmra.mxu0 %v5608
  %v5890 = vpop.f32.mrf.mxu0
  %v5891 = vadd.f32 0.0, %v5890
  %v5892 = vpop.f32.mrf.mxu0
  %v5893 = vpop.f32.mrf.mxu0
  %v5894 = vadd.f32 0.0, %v5893
  %v5895 = vpop.f32.mrf.mxu0
  %5896 = vmatprep.mubr.bf16.mxu0 0
  %5897 = vmatmul.mubr.bf16.gmra.mxu0 %v5611
  %v5898 = vpop.f32.mrf.mxu0
  %v5899 = vadd.f32 0.0, %v5898
  %v5900 = vpop.f32.mrf.mxu0
  %v5901 = vpop.f32.mrf.mxu0
  %v5902 = vadd.f32 0.0, %v5901
  %v5903 = vpop.f32.mrf.mxu0
  %5904 = vdwg.mxu0
  %v5905 = vld [vmem:[%s8] sm:$0x1]
  %v5906 = vld [vmem:[%s9] sm:$0x1]
  %v5907 = vsel %vm140, %v5651, 0.0
  %v5908 = vsel %vm140, %v5654, 0.0
  %v5909 = vadd.f32 %v5907, %v5908
  %v5910 = vsel %vm140, %v5659, 0.0
  %v5911 = vadd.f32 %v5909, %v5910
  %v5912 = vsel %vm140, %v5662, 0.0
  %v5913 = vadd.f32 %v5911, %v5912
  %v5914 = vsel %vm140, %v5667, 0.0
  %v5915 = vadd.f32 %v5913, %v5914
  %v5916 = vsel %vm140, %v5670, 0.0
  %v5917 = vadd.f32 %v5915, %v5916
  %v5918 = vsel %vm140, %v5675, 0.0
  %v5919 = vadd.f32 %v5917, %v5918
  %v5920 = vsel %vm140, %v5678, 0.0
  %v5921 = vadd.f32 %v5919, %v5920
  %v5922 = vsel %vm140, %v5683, 0.0
  %v5923 = vadd.f32 %v5921, %v5922
  %v5924 = vsel %vm140, %v5686, 0.0
  %v5925 = vadd.f32 %v5923, %v5924
  %v5926 = vsel %vm140, %v5691, 0.0
  %v5927 = vadd.f32 %v5925, %v5926
  %v5928 = vsel %vm140, %v5694, 0.0
  %v5929 = vadd.f32 %v5927, %v5928
  %v5930 = vsel %vm140, %v5699, 0.0
  %v5931 = vadd.f32 %v5929, %v5930
  %v5932 = vsel %vm140, %v5702, 0.0
  %v5933 = vadd.f32 %v5931, %v5932
  %v5934 = vsel %vm140, %v5707, 0.0
  %v5935 = vadd.f32 %v5933, %v5934
  %v5936 = vsel %vm140, %v5710, 0.0
  %v5937 = vadd.f32 %v5935, %v5936
  %v5938 = vsel %vm140, %v5715, 0.0
  %v5939 = vadd.f32 %v5937, %v5938
  %v5940 = vsel %vm140, %v5718, 0.0
  %v5941 = vadd.f32 %v5939, %v5940
  %v5942 = vsel %vm140, %v5723, 0.0
  %v5943 = vadd.f32 %v5941, %v5942
  %v5944 = vsel %vm140, %v5726, 0.0
  %v5945 = vadd.f32 %v5943, %v5944
  %v5946 = vsel %vm140, %v5731, 0.0
  %v5947 = vadd.f32 %v5945, %v5946
  %v5948 = vsel %vm140, %v5734, 0.0
  %v5949 = vadd.f32 %v5947, %v5948
  %v5950 = vsel %vm140, %v5739, 0.0
  %v5951 = vadd.f32 %v5949, %v5950
  %v5952 = vsel %vm140, %v5742, 0.0
  %v5953 = vadd.f32 %v5951, %v5952
  %v5954 = vsel %vm140, %v5747, 0.0
  %v5955 = vadd.f32 %v5953, %v5954
  %v5956 = vsel %vm140, %v5750, 0.0
  %v5957 = vadd.f32 %v5955, %v5956
  %v5958 = vsel %vm140, %v5755, 0.0
  %v5959 = vadd.f32 %v5957, %v5958
  %v5960 = vsel %vm140, %v5758, 0.0
  %v5961 = vadd.f32 %v5959, %v5960
  %v5962 = vsel %vm140, %v5763, 0.0
  %v5963 = vadd.f32 %v5961, %v5962
  %v5964 = vsel %vm140, %v5766, 0.0
  %v5965 = vadd.f32 %v5963, %v5964
  %v5966 = vsel %vm140, %v5771, 0.0
  %v5967 = vadd.f32 %v5965, %v5966
  %v5968 = vsel %vm140, %v5774, 0.0
  %v5969 = vadd.f32 %v5967, %v5968
  %v5970 = vsel %vm140, %v5779, 0.0
  %v5971 = vadd.f32 %v5969, %v5970
  %v5972 = vsel %vm140, %v5782, 0.0
  %v5973 = vadd.f32 %v5971, %v5972
  %v5974 = vsel %vm140, %v5787, 0.0
  %v5975 = vadd.f32 %v5973, %v5974
  %v5976 = vsel %vm140, %v5790, 0.0
  %v5977 = vadd.f32 %v5975, %v5976
  %v5978 = vsel %vm140, %v5795, 0.0
  %v5979 = vadd.f32 %v5977, %v5978
  %v5980 = vsel %vm140, %v5798, 0.0
  %v5981 = vadd.f32 %v5979, %v5980
  %v5982 = vsel %vm140, %v5803, 0.0
  %v5983 = vadd.f32 %v5981, %v5982
  %v5984 = vsel %vm140, %v5806, 0.0
  %v5985 = vadd.f32 %v5983, %v5984
  %v5986 = vsel %vm140, %v5811, 0.0
  %v5987 = vadd.f32 %v5985, %v5986
  %v5988 = vsel %vm140, %v5814, 0.0
  %v5989 = vadd.f32 %v5987, %v5988
  %v5990 = vsel %vm140, %v5819, 0.0
  %v5991 = vadd.f32 %v5989, %v5990
  %v5992 = vsel %vm140, %v5822, 0.0
  %v5993 = vadd.f32 %v5991, %v5992
  %v5994 = vsel %vm140, %v5827, 0.0
  %v5995 = vadd.f32 %v5993, %v5994
  %v5996 = vsel %vm140, %v5830, 0.0
  %v5997 = vadd.f32 %v5995, %v5996
  %v5998 = vsel %vm140, %v5835, 0.0
  %v5999 = vadd.f32 %v5997, %v5998
  %v6000 = vsel %vm140, %v5838, 0.0
  %v6001 = vadd.f32 %v5999, %v6000
  %v6002 = vsel %vm140, %v5843, 0.0
  %v6003 = vadd.f32 %v6001, %v6002
  %v6004 = vsel %vm140, %v5846, 0.0
  %v6005 = vadd.f32 %v6003, %v6004
  %v6006 = vsel %vm140, %v5851, 0.0
  %v6007 = vadd.f32 %v6005, %v6006
  %v6008 = vsel %vm140, %v5854, 0.0
  %v6009 = vadd.f32 %v6007, %v6008
  %v6010 = vsel %vm140, %v5859, 0.0
  %v6011 = vadd.f32 %v6009, %v6010
  %v6012 = vsel %vm140, %v5862, 0.0
  %v6013 = vadd.f32 %v6011, %v6012
  %v6014 = vsel %vm140, %v5867, 0.0
  %v6015 = vadd.f32 %v6013, %v6014
  %v6016 = vsel %vm140, %v5870, 0.0
  %v6017 = vadd.f32 %v6015, %v6016
  %v6018 = vsel %vm140, %v5875, 0.0
  %v6019 = vadd.f32 %v6017, %v6018
  %v6020 = vsel %vm140, %v5878, 0.0
  %v6021 = vadd.f32 %v6019, %v6020
  %v6022 = vsel %vm140, %v5883, 0.0
  %v6023 = vadd.f32 %v6021, %v6022
  %v6024 = vsel %vm140, %v5886, 0.0
  %v6025 = vadd.f32 %v6023, %v6024
  %v6026 = vsel %vm140, %v5891, 0.0
  %v6027 = vadd.f32 %v6025, %v6026
  %v6028 = vsel %vm140, %v5894, 0.0
  %v6029 = vadd.f32 %v6027, %v6028
  %v6030 = vsel %vm140, %v5899, 0.0
  %v6031 = vadd.f32 %v6029, %v6030
  %v6032 = vsel %vm140, %v5902, 0.0
  %v6033 = vadd.f32 %v6031, %v6032
  %v6034 = vrot.slane %v6033, 4
  %v6035 = vadd.f32 %v6033, %v6034
  %v6036 = vrot.slane %v6035, 2
  %v6037 = vadd.f32 %v6035, %v6036
  %v6038 = vrot.slane %v6037, 1
  %v6039 = vadd.f32 %v6037, %v6038
  %v6040 = vmul.f32 %v5651, %v5651
  %v6041 = vmul.f32 %v5654, %v5654
  %v6042 = vmul.f32 %v5659, %v5659
  %v6043 = vmul.f32 %v5662, %v5662
  %v6044 = vmul.f32 %v5667, %v5667
  %v6045 = vmul.f32 %v5670, %v5670
  %v6046 = vmul.f32 %v5675, %v5675
  %v6047 = vmul.f32 %v5678, %v5678
  %v6048 = vmul.f32 %v5683, %v5683
  %v6049 = vmul.f32 %v5686, %v5686
  %v6050 = vmul.f32 %v5691, %v5691
  %v6051 = vmul.f32 %v5694, %v5694
  %v6052 = vmul.f32 %v5699, %v5699
  %v6053 = vmul.f32 %v5702, %v5702
  %v6054 = vmul.f32 %v5707, %v5707
  %v6055 = vmul.f32 %v5710, %v5710
  %v6056 = vmul.f32 %v5715, %v5715
  %v6057 = vmul.f32 %v5718, %v5718
  %v6058 = vmul.f32 %v5723, %v5723
  %v6059 = vmul.f32 %v5726, %v5726
  %v6060 = vmul.f32 %v5731, %v5731
  %v6061 = vmul.f32 %v5734, %v5734
  %v6062 = vmul.f32 %v5739, %v5739
  %v6063 = vmul.f32 %v5742, %v5742
  %v6064 = vmul.f32 %v5747, %v5747
  %v6065 = vmul.f32 %v5750, %v5750
  %v6066 = vmul.f32 %v5755, %v5755
  %v6067 = vmul.f32 %v5758, %v5758
  %v6068 = vmul.f32 %v5763, %v5763
  %v6069 = vmul.f32 %v5766, %v5766
  %v6070 = vmul.f32 %v5771, %v5771
  %v6071 = vmul.f32 %v5774, %v5774
  %v6072 = vmul.f32 %v5779, %v5779
  %v6073 = vmul.f32 %v5782, %v5782
  %v6074 = vmul.f32 %v5787, %v5787
  %v6075 = vmul.f32 %v5790, %v5790
  %v6076 = vmul.f32 %v5795, %v5795
  %v6077 = vmul.f32 %v5798, %v5798
  %v6078 = vmul.f32 %v5803, %v5803
  %v6079 = vmul.f32 %v5806, %v5806
  %v6080 = vmul.f32 %v5811, %v5811
  %v6081 = vmul.f32 %v5814, %v5814
  %v6082 = vmul.f32 %v5819, %v5819
  %v6083 = vmul.f32 %v5822, %v5822
  %v6084 = vmul.f32 %v5827, %v5827
  %v6085 = vmul.f32 %v5830, %v5830
  %v6086 = vmul.f32 %v5835, %v5835
  %v6087 = vmul.f32 %v5838, %v5838
  %v6088 = vmul.f32 %v5843, %v5843
  %v6089 = vmul.f32 %v5846, %v5846
  %v6090 = vmul.f32 %v5851, %v5851
  %v6091 = vmul.f32 %v5854, %v5854
  %v6092 = vmul.f32 %v5859, %v5859
  %v6093 = vmul.f32 %v5862, %v5862
  %v6094 = vmul.f32 %v5867, %v5867
  %v6095 = vmul.f32 %v5870, %v5870
  %v6096 = vmul.f32 %v5875, %v5875
  %v6097 = vmul.f32 %v5878, %v5878
  %v6098 = vmul.f32 %v5883, %v5883
  %v6099 = vmul.f32 %v5886, %v5886
  %v6100 = vmul.f32 %v5891, %v5891
  %v6101 = vmul.f32 %v5894, %v5894
  %v6102 = vmul.f32 %v5899, %v5899
  %v6103 = vmul.f32 %v5902, %v5902
  %v6104 = vsel %vm140, %v6040, 0.0
  %v6105 = vsel %vm140, %v6041, 0.0
  %v6106 = vadd.f32 %v6104, %v6105
  %v6107 = vsel %vm140, %v6042, 0.0
  %v6108 = vadd.f32 %v6106, %v6107
  %v6109 = vsel %vm140, %v6043, 0.0
  %v6110 = vadd.f32 %v6108, %v6109
  %v6111 = vsel %vm140, %v6044, 0.0
  %v6112 = vadd.f32 %v6110, %v6111
  %v6113 = vsel %vm140, %v6045, 0.0
  %v6114 = vadd.f32 %v6112, %v6113
  %v6115 = vsel %vm140, %v6046, 0.0
  %v6116 = vadd.f32 %v6114, %v6115
  %v6117 = vsel %vm140, %v6047, 0.0
  %v6118 = vadd.f32 %v6116, %v6117
  %v6119 = vsel %vm140, %v6048, 0.0
  %v6120 = vadd.f32 %v6118, %v6119
  %v6121 = vsel %vm140, %v6049, 0.0
  %v6122 = vadd.f32 %v6120, %v6121
  %v6123 = vsel %vm140, %v6050, 0.0
  %v6124 = vadd.f32 %v6122, %v6123
  %v6125 = vsel %vm140, %v6051, 0.0
  %v6126 = vadd.f32 %v6124, %v6125
  %v6127 = vsel %vm140, %v6052, 0.0
  %v6128 = vadd.f32 %v6126, %v6127
  %v6129 = vsel %vm140, %v6053, 0.0
  %v6130 = vadd.f32 %v6128, %v6129
  %v6131 = vsel %vm140, %v6054, 0.0
  %v6132 = vadd.f32 %v6130, %v6131
  %v6133 = vsel %vm140, %v6055, 0.0
  %v6134 = vadd.f32 %v6132, %v6133
  %v6135 = vsel %vm140, %v6056, 0.0
  %v6136 = vadd.f32 %v6134, %v6135
  %v6137 = vsel %vm140, %v6057, 0.0
  %v6138 = vadd.f32 %v6136, %v6137
  %v6139 = vsel %vm140, %v6058, 0.0
  %v6140 = vadd.f32 %v6138, %v6139
  %v6141 = vsel %vm140, %v6059, 0.0
  %v6142 = vadd.f32 %v6140, %v6141
  %v6143 = vsel %vm140, %v6060, 0.0
  %v6144 = vadd.f32 %v6142, %v6143
  %v6145 = vsel %vm140, %v6061, 0.0
  %v6146 = vadd.f32 %v6144, %v6145
  %v6147 = vsel %vm140, %v6062, 0.0
  %v6148 = vadd.f32 %v6146, %v6147
  %v6149 = vsel %vm140, %v6063, 0.0
  %v6150 = vadd.f32 %v6148, %v6149
  %v6151 = vsel %vm140, %v6064, 0.0
  %v6152 = vadd.f32 %v6150, %v6151
  %v6153 = vsel %vm140, %v6065, 0.0
  %v6154 = vadd.f32 %v6152, %v6153
  %v6155 = vsel %vm140, %v6066, 0.0
  %v6156 = vadd.f32 %v6154, %v6155
  %v6157 = vsel %vm140, %v6067, 0.0
  %v6158 = vadd.f32 %v6156, %v6157
  %v6159 = vsel %vm140, %v6068, 0.0
  %v6160 = vadd.f32 %v6158, %v6159
  %v6161 = vsel %vm140, %v6069, 0.0
  %v6162 = vadd.f32 %v6160, %v6161
  %v6163 = vsel %vm140, %v6070, 0.0
  %v6164 = vadd.f32 %v6162, %v6163
  %v6165 = vsel %vm140, %v6071, 0.0
  %v6166 = vadd.f32 %v6164, %v6165
  %v6167 = vsel %vm140, %v6072, 0.0
  %v6168 = vadd.f32 %v6166, %v6167
  %v6169 = vsel %vm140, %v6073, 0.0
  %v6170 = vadd.f32 %v6168, %v6169
  %v6171 = vsel %vm140, %v6074, 0.0
  %v6172 = vadd.f32 %v6170, %v6171
  %v6173 = vsel %vm140, %v6075, 0.0
  %v6174 = vadd.f32 %v6172, %v6173
  %v6175 = vsel %vm140, %v6076, 0.0
  %v6176 = vadd.f32 %v6174, %v6175
  %v6177 = vsel %vm140, %v6077, 0.0
  %v6178 = vadd.f32 %v6176, %v6177
  %v6179 = vsel %vm140, %v6078, 0.0
  %v6180 = vadd.f32 %v6178, %v6179
  %v6181 = vsel %vm140, %v6079, 0.0
  %v6182 = vadd.f32 %v6180, %v6181
  %v6183 = vsel %vm140, %v6080, 0.0
  %v6184 = vadd.f32 %v6182, %v6183
  %v6185 = vsel %vm140, %v6081, 0.0
  %v6186 = vadd.f32 %v6184, %v6185
  %v6187 = vsel %vm140, %v6082, 0.0
  %v6188 = vadd.f32 %v6186, %v6187
  %v6189 = vsel %vm140, %v6083, 0.0
  %v6190 = vadd.f32 %v6188, %v6189
  %v6191 = vsel %vm140, %v6084, 0.0
  %v6192 = vadd.f32 %v6190, %v6191
  %v6193 = vsel %vm140, %v6085, 0.0
  %v6194 = vadd.f32 %v6192, %v6193
  %v6195 = vsel %vm140, %v6086, 0.0
  %v6196 = vadd.f32 %v6194, %v6195
  %v6197 = vsel %vm140, %v6087, 0.0
  %v6198 = vadd.f32 %v6196, %v6197
  %v6199 = vsel %vm140, %v6088, 0.0
  %v6200 = vadd.f32 %v6198, %v6199
  %v6201 = vsel %vm140, %v6089, 0.0
  %v6202 = vadd.f32 %v6200, %v6201
  %v6203 = vsel %vm140, %v6090, 0.0
  %v6204 = vadd.f32 %v6202, %v6203
  %v6205 = vsel %vm140, %v6091, 0.0
  %v6206 = vadd.f32 %v6204, %v6205
  %v6207 = vsel %vm140, %v6092, 0.0
  %v6208 = vadd.f32 %v6206, %v6207
  %v6209 = vsel %vm140, %v6093, 0.0
  %v6210 = vadd.f32 %v6208, %v6209
  %v6211 = vsel %vm140, %v6094, 0.0
  %v6212 = vadd.f32 %v6210, %v6211
  %v6213 = vsel %vm140, %v6095, 0.0
  %v6214 = vadd.f32 %v6212, %v6213
  %v6215 = vsel %vm140, %v6096, 0.0
  %v6216 = vadd.f32 %v6214, %v6215
  %v6217 = vsel %vm140, %v6097, 0.0
  %v6218 = vadd.f32 %v6216, %v6217
  %v6219 = vsel %vm140, %v6098, 0.0
  %v6220 = vadd.f32 %v6218, %v6219
  %v6221 = vsel %vm140, %v6099, 0.0
  %v6222 = vadd.f32 %v6220, %v6221
  %v6223 = vsel %vm140, %v6100, 0.0
  %v6224 = vadd.f32 %v6222, %v6223
  %v6225 = vsel %vm140, %v6101, 0.0
  %v6226 = vadd.f32 %v6224, %v6225
  %v6227 = vsel %vm140, %v6102, 0.0
  %v6228 = vadd.f32 %v6226, %v6227
  %v6229 = vsel %vm140, %v6103, 0.0
  %v6230 = vadd.f32 %v6228, %v6229
  %v6231 = vrot.slane %v6230, 4
  %v6232 = vadd.f32 %v6230, %v6231
  %v6233 = vrot.slane %v6232, 2
  %v6234 = vadd.f32 %v6232, %v6233
  %v6235 = vrot.slane %v6234, 1
  %v6236 = vadd.f32 %v6234, %v6235
  %v6237 = vmul.f32 %v6039, 0.001953125
  %v6238 = vmul.f32 %v6236, 0.001953125
  %v6239 = vmul.f32 %v6237, %v6237
  %v6240 = vsub.f32 %v6238, %v6239
  %v6241 = vadd.f32 %v6240, 1e-05
  %v6242 = vrsqrt.pop %v6241
  %v6243 = vmul.f32 %v5905, %v6242
  %v6244 = vmul.f32 %v6237, %v6243
  %v6245 = vsub.f32 %v5906, %v6244
  %v6247 = vlaneseq
  %v6248 = vshrl.u32 %v6247, 7
  %v6249 = vsub.s32 0, %v6248
  %v6250 = vrot.slane %v6243, %v6249
  %v6252 = vmul.f32 %v5651, %v6250
  %v6253 = vmul.f32 %v5654, %v6250
  %v6254 = vmul.f32 %v5659, %v6250
  %v6255 = vmul.f32 %v5662, %v6250
  %v6256 = vmul.f32 %v5667, %v6250
  %v6257 = vmul.f32 %v5670, %v6250
  %v6258 = vmul.f32 %v5675, %v6250
  %v6259 = vmul.f32 %v5678, %v6250
  %v6260 = vmul.f32 %v5683, %v6250
  %v6261 = vmul.f32 %v5686, %v6250
  %v6262 = vmul.f32 %v5691, %v6250
  %v6263 = vmul.f32 %v5694, %v6250
  %v6264 = vmul.f32 %v5699, %v6250
  %v6265 = vmul.f32 %v5702, %v6250
  %v6266 = vmul.f32 %v5707, %v6250
  %v6267 = vmul.f32 %v5710, %v6250
  %v6268 = vmul.f32 %v5715, %v6250
  %v6269 = vmul.f32 %v5718, %v6250
  %v6270 = vmul.f32 %v5723, %v6250
  %v6271 = vmul.f32 %v5726, %v6250
  %v6272 = vmul.f32 %v5731, %v6250
  %v6273 = vmul.f32 %v5734, %v6250
  %v6274 = vmul.f32 %v5739, %v6250
  %v6275 = vmul.f32 %v5742, %v6250
  %v6276 = vmul.f32 %v5747, %v6250
  %v6277 = vmul.f32 %v5750, %v6250
  %v6278 = vmul.f32 %v5755, %v6250
  %v6279 = vmul.f32 %v5758, %v6250
  %v6280 = vmul.f32 %v5763, %v6250
  %v6281 = vmul.f32 %v5766, %v6250
  %v6282 = vmul.f32 %v5771, %v6250
  %v6283 = vmul.f32 %v5774, %v6250
  %v6284 = vmul.f32 %v5779, %v6250
  %v6285 = vmul.f32 %v5782, %v6250
  %v6286 = vmul.f32 %v5787, %v6250
  %v6287 = vmul.f32 %v5790, %v6250
  %v6288 = vmul.f32 %v5795, %v6250
  %v6289 = vmul.f32 %v5798, %v6250
  %v6290 = vmul.f32 %v5803, %v6250
  %v6291 = vmul.f32 %v5806, %v6250
  %v6292 = vmul.f32 %v5811, %v6250
  %v6293 = vmul.f32 %v5814, %v6250
  %v6294 = vmul.f32 %v5819, %v6250
  %v6295 = vmul.f32 %v5822, %v6250
  %v6296 = vmul.f32 %v5827, %v6250
  %v6297 = vmul.f32 %v5830, %v6250
  %v6298 = vmul.f32 %v5835, %v6250
  %v6299 = vmul.f32 %v5838, %v6250
  %v6300 = vmul.f32 %v5843, %v6250
  %v6301 = vmul.f32 %v5846, %v6250
  %v6302 = vmul.f32 %v5851, %v6250
  %v6303 = vmul.f32 %v5854, %v6250
  %v6304 = vmul.f32 %v5859, %v6250
  %v6305 = vmul.f32 %v5862, %v6250
  %v6306 = vmul.f32 %v5867, %v6250
  %v6307 = vmul.f32 %v5870, %v6250
  %v6308 = vmul.f32 %v5875, %v6250
  %v6309 = vmul.f32 %v5878, %v6250
  %v6310 = vmul.f32 %v5883, %v6250
  %v6311 = vmul.f32 %v5886, %v6250
  %v6312 = vmul.f32 %v5891, %v6250
  %v6313 = vmul.f32 %v5894, %v6250
  %v6314 = vmul.f32 %v5899, %v6250
  %v6315 = vmul.f32 %v5902, %v6250
  %v6317 = vlaneseq
  %v6318 = vshrl.u32 %v6317, 7
  %v6319 = vsub.s32 0, %v6318
  %v6320 = vrot.slane %v6245, %v6319
  %v6322 = vadd.f32 %v6252, %v6320
  %v6323 = vadd.f32 %v6253, %v6320
  %v6324 = vadd.f32 %v6254, %v6320
  %v6325 = vadd.f32 %v6255, %v6320
  %v6326 = vadd.f32 %v6256, %v6320
  %v6327 = vadd.f32 %v6257, %v6320
  %v6328 = vadd.f32 %v6258, %v6320
  %v6329 = vadd.f32 %v6259, %v6320
  %v6330 = vadd.f32 %v6260, %v6320
  %v6331 = vadd.f32 %v6261, %v6320
  %v6332 = vadd.f32 %v6262, %v6320
  %v6333 = vadd.f32 %v6263, %v6320
  %v6334 = vadd.f32 %v6264, %v6320
  %v6335 = vadd.f32 %v6265, %v6320
  %v6336 = vadd.f32 %v6266, %v6320
  %v6337 = vadd.f32 %v6267, %v6320
  %v6338 = vadd.f32 %v6268, %v6320
  %v6339 = vadd.f32 %v6269, %v6320
  %v6340 = vadd.f32 %v6270, %v6320
  %v6341 = vadd.f32 %v6271, %v6320
  %v6342 = vadd.f32 %v6272, %v6320
  %v6343 = vadd.f32 %v6273, %v6320
  %v6344 = vadd.f32 %v6274, %v6320
  %v6345 = vadd.f32 %v6275, %v6320
  %v6346 = vadd.f32 %v6276, %v6320
  %v6347 = vadd.f32 %v6277, %v6320
  %v6348 = vadd.f32 %v6278, %v6320
  %v6349 = vadd.f32 %v6279, %v6320
  %v6350 = vadd.f32 %v6280, %v6320
  %v6351 = vadd.f32 %v6281, %v6320
  %v6352 = vadd.f32 %v6282, %v6320
  %v6353 = vadd.f32 %v6283, %v6320
  %v6354 = vadd.f32 %v6284, %v6320
  %v6355 = vadd.f32 %v6285, %v6320
  %v6356 = vadd.f32 %v6286, %v6320
  %v6357 = vadd.f32 %v6287, %v6320
  %v6358 = vadd.f32 %v6288, %v6320
  %v6359 = vadd.f32 %v6289, %v6320
  %v6360 = vadd.f32 %v6290, %v6320
  %v6361 = vadd.f32 %v6291, %v6320
  %v6362 = vadd.f32 %v6292, %v6320
  %v6363 = vadd.f32 %v6293, %v6320
  %v6364 = vadd.f32 %v6294, %v6320
  %v6365 = vadd.f32 %v6295, %v6320
  %v6366 = vadd.f32 %v6296, %v6320
  %v6367 = vadd.f32 %v6297, %v6320
  %v6368 = vadd.f32 %v6298, %v6320
  %v6369 = vadd.f32 %v6299, %v6320
  %v6370 = vadd.f32 %v6300, %v6320
  %v6371 = vadd.f32 %v6301, %v6320
  %v6372 = vadd.f32 %v6302, %v6320
  %v6373 = vadd.f32 %v6303, %v6320
  %v6374 = vadd.f32 %v6304, %v6320
  %v6375 = vadd.f32 %v6305, %v6320
  %v6376 = vadd.f32 %v6306, %v6320
  %v6377 = vadd.f32 %v6307, %v6320
  %v6378 = vadd.f32 %v6308, %v6320
  %v6379 = vadd.f32 %v6309, %v6320
  %v6380 = vadd.f32 %v6310, %v6320
  %v6381 = vadd.f32 %v6311, %v6320
  %v6382 = vadd.f32 %v6312, %v6320
  %v6383 = vadd.f32 %v6313, %v6320
  %v6384 = vadd.f32 %v6314, %v6320
  %v6385 = vadd.f32 %v6315, %v6320
  %v6386 = vadd.f32 %v6322, %v36
  %v6387 = vadd.f32 %v6323, %v37
  %v6388 = vadd.f32 %v6324, %v38
  %v6389 = vadd.f32 %v6325, %v39
  %v6390 = vadd.f32 %v6326, %v40
  %v6391 = vadd.f32 %v6327, %v41
  %v6392 = vadd.f32 %v6328, %v42
  %v6393 = vadd.f32 %v6329, %v43
  %v6394 = vadd.f32 %v6330, %v44
  %v6395 = vadd.f32 %v6331, %v45
  %v6396 = vadd.f32 %v6332, %v46
  %v6397 = vadd.f32 %v6333, %v47
  %v6398 = vadd.f32 %v6334, %v48
  %v6399 = vadd.f32 %v6335, %v49
  %v6400 = vadd.f32 %v6336, %v50
  %v6401 = vadd.f32 %v6337, %v51
  %v6402 = vadd.f32 %v6338, %v52
  %v6403 = vadd.f32 %v6339, %v53
  %v6404 = vadd.f32 %v6340, %v54
  %v6405 = vadd.f32 %v6341, %v55
  %v6406 = vadd.f32 %v6342, %v56
  %v6407 = vadd.f32 %v6343, %v57
  %v6408 = vadd.f32 %v6344, %v58
  %v6409 = vadd.f32 %v6345, %v59
  %v6410 = vadd.f32 %v6346, %v60
  %v6411 = vadd.f32 %v6347, %v61
  %v6412 = vadd.f32 %v6348, %v62
  %v6413 = vadd.f32 %v6349, %v63
  %v6414 = vadd.f32 %v6350, %v64
  %v6415 = vadd.f32 %v6351, %v65
  %v6416 = vadd.f32 %v6352, %v66
  %v6417 = vadd.f32 %v6353, %v67
  %v6418 = vadd.f32 %v6354, %v68
  %v6419 = vadd.f32 %v6355, %v69
  %v6420 = vadd.f32 %v6356, %v70
  %v6421 = vadd.f32 %v6357, %v71
  %v6422 = vadd.f32 %v6358, %v72
  %v6423 = vadd.f32 %v6359, %v73
  %v6424 = vadd.f32 %v6360, %v74
  %v6425 = vadd.f32 %v6361, %v75
  %v6426 = vadd.f32 %v6362, %v76
  %v6427 = vadd.f32 %v6363, %v77
  %v6428 = vadd.f32 %v6364, %v78
  %v6429 = vadd.f32 %v6365, %v79
  %v6430 = vadd.f32 %v6366, %v80
  %v6431 = vadd.f32 %v6367, %v81
  %v6432 = vadd.f32 %v6368, %v82
  %v6433 = vadd.f32 %v6369, %v83
  %v6434 = vadd.f32 %v6370, %v84
  %v6435 = vadd.f32 %v6371, %v85
  %v6436 = vadd.f32 %v6372, %v86
  %v6437 = vadd.f32 %v6373, %v87
  %v6438 = vadd.f32 %v6374, %v88
  %v6439 = vadd.f32 %v6375, %v89
  %v6440 = vadd.f32 %v6376, %v90
  %v6441 = vadd.f32 %v6377, %v91
  %v6442 = vadd.f32 %v6378, %v92
  %v6443 = vadd.f32 %v6379, %v93
  %v6444 = vadd.f32 %v6380, %v94
  %v6445 = vadd.f32 %v6381, %v95
  %v6446 = vadd.f32 %v6382, %v96
  %v6447 = vadd.f32 %v6383, %v97
  %v6448 = vadd.f32 %v6384, %v98
  %v6449 = vadd.f32 %v6385, %v99
  %v6450 = vmax.f32 %v6386, 0.0
  %v6451 = vmax.f32 %v6387, 0.0
  %v6452 = vmax.f32 %v6388, 0.0
  %v6453 = vmax.f32 %v6389, 0.0
  %v6454 = vmax.f32 %v6390, 0.0
  %v6455 = vmax.f32 %v6391, 0.0
  %v6456 = vmax.f32 %v6392, 0.0
  %v6457 = vmax.f32 %v6393, 0.0
  %v6458 = vmax.f32 %v6394, 0.0
  %v6459 = vmax.f32 %v6395, 0.0
  %v6460 = vmax.f32 %v6396, 0.0
  %v6461 = vmax.f32 %v6397, 0.0
  %v6462 = vmax.f32 %v6398, 0.0
  %v6463 = vmax.f32 %v6399, 0.0
  %v6464 = vmax.f32 %v6400, 0.0
  %v6465 = vmax.f32 %v6401, 0.0
  %v6466 = vmax.f32 %v6402, 0.0
  %v6467 = vmax.f32 %v6403, 0.0
  %v6468 = vmax.f32 %v6404, 0.0
  %v6469 = vmax.f32 %v6405, 0.0
  %v6470 = vmax.f32 %v6406, 0.0
  %v6471 = vmax.f32 %v6407, 0.0
  %v6472 = vmax.f32 %v6408, 0.0
  %v6473 = vmax.f32 %v6409, 0.0
  %v6474 = vmax.f32 %v6410, 0.0
  %v6475 = vmax.f32 %v6411, 0.0
  %v6476 = vmax.f32 %v6412, 0.0
  %v6477 = vmax.f32 %v6413, 0.0
  %v6478 = vmax.f32 %v6414, 0.0
  %v6479 = vmax.f32 %v6415, 0.0
  %v6480 = vmax.f32 %v6416, 0.0
  %v6481 = vmax.f32 %v6417, 0.0
  %v6482 = vmax.f32 %v6418, 0.0
  %v6483 = vmax.f32 %v6419, 0.0
  %v6484 = vmax.f32 %v6420, 0.0
  %v6485 = vmax.f32 %v6421, 0.0
  %v6486 = vmax.f32 %v6422, 0.0
  %v6487 = vmax.f32 %v6423, 0.0
  %v6488 = vmax.f32 %v6424, 0.0
  %v6489 = vmax.f32 %v6425, 0.0
  %v6490 = vmax.f32 %v6426, 0.0
  %v6491 = vmax.f32 %v6427, 0.0
  %v6492 = vmax.f32 %v6428, 0.0
  %v6493 = vmax.f32 %v6429, 0.0
  %v6494 = vmax.f32 %v6430, 0.0
  %v6495 = vmax.f32 %v6431, 0.0
  %v6496 = vmax.f32 %v6432, 0.0
  %v6497 = vmax.f32 %v6433, 0.0
  %v6498 = vmax.f32 %v6434, 0.0
  %v6499 = vmax.f32 %v6435, 0.0
  %v6500 = vmax.f32 %v6436, 0.0
  %v6501 = vmax.f32 %v6437, 0.0
  %v6502 = vmax.f32 %v6438, 0.0
  %v6503 = vmax.f32 %v6439, 0.0
  %v6504 = vmax.f32 %v6440, 0.0
  %v6505 = vmax.f32 %v6441, 0.0
  %v6506 = vmax.f32 %v6442, 0.0
  %v6507 = vmax.f32 %v6443, 0.0
  %v6508 = vmax.f32 %v6444, 0.0
  %v6509 = vmax.f32 %v6445, 0.0
  %v6510 = vmax.f32 %v6446, 0.0
  %v6511 = vmax.f32 %v6447, 0.0
  %v6512 = vmax.f32 %v6448, 0.0
  %v6513 = vmax.f32 %v6449, 0.0
  %6514 = vst.msk [vmem:[%s10] sm:$0xff] %vm140, %v6450
  %6515 = vst.msk [vmem:[%s10 + $0x8] sm:$0xff] %vm140, %v6451
  %6516 = vst.msk [vmem:[%s10 + $0x10] sm:$0xff] %vm140, %v6452
  %6517 = vst.msk [vmem:[%s10 + $0x18] sm:$0xff] %vm140, %v6453
  %6518 = vst.msk [vmem:[%s10 + $0x20] sm:$0xff] %vm140, %v6454
  %6519 = vst.msk [vmem:[%s10 + $0x28] sm:$0xff] %vm140, %v6455
  %6520 = vst.msk [vmem:[%s10 + $0x30] sm:$0xff] %vm140, %v6456
  %6521 = vst.msk [vmem:[%s10 + $0x38] sm:$0xff] %vm140, %v6457
  %6522 = vst.msk [vmem:[%s10 + $0x40] sm:$0xff] %vm140, %v6458
  %6523 = vst.msk [vmem:[%s10 + $0x48] sm:$0xff] %vm140, %v6459
  %6524 = vst.msk [vmem:[%s10 + $0x50] sm:$0xff] %vm140, %v6460
  %6525 = vst.msk [vmem:[%s10 + $0x58] sm:$0xff] %vm140, %v6461
  %6526 = vst.msk [vmem:[%s10 + $0x60] sm:$0xff] %vm140, %v6462
  %6527 = vst.msk [vmem:[%s10 + $0x68] sm:$0xff] %vm140, %v6463
  %6528 = vst.msk [vmem:[%s10 + $0x70] sm:$0xff] %vm140, %v6464
  %6529 = vst.msk [vmem:[%s10 + $0x78] sm:$0xff] %vm140, %v6465
  %6530 = vst.msk [vmem:[%s10 + $0x80] sm:$0xff] %vm140, %v6466
  %6531 = vst.msk [vmem:[%s10 + $0x88] sm:$0xff] %vm140, %v6467
  %6532 = vst.msk [vmem:[%s10 + $0x90] sm:$0xff] %vm140, %v6468
  %6533 = vst.msk [vmem:[%s10 + $0x98] sm:$0xff] %vm140, %v6469
  %6534 = vst.msk [vmem:[%s10 + $0xa0] sm:$0xff] %vm140, %v6470
  %6535 = vst.msk [vmem:[%s10 + $0xa8] sm:$0xff] %vm140, %v6471
  %6536 = vst.msk [vmem:[%s10 + $0xb0] sm:$0xff] %vm140, %v6472
  %6537 = vst.msk [vmem:[%s10 + $0xb8] sm:$0xff] %vm140, %v6473
  %6538 = vst.msk [vmem:[%s10 + $0xc0] sm:$0xff] %vm140, %v6474
  %6539 = vst.msk [vmem:[%s10 + $0xc8] sm:$0xff] %vm140, %v6475
  %6540 = vst.msk [vmem:[%s10 + $0xd0] sm:$0xff] %vm140, %v6476
  %6541 = vst.msk [vmem:[%s10 + $0xd8] sm:$0xff] %vm140, %v6477
  %6542 = vst.msk [vmem:[%s10 + $0xe0] sm:$0xff] %vm140, %v6478
  %6543 = vst.msk [vmem:[%s10 + $0xe8] sm:$0xff] %vm140, %v6479
  %6544 = vst.msk [vmem:[%s10 + $0xf0] sm:$0xff] %vm140, %v6480
  %6545 = vst.msk [vmem:[%s10 + $0xf8] sm:$0xff] %vm140, %v6481
  %6546 = vst.msk [vmem:[%s10 + $0x100] sm:$0xff] %vm140, %v6482
  %6547 = vst.msk [vmem:[%s10 + $0x108] sm:$0xff] %vm140, %v6483
  %6548 = vst.msk [vmem:[%s10 + $0x110] sm:$0xff] %vm140, %v6484
  %6549 = vst.msk [vmem:[%s10 + $0x118] sm:$0xff] %vm140, %v6485
  %6550 = vst.msk [vmem:[%s10 + $0x120] sm:$0xff] %vm140, %v6486
  %6551 = vst.msk [vmem:[%s10 + $0x128] sm:$0xff] %vm140, %v6487
  %6552 = vst.msk [vmem:[%s10 + $0x130] sm:$0xff] %vm140, %v6488
  %6553 = vst.msk [vmem:[%s10 + $0x138] sm:$0xff] %vm140, %v6489
  %6554 = vst.msk [vmem:[%s10 + $0x140] sm:$0xff] %vm140, %v6490
  %6555 = vst.msk [vmem:[%s10 + $0x148] sm:$0xff] %vm140, %v6491
  %6556 = vst.msk [vmem:[%s10 + $0x150] sm:$0xff] %vm140, %v6492
  %6557 = vst.msk [vmem:[%s10 + $0x158] sm:$0xff] %vm140, %v6493
  %6558 = vst.msk [vmem:[%s10 + $0x160] sm:$0xff] %vm140, %v6494
  %6559 = vst.msk [vmem:[%s10 + $0x168] sm:$0xff] %vm140, %v6495
  %6560 = vst.msk [vmem:[%s10 + $0x170] sm:$0xff] %vm140, %v6496
  %6561 = vst.msk [vmem:[%s10 + $0x178] sm:$0xff] %vm140, %v6497
  %6562 = vst.msk [vmem:[%s10 + $0x180] sm:$0xff] %vm140, %v6498
  %6563 = vst.msk [vmem:[%s10 + $0x188] sm:$0xff] %vm140, %v6499
  %6564 = vst.msk [vmem:[%s10 + $0x190] sm:$0xff] %vm140, %v6500
  %6565 = vst.msk [vmem:[%s10 + $0x198] sm:$0xff] %vm140, %v6501
  %6566 = vst.msk [vmem:[%s10 + $0x1a0] sm:$0xff] %vm140, %v6502
  %6567 = vst.msk [vmem:[%s10 + $0x1a8] sm:$0xff] %vm140, %v6503
  %6568 = vst.msk [vmem:[%s10 + $0x1b0] sm:$0xff] %vm140, %v6504
  %6569 = vst.msk [vmem:[%s10 + $0x1b8] sm:$0xff] %vm140, %v6505
  %6570 = vst.msk [vmem:[%s10 + $0x1c0] sm:$0xff] %vm140, %v6506
  %6571 = vst.msk [vmem:[%s10 + $0x1c8] sm:$0xff] %vm140, %v6507
  %6572 = vst.msk [vmem:[%s10 + $0x1d0] sm:$0xff] %vm140, %v6508
  %6573 = vst.msk [vmem:[%s10 + $0x1d8] sm:$0xff] %vm140, %v6509
  %6574 = vst.msk [vmem:[%s10 + $0x1e0] sm:$0xff] %vm140, %v6510
  %6575 = vst.msk [vmem:[%s10 + $0x1e8] sm:$0xff] %vm140, %v6511
  %6576 = vst.msk [vmem:[%s10 + $0x1f0] sm:$0xff] %vm140, %v6512
  %6577 = vst.msk [vmem:[%s10 + $0x1f8] sm:$0xff] %vm140, %v6513
  // Predicated region
  $region42: #{bottleneck_pallas.1} parent=0 // pred_check
    _
  $region43: #{bottleneck_pallas.1} parent=0 // pred_check_branch
    %6579 = sbr.rel (0) target = $region45
  $region44: #{bottleneck_pallas.1} parent=0 // pred_region
    _
  $region45: #{bottleneck_pallas.1} parent=0 // pred_fallthru
    _
  // Predicated region
  $region46: #{bottleneck_pallas.1} parent=0 // pred_check
    _
  $region47: #{bottleneck_pallas.1} parent=0 // pred_check_branch
    %6581 = sbr.rel (0) target = $region49
  $region48: #{bottleneck_pallas.1} parent=0 // pred_region
    _
  $region49: #{bottleneck_pallas.1} parent=0 // pred_fallthru
    _

</llo_original>
